<compile_context>
chip_gen: v7x
topology: tpu7x:2x2x1
jax: 0.10.0
libtpu: 0.0.40
codegen_flags: <defaults>
</compile_context>

<pallas_src>
import functools

import jax
import jax.numpy as jnp
from jax.experimental import pallas as pl
from jax.experimental.pallas import tpu as pltpu

LANE = 128   # lane width of every weight tile / kernel output
HALF = 64    # out2 lane split: z -> lanes [0, HALF), cluster logits -> [HALF, HALF+cls)
CPAD = 8     # conv input channels zero-padded to 8 (8-aligned wconv row slices)


# -----------------------------------------------------------------------------
# One fused kernel: conv3x3+ReLU (in-kernel im2col) -> global avg pool (in-kernel
# selector) -> merged projector layer-1 (fc folded in) -> block-diag layer-2 ->
# L2-normalize + softmax.  Everything resident in VMEM (<~4 MB).
# -----------------------------------------------------------------------------
def fused_forward_kernel(x_ref, wconv_ref, bconv_ref, w1_ref, b1_ref,
                         w2_ref, b2_ref, z_ref, c_ref, *,
                         n_img, H, W, Hp, Wp, class_num, pb):
    R0 = n_img * Hp * Wp          # one conv row per padded pixel of every image
    MIDP = wconv_ref.shape[1]     # conv output channels, zero-padded to LANE

    # ---- conv3x3 (stride 1, pad 1) + ReLU as 9 shifted matmuls --------------
    # Row j = n*Hp*Wp + h*Wp + w of `conv` holds the conv output at (n, h, w);
    # rows with h >= H or w >= W are harmless garbage and are masked out by the
    # pooling selector below.
    acc = None
    for k in range(9):
        di, dj = divmod(k, 3)
        off = di * Wp + dj                                   # static 0 .. 2*Wp+2
        xk = x_ref[pl.ds(off, R0), :].astype(jnp.bfloat16)   # (R0, CPAD)
        wk = wconv_ref[pl.ds(k * CPAD, CPAD), :]             # (CPAD, MIDP) bf16
        d = jnp.dot(xk, wk, preferred_element_type=jnp.float32)
        acc = d if acc is None else acc + d
    conv = jnp.maximum(acc + bconv_ref[...], 0.0)            # (R0, MIDP) f32

    # ---- global average pool: selector built in-kernel (no pool_mat input) ---
    # Float decode of (image, h, w) from the flat row index; margins (>=0.5/Wp)
    # are orders of magnitude above f32 rounding error, so floor() is exact.
    r = jax.lax.broadcasted_iota(jnp.int32, (pb, R0), 1).astype(jnp.float32)
    bi = jax.lax.broadcasted_iota(jnp.int32, (pb, R0), 0).astype(jnp.float32)
    img = jnp.floor((r + 0.5) * (1.0 / (Hp * Wp)))
    p = r - img * (Hp * Wp)
    hh = jnp.floor((p + 0.5) * (1.0 / Wp))
    ww = p - hh * Wp
    valid = (img == bi) & (hh < H) & (ww < W)                # drop pad/garbage rows
    sel = jnp.where(valid, 1.0 / (H * W), 0.0).astype(jnp.bfloat16)
    pooled = jnp.dot(sel, conv.astype(jnp.bfloat16),
                     preferred_element_type=jnp.float32)     # (pb, MIDP) f32

    # ---- fused head: merged [instance|cluster] layer-1 (fc folded), block-diag layer-2
    t = jnp.maximum(
        jnp.dot(pooled.astype(jnp.bfloat16), w1_ref[...],
                preferred_element_type=jnp.float32) + b1_ref[...], 0.0)   # (pb, 2*rep)
    out2 = jnp.dot(t.astype(jnp.bfloat16), w2_ref[...],
                   preferred_element_type=jnp.float32) + b2_ref[...]      # (pb, LANE)

    lane = jax.lax.broadcasted_iota(jnp.int32, out2.shape, 1)

    # instance branch -> F.normalize(dim=1); lanes >= HALF hold cluster logits,
    # lanes [feature_dim, HALF) are exactly zero by construction.
    zp = jnp.where(lane < HALF, out2, 0.0)
    ss = jnp.sum(zp * zp, axis=1, keepdims=True)
    z_ref[...] = zp * jax.lax.rsqrt(jnp.maximum(ss, 1e-24))  # == z / max(||z||, 1e-12)

    # cluster branch -> Softmax(dim=1) with exact reciprocal (log-prob safe)
    lg = jnp.where((lane >= HALF) & (lane < HALF + class_num), out2, -1e30)
    m = jnp.max(lg, axis=1, keepdims=True)
    e = jnp.exp(lg - m)                                      # masked lanes -> exactly 0
    c_ref[...] = e / jnp.sum(e, axis=1, keepdims=True)


def _full_spec(arr):
    nd = arr.ndim
    return pl.BlockSpec(arr.shape, lambda i, _nd=nd: (0,) * _nd)


def fused_forward_pallas(xflat, params, *, n_img, H, W, Hp, Wp, class_num):
    pb = max(8, ((n_img + 7) // 8) * 8)                      # sublane-aligned batch
    args = (xflat, params["wconv"], params["bconv"],
            params["w1"], params["b1"], params["w2"], params["b2"])
    kernel = functools.partial(fused_forward_kernel, n_img=n_img, H=H, W=W,
                               Hp=Hp, Wp=Wp, class_num=class_num, pb=pb)
    return pl.pallas_call(
        kernel,
        out_shape=(jax.ShapeDtypeStruct((pb, LANE), jnp.float32),
                   jax.ShapeDtypeStruct((pb, LANE), jnp.float32)),
        grid=(1,),
        in_specs=[_full_spec(a) for a in args],
        out_specs=(pl.BlockSpec((pb, LANE), lambda i: (0, 0)),
                   pl.BlockSpec((pb, LANE), lambda i: (0, 0))),
        compiler_params=pltpu.CompilerParams(
            dimension_semantics=("arbitrary",),
            vmem_limit_bytes=32 * 1024 * 1024),
    )(*args)


# -----------------------------------------------------------------------------
# Parameter construction: raw (reference) params + pre-folded / padded / bf16
# kernel params.  Zero padding is exact after the bf16 cast, so the L2-norm and
# softmax masking tricks stay valid.
# -----------------------------------------------------------------------------
def make_params(key, in_ch, mid_ch, rep_dim, feature_dim, class_num):
    assert feature_dim <= HALF and HALF + class_num <= LANE
    keys = jax.random.split(key, 12)
    s = 0.05

    def rnd(k, shape):
        return (s * jax.random.normal(k, shape)).astype(jnp.float32)

    raw = {
        "wconv": rnd(keys[0], (in_ch, 3, 3, mid_ch)),   # [c, di, dj, m]
        "bconv": rnd(keys[1], (mid_ch,)),
        "wfc": rnd(keys[2], (mid_ch, rep_dim)), "bfc": rnd(keys[3], (rep_dim,)),
        "wi1": rnd(keys[4], (rep_dim, rep_dim)), "bi1": rnd(keys[5], (rep_dim,)),
        "wi2": rnd(keys[6], (rep_dim, feature_dim)), "bi2": rnd(keys[7], (feature_dim,)),
        "wc1": rnd(keys[8], (rep_dim, rep_dim)), "bc1": rnd(keys[9], (rep_dim,)),
        "wc2": rnd(keys[10], (rep_dim, class_num)), "bc2": rnd(keys[11], (class_num,)),
    }

    midp = LANE
    # conv weight tiles: rows k*CPAD + c for offset k = di*3 + dj
    wconv_k = raw["wconv"].transpose(1, 2, 0, 3).reshape(9, in_ch, mid_ch)
    wconv_k = jnp.pad(wconv_k, ((0, 0), (0, CPAD - in_ch), (0, midp - mid_ch)))
    wconv_k = wconv_k.reshape(9 * CPAD, midp)
    bconv_p = jnp.pad(raw["bconv"], (0, midp - mid_ch)).reshape(1, midp)

    # fold backbone fc into projector first layers, concat [instance | cluster]
    w1i = raw["wfc"] @ raw["wi1"]
    b1i = raw["bfc"] @ raw["wi1"] + raw["bi1"]
    w1c = raw["wfc"] @ raw["wc1"]
    b1c = raw["bfc"] @ raw["wc1"] + raw["bc1"]
    w1 = jnp.concatenate([w1i, w1c], axis=1)                  # (mid, 2*rep)
    w1 = jnp.pad(w1, ((0, midp - mid_ch), (0, 0)))            # (MIDP, 2*rep)
    b1 = jnp.concatenate([b1i, b1c]).reshape(1, 2 * rep_dim)

    # block-diagonal second layer: instance -> lanes [0, feat), cluster -> [HALF, HALF+cls)
    w2 = jnp.zeros((2 * rep_dim, LANE), jnp.float32)
    w2 = w2.at[:rep_dim, :feature_dim].set(raw["wi2"])
    w2 = w2.at[rep_dim:, HALF:HALF + class_num].set(raw["wc2"])
    b2 = jnp.zeros((1, LANE), jnp.float32)
    b2 = b2.at[0, :feature_dim].set(raw["bi2"])
    b2 = b2.at[0, HALF:HALF + class_num].set(raw["bc2"])

    kparams = {
        "wconv": wconv_k.astype(jnp.bfloat16),
        "bconv": bconv_p,                       # f32
        "w1": w1.astype(jnp.bfloat16),
        "b1": b1,                               # f32
        "w2": w2.astype(jnp.bfloat16),
        "b2": b2,                               # f32
    }
    return kparams, raw


# -----------------------------------------------------------------------------
# XLA glue: flatten the zero-padded image (cheap, ~40 KB) and slice the outputs.
# -----------------------------------------------------------------------------
@functools.partial(jax.jit, static_argnames=("feature_dim", "class_num"))
def network_forward(x_i, x_j, kparams, *, feature_dim, class_num):
    B = x_i.shape[0]
    x = jnp.concatenate([x_i, x_j], axis=0)                   # (2B, C, H, W)
    n_img, C, H, W = x.shape
    Hp, Wp = H + 2, W + 2

    xp = jnp.pad(x, ((0, 0), (0, 0), (1, 1), (1, 1)))         # (nB, C, Hp, Wp)
    xflat = xp.transpose(0, 2, 3, 1).reshape(n_img * Hp * Wp, C)
    r0 = n_img * Hp * Wp
    o_max = 2 * Wp + 2
    r_pad = ((r0 + o_max + 7) // 8) * 8
    xflat = jnp.pad(xflat, ((0, r_pad - r0), (0, CPAD - C)))  # zero tail / channels

    z_pad, c_pad = fused_forward_pallas(
        xflat, kparams, n_img=n_img, H=H, W=W, Hp=Hp, Wp=Wp, class_num=class_num)

    z = z_pad[:n_img, :feature_dim]
    c = c_pad[:n_img, HALF:HALF + class_num]
    return z[:B], z[B:], c[:B], c[B:]


# -----------------------------------------------------------------------------
# Pure-JAX f32 reference (unfused, unfolded) for correctness checking.
# -----------------------------------------------------------------------------
def reference_forward(x_i, x_j, raw):
    def backbone(x):
        B, C, H, W = x.shape
        xp = jnp.pad(x, ((0, 0), (0, 0), (1, 1), (1, 1)))
        out = 0.0
        for di in range(3):
            for dj in range(3):
                win = xp[:, :, di:di + H, dj:dj + W].transpose(0, 2, 3, 1)
                out = out + jnp.einsum("bhwc,cm->bhwm", win, raw["wconv"][:, di, dj, :])
        out = jnp.maximum(out + raw["bconv"], 0.0)
        pooled = out.mean(axis=(1, 2))
        return pooled @ raw["wfc"] + raw["bfc"]

    def inst(h):
        t = jnp.maximum(h @ raw["wi1"] + raw["bi1"], 0.0)
        z = t @ raw["wi2"] + raw["bi2"]
        return z / jnp.maximum(jnp.linalg.norm(z, axis=1, keepdims=True), 1e-12)

    def clus(h):
        t = jnp.maximum(h @ raw["wc1"] + raw["bc1"], 0.0)
        return jax.nn.softmax(t @ raw["wc2"] + raw["bc2"], axis=1)

    h_i, h_j = backbone(x_i), backbone(x_j)
    return inst(h_i), inst(h_j), clus(h_i), clus(h_j)


if __name__ == "__main__":
    B, C, H, W = 2, 4, 16, 16
    MID, REP_DIM, FEATURE_DIM, CLASS_NUM = 8, 64, 32, 10

    key = jax.random.PRNGKey(0)
    k_xi, k_xj, k_par = jax.random.split(key, 3)
    x_i = jax.random.normal(k_xi, (B, C, H, W), jnp.float32)
    x_j = jax.random.normal(k_xj, (B, C, H, W), jnp.float32)
    kparams, raw = make_params(k_par, C, MID, REP_DIM, FEATURE_DIM, CLASS_NUM)

    z_i, z_j, c_i, c_j = network_forward(
        x_i, x_j, kparams, feature_dim=FEATURE_DIM, class_num=CLASS_NUM)
    jax.block_until_ready((z_i, z_j, c_i, c_j))

    assert z_i.shape == (B, FEATURE_DIM) and z_j.shape == (B, FEATURE_DIM)
    assert c_i.shape == (B, CLASS_NUM) and c_j.shape == (B, CLASS_NUM)
    # structural checks: unit-norm rows / probability rows
    assert jnp.allclose(jnp.linalg.norm(z_i, axis=1), 1.0, atol=1e-3)
    assert jnp.allclose(jnp.linalg.norm(z_j, axis=1), 1.0, atol=1e-3)
    assert jnp.allclose(jnp.sum(c_i, axis=1), 1.0, atol=1e-3)
    assert jnp.allclose(jnp.sum(c_j, axis=1), 1.0, atol=1e-3)
    assert bool(jnp.all(c_i >= 0.0)) and bool(jnp.all(c_j >= 0.0))
    # value check vs the pure-JAX f32 reference (bf16 MXU operands -> loose tol)
    rz_i, rz_j, rc_i, rc_j = reference_forward(x_i, x_j, raw)
    assert jnp.allclose(z_i, rz_i, atol=3e-2) and jnp.allclose(z_j, rz_j, atol=3e-2)
    assert jnp.allclose(c_i, rc_i, atol=3e-2) and jnp.allclose(c_j, rc_j, atol=3e-2)

    print("KERNEL_OK")
</pallas_src>

<mosaic_0001>
module attributes {stable_mosaic.version = 11 : i64} {
  func.func @fused_forward_kernel(%arg0: i32, %arg1: memref<1336x8xf32, #tpu.memory_space<vmem>>, %arg2: memref<72x128xbf16, #tpu.memory_space<vmem>>, %arg3: memref<1x128xf32, #tpu.memory_space<vmem>>, %arg4: memref<128x128xbf16, #tpu.memory_space<vmem>>, %arg5: memref<1x128xf32, #tpu.memory_space<vmem>>, %arg6: memref<128x128xbf16, #tpu.memory_space<vmem>>, %arg7: memref<1x128xf32, #tpu.memory_space<vmem>>, %arg8: memref<8x128xf32, #tpu.memory_space<vmem>>, %arg9: memref<8x128xf32, #tpu.memory_space<vmem>>) attributes {dimension_semantics = [#tpu.dimension_semantics<arbitrary>], iteration_bounds = array<i64: 1>, scalar_prefetch = 0 : i64, scratch_operands = 0 : i64, tpu.core_type = #tpu.core_type<tc>, window_params = [{pipeline_mode = #tpu.pipeline_mode<synchronous>, transform_indices = @transform_0, window_bounds = array<i64: 1336, 8>}, {pipeline_mode = #tpu.pipeline_mode<synchronous>, transform_indices = @transform_1, window_bounds = array<i64: 72, 128>}, {pipeline_mode = #tpu.pipeline_mode<synchronous>, transform_indices = @transform_2, window_bounds = array<i64: 1, 128>}, {pipeline_mode = #tpu.pipeline_mode<synchronous>, transform_indices = @transform_3, window_bounds = array<i64: 128, 128>}, {pipeline_mode = #tpu.pipeline_mode<synchronous>, transform_indices = @transform_4, window_bounds = array<i64: 1, 128>}, {pipeline_mode = #tpu.pipeline_mode<synchronous>, transform_indices = @transform_5, window_bounds = array<i64: 128, 128>}, {pipeline_mode = #tpu.pipeline_mode<synchronous>, transform_indices = @transform_6, window_bounds = array<i64: 1, 128>}, {pipeline_mode = #tpu.pipeline_mode<synchronous>, transform_indices = @transform_7, window_bounds = array<i64: 8, 128>}, {pipeline_mode = #tpu.pipeline_mode<synchronous>, transform_indices = @transform_8, window_bounds = array<i64: 8, 128>}]} {
    %c0 = arith.constant 0 : index
    %c0_0 = arith.constant 0 : index
    %0 = vector.load %arg1[%c0, %c0_0] : memref<1336x8xf32, #tpu.memory_space<vmem>>, vector<1296x8xf32>
    %1 = arith.truncf %0 : vector<1296x8xf32> to vector<1296x8xbf16>
    %c0_1 = arith.constant 0 : index
    %c0_2 = arith.constant 0 : index
    %2 = vector.load %arg2[%c0_1, %c0_2] : memref<72x128xbf16, #tpu.memory_space<vmem>>, vector<8x128xbf16>
    %cst = arith.constant dense<0.000000e+00> : vector<1296x128xf32>
    %3 = tpu.matmul %1, %2, %cst {dimension_numbers = #tpu.dot_dimension_numbers<[1], [0], [0], [1], [0, 0, 1, 1], [], []>} : vector<1296x8xbf16>, vector<8x128xbf16>, vector<1296x128xf32> -> vector<1296x128xf32>
    %c1 = arith.constant 1 : index
    %c0_3 = arith.constant 0 : index
    %4 = vector.load %arg1[%c1, %c0_3] : memref<1336x8xf32, #tpu.memory_space<vmem>>, vector<1296x8xf32>
    %5 = arith.truncf %4 : vector<1296x8xf32> to vector<1296x8xbf16>
    %c8 = arith.constant 8 : index
    %c0_4 = arith.constant 0 : index
    %6 = vector.load %arg2[%c8, %c0_4] : memref<72x128xbf16, #tpu.memory_space<vmem>>, vector<8x128xbf16>
    %cst_5 = arith.constant dense<0.000000e+00> : vector<1296x128xf32>
    %7 = tpu.matmul %5, %6, %cst_5 {dimension_numbers = #tpu.dot_dimension_numbers<[1], [0], [0], [1], [0, 0, 1, 1], [], []>} : vector<1296x8xbf16>, vector<8x128xbf16>, vector<1296x128xf32> -> vector<1296x128xf32>
    %8 = arith.addf %3, %7 : vector<1296x128xf32>
    %c2 = arith.constant 2 : index
    %c0_6 = arith.constant 0 : index
    %9 = vector.load %arg1[%c2, %c0_6] : memref<1336x8xf32, #tpu.memory_space<vmem>>, vector<1296x8xf32>
    %10 = arith.truncf %9 : vector<1296x8xf32> to vector<1296x8xbf16>
    %c16 = arith.constant 16 : index
    %c0_7 = arith.constant 0 : index
    %11 = vector.load %arg2[%c16, %c0_7] : memref<72x128xbf16, #tpu.memory_space<vmem>>, vector<8x128xbf16>
    %cst_8 = arith.constant dense<0.000000e+00> : vector<1296x128xf32>
    %12 = tpu.matmul %10, %11, %cst_8 {dimension_numbers = #tpu.dot_dimension_numbers<[1], [0], [0], [1], [0, 0, 1, 1], [], []>} : vector<1296x8xbf16>, vector<8x128xbf16>, vector<1296x128xf32> -> vector<1296x128xf32>
    %13 = arith.addf %8, %12 : vector<1296x128xf32>
    %c18 = arith.constant 18 : index
    %c0_9 = arith.constant 0 : index
    %14 = vector.load %arg1[%c18, %c0_9] : memref<1336x8xf32, #tpu.memory_space<vmem>>, vector<1296x8xf32>
    %15 = arith.truncf %14 : vector<1296x8xf32> to vector<1296x8xbf16>
    %c24 = arith.constant 24 : index
    %c0_10 = arith.constant 0 : index
    %16 = vector.load %arg2[%c24, %c0_10] : memref<72x128xbf16, #tpu.memory_space<vmem>>, vector<8x128xbf16>
    %cst_11 = arith.constant dense<0.000000e+00> : vector<1296x128xf32>
    %17 = tpu.matmul %15, %16, %cst_11 {dimension_numbers = #tpu.dot_dimension_numbers<[1], [0], [0], [1], [0, 0, 1, 1], [], []>} : vector<1296x8xbf16>, vector<8x128xbf16>, vector<1296x128xf32> -> vector<1296x128xf32>
    %18 = arith.addf %13, %17 : vector<1296x128xf32>
    %c19 = arith.constant 19 : index
    %c0_12 = arith.constant 0 : index
    %19 = vector.load %arg1[%c19, %c0_12] : memref<1336x8xf32, #tpu.memory_space<vmem>>, vector<1296x8xf32>
    %20 = arith.truncf %19 : vector<1296x8xf32> to vector<1296x8xbf16>
    %c32 = arith.constant 32 : index
    %c0_13 = arith.constant 0 : index
    %21 = vector.load %arg2[%c32, %c0_13] : memref<72x128xbf16, #tpu.memory_space<vmem>>, vector<8x128xbf16>
    %cst_14 = arith.constant dense<0.000000e+00> : vector<1296x128xf32>
    %22 = tpu.matmul %20, %21, %cst_14 {dimension_numbers = #tpu.dot_dimension_numbers<[1], [0], [0], [1], [0, 0, 1, 1], [], []>} : vector<1296x8xbf16>, vector<8x128xbf16>, vector<1296x128xf32> -> vector<1296x128xf32>
    %23 = arith.addf %18, %22 : vector<1296x128xf32>
    %c20 = arith.constant 20 : index
    %c0_15 = arith.constant 0 : index
    %24 = vector.load %arg1[%c20, %c0_15] : memref<1336x8xf32, #tpu.memory_space<vmem>>, vector<1296x8xf32>
    %25 = arith.truncf %24 : vector<1296x8xf32> to vector<1296x8xbf16>
    %c40 = arith.constant 40 : index
    %c0_16 = arith.constant 0 : index
    %26 = vector.load %arg2[%c40, %c0_16] : memref<72x128xbf16, #tpu.memory_space<vmem>>, vector<8x128xbf16>
    %cst_17 = arith.constant dense<0.000000e+00> : vector<1296x128xf32>
    %27 = tpu.matmul %25, %26, %cst_17 {dimension_numbers = #tpu.dot_dimension_numbers<[1], [0], [0], [1], [0, 0, 1, 1], [], []>} : vector<1296x8xbf16>, vector<8x128xbf16>, vector<1296x128xf32> -> vector<1296x128xf32>
    %28 = arith.addf %23, %27 : vector<1296x128xf32>
    %c36 = arith.constant 36 : index
    %c0_18 = arith.constant 0 : index
    %29 = vector.load %arg1[%c36, %c0_18] : memref<1336x8xf32, #tpu.memory_space<vmem>>, vector<1296x8xf32>
    %30 = arith.truncf %29 : vector<1296x8xf32> to vector<1296x8xbf16>
    %c48 = arith.constant 48 : index
    %c0_19 = arith.constant 0 : index
    %31 = vector.load %arg2[%c48, %c0_19] : memref<72x128xbf16, #tpu.memory_space<vmem>>, vector<8x128xbf16>
    %cst_20 = arith.constant dense<0.000000e+00> : vector<1296x128xf32>
    %32 = tpu.matmul %30, %31, %cst_20 {dimension_numbers = #tpu.dot_dimension_numbers<[1], [0], [0], [1], [0, 0, 1, 1], [], []>} : vector<1296x8xbf16>, vector<8x128xbf16>, vector<1296x128xf32> -> vector<1296x128xf32>
    %33 = arith.addf %28, %32 : vector<1296x128xf32>
    %c37 = arith.constant 37 : index
    %c0_21 = arith.constant 0 : index
    %34 = vector.load %arg1[%c37, %c0_21] : memref<1336x8xf32, #tpu.memory_space<vmem>>, vector<1296x8xf32>
    %35 = arith.truncf %34 : vector<1296x8xf32> to vector<1296x8xbf16>
    %c56 = arith.constant 56 : index
    %c0_22 = arith.constant 0 : index
    %36 = vector.load %arg2[%c56, %c0_22] : memref<72x128xbf16, #tpu.memory_space<vmem>>, vector<8x128xbf16>
    %cst_23 = arith.constant dense<0.000000e+00> : vector<1296x128xf32>
    %37 = tpu.matmul %35, %36, %cst_23 {dimension_numbers = #tpu.dot_dimension_numbers<[1], [0], [0], [1], [0, 0, 1, 1], [], []>} : vector<1296x8xbf16>, vector<8x128xbf16>, vector<1296x128xf32> -> vector<1296x128xf32>
    %38 = arith.addf %33, %37 : vector<1296x128xf32>
    %c38 = arith.constant 38 : index
    %c0_24 = arith.constant 0 : index
    %39 = vector.load %arg1[%c38, %c0_24] : memref<1336x8xf32, #tpu.memory_space<vmem>>, vector<1296x8xf32>
    %40 = arith.truncf %39 : vector<1296x8xf32> to vector<1296x8xbf16>
    %c64 = arith.constant 64 : index
    %c0_25 = arith.constant 0 : index
    %41 = vector.load %arg2[%c64, %c0_25] : memref<72x128xbf16, #tpu.memory_space<vmem>>, vector<8x128xbf16>
    %cst_26 = arith.constant dense<0.000000e+00> : vector<1296x128xf32>
    %42 = tpu.matmul %40, %41, %cst_26 {dimension_numbers = #tpu.dot_dimension_numbers<[1], [0], [0], [1], [0, 0, 1, 1], [], []>} : vector<1296x8xbf16>, vector<8x128xbf16>, vector<1296x128xf32> -> vector<1296x128xf32>
    %43 = arith.addf %38, %42 : vector<1296x128xf32>
    %c0_27 = arith.constant 0 : index
    %c0_28 = arith.constant 0 : index
    %44 = vector.load %arg3[%c0_27, %c0_28] : memref<1x128xf32, #tpu.memory_space<vmem>>, vector<1x128xf32>
    %45 = vector.broadcast %44 : vector<1x128xf32> to vector<1296x128xf32>
    %46 = arith.addf %43, %45 : vector<1296x128xf32>
    %cst_29 = arith.constant 0.000000e+00 : f32
    %47 = vector.broadcast %cst_29 : f32 to vector<1296x128xf32>
    %48 = arith.maximumf %46, %47 : vector<1296x128xf32>
    %49 = tpu.iota {dimensions = array<i32: 1>} : vector<8x1296xi32>
    %50 = arith.sitofp %49 : vector<8x1296xi32> to vector<8x1296xf32>
    %51 = tpu.iota {dimensions = array<i32: 0>} : vector<8x1296xi32>
    %52 = arith.sitofp %51 : vector<8x1296xi32> to vector<8x1296xf32>
    %cst_30 = arith.constant 5.000000e-01 : f32
    %53 = vector.broadcast %cst_30 : f32 to vector<8x1296xf32>
    %54 = arith.addf %50, %53 : vector<8x1296xf32>
    %cst_31 = arith.constant 0.00308641978 : f32
    %55 = vector.broadcast %cst_31 : f32 to vector<8x1296xf32>
    %56 = arith.mulf %54, %55 : vector<8x1296xf32>
    %57 = math.floor %56 : vector<8x1296xf32>
    %cst_32 = arith.constant 3.240000e+02 : f32
    %58 = vector.broadcast %cst_32 : f32 to vector<8x1296xf32>
    %59 = arith.mulf %57, %58 : vector<8x1296xf32>
    %60 = arith.subf %50, %59 : vector<8x1296xf32>
    %cst_33 = arith.constant 5.000000e-01 : f32
    %61 = vector.broadcast %cst_33 : f32 to vector<8x1296xf32>
    %62 = arith.addf %60, %61 : vector<8x1296xf32>
    %cst_34 = arith.constant 0.055555556 : f32
    %63 = vector.broadcast %cst_34 : f32 to vector<8x1296xf32>
    %64 = arith.mulf %62, %63 : vector<8x1296xf32>
    %65 = math.floor %64 : vector<8x1296xf32>
    %cst_35 = arith.constant 1.800000e+01 : f32
    %66 = vector.broadcast %cst_35 : f32 to vector<8x1296xf32>
    %67 = arith.mulf %65, %66 : vector<8x1296xf32>
    %68 = arith.subf %60, %67 : vector<8x1296xf32>
    %69 = arith.cmpf oeq, %57, %52 : vector<8x1296xf32>
    %cst_36 = arith.constant 1.600000e+01 : f32
    %70 = vector.broadcast %cst_36 : f32 to vector<8x1296xf32>
    %71 = arith.cmpf olt, %65, %70 : vector<8x1296xf32>
    %72 = arith.andi %69, %71 : vector<8x1296xi1>
    %cst_37 = arith.constant 1.600000e+01 : f32
    %73 = vector.broadcast %cst_37 : f32 to vector<8x1296xf32>
    %74 = arith.cmpf olt, %68, %73 : vector<8x1296xf32>
    %75 = arith.andi %72, %74 : vector<8x1296xi1>
    %cst_38 = arith.constant 3.906250e-03 : f32
    %cst_39 = arith.constant 0.000000e+00 : f32
    %76 = vector.broadcast %cst_38 : f32 to vector<8x1296xf32>
    %77 = vector.broadcast %cst_39 : f32 to vector<8x1296xf32>
    %78 = arith.select %75, %76, %77 : vector<8x1296xi1>, vector<8x1296xf32>
    %79 = arith.truncf %78 : vector<8x1296xf32> to vector<8x1296xbf16>
    %80 = arith.truncf %48 : vector<1296x128xf32> to vector<1296x128xbf16>
    %cst_40 = arith.constant dense<0.000000e+00> : vector<8x128xf32>
    %81 = tpu.matmul %79, %80, %cst_40 {dimension_numbers = #tpu.dot_dimension_numbers<[1], [0], [0], [1], [0, 0, 1, 1], [], []>} : vector<8x1296xbf16>, vector<1296x128xbf16>, vector<8x128xf32> -> vector<8x128xf32>
    %82 = arith.truncf %81 : vector<8x128xf32> to vector<8x128xbf16>
    %c0_41 = arith.constant 0 : index
    %c0_42 = arith.constant 0 : index
    %83 = vector.load %arg4[%c0_41, %c0_42] : memref<128x128xbf16, #tpu.memory_space<vmem>>, vector<128x128xbf16>
    %cst_43 = arith.constant dense<0.000000e+00> : vector<8x128xf32>
    %84 = tpu.matmul %82, %83, %cst_43 {dimension_numbers = #tpu.dot_dimension_numbers<[1], [0], [0], [1], [0, 0, 1, 1], [], []>} : vector<8x128xbf16>, vector<128x128xbf16>, vector<8x128xf32> -> vector<8x128xf32>
    %c0_44 = arith.constant 0 : index
    %c0_45 = arith.constant 0 : index
    %85 = vector.load %arg5[%c0_44, %c0_45] : memref<1x128xf32, #tpu.memory_space<vmem>>, vector<1x128xf32>
    %86 = vector.broadcast %85 : vector<1x128xf32> to vector<8x128xf32>
    %87 = arith.addf %84, %86 : vector<8x128xf32>
    %cst_46 = arith.constant 0.000000e+00 : f32
    %88 = vector.broadcast %cst_46 : f32 to vector<8x128xf32>
    %89 = arith.maximumf %87, %88 : vector<8x128xf32>
    %90 = arith.truncf %89 : vector<8x128xf32> to vector<8x128xbf16>
    %c0_47 = arith.constant 0 : index
    %c0_48 = arith.constant 0 : index
    %91 = vector.load %arg6[%c0_47, %c0_48] : memref<128x128xbf16, #tpu.memory_space<vmem>>, vector<128x128xbf16>
    %cst_49 = arith.constant dense<0.000000e+00> : vector<8x128xf32>
    %92 = tpu.matmul %90, %91, %cst_49 {dimension_numbers = #tpu.dot_dimension_numbers<[1], [0], [0], [1], [0, 0, 1, 1], [], []>} : vector<8x128xbf16>, vector<128x128xbf16>, vector<8x128xf32> -> vector<8x128xf32>
    %c0_50 = arith.constant 0 : index
    %c0_51 = arith.constant 0 : index
    %93 = vector.load %arg7[%c0_50, %c0_51] : memref<1x128xf32, #tpu.memory_space<vmem>>, vector<1x128xf32>
    %94 = vector.broadcast %93 : vector<1x128xf32> to vector<8x128xf32>
    %95 = arith.addf %92, %94 : vector<8x128xf32>
    %96 = tpu.iota {dimensions = array<i32: 1>} : vector<8x128xi32>
    %c64_i32 = arith.constant 64 : i32
    %97 = vector.broadcast %c64_i32 : i32 to vector<8x128xi32>
    %98 = arith.cmpi slt, %96, %97 : vector<8x128xi32>
    %cst_52 = arith.constant 0.000000e+00 : f32
    %99 = vector.broadcast %cst_52 : f32 to vector<8x128xf32>
    %100 = arith.select %98, %95, %99 : vector<8x128xi1>, vector<8x128xf32>
    %101 = arith.mulf %100, %100 : vector<8x128xf32>
    %cst_53 = arith.constant dense<0.000000e+00> : vector<8xf32>
    %102 = vector.multi_reduction <add>, %101, %cst_53 [1] : vector<8x128xf32> to vector<8xf32>
    %103 = vector.shape_cast %102 : vector<8xf32> to vector<8x1xf32>
    %cst_54 = arith.constant 1.000000e-24 : f32
    %104 = vector.broadcast %cst_54 : f32 to vector<8x1xf32>
    %105 = arith.maximumf %103, %104 : vector<8x1xf32>
    %106 = math.rsqrt %105 : vector<8x1xf32>
    %107 = vector.broadcast %106 : vector<8x1xf32> to vector<8x128xf32>
    %108 = arith.mulf %100, %107 : vector<8x128xf32>
    %c0_55 = arith.constant 0 : index
    %c0_56 = arith.constant 0 : index
    %109 = vector.load %arg8[%c0_55, %c0_56] : memref<8x128xf32, #tpu.memory_space<vmem>>, vector<8x128xf32>
    tpu.vector_store %arg8[%c0_55, %c0_56], %108 {strides = array<i32>} : memref<8x128xf32, #tpu.memory_space<vmem>>, vector<8x128xf32>,
    %c64_i32_57 = arith.constant 64 : i32
    %110 = vector.broadcast %c64_i32_57 : i32 to vector<8x128xi32>
    %111 = arith.cmpi sge, %96, %110 : vector<8x128xi32>
    %c74_i32 = arith.constant 74 : i32
    %112 = vector.broadcast %c74_i32 : i32 to vector<8x128xi32>
    %113 = arith.cmpi slt, %96, %112 : vector<8x128xi32>
    %114 = arith.andi %111, %113 : vector<8x128xi1>
    %cst_58 = arith.constant -1.000000e+30 : f32
    %115 = vector.broadcast %cst_58 : f32 to vector<8x128xf32>
    %116 = arith.select %114, %95, %115 : vector<8x128xi1>, vector<8x128xf32>
    %cst_59 = arith.constant dense<0xFF800000> : vector<8xf32>
    %117 = vector.multi_reduction <maximumf>, %116, %cst_59 [1] : vector<8x128xf32> to vector<8xf32>
    %118 = vector.shape_cast %117 : vector<8xf32> to vector<8x1xf32>
    %119 = vector.broadcast %118 : vector<8x1xf32> to vector<8x128xf32>
    %120 = arith.subf %116, %119 : vector<8x128xf32>
    %121 = math.exp %120 : vector<8x128xf32>
    %cst_60 = arith.constant dense<0.000000e+00> : vector<8xf32>
    %122 = vector.multi_reduction <add>, %121, %cst_60 [1] : vector<8x128xf32> to vector<8xf32>
    %123 = vector.shape_cast %122 : vector<8xf32> to vector<8x1xf32>
    %124 = vector.broadcast %123 : vector<8x1xf32> to vector<8x128xf32>
    %125 = arith.divf %121, %124 : vector<8x128xf32>
    %c0_61 = arith.constant 0 : index
    %c0_62 = arith.constant 0 : index
    %126 = vector.load %arg9[%c0_61, %c0_62] : memref<8x128xf32, #tpu.memory_space<vmem>>, vector<8x128xf32>
    tpu.vector_store %arg9[%c0_61, %c0_62], %125 {strides = array<i32>} : memref<8x128xf32, #tpu.memory_space<vmem>>, vector<8x128xf32>,
    return
  }
  func.func @transform_0(%arg0: i32) -> (i32, i32) {
    %c0_i32 = arith.constant 0 : i32
    %c0_i32_0 = arith.constant 0 : i32
    %c0_i32_1 = arith.constant 0 : i32
    return %c0_i32, %c0_i32_0 : i32, i32
  }
  func.func @transform_1(%arg0: i32) -> (i32, i32) {
    %c0_i32 = arith.constant 0 : i32
    %c0_i32_0 = arith.constant 0 : i32
    %c0_i32_1 = arith.constant 0 : i32
    return %c0_i32, %c0_i32_0 : i32, i32
  }
  func.func @transform_2(%arg0: i32) -> (i32, i32) {
    %c0_i32 = arith.constant 0 : i32
    %c0_i32_0 = arith.constant 0 : i32
    %c0_i32_1 = arith.constant 0 : i32
    return %c0_i32, %c0_i32_0 : i32, i32
  }
  func.func @transform_3(%arg0: i32) -> (i32, i32) {
    %c0_i32 = arith.constant 0 : i32
    %c0_i32_0 = arith.constant 0 : i32
    %c0_i32_1 = arith.constant 0 : i32
    return %c0_i32, %c0_i32_0 : i32, i32
  }
  func.func @transform_4(%arg0: i32) -> (i32, i32) {
    %c0_i32 = arith.constant 0 : i32
    %c0_i32_0 = arith.constant 0 : i32
    %c0_i32_1 = arith.constant 0 : i32
    return %c0_i32, %c0_i32_0 : i32, i32
  }
  func.func @transform_5(%arg0: i32) -> (i32, i32) {
    %c0_i32 = arith.constant 0 : i32
    %c0_i32_0 = arith.constant 0 : i32
    %c0_i32_1 = arith.constant 0 : i32
    return %c0_i32, %c0_i32_0 : i32, i32
  }
  func.func @transform_6(%arg0: i32) -> (i32, i32) {
    %c0_i32 = arith.constant 0 : i32
    %c0_i32_0 = arith.constant 0 : i32
    %c0_i32_1 = arith.constant 0 : i32
    return %c0_i32, %c0_i32_0 : i32, i32
  }
  func.func @transform_7(%arg0: i32) -> (i32, i32) {
    %c0_i32 = arith.constant 0 : i32
    %c0_i32_0 = arith.constant 0 : i32
    %c0_i32_1 = arith.constant 0 : i32
    return %c0_i32, %c0_i32_0 : i32, i32
  }
  func.func @transform_8(%arg0: i32) -> (i32, i32) {
    %c0_i32 = arith.constant 0 : i32
    %c0_i32_0 = arith.constant 0 : i32
    %c0_i32_1 = arith.constant 0 : i32
    return %c0_i32, %c0_i32_0 : i32, i32
  }
}

</mosaic_0001>

<llo_original>
// kernel: network_forward.1
$region0: #{network_forward.1}
  #allocation0 [shape = 'u32[]', space=smem, size = 0x4, offset = 0x4, fixed_abs, tag = 'smem constant byte address 0x4 - core index']
  #allocation1 [shape = 'u32[144,128]{1,0:T(1,128)}', space=vmem, size = 0x12000, scoped, tag = 'internal scratch']
  %s0 = inlined_call_operand.vmem [shape: f32[1336,8], index: 0, kind: input, shape index: {}]
  %s1 = inlined_call_operand.vmem [shape: bf16[72,128], index: 1, kind: input, shape index: {}]
  %s2 = inlined_call_operand.vmem [shape: f32[1,128], index: 2, kind: input, shape index: {}]
  %s3 = inlined_call_operand.vmem [shape: bf16[128,128], index: 3, kind: input, shape index: {}]
  %s4 = inlined_call_operand.vmem [shape: f32[1,128], index: 4, kind: input, shape index: {}]
  %s5 = inlined_call_operand.vmem [shape: bf16[128,128], index: 5, kind: input, shape index: {}]
  %s6 = inlined_call_operand.vmem [shape: f32[1,128], index: 6, kind: input, shape index: {}]
  %s7 = inlined_call_operand.vmem [shape: f32[8,128], index: 7, kind: output, shape index: {0}]
  %s8 = inlined_call_operand.vmem [shape: f32[8,128], index: 8, kind: output, shape index: {1}]
  %9 = xla_tuple %s7, %s8
  %s10 = sld [smem:[#allocation0]]
  $region46: #{network_forward.1} parent=0
    _
  %s12 = ssub.s32 1, %s10
  %s13 = scalar_select 0, %s12, %s10
  // Predicated region
  $region2: #{network_forward.1} parent=0 // pred_check
    _
  $region3: #{network_forward.1} parent=0 // pred_check_branch
    %15 = sbr.rel (0) target = $region5
  $region4: #{network_forward.1} parent=0 // pred_region
    _
  $region5: #{network_forward.1} parent=0 // pred_fallthru
    _
  // Predicated region
  $region6: #{network_forward.1} parent=0 // pred_check
    _
  $region7: #{network_forward.1} parent=0 // pred_check_branch
    %17 = sbr.rel (0) target = $region9
  $region8: #{network_forward.1} parent=0 // pred_region
    _
  $region9: #{network_forward.1} parent=0 // pred_fallthru
    _
  // Predicated region
  $region10: #{network_forward.1} parent=0 // pred_check
    _
  $region11: #{network_forward.1} parent=0 // pred_check_branch
    %19 = sbr.rel (0) target = $region13
  $region12: #{network_forward.1} parent=0 // pred_region
    _
  $region13: #{network_forward.1} parent=0 // pred_fallthru
    _
  // Predicated region
  $region14: #{network_forward.1} parent=0 // pred_check
    _
  $region15: #{network_forward.1} parent=0 // pred_check_branch
    %21 = sbr.rel (0) target = $region17
  $region16: #{network_forward.1} parent=0 // pred_region
    _
  $region17: #{network_forward.1} parent=0 // pred_fallthru
    _
  // Predicated region
  $region18: #{network_forward.1} parent=0 // pred_check
    _
  $region19: #{network_forward.1} parent=0 // pred_check_branch
    %23 = sbr.rel (0) target = $region21
  $region20: #{network_forward.1} parent=0 // pred_region
    _
  $region21: #{network_forward.1} parent=0 // pred_fallthru
    _
  // Predicated region
  $region22: #{network_forward.1} parent=0 // pred_check
    _
  $region23: #{network_forward.1} parent=0 // pred_check_branch
    %25 = sbr.rel (0) target = $region25
  $region24: #{network_forward.1} parent=0 // pred_region
    _
  $region25: #{network_forward.1} parent=0 // pred_fallthru
    _
  // Predicated region
  $region26: #{network_forward.1} parent=0 // pred_check
    _
  $region27: #{network_forward.1} parent=0 // pred_check_branch
    %27 = sbr.rel (0) target = $region29
  $region28: #{network_forward.1} parent=0 // pred_region
    _
  $region29: #{network_forward.1} parent=0 // pred_fallthru
    _
  %v29 = vld [vmem:[%s0] sm:$0xff]
  %v30 = vld [vmem:[%s0 + $0x8] sm:$0xff]
  %v31 = vld [vmem:[%s0 + $0x10] sm:$0xff]
  %v32 = vld [vmem:[%s0 + $0x18] sm:$0xff]
  %v33 = vld [vmem:[%s0 + $0x20] sm:$0xff]
  %v34 = vld [vmem:[%s0 + $0x28] sm:$0xff]
  %v35 = vld [vmem:[%s0 + $0x30] sm:$0xff]
  %v36 = vld [vmem:[%s0 + $0x38] sm:$0xff]
  %v37 = vld [vmem:[%s0 + $0x40] sm:$0xff]
  %v38 = vld [vmem:[%s0 + $0x48] sm:$0xff]
  %v39 = vld [vmem:[%s0 + $0x50] sm:$0xff]
  %v40 = vld [vmem:[%s0 + $0x58] sm:$0xff]
  %v41 = vld [vmem:[%s0 + $0x60] sm:$0xff]
  %v42 = vld [vmem:[%s0 + $0x68] sm:$0xff]
  %v43 = vld [vmem:[%s0 + $0x70] sm:$0xff]
  %v44 = vld [vmem:[%s0 + $0x78] sm:$0xff]
  %v45 = vld [vmem:[%s0 + $0x80] sm:$0xff]
  %v46 = vld [vmem:[%s0 + $0x88] sm:$0xff]
  %v47 = vld [vmem:[%s0 + $0x90] sm:$0xff]
  %v48 = vld [vmem:[%s0 + $0x98] sm:$0xff]
  %v49 = vld [vmem:[%s0 + $0xa0] sm:$0xff]
  %v50 = vld [vmem:[%s0 + $0xa8] sm:$0xff]
  %v51 = vld [vmem:[%s0 + $0xb0] sm:$0xff]
  %v52 = vld [vmem:[%s0 + $0xb8] sm:$0xff]
  %v53 = vld [vmem:[%s0 + $0xc0] sm:$0xff]
  %v54 = vld [vmem:[%s0 + $0xc8] sm:$0xff]
  %v55 = vld [vmem:[%s0 + $0xd0] sm:$0xff]
  %v56 = vld [vmem:[%s0 + $0xd8] sm:$0xff]
  %v57 = vld [vmem:[%s0 + $0xe0] sm:$0xff]
  %v58 = vld [vmem:[%s0 + $0xe8] sm:$0xff]
  %v59 = vld [vmem:[%s0 + $0xf0] sm:$0xff]
  %v60 = vld [vmem:[%s0 + $0xf8] sm:$0xff]
  %v61 = vld [vmem:[%s0 + $0x100] sm:$0xff]
  %v62 = vld [vmem:[%s0 + $0x108] sm:$0xff]
  %v63 = vld [vmem:[%s0 + $0x110] sm:$0xff]
  %v64 = vld [vmem:[%s0 + $0x118] sm:$0xff]
  %v65 = vld [vmem:[%s0 + $0x120] sm:$0xff]
  %v66 = vld [vmem:[%s0 + $0x128] sm:$0xff]
  %v67 = vld [vmem:[%s0 + $0x130] sm:$0xff]
  %v68 = vld [vmem:[%s0 + $0x138] sm:$0xff]
  %v69 = vld [vmem:[%s0 + $0x140] sm:$0xff]
  %v70 = vld [vmem:[%s0 + $0x148] sm:$0xff]
  %v71 = vld [vmem:[%s0 + $0x150] sm:$0xff]
  %v72 = vld [vmem:[%s0 + $0x158] sm:$0xff]
  %v73 = vld [vmem:[%s0 + $0x160] sm:$0xff]
  %v74 = vld [vmem:[%s0 + $0x168] sm:$0xff]
  %v75 = vld [vmem:[%s0 + $0x170] sm:$0xff]
  %v76 = vld [vmem:[%s0 + $0x178] sm:$0xff]
  %v77 = vld [vmem:[%s0 + $0x180] sm:$0xff]
  %v78 = vld [vmem:[%s0 + $0x188] sm:$0xff]
  %v79 = vld [vmem:[%s0 + $0x190] sm:$0xff]
  %v80 = vld [vmem:[%s0 + $0x198] sm:$0xff]
  %v81 = vld [vmem:[%s0 + $0x1a0] sm:$0xff]
  %v82 = vld [vmem:[%s0 + $0x1a8] sm:$0xff]
  %v83 = vld [vmem:[%s0 + $0x1b0] sm:$0xff]
  %v84 = vld [vmem:[%s0 + $0x1b8] sm:$0xff]
  %v85 = vld [vmem:[%s0 + $0x1c0] sm:$0xff]
  %v86 = vld [vmem:[%s0 + $0x1c8] sm:$0xff]
  %v87 = vld [vmem:[%s0 + $0x1d0] sm:$0xff]
  %v88 = vld [vmem:[%s0 + $0x1d8] sm:$0xff]
  %v89 = vld [vmem:[%s0 + $0x1e0] sm:$0xff]
  %v90 = vld [vmem:[%s0 + $0x1e8] sm:$0xff]
  %v91 = vld [vmem:[%s0 + $0x1f0] sm:$0xff]
  %v92 = vld [vmem:[%s0 + $0x1f8] sm:$0xff]
  %v93 = vld [vmem:[%s0 + $0x200] sm:$0xff]
  %v94 = vld [vmem:[%s0 + $0x208] sm:$0xff]
  %v95 = vld [vmem:[%s0 + $0x210] sm:$0xff]
  %v96 = vld [vmem:[%s0 + $0x218] sm:$0xff]
  %v97 = vld [vmem:[%s0 + $0x220] sm:$0xff]
  %v98 = vld [vmem:[%s0 + $0x228] sm:$0xff]
  %v99 = vld [vmem:[%s0 + $0x230] sm:$0xff]
  %v100 = vld [vmem:[%s0 + $0x238] sm:$0xff]
  %v101 = vld [vmem:[%s0 + $0x240] sm:$0xff]
  %v102 = vld [vmem:[%s0 + $0x248] sm:$0xff]
  %v103 = vld [vmem:[%s0 + $0x250] sm:$0xff]
  %v104 = vld [vmem:[%s0 + $0x258] sm:$0xff]
  %v105 = vld [vmem:[%s0 + $0x260] sm:$0xff]
  %v106 = vld [vmem:[%s0 + $0x268] sm:$0xff]
  %v107 = vld [vmem:[%s0 + $0x270] sm:$0xff]
  %v108 = vld [vmem:[%s0 + $0x278] sm:$0xff]
  %v109 = vld [vmem:[%s0 + $0x280] sm:$0xff]
  %v110 = vld [vmem:[%s0 + $0x288] sm:$0xff]
  %v111 = vld [vmem:[%s0 + $0x290] sm:$0xff]
  %v112 = vld [vmem:[%s0 + $0x298] sm:$0xff]
  %v113 = vld [vmem:[%s0 + $0x2a0] sm:$0xff]
  %v114 = vld [vmem:[%s0 + $0x2a8] sm:$0xff]
  %v115 = vld [vmem:[%s0 + $0x2b0] sm:$0xff]
  %v116 = vld [vmem:[%s0 + $0x2b8] sm:$0xff]
  %v117 = vld [vmem:[%s0 + $0x2c0] sm:$0xff]
  %v118 = vld [vmem:[%s0 + $0x2c8] sm:$0xff]
  %v119 = vld [vmem:[%s0 + $0x2d0] sm:$0xff]
  %v120 = vld [vmem:[%s0 + $0x2d8] sm:$0xff]
  %v121 = vld [vmem:[%s0 + $0x2e0] sm:$0xff]
  %v122 = vld [vmem:[%s0 + $0x2e8] sm:$0xff]
  %v123 = vld [vmem:[%s0 + $0x2f0] sm:$0xff]
  %v124 = vld [vmem:[%s0 + $0x2f8] sm:$0xff]
  %v125 = vld [vmem:[%s0 + $0x300] sm:$0xff]
  %v126 = vld [vmem:[%s0 + $0x308] sm:$0xff]
  %v127 = vld [vmem:[%s0 + $0x310] sm:$0xff]
  %v128 = vld [vmem:[%s0 + $0x318] sm:$0xff]
  %v129 = vld [vmem:[%s0 + $0x320] sm:$0xff]
  %v130 = vld [vmem:[%s0 + $0x328] sm:$0xff]
  %v131 = vld [vmem:[%s0 + $0x330] sm:$0xff]
  %v132 = vld [vmem:[%s0 + $0x338] sm:$0xff]
  %v133 = vld [vmem:[%s0 + $0x340] sm:$0xff]
  %v134 = vld [vmem:[%s0 + $0x348] sm:$0xff]
  %v135 = vld [vmem:[%s0 + $0x350] sm:$0xff]
  %v136 = vld [vmem:[%s0 + $0x358] sm:$0xff]
  %v137 = vld [vmem:[%s0 + $0x360] sm:$0xff]
  %v138 = vld [vmem:[%s0 + $0x368] sm:$0xff]
  %v139 = vld [vmem:[%s0 + $0x370] sm:$0xff]
  %v140 = vld [vmem:[%s0 + $0x378] sm:$0xff]
  %v141 = vld [vmem:[%s0 + $0x380] sm:$0xff]
  %v142 = vld [vmem:[%s0 + $0x388] sm:$0xff]
  %v143 = vld [vmem:[%s0 + $0x390] sm:$0xff]
  %v144 = vld [vmem:[%s0 + $0x398] sm:$0xff]
  %v145 = vld [vmem:[%s0 + $0x3a0] sm:$0xff]
  %v146 = vld [vmem:[%s0 + $0x3a8] sm:$0xff]
  %v147 = vld [vmem:[%s0 + $0x3b0] sm:$0xff]
  %v148 = vld [vmem:[%s0 + $0x3b8] sm:$0xff]
  %v149 = vld [vmem:[%s0 + $0x3c0] sm:$0xff]
  %v150 = vld [vmem:[%s0 + $0x3c8] sm:$0xff]
  %v151 = vld [vmem:[%s0 + $0x3d0] sm:$0xff]
  %v152 = vld [vmem:[%s0 + $0x3d8] sm:$0xff]
  %v153 = vld [vmem:[%s0 + $0x3e0] sm:$0xff]
  %v154 = vld [vmem:[%s0 + $0x3e8] sm:$0xff]
  %v155 = vld [vmem:[%s0 + $0x3f0] sm:$0xff]
  %v156 = vld [vmem:[%s0 + $0x3f8] sm:$0xff]
  %v157 = vld [vmem:[%s0 + $0x400] sm:$0xff]
  %v158 = vld [vmem:[%s0 + $0x408] sm:$0xff]
  %v159 = vld [vmem:[%s0 + $0x410] sm:$0xff]
  %v160 = vld [vmem:[%s0 + $0x418] sm:$0xff]
  %v161 = vld [vmem:[%s0 + $0x420] sm:$0xff]
  %v162 = vld [vmem:[%s0 + $0x428] sm:$0xff]
  %v163 = vld [vmem:[%s0 + $0x430] sm:$0xff]
  %v164 = vld [vmem:[%s0 + $0x438] sm:$0xff]
  %v165 = vld [vmem:[%s0 + $0x440] sm:$0xff]
  %v166 = vld [vmem:[%s0 + $0x448] sm:$0xff]
  %v167 = vld [vmem:[%s0 + $0x450] sm:$0xff]
  %v168 = vld [vmem:[%s0 + $0x458] sm:$0xff]
  %v169 = vld [vmem:[%s0 + $0x460] sm:$0xff]
  %v170 = vld [vmem:[%s0 + $0x468] sm:$0xff]
  %v171 = vld [vmem:[%s0 + $0x470] sm:$0xff]
  %v172 = vld [vmem:[%s0 + $0x478] sm:$0xff]
  %v173 = vld [vmem:[%s0 + $0x480] sm:$0xff]
  %v174 = vld [vmem:[%s0 + $0x488] sm:$0xff]
  %v175 = vld [vmem:[%s0 + $0x490] sm:$0xff]
  %v176 = vld [vmem:[%s0 + $0x498] sm:$0xff]
  %v177 = vld [vmem:[%s0 + $0x4a0] sm:$0xff]
  %v178 = vld [vmem:[%s0 + $0x4a8] sm:$0xff]
  %v179 = vld [vmem:[%s0 + $0x4b0] sm:$0xff]
  %v180 = vld [vmem:[%s0 + $0x4b8] sm:$0xff]
  %v181 = vld [vmem:[%s0 + $0x4c0] sm:$0xff]
  %v182 = vld [vmem:[%s0 + $0x4c8] sm:$0xff]
  %v183 = vld [vmem:[%s0 + $0x4d0] sm:$0xff]
  %v184 = vld [vmem:[%s0 + $0x4d8] sm:$0xff]
  %v185 = vld [vmem:[%s0 + $0x4e0] sm:$0xff]
  %v186 = vld [vmem:[%s0 + $0x4e8] sm:$0xff]
  %v187 = vld [vmem:[%s0 + $0x4f0] sm:$0xff]
  %v188 = vld [vmem:[%s0 + $0x4f8] sm:$0xff]
  %v189 = vld [vmem:[%s0 + $0x500] sm:$0xff]
  %v190 = vld [vmem:[%s0 + $0x508] sm:$0xff]
  %v191 = vpack.c.bf16 %v30, %v29
  %v192 = vpack.c.bf16 %v32, %v31
  %v193 = vpack.c.bf16 %v34, %v33
  %v194 = vpack.c.bf16 %v36, %v35
  %v195 = vpack.c.bf16 %v38, %v37
  %v196 = vpack.c.bf16 %v40, %v39
  %v197 = vpack.c.bf16 %v42, %v41
  %v198 = vpack.c.bf16 %v44, %v43
  %v199 = vpack.c.bf16 %v46, %v45
  %v200 = vpack.c.bf16 %v48, %v47
  %v201 = vpack.c.bf16 %v50, %v49
  %v202 = vpack.c.bf16 %v52, %v51
  %v203 = vpack.c.bf16 %v54, %v53
  %v204 = vpack.c.bf16 %v56, %v55
  %v205 = vpack.c.bf16 %v58, %v57
  %v206 = vpack.c.bf16 %v60, %v59
  %v207 = vpack.c.bf16 %v62, %v61
  %v208 = vpack.c.bf16 %v64, %v63
  %v209 = vpack.c.bf16 %v66, %v65
  %v210 = vpack.c.bf16 %v68, %v67
  %v211 = vpack.c.bf16 %v70, %v69
  %v212 = vpack.c.bf16 %v72, %v71
  %v213 = vpack.c.bf16 %v74, %v73
  %v214 = vpack.c.bf16 %v76, %v75
  %v215 = vpack.c.bf16 %v78, %v77
  %v216 = vpack.c.bf16 %v80, %v79
  %v217 = vpack.c.bf16 %v82, %v81
  %v218 = vpack.c.bf16 %v84, %v83
  %v219 = vpack.c.bf16 %v86, %v85
  %v220 = vpack.c.bf16 %v88, %v87
  %v221 = vpack.c.bf16 %v90, %v89
  %v222 = vpack.c.bf16 %v92, %v91
  %v223 = vpack.c.bf16 %v94, %v93
  %v224 = vpack.c.bf16 %v96, %v95
  %v225 = vpack.c.bf16 %v98, %v97
  %v226 = vpack.c.bf16 %v100, %v99
  %v227 = vpack.c.bf16 %v102, %v101
  %v228 = vpack.c.bf16 %v104, %v103
  %v229 = vpack.c.bf16 %v106, %v105
  %v230 = vpack.c.bf16 %v108, %v107
  %v231 = vpack.c.bf16 %v110, %v109
  %v232 = vpack.c.bf16 %v112, %v111
  %v233 = vpack.c.bf16 %v114, %v113
  %v234 = vpack.c.bf16 %v116, %v115
  %v235 = vpack.c.bf16 %v118, %v117
  %v236 = vpack.c.bf16 %v120, %v119
  %v237 = vpack.c.bf16 %v122, %v121
  %v238 = vpack.c.bf16 %v124, %v123
  %v239 = vpack.c.bf16 %v126, %v125
  %v240 = vpack.c.bf16 %v128, %v127
  %v241 = vpack.c.bf16 %v130, %v129
  %v242 = vpack.c.bf16 %v132, %v131
  %v243 = vpack.c.bf16 %v134, %v133
  %v244 = vpack.c.bf16 %v136, %v135
  %v245 = vpack.c.bf16 %v138, %v137
  %v246 = vpack.c.bf16 %v140, %v139
  %v247 = vpack.c.bf16 %v142, %v141
  %v248 = vpack.c.bf16 %v144, %v143
  %v249 = vpack.c.bf16 %v146, %v145
  %v250 = vpack.c.bf16 %v148, %v147
  %v251 = vpack.c.bf16 %v150, %v149
  %v252 = vpack.c.bf16 %v152, %v151
  %v253 = vpack.c.bf16 %v154, %v153
  %v254 = vpack.c.bf16 %v156, %v155
  %v255 = vpack.c.bf16 %v158, %v157
  %v256 = vpack.c.bf16 %v160, %v159
  %v257 = vpack.c.bf16 %v162, %v161
  %v258 = vpack.c.bf16 %v164, %v163
  %v259 = vpack.c.bf16 %v166, %v165
  %v260 = vpack.c.bf16 %v168, %v167
  %v261 = vpack.c.bf16 %v170, %v169
  %v262 = vpack.c.bf16 %v172, %v171
  %v263 = vpack.c.bf16 %v174, %v173
  %v264 = vpack.c.bf16 %v176, %v175
  %v265 = vpack.c.bf16 %v178, %v177
  %v266 = vpack.c.bf16 %v180, %v179
  %v267 = vpack.c.bf16 %v182, %v181
  %v268 = vpack.c.bf16 %v184, %v183
  %v269 = vpack.c.bf16 %v186, %v185
  %v270 = vpack.c.bf16 %v188, %v187
  %v271 = vpack.c.bf16 %v190, %v189
  %v272 = vld [vmem:[%s1] sm:$0xf]
  %v273 = vld [vmem:[%s0 + $0x1] sm:$0xff]
  %v274 = vld [vmem:[%s0 + $0x9] sm:$0xff]
  %v275 = vld [vmem:[%s0 + $0x11] sm:$0xff]
  %v276 = vld [vmem:[%s0 + $0x19] sm:$0xff]
  %v277 = vld [vmem:[%s0 + $0x21] sm:$0xff]
  %v278 = vld [vmem:[%s0 + $0x29] sm:$0xff]
  %v279 = vld [vmem:[%s0 + $0x31] sm:$0xff]
  %v280 = vld [vmem:[%s0 + $0x39] sm:$0xff]
  %v281 = vld [vmem:[%s0 + $0x41] sm:$0xff]
  %v282 = vld [vmem:[%s0 + $0x49] sm:$0xff]
  %v283 = vld [vmem:[%s0 + $0x51] sm:$0xff]
  %v284 = vld [vmem:[%s0 + $0x59] sm:$0xff]
  %v285 = vld [vmem:[%s0 + $0x61] sm:$0xff]
  %v286 = vld [vmem:[%s0 + $0x69] sm:$0xff]
  %v287 = vld [vmem:[%s0 + $0x71] sm:$0xff]
  %v288 = vld [vmem:[%s0 + $0x79] sm:$0xff]
  %v289 = vld [vmem:[%s0 + $0x81] sm:$0xff]
  %v290 = vld [vmem:[%s0 + $0x89] sm:$0xff]
  %v291 = vld [vmem:[%s0 + $0x91] sm:$0xff]
  %v292 = vld [vmem:[%s0 + $0x99] sm:$0xff]
  %v293 = vld [vmem:[%s0 + $0xa1] sm:$0xff]
  %v294 = vld [vmem:[%s0 + $0xa9] sm:$0xff]
  %v295 = vld [vmem:[%s0 + $0xb1] sm:$0xff]
  %v296 = vld [vmem:[%s0 + $0xb9] sm:$0xff]
  %v297 = vld [vmem:[%s0 + $0xc1] sm:$0xff]
  %v298 = vld [vmem:[%s0 + $0xc9] sm:$0xff]
  %v299 = vld [vmem:[%s0 + $0xd1] sm:$0xff]
  %v300 = vld [vmem:[%s0 + $0xd9] sm:$0xff]
  %v301 = vld [vmem:[%s0 + $0xe1] sm:$0xff]
  %v302 = vld [vmem:[%s0 + $0xe9] sm:$0xff]
  %v303 = vld [vmem:[%s0 + $0xf1] sm:$0xff]
  %v304 = vld [vmem:[%s0 + $0xf9] sm:$0xff]
  %v305 = vld [vmem:[%s0 + $0x101] sm:$0xff]
  %v306 = vld [vmem:[%s0 + $0x109] sm:$0xff]
  %v307 = vld [vmem:[%s0 + $0x111] sm:$0xff]
  %v308 = vld [vmem:[%s0 + $0x119] sm:$0xff]
  %v309 = vld [vmem:[%s0 + $0x121] sm:$0xff]
  %v310 = vld [vmem:[%s0 + $0x129] sm:$0xff]
  %v311 = vld [vmem:[%s0 + $0x131] sm:$0xff]
  %v312 = vld [vmem:[%s0 + $0x139] sm:$0xff]
  %v313 = vld [vmem:[%s0 + $0x141] sm:$0xff]
  %v314 = vld [vmem:[%s0 + $0x149] sm:$0xff]
  %v315 = vld [vmem:[%s0 + $0x151] sm:$0xff]
  %v316 = vld [vmem:[%s0 + $0x159] sm:$0xff]
  %v317 = vld [vmem:[%s0 + $0x161] sm:$0xff]
  %v318 = vld [vmem:[%s0 + $0x169] sm:$0xff]
  %v319 = vld [vmem:[%s0 + $0x171] sm:$0xff]
  %v320 = vld [vmem:[%s0 + $0x179] sm:$0xff]
  %v321 = vld [vmem:[%s0 + $0x181] sm:$0xff]
  %v322 = vld [vmem:[%s0 + $0x189] sm:$0xff]
  %v323 = vld [vmem:[%s0 + $0x191] sm:$0xff]
  %v324 = vld [vmem:[%s0 + $0x199] sm:$0xff]
  %v325 = vld [vmem:[%s0 + $0x1a1] sm:$0xff]
  %v326 = vld [vmem:[%s0 + $0x1a9] sm:$0xff]
  %v327 = vld [vmem:[%s0 + $0x1b1] sm:$0xff]
  %v328 = vld [vmem:[%s0 + $0x1b9] sm:$0xff]
  %v329 = vld [vmem:[%s0 + $0x1c1] sm:$0xff]
  %v330 = vld [vmem:[%s0 + $0x1c9] sm:$0xff]
  %v331 = vld [vmem:[%s0 + $0x1d1] sm:$0xff]
  %v332 = vld [vmem:[%s0 + $0x1d9] sm:$0xff]
  %v333 = vld [vmem:[%s0 + $0x1e1] sm:$0xff]
  %v334 = vld [vmem:[%s0 + $0x1e9] sm:$0xff]
  %v335 = vld [vmem:[%s0 + $0x1f1] sm:$0xff]
  %v336 = vld [vmem:[%s0 + $0x1f9] sm:$0xff]
  %v337 = vld [vmem:[%s0 + $0x201] sm:$0xff]
  %v338 = vld [vmem:[%s0 + $0x209] sm:$0xff]
  %v339 = vld [vmem:[%s0 + $0x211] sm:$0xff]
  %v340 = vld [vmem:[%s0 + $0x219] sm:$0xff]
  %v341 = vld [vmem:[%s0 + $0x221] sm:$0xff]
  %v342 = vld [vmem:[%s0 + $0x229] sm:$0xff]
  %v343 = vld [vmem:[%s0 + $0x231] sm:$0xff]
  %v344 = vld [vmem:[%s0 + $0x239] sm:$0xff]
  %v345 = vld [vmem:[%s0 + $0x241] sm:$0xff]
  %v346 = vld [vmem:[%s0 + $0x249] sm:$0xff]
  %v347 = vld [vmem:[%s0 + $0x251] sm:$0xff]
  %v348 = vld [vmem:[%s0 + $0x259] sm:$0xff]
  %v349 = vld [vmem:[%s0 + $0x261] sm:$0xff]
  %v350 = vld [vmem:[%s0 + $0x269] sm:$0xff]
  %v351 = vld [vmem:[%s0 + $0x271] sm:$0xff]
  %v352 = vld [vmem:[%s0 + $0x279] sm:$0xff]
  %v353 = vld [vmem:[%s0 + $0x281] sm:$0xff]
  %v354 = vld [vmem:[%s0 + $0x289] sm:$0xff]
  %v355 = vld [vmem:[%s0 + $0x291] sm:$0xff]
  %v356 = vld [vmem:[%s0 + $0x299] sm:$0xff]
  %v357 = vld [vmem:[%s0 + $0x2a1] sm:$0xff]
  %v358 = vld [vmem:[%s0 + $0x2a9] sm:$0xff]
  %v359 = vld [vmem:[%s0 + $0x2b1] sm:$0xff]
  %v360 = vld [vmem:[%s0 + $0x2b9] sm:$0xff]
  %v361 = vld [vmem:[%s0 + $0x2c1] sm:$0xff]
  %v362 = vld [vmem:[%s0 + $0x2c9] sm:$0xff]
  %v363 = vld [vmem:[%s0 + $0x2d1] sm:$0xff]
  %v364 = vld [vmem:[%s0 + $0x2d9] sm:$0xff]
  %v365 = vld [vmem:[%s0 + $0x2e1] sm:$0xff]
  %v366 = vld [vmem:[%s0 + $0x2e9] sm:$0xff]
  %v367 = vld [vmem:[%s0 + $0x2f1] sm:$0xff]
  %v368 = vld [vmem:[%s0 + $0x2f9] sm:$0xff]
  %v369 = vld [vmem:[%s0 + $0x301] sm:$0xff]
  %v370 = vld [vmem:[%s0 + $0x309] sm:$0xff]
  %v371 = vld [vmem:[%s0 + $0x311] sm:$0xff]
  %v372 = vld [vmem:[%s0 + $0x319] sm:$0xff]
  %v373 = vld [vmem:[%s0 + $0x321] sm:$0xff]
  %v374 = vld [vmem:[%s0 + $0x329] sm:$0xff]
  %v375 = vld [vmem:[%s0 + $0x331] sm:$0xff]
  %v376 = vld [vmem:[%s0 + $0x339] sm:$0xff]
  %v377 = vld [vmem:[%s0 + $0x341] sm:$0xff]
  %v378 = vld [vmem:[%s0 + $0x349] sm:$0xff]
  %v379 = vld [vmem:[%s0 + $0x351] sm:$0xff]
  %v380 = vld [vmem:[%s0 + $0x359] sm:$0xff]
  %v381 = vld [vmem:[%s0 + $0x361] sm:$0xff]
  %v382 = vld [vmem:[%s0 + $0x369] sm:$0xff]
  %v383 = vld [vmem:[%s0 + $0x371] sm:$0xff]
  %v384 = vld [vmem:[%s0 + $0x379] sm:$0xff]
  %v385 = vld [vmem:[%s0 + $0x381] sm:$0xff]
  %v386 = vld [vmem:[%s0 + $0x389] sm:$0xff]
  %v387 = vld [vmem:[%s0 + $0x391] sm:$0xff]
  %v388 = vld [vmem:[%s0 + $0x399] sm:$0xff]
  %v389 = vld [vmem:[%s0 + $0x3a1] sm:$0xff]
  %v390 = vld [vmem:[%s0 + $0x3a9] sm:$0xff]
  %v391 = vld [vmem:[%s0 + $0x3b1] sm:$0xff]
  %v392 = vld [vmem:[%s0 + $0x3b9] sm:$0xff]
  %v393 = vld [vmem:[%s0 + $0x3c1] sm:$0xff]
  %v394 = vld [vmem:[%s0 + $0x3c9] sm:$0xff]
  %v395 = vld [vmem:[%s0 + $0x3d1] sm:$0xff]
  %v396 = vld [vmem:[%s0 + $0x3d9] sm:$0xff]
  %v397 = vld [vmem:[%s0 + $0x3e1] sm:$0xff]
  %v398 = vld [vmem:[%s0 + $0x3e9] sm:$0xff]
  %v399 = vld [vmem:[%s0 + $0x3f1] sm:$0xff]
  %v400 = vld [vmem:[%s0 + $0x3f9] sm:$0xff]
  %v401 = vld [vmem:[%s0 + $0x401] sm:$0xff]
  %v402 = vld [vmem:[%s0 + $0x409] sm:$0xff]
  %v403 = vld [vmem:[%s0 + $0x411] sm:$0xff]
  %v404 = vld [vmem:[%s0 + $0x419] sm:$0xff]
  %v405 = vld [vmem:[%s0 + $0x421] sm:$0xff]
  %v406 = vld [vmem:[%s0 + $0x429] sm:$0xff]
  %v407 = vld [vmem:[%s0 + $0x431] sm:$0xff]
  %v408 = vld [vmem:[%s0 + $0x439] sm:$0xff]
  %v409 = vld [vmem:[%s0 + $0x441] sm:$0xff]
  %v410 = vld [vmem:[%s0 + $0x449] sm:$0xff]
  %v411 = vld [vmem:[%s0 + $0x451] sm:$0xff]
  %v412 = vld [vmem:[%s0 + $0x459] sm:$0xff]
  %v413 = vld [vmem:[%s0 + $0x461] sm:$0xff]
  %v414 = vld [vmem:[%s0 + $0x469] sm:$0xff]
  %v415 = vld [vmem:[%s0 + $0x471] sm:$0xff]
  %v416 = vld [vmem:[%s0 + $0x479] sm:$0xff]
  %v417 = vld [vmem:[%s0 + $0x481] sm:$0xff]
  %v418 = vld [vmem:[%s0 + $0x489] sm:$0xff]
  %v419 = vld [vmem:[%s0 + $0x491] sm:$0xff]
  %v420 = vld [vmem:[%s0 + $0x499] sm:$0xff]
  %v421 = vld [vmem:[%s0 + $0x4a1] sm:$0xff]
  %v422 = vld [vmem:[%s0 + $0x4a9] sm:$0xff]
  %v423 = vld [vmem:[%s0 + $0x4b1] sm:$0xff]
  %v424 = vld [vmem:[%s0 + $0x4b9] sm:$0xff]
  %v425 = vld [vmem:[%s0 + $0x4c1] sm:$0xff]
  %v426 = vld [vmem:[%s0 + $0x4c9] sm:$0xff]
  %v427 = vld [vmem:[%s0 + $0x4d1] sm:$0xff]
  %v428 = vld [vmem:[%s0 + $0x4d9] sm:$0xff]
  %v429 = vld [vmem:[%s0 + $0x4e1] sm:$0xff]
  %v430 = vld [vmem:[%s0 + $0x4e9] sm:$0xff]
  %v431 = vld [vmem:[%s0 + $0x4f1] sm:$0xff]
  %v432 = vld [vmem:[%s0 + $0x4f9] sm:$0xff]
  %v433 = vld [vmem:[%s0 + $0x501] sm:$0xff]
  %v434 = vld [vmem:[%s0 + $0x509] sm:$0xff]
  %v435 = vpack.c.bf16 %v274, %v273
  %v436 = vpack.c.bf16 %v276, %v275
  %v437 = vpack.c.bf16 %v278, %v277
  %v438 = vpack.c.bf16 %v280, %v279
  %v439 = vpack.c.bf16 %v282, %v281
  %v440 = vpack.c.bf16 %v284, %v283
  %v441 = vpack.c.bf16 %v286, %v285
  %v442 = vpack.c.bf16 %v288, %v287
  %v443 = vpack.c.bf16 %v290, %v289
  %v444 = vpack.c.bf16 %v292, %v291
  %v445 = vpack.c.bf16 %v294, %v293
  %v446 = vpack.c.bf16 %v296, %v295
  %v447 = vpack.c.bf16 %v298, %v297
  %v448 = vpack.c.bf16 %v300, %v299
  %v449 = vpack.c.bf16 %v302, %v301
  %v450 = vpack.c.bf16 %v304, %v303
  %v451 = vpack.c.bf16 %v306, %v305
  %v452 = vpack.c.bf16 %v308, %v307
  %v453 = vpack.c.bf16 %v310, %v309
  %v454 = vpack.c.bf16 %v312, %v311
  %v455 = vpack.c.bf16 %v314, %v313
  %v456 = vpack.c.bf16 %v316, %v315
  %v457 = vpack.c.bf16 %v318, %v317
  %v458 = vpack.c.bf16 %v320, %v319
  %v459 = vpack.c.bf16 %v322, %v321
  %v460 = vpack.c.bf16 %v324, %v323
  %v461 = vpack.c.bf16 %v326, %v325
  %v462 = vpack.c.bf16 %v328, %v327
  %v463 = vpack.c.bf16 %v330, %v329
  %v464 = vpack.c.bf16 %v332, %v331
  %v465 = vpack.c.bf16 %v334, %v333
  %v466 = vpack.c.bf16 %v336, %v335
  %v467 = vpack.c.bf16 %v338, %v337
  %v468 = vpack.c.bf16 %v340, %v339
  %v469 = vpack.c.bf16 %v342, %v341
  %v470 = vpack.c.bf16 %v344, %v343
  %v471 = vpack.c.bf16 %v346, %v345
  %v472 = vpack.c.bf16 %v348, %v347
  %v473 = vpack.c.bf16 %v350, %v349
  %v474 = vpack.c.bf16 %v352, %v351
  %v475 = vpack.c.bf16 %v354, %v353
  %v476 = vpack.c.bf16 %v356, %v355
  %v477 = vpack.c.bf16 %v358, %v357
  %v478 = vpack.c.bf16 %v360, %v359
  %v479 = vpack.c.bf16 %v362, %v361
  %v480 = vpack.c.bf16 %v364, %v363
  %v481 = vpack.c.bf16 %v366, %v365
  %v482 = vpack.c.bf16 %v368, %v367
  %v483 = vpack.c.bf16 %v370, %v369
  %v484 = vpack.c.bf16 %v372, %v371
  %v485 = vpack.c.bf16 %v374, %v373
  %v486 = vpack.c.bf16 %v376, %v375
  %v487 = vpack.c.bf16 %v378, %v377
  %v488 = vpack.c.bf16 %v380, %v379
  %v489 = vpack.c.bf16 %v382, %v381
  %v490 = vpack.c.bf16 %v384, %v383
  %v491 = vpack.c.bf16 %v386, %v385
  %v492 = vpack.c.bf16 %v388, %v387
  %v493 = vpack.c.bf16 %v390, %v389
  %v494 = vpack.c.bf16 %v392, %v391
  %v495 = vpack.c.bf16 %v394, %v393
  %v496 = vpack.c.bf16 %v396, %v395
  %v497 = vpack.c.bf16 %v398, %v397
  %v498 = vpack.c.bf16 %v400, %v399
  %v499 = vpack.c.bf16 %v402, %v401
  %v500 = vpack.c.bf16 %v404, %v403
  %v501 = vpack.c.bf16 %v406, %v405
  %v502 = vpack.c.bf16 %v408, %v407
  %v503 = vpack.c.bf16 %v410, %v409
  %v504 = vpack.c.bf16 %v412, %v411
  %v505 = vpack.c.bf16 %v414, %v413
  %v506 = vpack.c.bf16 %v416, %v415
  %v507 = vpack.c.bf16 %v418, %v417
  %v508 = vpack.c.bf16 %v420, %v419
  %v509 = vpack.c.bf16 %v422, %v421
  %v510 = vpack.c.bf16 %v424, %v423
  %v511 = vpack.c.bf16 %v426, %v425
  %v512 = vpack.c.bf16 %v428, %v427
  %v513 = vpack.c.bf16 %v430, %v429
  %v514 = vpack.c.bf16 %v432, %v431
  %v515 = vpack.c.bf16 %v434, %v433
  %v516 = vld [vmem:[%s1 + $0x4] sm:$0xf]
  %vm517 = vcmask 64512
  %v519 = vsel %vm517, %v435, 0
  %v522 = vsel %vm517, %v436, 0
  %v525 = vsel %vm517, %v437, 0
  %v528 = vsel %vm517, %v438, 0
  %v531 = vsel %vm517, %v439, 0
  %v534 = vsel %vm517, %v440, 0
  %v537 = vsel %vm517, %v441, 0
  %v540 = vsel %vm517, %v442, 0
  %v543 = vsel %vm517, %v443, 0
  %v546 = vsel %vm517, %v444, 0
  %v549 = vsel %vm517, %v445, 0
  %v552 = vsel %vm517, %v446, 0
  %v555 = vsel %vm517, %v447, 0
  %v558 = vsel %vm517, %v448, 0
  %v561 = vsel %vm517, %v449, 0
  %v564 = vsel %vm517, %v450, 0
  %v567 = vsel %vm517, %v451, 0
  %v570 = vsel %vm517, %v452, 0
  %v573 = vsel %vm517, %v453, 0
  %v576 = vsel %vm517, %v454, 0
  %v579 = vsel %vm517, %v455, 0
  %v582 = vsel %vm517, %v456, 0
  %v585 = vsel %vm517, %v457, 0
  %v588 = vsel %vm517, %v458, 0
  %v591 = vsel %vm517, %v459, 0
  %v594 = vsel %vm517, %v460, 0
  %v597 = vsel %vm517, %v461, 0
  %v600 = vsel %vm517, %v462, 0
  %v603 = vsel %vm517, %v463, 0
  %v606 = vsel %vm517, %v464, 0
  %v609 = vsel %vm517, %v465, 0
  %v612 = vsel %vm517, %v466, 0
  %v615 = vsel %vm517, %v467, 0
  %v618 = vsel %vm517, %v468, 0
  %v621 = vsel %vm517, %v469, 0
  %v624 = vsel %vm517, %v470, 0
  %v627 = vsel %vm517, %v471, 0
  %v630 = vsel %vm517, %v472, 0
  %v633 = vsel %vm517, %v473, 0
  %v636 = vsel %vm517, %v474, 0
  %v639 = vsel %vm517, %v475, 0
  %v642 = vsel %vm517, %v476, 0
  %v645 = vsel %vm517, %v477, 0
  %v648 = vsel %vm517, %v478, 0
  %v651 = vsel %vm517, %v479, 0
  %v654 = vsel %vm517, %v480, 0
  %v657 = vsel %vm517, %v481, 0
  %v660 = vsel %vm517, %v482, 0
  %v663 = vsel %vm517, %v483, 0
  %v666 = vsel %vm517, %v484, 0
  %v669 = vsel %vm517, %v485, 0
  %v672 = vsel %vm517, %v486, 0
  %v675 = vsel %vm517, %v487, 0
  %v678 = vsel %vm517, %v488, 0
  %v681 = vsel %vm517, %v489, 0
  %v684 = vsel %vm517, %v490, 0
  %v687 = vsel %vm517, %v491, 0
  %v690 = vsel %vm517, %v492, 0
  %v693 = vsel %vm517, %v493, 0
  %v696 = vsel %vm517, %v494, 0
  %v699 = vsel %vm517, %v495, 0
  %v702 = vsel %vm517, %v496, 0
  %v705 = vsel %vm517, %v497, 0
  %v708 = vsel %vm517, %v498, 0
  %v711 = vsel %vm517, %v499, 0
  %v714 = vsel %vm517, %v500, 0
  %v717 = vsel %vm517, %v501, 0
  %v720 = vsel %vm517, %v502, 0
  %v723 = vsel %vm517, %v503, 0
  %v726 = vsel %vm517, %v504, 0
  %v729 = vsel %vm517, %v505, 0
  %v732 = vsel %vm517, %v506, 0
  %v735 = vsel %vm517, %v507, 0
  %v738 = vsel %vm517, %v508, 0
  %v741 = vsel %vm517, %v509, 0
  %v744 = vsel %vm517, %v510, 0
  %v747 = vsel %vm517, %v511, 0
  %v750 = vsel %vm517, %v512, 0
  %v753 = vsel %vm517, %v513, 0
  %v756 = vsel %vm517, %v514, 0
  %v759 = vsel %vm517, %v515, 0
  %vm761 = vcmask 1043456
  %v763 = vsel %vm761, %v516, 0
  %765 = vmatprep.subr.bf16.mxu0 0
  %766 = vmatpush1.bf16.msra.mxu0 %v763
  %767 = vmatprep.subr.bf16.mxu0 0
  %768 = vmatpush1.bf16.msra.mxu0 0
  %769 = vmatprep.subr.bf16.mxu0 0
  %770 = vmatpush1.bf16.msra.mxu0 0
  %771 = vmatprep.subr.bf16.mxu0 0
  %772 = vmatpush1.bf16.msra.mxu0 0
  %773 = vmatprep.subr.bf16.mxu0 0
  %774 = vmatpush1.bf16.msra.mxu0 0
  %775 = vmatprep.subr.bf16.mxu0 0
  %776 = vmatpush1.bf16.msra.mxu0 0
  %777 = vmatprep.subr.bf16.mxu0 0
  %778 = vmatpush1.bf16.msra.mxu0 0
  %779 = vmatprep.subr.bf16.mxu0 0
  %780 = vmatpush1.bf16.msra.mxu0 0
  %781 = vmatprep.subr.bf16.mxu0 0
  %782 = vmatpush1.bf16.msra.mxu0 0
  %783 = vmatprep.subr.bf16.mxu0 0
  %784 = vmatpush1.bf16.msra.mxu0 0
  %785 = vmatprep.subr.bf16.mxu0 0
  %786 = vmatpush1.bf16.msra.mxu0 0
  %787 = vmatprep.subr.bf16.mxu0 0
  %788 = vmatpush1.bf16.msra.mxu0 0
  %789 = vmatprep.subr.bf16.mxu0 0
  %790 = vmatpush1.bf16.msra.mxu0 0
  %791 = vmatprep.subr.bf16.mxu0 0
  %792 = vmatpush1.bf16.msra.mxu0 0
  %793 = vmatprep.subr.bf16.mxu0 0
  %794 = vmatpush1.bf16.msra.mxu0 0
  %795 = vmatprep.subr.bf16.mxu0 0
  %796 = vmatpush1.bf16.msra.mxu0 0
  %797 = vmatprep.mubr.bf16.mxu0 0
  %798 = vmatmul.mubr.bf16.gmra.mrb[0].mxu0 %v519
  %v799 = vpop.f32.mrb[0].mxu0
  %v800 = vadd.f32 0.0, %v799
  %v801 = vpop.f32.mrb[0].mxu0
  %v802 = vpop.f32.mrb[0].mxu0
  %v803 = vadd.f32 0.0, %v802
  %v804 = vpop.f32.mrb[0].mxu0
  %805 = vmatprep.mubr.bf16.mxu0 0
  %806 = vmatmul.mubr.bf16.gmra.mrb[0].mxu0 %v522
  %v807 = vpop.f32.mrb[0].mxu0
  %v808 = vadd.f32 0.0, %v807
  %v809 = vpop.f32.mrb[0].mxu0
  %v810 = vpop.f32.mrb[0].mxu0
  %v811 = vadd.f32 0.0, %v810
  %v812 = vpop.f32.mrb[0].mxu0
  %813 = vmatprep.mubr.bf16.mxu0 0
  %814 = vmatmul.mubr.bf16.gmra.mrb[0].mxu0 %v525
  %v815 = vpop.f32.mrb[0].mxu0
  %v816 = vadd.f32 0.0, %v815
  %v817 = vpop.f32.mrb[0].mxu0
  %v818 = vpop.f32.mrb[0].mxu0
  %v819 = vadd.f32 0.0, %v818
  %v820 = vpop.f32.mrb[0].mxu0
  %821 = vmatprep.mubr.bf16.mxu0 0
  %822 = vmatmul.mubr.bf16.gmra.mrb[0].mxu0 %v528
  %v823 = vpop.f32.mrb[0].mxu0
  %v824 = vadd.f32 0.0, %v823
  %v825 = vpop.f32.mrb[0].mxu0
  %v826 = vpop.f32.mrb[0].mxu0
  %v827 = vadd.f32 0.0, %v826
  %v828 = vpop.f32.mrb[0].mxu0
  %829 = vmatprep.mubr.bf16.mxu0 0
  %830 = vmatmul.mubr.bf16.gmra.mrb[0].mxu0 %v531
  %v831 = vpop.f32.mrb[0].mxu0
  %v832 = vadd.f32 0.0, %v831
  %v833 = vpop.f32.mrb[0].mxu0
  %v834 = vpop.f32.mrb[0].mxu0
  %v835 = vadd.f32 0.0, %v834
  %v836 = vpop.f32.mrb[0].mxu0
  %837 = vmatprep.mubr.bf16.mxu0 0
  %838 = vmatmul.mubr.bf16.gmra.mrb[0].mxu0 %v534
  %v839 = vpop.f32.mrb[0].mxu0
  %v840 = vadd.f32 0.0, %v839
  %v841 = vpop.f32.mrb[0].mxu0
  %v842 = vpop.f32.mrb[0].mxu0
  %v843 = vadd.f32 0.0, %v842
  %v844 = vpop.f32.mrb[0].mxu0
  %845 = vmatprep.mubr.bf16.mxu0 0
  %846 = vmatmul.mubr.bf16.gmra.mrb[0].mxu0 %v537
  %v847 = vpop.f32.mrb[0].mxu0
  %v848 = vadd.f32 0.0, %v847
  %v849 = vpop.f32.mrb[0].mxu0
  %v850 = vpop.f32.mrb[0].mxu0
  %v851 = vadd.f32 0.0, %v850
  %v852 = vpop.f32.mrb[0].mxu0
  %853 = vmatprep.mubr.bf16.mxu0 0
  %854 = vmatmul.mubr.bf16.gmra.mrb[0].mxu0 %v540
  %v855 = vpop.f32.mrb[0].mxu0
  %v856 = vadd.f32 0.0, %v855
  %v857 = vpop.f32.mrb[0].mxu0
  %v858 = vpop.f32.mrb[0].mxu0
  %v859 = vadd.f32 0.0, %v858
  %v860 = vpop.f32.mrb[0].mxu0
  %861 = vmatprep.mubr.bf16.mxu0 0
  %862 = vmatmul.mubr.bf16.gmra.mrb[0].mxu0 %v543
  %v863 = vpop.f32.mrb[0].mxu0
  %v864 = vadd.f32 0.0, %v863
  %v865 = vpop.f32.mrb[0].mxu0
  %v866 = vpop.f32.mrb[0].mxu0
  %v867 = vadd.f32 0.0, %v866
  %v868 = vpop.f32.mrb[0].mxu0
  %869 = vmatprep.mubr.bf16.mxu0 0
  %870 = vmatmul.mubr.bf16.gmra.mrb[0].mxu0 %v546
  %v871 = vpop.f32.mrb[0].mxu0
  %v872 = vadd.f32 0.0, %v871
  %v873 = vpop.f32.mrb[0].mxu0
  %v874 = vpop.f32.mrb[0].mxu0
  %v875 = vadd.f32 0.0, %v874
  %v876 = vpop.f32.mrb[0].mxu0
  %877 = vmatprep.mubr.bf16.mxu0 0
  %878 = vmatmul.mubr.bf16.gmra.mrb[0].mxu0 %v549
  %v879 = vpop.f32.mrb[0].mxu0
  %v880 = vadd.f32 0.0, %v879
  %v881 = vpop.f32.mrb[0].mxu0
  %v882 = vpop.f32.mrb[0].mxu0
  %v883 = vadd.f32 0.0, %v882
  %v884 = vpop.f32.mrb[0].mxu0
  %885 = vmatprep.mubr.bf16.mxu0 0
  %886 = vmatmul.mubr.bf16.gmra.mrb[0].mxu0 %v552
  %v887 = vpop.f32.mrb[0].mxu0
  %v888 = vadd.f32 0.0, %v887
  %v889 = vpop.f32.mrb[0].mxu0
  %v890 = vpop.f32.mrb[0].mxu0
  %v891 = vadd.f32 0.0, %v890
  %v892 = vpop.f32.mrb[0].mxu0
  %893 = vmatprep.mubr.bf16.mxu0 0
  %894 = vmatmul.mubr.bf16.gmra.mrb[0].mxu0 %v555
  %v895 = vpop.f32.mrb[0].mxu0
  %v896 = vadd.f32 0.0, %v895
  %v897 = vpop.f32.mrb[0].mxu0
  %v898 = vpop.f32.mrb[0].mxu0
  %v899 = vadd.f32 0.0, %v898
  %v900 = vpop.f32.mrb[0].mxu0
  %901 = vmatprep.mubr.bf16.mxu0 0
  %902 = vmatmul.mubr.bf16.gmra.mrb[0].mxu0 %v558
  %v903 = vpop.f32.mrb[0].mxu0
  %v904 = vadd.f32 0.0, %v903
  %v905 = vpop.f32.mrb[0].mxu0
  %v906 = vpop.f32.mrb[0].mxu0
  %v907 = vadd.f32 0.0, %v906
  %v908 = vpop.f32.mrb[0].mxu0
  %909 = vmatprep.mubr.bf16.mxu0 0
  %910 = vmatmul.mubr.bf16.gmra.mrb[0].mxu0 %v561
  %v911 = vpop.f32.mrb[0].mxu0
  %v912 = vadd.f32 0.0, %v911
  %v913 = vpop.f32.mrb[0].mxu0
  %v914 = vpop.f32.mrb[0].mxu0
  %v915 = vadd.f32 0.0, %v914
  %v916 = vpop.f32.mrb[0].mxu0
  %917 = vmatprep.mubr.bf16.mxu0 0
  %918 = vmatmul.mubr.bf16.gmra.mrb[0].mxu0 %v564
  %v919 = vpop.f32.mrb[0].mxu0
  %v920 = vadd.f32 0.0, %v919
  %v921 = vpop.f32.mrb[0].mxu0
  %v922 = vpop.f32.mrb[0].mxu0
  %v923 = vadd.f32 0.0, %v922
  %v924 = vpop.f32.mrb[0].mxu0
  %925 = vmatprep.mubr.bf16.mxu0 0
  %926 = vmatmul.mubr.bf16.gmra.mrb[0].mxu0 %v567
  %v927 = vpop.f32.mrb[0].mxu0
  %v928 = vadd.f32 0.0, %v927
  %v929 = vpop.f32.mrb[0].mxu0
  %v930 = vpop.f32.mrb[0].mxu0
  %v931 = vadd.f32 0.0, %v930
  %v932 = vpop.f32.mrb[0].mxu0
  %933 = vmatprep.mubr.bf16.mxu0 0
  %934 = vmatmul.mubr.bf16.gmra.mrb[0].mxu0 %v570
  %v935 = vpop.f32.mrb[0].mxu0
  %v936 = vadd.f32 0.0, %v935
  %v937 = vpop.f32.mrb[0].mxu0
  %v938 = vpop.f32.mrb[0].mxu0
  %v939 = vadd.f32 0.0, %v938
  %v940 = vpop.f32.mrb[0].mxu0
  %941 = vmatprep.mubr.bf16.mxu0 0
  %942 = vmatmul.mubr.bf16.gmra.mrb[0].mxu0 %v573
  %v943 = vpop.f32.mrb[0].mxu0
  %v944 = vadd.f32 0.0, %v943
  %v945 = vpop.f32.mrb[0].mxu0
  %v946 = vpop.f32.mrb[0].mxu0
  %v947 = vadd.f32 0.0, %v946
  %v948 = vpop.f32.mrb[0].mxu0
  %949 = vmatprep.mubr.bf16.mxu0 0
  %950 = vmatmul.mubr.bf16.gmra.mrb[0].mxu0 %v576
  %v951 = vpop.f32.mrb[0].mxu0
  %v952 = vadd.f32 0.0, %v951
  %v953 = vpop.f32.mrb[0].mxu0
  %v954 = vpop.f32.mrb[0].mxu0
  %v955 = vadd.f32 0.0, %v954
  %v956 = vpop.f32.mrb[0].mxu0
  %957 = vmatprep.mubr.bf16.mxu0 0
  %958 = vmatmul.mubr.bf16.gmra.mrb[0].mxu0 %v579
  %v959 = vpop.f32.mrb[0].mxu0
  %v960 = vadd.f32 0.0, %v959
  %v961 = vpop.f32.mrb[0].mxu0
  %v962 = vpop.f32.mrb[0].mxu0
  %v963 = vadd.f32 0.0, %v962
  %v964 = vpop.f32.mrb[0].mxu0
  %965 = vmatprep.mubr.bf16.mxu0 0
  %966 = vmatmul.mubr.bf16.gmra.mrb[0].mxu0 %v582
  %v967 = vpop.f32.mrb[0].mxu0
  %v968 = vadd.f32 0.0, %v967
  %v969 = vpop.f32.mrb[0].mxu0
  %v970 = vpop.f32.mrb[0].mxu0
  %v971 = vadd.f32 0.0, %v970
  %v972 = vpop.f32.mrb[0].mxu0
  %973 = vmatprep.mubr.bf16.mxu0 0
  %974 = vmatmul.mubr.bf16.gmra.mrb[0].mxu0 %v585
  %v975 = vpop.f32.mrb[0].mxu0
  %v976 = vadd.f32 0.0, %v975
  %v977 = vpop.f32.mrb[0].mxu0
  %v978 = vpop.f32.mrb[0].mxu0
  %v979 = vadd.f32 0.0, %v978
  %v980 = vpop.f32.mrb[0].mxu0
  %981 = vmatprep.mubr.bf16.mxu0 0
  %982 = vmatmul.mubr.bf16.gmra.mrb[0].mxu0 %v588
  %v983 = vpop.f32.mrb[0].mxu0
  %v984 = vadd.f32 0.0, %v983
  %v985 = vpop.f32.mrb[0].mxu0
  %v986 = vpop.f32.mrb[0].mxu0
  %v987 = vadd.f32 0.0, %v986
  %v988 = vpop.f32.mrb[0].mxu0
  %989 = vmatprep.mubr.bf16.mxu0 0
  %990 = vmatmul.mubr.bf16.gmra.mrb[0].mxu0 %v591
  %v991 = vpop.f32.mrb[0].mxu0
  %v992 = vadd.f32 0.0, %v991
  %v993 = vpop.f32.mrb[0].mxu0
  %v994 = vpop.f32.mrb[0].mxu0
  %v995 = vadd.f32 0.0, %v994
  %v996 = vpop.f32.mrb[0].mxu0
  %997 = vmatprep.mubr.bf16.mxu0 0
  %998 = vmatmul.mubr.bf16.gmra.mrb[0].mxu0 %v594
  %v999 = vpop.f32.mrb[0].mxu0
  %v1000 = vadd.f32 0.0, %v999
  %v1001 = vpop.f32.mrb[0].mxu0
  %v1002 = vpop.f32.mrb[0].mxu0
  %v1003 = vadd.f32 0.0, %v1002
  %v1004 = vpop.f32.mrb[0].mxu0
  %1005 = vmatprep.mubr.bf16.mxu0 0
  %1006 = vmatmul.mubr.bf16.gmra.mrb[0].mxu0 %v597
  %v1007 = vpop.f32.mrb[0].mxu0
  %v1008 = vadd.f32 0.0, %v1007
  %v1009 = vpop.f32.mrb[0].mxu0
  %v1010 = vpop.f32.mrb[0].mxu0
  %v1011 = vadd.f32 0.0, %v1010
  %v1012 = vpop.f32.mrb[0].mxu0
  %1013 = vmatprep.mubr.bf16.mxu0 0
  %1014 = vmatmul.mubr.bf16.gmra.mrb[0].mxu0 %v600
  %v1015 = vpop.f32.mrb[0].mxu0
  %v1016 = vadd.f32 0.0, %v1015
  %v1017 = vpop.f32.mrb[0].mxu0
  %v1018 = vpop.f32.mrb[0].mxu0
  %v1019 = vadd.f32 0.0, %v1018
  %v1020 = vpop.f32.mrb[0].mxu0
  %1021 = vmatprep.mubr.bf16.mxu0 0
  %1022 = vmatmul.mubr.bf16.gmra.mrb[0].mxu0 %v603
  %v1023 = vpop.f32.mrb[0].mxu0
  %v1024 = vadd.f32 0.0, %v1023
  %v1025 = vpop.f32.mrb[0].mxu0
  %v1026 = vpop.f32.mrb[0].mxu0
  %v1027 = vadd.f32 0.0, %v1026
  %v1028 = vpop.f32.mrb[0].mxu0
  %1029 = vmatprep.mubr.bf16.mxu0 0
  %1030 = vmatmul.mubr.bf16.gmra.mrb[0].mxu0 %v606
  %v1031 = vpop.f32.mrb[0].mxu0
  %v1032 = vadd.f32 0.0, %v1031
  %v1033 = vpop.f32.mrb[0].mxu0
  %v1034 = vpop.f32.mrb[0].mxu0
  %v1035 = vadd.f32 0.0, %v1034
  %v1036 = vpop.f32.mrb[0].mxu0
  %1037 = vmatprep.mubr.bf16.mxu0 0
  %1038 = vmatmul.mubr.bf16.gmra.mrb[0].mxu0 %v609
  %v1039 = vpop.f32.mrb[0].mxu0
  %v1040 = vadd.f32 0.0, %v1039
  %v1041 = vpop.f32.mrb[0].mxu0
  %v1042 = vpop.f32.mrb[0].mxu0
  %v1043 = vadd.f32 0.0, %v1042
  %v1044 = vpop.f32.mrb[0].mxu0
  %1045 = vmatprep.mubr.bf16.mxu0 0
  %1046 = vmatmul.mubr.bf16.gmra.mrb[0].mxu0 %v612
  %v1047 = vpop.f32.mrb[0].mxu0
  %v1048 = vadd.f32 0.0, %v1047
  %v1049 = vpop.f32.mrb[0].mxu0
  %v1050 = vpop.f32.mrb[0].mxu0
  %v1051 = vadd.f32 0.0, %v1050
  %v1052 = vpop.f32.mrb[0].mxu0
  %1053 = vmatprep.mubr.bf16.mxu0 0
  %1054 = vmatmul.mubr.bf16.gmra.mrb[0].mxu0 %v615
  %v1055 = vpop.f32.mrb[0].mxu0
  %v1056 = vadd.f32 0.0, %v1055
  %v1057 = vpop.f32.mrb[0].mxu0
  %v1058 = vpop.f32.mrb[0].mxu0
  %v1059 = vadd.f32 0.0, %v1058
  %v1060 = vpop.f32.mrb[0].mxu0
  %1061 = vmatprep.mubr.bf16.mxu0 0
  %1062 = vmatmul.mubr.bf16.gmra.mrb[0].mxu0 %v618
  %v1063 = vpop.f32.mrb[0].mxu0
  %v1064 = vadd.f32 0.0, %v1063
  %v1065 = vpop.f32.mrb[0].mxu0
  %v1066 = vpop.f32.mrb[0].mxu0
  %v1067 = vadd.f32 0.0, %v1066
  %v1068 = vpop.f32.mrb[0].mxu0
  %1069 = vmatprep.mubr.bf16.mxu0 0
  %1070 = vmatmul.mubr.bf16.gmra.mrb[0].mxu0 %v621
  %v1071 = vpop.f32.mrb[0].mxu0
  %v1072 = vadd.f32 0.0, %v1071
  %v1073 = vpop.f32.mrb[0].mxu0
  %v1074 = vpop.f32.mrb[0].mxu0
  %v1075 = vadd.f32 0.0, %v1074
  %v1076 = vpop.f32.mrb[0].mxu0
  %1077 = vmatprep.mubr.bf16.mxu0 0
  %1078 = vmatmul.mubr.bf16.gmra.mrb[0].mxu0 %v624
  %v1079 = vpop.f32.mrb[0].mxu0
  %v1080 = vadd.f32 0.0, %v1079
  %v1081 = vpop.f32.mrb[0].mxu0
  %v1082 = vpop.f32.mrb[0].mxu0
  %v1083 = vadd.f32 0.0, %v1082
  %v1084 = vpop.f32.mrb[0].mxu0
  %1085 = vmatprep.mubr.bf16.mxu0 0
  %1086 = vmatmul.mubr.bf16.gmra.mrb[0].mxu0 %v627
  %v1087 = vpop.f32.mrb[0].mxu0
  %v1088 = vadd.f32 0.0, %v1087
  %v1089 = vpop.f32.mrb[0].mxu0
  %v1090 = vpop.f32.mrb[0].mxu0
  %v1091 = vadd.f32 0.0, %v1090
  %v1092 = vpop.f32.mrb[0].mxu0
  %1093 = vmatprep.mubr.bf16.mxu0 0
  %1094 = vmatmul.mubr.bf16.gmra.mrb[0].mxu0 %v630
  %v1095 = vpop.f32.mrb[0].mxu0
  %v1096 = vadd.f32 0.0, %v1095
  %v1097 = vpop.f32.mrb[0].mxu0
  %v1098 = vpop.f32.mrb[0].mxu0
  %v1099 = vadd.f32 0.0, %v1098
  %v1100 = vpop.f32.mrb[0].mxu0
  %1101 = vmatprep.mubr.bf16.mxu0 0
  %1102 = vmatmul.mubr.bf16.gmra.mrb[0].mxu0 %v633
  %v1103 = vpop.f32.mrb[0].mxu0
  %v1104 = vadd.f32 0.0, %v1103
  %v1105 = vpop.f32.mrb[0].mxu0
  %v1106 = vpop.f32.mrb[0].mxu0
  %v1107 = vadd.f32 0.0, %v1106
  %v1108 = vpop.f32.mrb[0].mxu0
  %1109 = vmatprep.mubr.bf16.mxu0 0
  %1110 = vmatmul.mubr.bf16.gmra.mrb[0].mxu0 %v636
  %v1111 = vpop.f32.mrb[0].mxu0
  %v1112 = vadd.f32 0.0, %v1111
  %v1113 = vpop.f32.mrb[0].mxu0
  %v1114 = vpop.f32.mrb[0].mxu0
  %v1115 = vadd.f32 0.0, %v1114
  %v1116 = vpop.f32.mrb[0].mxu0
  %1117 = vmatprep.mubr.bf16.mxu0 0
  %1118 = vmatmul.mubr.bf16.gmra.mrb[0].mxu0 %v639
  %v1119 = vpop.f32.mrb[0].mxu0
  %v1120 = vadd.f32 0.0, %v1119
  %v1121 = vpop.f32.mrb[0].mxu0
  %v1122 = vpop.f32.mrb[0].mxu0
  %v1123 = vadd.f32 0.0, %v1122
  %v1124 = vpop.f32.mrb[0].mxu0
  %1125 = vmatprep.mubr.bf16.mxu0 0
  %1126 = vmatmul.mubr.bf16.gmra.mrb[0].mxu0 %v642
  %v1127 = vpop.f32.mrb[0].mxu0
  %v1128 = vadd.f32 0.0, %v1127
  %v1129 = vpop.f32.mrb[0].mxu0
  %v1130 = vpop.f32.mrb[0].mxu0
  %v1131 = vadd.f32 0.0, %v1130
  %v1132 = vpop.f32.mrb[0].mxu0
  %1133 = vmatprep.mubr.bf16.mxu0 0
  %1134 = vmatmul.mubr.bf16.gmra.mrb[0].mxu0 %v645
  %v1135 = vpop.f32.mrb[0].mxu0
  %v1136 = vadd.f32 0.0, %v1135
  %v1137 = vpop.f32.mrb[0].mxu0
  %v1138 = vpop.f32.mrb[0].mxu0
  %v1139 = vadd.f32 0.0, %v1138
  %v1140 = vpop.f32.mrb[0].mxu0
  %1141 = vmatprep.mubr.bf16.mxu0 0
  %1142 = vmatmul.mubr.bf16.gmra.mrb[0].mxu0 %v648
  %v1143 = vpop.f32.mrb[0].mxu0
  %v1144 = vadd.f32 0.0, %v1143
  %v1145 = vpop.f32.mrb[0].mxu0
  %v1146 = vpop.f32.mrb[0].mxu0
  %v1147 = vadd.f32 0.0, %v1146
  %v1148 = vpop.f32.mrb[0].mxu0
  %1149 = vmatprep.mubr.bf16.mxu0 0
  %1150 = vmatmul.mubr.bf16.gmra.mrb[0].mxu0 %v651
  %v1151 = vpop.f32.mrb[0].mxu0
  %v1152 = vadd.f32 0.0, %v1151
  %v1153 = vpop.f32.mrb[0].mxu0
  %v1154 = vpop.f32.mrb[0].mxu0
  %v1155 = vadd.f32 0.0, %v1154
  %v1156 = vpop.f32.mrb[0].mxu0
  %1157 = vmatprep.mubr.bf16.mxu0 0
  %1158 = vmatmul.mubr.bf16.gmra.mrb[0].mxu0 %v654
  %v1159 = vpop.f32.mrb[0].mxu0
  %v1160 = vadd.f32 0.0, %v1159
  %v1161 = vpop.f32.mrb[0].mxu0
  %v1162 = vpop.f32.mrb[0].mxu0
  %v1163 = vadd.f32 0.0, %v1162
  %v1164 = vpop.f32.mrb[0].mxu0
  %1165 = vmatprep.mubr.bf16.mxu0 0
  %1166 = vmatmul.mubr.bf16.gmra.mrb[0].mxu0 %v657
  %v1167 = vpop.f32.mrb[0].mxu0
  %v1168 = vadd.f32 0.0, %v1167
  %v1169 = vpop.f32.mrb[0].mxu0
  %v1170 = vpop.f32.mrb[0].mxu0
  %v1171 = vadd.f32 0.0, %v1170
  %v1172 = vpop.f32.mrb[0].mxu0
  %1173 = vmatprep.mubr.bf16.mxu0 0
  %1174 = vmatmul.mubr.bf16.gmra.mrb[0].mxu0 %v660
  %v1175 = vpop.f32.mrb[0].mxu0
  %v1176 = vadd.f32 0.0, %v1175
  %v1177 = vpop.f32.mrb[0].mxu0
  %v1178 = vpop.f32.mrb[0].mxu0
  %v1179 = vadd.f32 0.0, %v1178
  %v1180 = vpop.f32.mrb[0].mxu0
  %1181 = vmatprep.mubr.bf16.mxu0 0
  %1182 = vmatmul.mubr.bf16.gmra.mrb[0].mxu0 %v663
  %v1183 = vpop.f32.mrb[0].mxu0
  %v1184 = vadd.f32 0.0, %v1183
  %v1185 = vpop.f32.mrb[0].mxu0
  %v1186 = vpop.f32.mrb[0].mxu0
  %v1187 = vadd.f32 0.0, %v1186
  %v1188 = vpop.f32.mrb[0].mxu0
  %1189 = vmatprep.mubr.bf16.mxu0 0
  %1190 = vmatmul.mubr.bf16.gmra.mrb[0].mxu0 %v666
  %v1191 = vpop.f32.mrb[0].mxu0
  %v1192 = vadd.f32 0.0, %v1191
  %v1193 = vpop.f32.mrb[0].mxu0
  %v1194 = vpop.f32.mrb[0].mxu0
  %v1195 = vadd.f32 0.0, %v1194
  %v1196 = vpop.f32.mrb[0].mxu0
  %1197 = vmatprep.mubr.bf16.mxu0 0
  %1198 = vmatmul.mubr.bf16.gmra.mrb[0].mxu0 %v669
  %v1199 = vpop.f32.mrb[0].mxu0
  %v1200 = vadd.f32 0.0, %v1199
  %v1201 = vpop.f32.mrb[0].mxu0
  %v1202 = vpop.f32.mrb[0].mxu0
  %v1203 = vadd.f32 0.0, %v1202
  %v1204 = vpop.f32.mrb[0].mxu0
  %1205 = vmatprep.mubr.bf16.mxu0 0
  %1206 = vmatmul.mubr.bf16.gmra.mrb[0].mxu0 %v672
  %v1207 = vpop.f32.mrb[0].mxu0
  %v1208 = vadd.f32 0.0, %v1207
  %v1209 = vpop.f32.mrb[0].mxu0
  %v1210 = vpop.f32.mrb[0].mxu0
  %v1211 = vadd.f32 0.0, %v1210
  %v1212 = vpop.f32.mrb[0].mxu0
  %1213 = vmatprep.mubr.bf16.mxu0 0
  %1214 = vmatmul.mubr.bf16.gmra.mrb[0].mxu0 %v675
  %v1215 = vpop.f32.mrb[0].mxu0
  %v1216 = vadd.f32 0.0, %v1215
  %v1217 = vpop.f32.mrb[0].mxu0
  %v1218 = vpop.f32.mrb[0].mxu0
  %v1219 = vadd.f32 0.0, %v1218
  %v1220 = vpop.f32.mrb[0].mxu0
  %1221 = vmatprep.mubr.bf16.mxu0 0
  %1222 = vmatmul.mubr.bf16.gmra.mrb[0].mxu0 %v678
  %v1223 = vpop.f32.mrb[0].mxu0
  %v1224 = vadd.f32 0.0, %v1223
  %v1225 = vpop.f32.mrb[0].mxu0
  %v1226 = vpop.f32.mrb[0].mxu0
  %v1227 = vadd.f32 0.0, %v1226
  %v1228 = vpop.f32.mrb[0].mxu0
  %1229 = vmatprep.mubr.bf16.mxu0 0
  %1230 = vmatmul.mubr.bf16.gmra.mrb[0].mxu0 %v681
  %v1231 = vpop.f32.mrb[0].mxu0
  %v1232 = vadd.f32 0.0, %v1231
  %v1233 = vpop.f32.mrb[0].mxu0
  %v1234 = vpop.f32.mrb[0].mxu0
  %v1235 = vadd.f32 0.0, %v1234
  %v1236 = vpop.f32.mrb[0].mxu0
  %1237 = vmatprep.mubr.bf16.mxu0 0
  %1238 = vmatmul.mubr.bf16.gmra.mrb[0].mxu0 %v684
  %v1239 = vpop.f32.mrb[0].mxu0
  %v1240 = vadd.f32 0.0, %v1239
  %v1241 = vpop.f32.mrb[0].mxu0
  %v1242 = vpop.f32.mrb[0].mxu0
  %v1243 = vadd.f32 0.0, %v1242
  %v1244 = vpop.f32.mrb[0].mxu0
  %1245 = vmatprep.mubr.bf16.mxu0 0
  %1246 = vmatmul.mubr.bf16.gmra.mrb[0].mxu0 %v687
  %v1247 = vpop.f32.mrb[0].mxu0
  %v1248 = vadd.f32 0.0, %v1247
  %v1249 = vpop.f32.mrb[0].mxu0
  %v1250 = vpop.f32.mrb[0].mxu0
  %v1251 = vadd.f32 0.0, %v1250
  %v1252 = vpop.f32.mrb[0].mxu0
  %1253 = vmatprep.mubr.bf16.mxu0 0
  %1254 = vmatmul.mubr.bf16.gmra.mrb[0].mxu0 %v690
  %v1255 = vpop.f32.mrb[0].mxu0
  %v1256 = vadd.f32 0.0, %v1255
  %v1257 = vpop.f32.mrb[0].mxu0
  %v1258 = vpop.f32.mrb[0].mxu0
  %v1259 = vadd.f32 0.0, %v1258
  %v1260 = vpop.f32.mrb[0].mxu0
  %1261 = vmatprep.mubr.bf16.mxu0 0
  %1262 = vmatmul.mubr.bf16.gmra.mrb[0].mxu0 %v693
  %v1263 = vpop.f32.mrb[0].mxu0
  %v1264 = vadd.f32 0.0, %v1263
  %v1265 = vpop.f32.mrb[0].mxu0
  %v1266 = vpop.f32.mrb[0].mxu0
  %v1267 = vadd.f32 0.0, %v1266
  %v1268 = vpop.f32.mrb[0].mxu0
  %1269 = vmatprep.mubr.bf16.mxu0 0
  %1270 = vmatmul.mubr.bf16.gmra.mrb[0].mxu0 %v696
  %v1271 = vpop.f32.mrb[0].mxu0
  %v1272 = vadd.f32 0.0, %v1271
  %v1273 = vpop.f32.mrb[0].mxu0
  %v1274 = vpop.f32.mrb[0].mxu0
  %v1275 = vadd.f32 0.0, %v1274
  %v1276 = vpop.f32.mrb[0].mxu0
  %1277 = vmatprep.mubr.bf16.mxu0 0
  %1278 = vmatmul.mubr.bf16.gmra.mrb[0].mxu0 %v699
  %v1279 = vpop.f32.mrb[0].mxu0
  %v1280 = vadd.f32 0.0, %v1279
  %v1281 = vpop.f32.mrb[0].mxu0
  %v1282 = vpop.f32.mrb[0].mxu0
  %v1283 = vadd.f32 0.0, %v1282
  %v1284 = vpop.f32.mrb[0].mxu0
  %1285 = vmatprep.mubr.bf16.mxu0 0
  %1286 = vmatmul.mubr.bf16.gmra.mrb[0].mxu0 %v702
  %v1287 = vpop.f32.mrb[0].mxu0
  %v1288 = vadd.f32 0.0, %v1287
  %v1289 = vpop.f32.mrb[0].mxu0
  %v1290 = vpop.f32.mrb[0].mxu0
  %v1291 = vadd.f32 0.0, %v1290
  %v1292 = vpop.f32.mrb[0].mxu0
  %1293 = vmatprep.mubr.bf16.mxu0 0
  %1294 = vmatmul.mubr.bf16.gmra.mrb[0].mxu0 %v705
  %v1295 = vpop.f32.mrb[0].mxu0
  %v1296 = vadd.f32 0.0, %v1295
  %v1297 = vpop.f32.mrb[0].mxu0
  %v1298 = vpop.f32.mrb[0].mxu0
  %v1299 = vadd.f32 0.0, %v1298
  %v1300 = vpop.f32.mrb[0].mxu0
  %1301 = vmatprep.mubr.bf16.mxu0 0
  %1302 = vmatmul.mubr.bf16.gmra.mrb[0].mxu0 %v708
  %v1303 = vpop.f32.mrb[0].mxu0
  %v1304 = vadd.f32 0.0, %v1303
  %v1305 = vpop.f32.mrb[0].mxu0
  %v1306 = vpop.f32.mrb[0].mxu0
  %v1307 = vadd.f32 0.0, %v1306
  %v1308 = vpop.f32.mrb[0].mxu0
  %1309 = vmatprep.mubr.bf16.mxu0 0
  %1310 = vmatmul.mubr.bf16.gmra.mrb[0].mxu0 %v711
  %v1311 = vpop.f32.mrb[0].mxu0
  %v1312 = vadd.f32 0.0, %v1311
  %v1313 = vpop.f32.mrb[0].mxu0
  %v1314 = vpop.f32.mrb[0].mxu0
  %v1315 = vadd.f32 0.0, %v1314
  %v1316 = vpop.f32.mrb[0].mxu0
  %1317 = vmatprep.mubr.bf16.mxu0 0
  %1318 = vmatmul.mubr.bf16.gmra.mrb[0].mxu0 %v714
  %v1319 = vpop.f32.mrb[0].mxu0
  %v1320 = vadd.f32 0.0, %v1319
  %v1321 = vpop.f32.mrb[0].mxu0
  %v1322 = vpop.f32.mrb[0].mxu0
  %v1323 = vadd.f32 0.0, %v1322
  %v1324 = vpop.f32.mrb[0].mxu0
  %1325 = vmatprep.mubr.bf16.mxu0 0
  %1326 = vmatmul.mubr.bf16.gmra.mrb[0].mxu0 %v717
  %v1327 = vpop.f32.mrb[0].mxu0
  %v1328 = vadd.f32 0.0, %v1327
  %v1329 = vpop.f32.mrb[0].mxu0
  %v1330 = vpop.f32.mrb[0].mxu0
  %v1331 = vadd.f32 0.0, %v1330
  %v1332 = vpop.f32.mrb[0].mxu0
  %1333 = vmatprep.mubr.bf16.mxu0 0
  %1334 = vmatmul.mubr.bf16.gmra.mrb[0].mxu0 %v720
  %v1335 = vpop.f32.mrb[0].mxu0
  %v1336 = vadd.f32 0.0, %v1335
  %v1337 = vpop.f32.mrb[0].mxu0
  %v1338 = vpop.f32.mrb[0].mxu0
  %v1339 = vadd.f32 0.0, %v1338
  %v1340 = vpop.f32.mrb[0].mxu0
  %1341 = vmatprep.mubr.bf16.mxu0 0
  %1342 = vmatmul.mubr.bf16.gmra.mrb[0].mxu0 %v723
  %v1343 = vpop.f32.mrb[0].mxu0
  %v1344 = vadd.f32 0.0, %v1343
  %v1345 = vpop.f32.mrb[0].mxu0
  %v1346 = vpop.f32.mrb[0].mxu0
  %v1347 = vadd.f32 0.0, %v1346
  %v1348 = vpop.f32.mrb[0].mxu0
  %1349 = vmatprep.mubr.bf16.mxu0 0
  %1350 = vmatmul.mubr.bf16.gmra.mrb[0].mxu0 %v726
  %v1351 = vpop.f32.mrb[0].mxu0
  %v1352 = vadd.f32 0.0, %v1351
  %v1353 = vpop.f32.mrb[0].mxu0
  %v1354 = vpop.f32.mrb[0].mxu0
  %v1355 = vadd.f32 0.0, %v1354
  %v1356 = vpop.f32.mrb[0].mxu0
  %1357 = vmatprep.mubr.bf16.mxu0 0
  %1358 = vmatmul.mubr.bf16.gmra.mrb[0].mxu0 %v729
  %v1359 = vpop.f32.mrb[0].mxu0
  %v1360 = vadd.f32 0.0, %v1359
  %v1361 = vpop.f32.mrb[0].mxu0
  %v1362 = vpop.f32.mrb[0].mxu0
  %v1363 = vadd.f32 0.0, %v1362
  %v1364 = vpop.f32.mrb[0].mxu0
  %1365 = vmatprep.mubr.bf16.mxu0 0
  %1366 = vmatmul.mubr.bf16.gmra.mrb[0].mxu0 %v732
  %v1367 = vpop.f32.mrb[0].mxu0
  %v1368 = vadd.f32 0.0, %v1367
  %v1369 = vpop.f32.mrb[0].mxu0
  %v1370 = vpop.f32.mrb[0].mxu0
  %v1371 = vadd.f32 0.0, %v1370
  %v1372 = vpop.f32.mrb[0].mxu0
  %1373 = vmatprep.mubr.bf16.mxu0 0
  %1374 = vmatmul.mubr.bf16.gmra.mrb[0].mxu0 %v735
  %v1375 = vpop.f32.mrb[0].mxu0
  %v1376 = vadd.f32 0.0, %v1375
  %v1377 = vpop.f32.mrb[0].mxu0
  %v1378 = vpop.f32.mrb[0].mxu0
  %v1379 = vadd.f32 0.0, %v1378
  %v1380 = vpop.f32.mrb[0].mxu0
  %1381 = vmatprep.mubr.bf16.mxu0 0
  %1382 = vmatmul.mubr.bf16.gmra.mrb[0].mxu0 %v738
  %v1383 = vpop.f32.mrb[0].mxu0
  %v1384 = vadd.f32 0.0, %v1383
  %v1385 = vpop.f32.mrb[0].mxu0
  %v1386 = vpop.f32.mrb[0].mxu0
  %v1387 = vadd.f32 0.0, %v1386
  %v1388 = vpop.f32.mrb[0].mxu0
  %1389 = vmatprep.mubr.bf16.mxu0 0
  %1390 = vmatmul.mubr.bf16.gmra.mrb[0].mxu0 %v741
  %v1391 = vpop.f32.mrb[0].mxu0
  %v1392 = vadd.f32 0.0, %v1391
  %v1393 = vpop.f32.mrb[0].mxu0
  %v1394 = vpop.f32.mrb[0].mxu0
  %v1395 = vadd.f32 0.0, %v1394
  %v1396 = vpop.f32.mrb[0].mxu0
  %1397 = vmatprep.mubr.bf16.mxu0 0
  %1398 = vmatmul.mubr.bf16.gmra.mrb[0].mxu0 %v744
  %v1399 = vpop.f32.mrb[0].mxu0
  %v1400 = vadd.f32 0.0, %v1399
  %v1401 = vpop.f32.mrb[0].mxu0
  %v1402 = vpop.f32.mrb[0].mxu0
  %v1403 = vadd.f32 0.0, %v1402
  %v1404 = vpop.f32.mrb[0].mxu0
  %1405 = vmatprep.mubr.bf16.mxu0 0
  %1406 = vmatmul.mubr.bf16.gmra.mrb[0].mxu0 %v747
  %v1407 = vpop.f32.mrb[0].mxu0
  %v1408 = vadd.f32 0.0, %v1407
  %v1409 = vpop.f32.mrb[0].mxu0
  %v1410 = vpop.f32.mrb[0].mxu0
  %v1411 = vadd.f32 0.0, %v1410
  %v1412 = vpop.f32.mrb[0].mxu0
  %1413 = vmatprep.mubr.bf16.mxu0 0
  %1414 = vmatmul.mubr.bf16.gmra.mrb[0].mxu0 %v750
  %v1415 = vpop.f32.mrb[0].mxu0
  %v1416 = vadd.f32 0.0, %v1415
  %v1417 = vpop.f32.mrb[0].mxu0
  %v1418 = vpop.f32.mrb[0].mxu0
  %v1419 = vadd.f32 0.0, %v1418
  %v1420 = vpop.f32.mrb[0].mxu0
  %1421 = vmatprep.mubr.bf16.mxu0 0
  %1422 = vmatmul.mubr.bf16.gmra.mrb[0].mxu0 %v753
  %v1423 = vpop.f32.mrb[0].mxu0
  %v1424 = vadd.f32 0.0, %v1423
  %v1425 = vpop.f32.mrb[0].mxu0
  %v1426 = vpop.f32.mrb[0].mxu0
  %v1427 = vadd.f32 0.0, %v1426
  %v1428 = vpop.f32.mrb[0].mxu0
  %1429 = vmatprep.mubr.bf16.mxu0 0
  %1430 = vmatmul.mubr.bf16.gmra.mrb[0].mxu0 %v756
  %v1431 = vpop.f32.mrb[0].mxu0
  %v1432 = vadd.f32 0.0, %v1431
  %v1433 = vpop.f32.mrb[0].mxu0
  %v1434 = vpop.f32.mrb[0].mxu0
  %v1435 = vadd.f32 0.0, %v1434
  %v1436 = vpop.f32.mrb[0].mxu0
  %1437 = vmatprep.mubr.bf16.mxu0 0
  %1438 = vmatmul.mubr.bf16.gmra.mrb[0].mxu0 %v759
  %v1439 = vpop.f32.mrb[0].mxu0
  %v1440 = vadd.f32 0.0, %v1439
  %v1441 = vpop.f32.mrb[0].mxu0
  %v1442 = vpop.f32.mrb[0].mxu0
  %v1443 = vadd.f32 0.0, %v1442
  %v1444 = vpop.f32.mrb[0].mxu0
  %1445 = vdwg.mxu0
  %v1447 = vsel %vm517, %v191, 0
  %v1450 = vsel %vm517, %v192, 0
  %v1453 = vsel %vm517, %v193, 0
  %v1456 = vsel %vm517, %v194, 0
  %v1459 = vsel %vm517, %v195, 0
  %v1462 = vsel %vm517, %v196, 0
  %v1465 = vsel %vm517, %v197, 0
  %v1468 = vsel %vm517, %v198, 0
  %v1471 = vsel %vm517, %v199, 0
  %v1474 = vsel %vm517, %v200, 0
  %v1477 = vsel %vm517, %v201, 0
  %v1480 = vsel %vm517, %v202, 0
  %v1483 = vsel %vm517, %v203, 0
  %v1486 = vsel %vm517, %v204, 0
  %v1489 = vsel %vm517, %v205, 0
  %v1492 = vsel %vm517, %v206, 0
  %v1495 = vsel %vm517, %v207, 0
  %v1498 = vsel %vm517, %v208, 0
  %v1501 = vsel %vm517, %v209, 0
  %v1504 = vsel %vm517, %v210, 0
  %v1507 = vsel %vm517, %v211, 0
  %v1510 = vsel %vm517, %v212, 0
  %v1513 = vsel %vm517, %v213, 0
  %v1516 = vsel %vm517, %v214, 0
  %v1519 = vsel %vm517, %v215, 0
  %v1522 = vsel %vm517, %v216, 0
  %v1525 = vsel %vm517, %v217, 0
  %v1528 = vsel %vm517, %v218, 0
  %v1531 = vsel %vm517, %v219, 0
  %v1534 = vsel %vm517, %v220, 0
  %v1537 = vsel %vm517, %v221, 0
  %v1540 = vsel %vm517, %v222, 0
  %v1543 = vsel %vm517, %v223, 0
  %v1546 = vsel %vm517, %v224, 0
  %v1549 = vsel %vm517, %v225, 0
  %v1552 = vsel %vm517, %v226, 0
  %v1555 = vsel %vm517, %v227, 0
  %v1558 = vsel %vm517, %v228, 0
  %v1561 = vsel %vm517, %v229, 0
  %v1564 = vsel %vm517, %v230, 0
  %v1567 = vsel %vm517, %v231, 0
  %v1570 = vsel %vm517, %v232, 0
  %v1573 = vsel %vm517, %v233, 0
  %v1576 = vsel %vm517, %v234, 0
  %v1579 = vsel %vm517, %v235, 0
  %v1582 = vsel %vm517, %v236, 0
  %v1585 = vsel %vm517, %v237, 0
  %v1588 = vsel %vm517, %v238, 0
  %v1591 = vsel %vm517, %v239, 0
  %v1594 = vsel %vm517, %v240, 0
  %v1597 = vsel %vm517, %v241, 0
  %v1600 = vsel %vm517, %v242, 0
  %v1603 = vsel %vm517, %v243, 0
  %v1606 = vsel %vm517, %v244, 0
  %v1609 = vsel %vm517, %v245, 0
  %v1612 = vsel %vm517, %v246, 0
  %v1615 = vsel %vm517, %v247, 0
  %v1618 = vsel %vm517, %v248, 0
  %v1621 = vsel %vm517, %v249, 0
  %v1624 = vsel %vm517, %v250, 0
  %v1627 = vsel %vm517, %v251, 0
  %v1630 = vsel %vm517, %v252, 0
  %v1633 = vsel %vm517, %v253, 0
  %v1636 = vsel %vm517, %v254, 0
  %v1639 = vsel %vm517, %v255, 0
  %v1642 = vsel %vm517, %v256, 0
  %v1645 = vsel %vm517, %v257, 0
  %v1648 = vsel %vm517, %v258, 0
  %v1651 = vsel %vm517, %v259, 0
  %v1654 = vsel %vm517, %v260, 0
  %v1657 = vsel %vm517, %v261, 0
  %v1660 = vsel %vm517, %v262, 0
  %v1663 = vsel %vm517, %v263, 0
  %v1666 = vsel %vm517, %v264, 0
  %v1669 = vsel %vm517, %v265, 0
  %v1672 = vsel %vm517, %v266, 0
  %v1675 = vsel %vm517, %v267, 0
  %v1678 = vsel %vm517, %v268, 0
  %v1681 = vsel %vm517, %v269, 0
  %v1684 = vsel %vm517, %v270, 0
  %v1687 = vsel %vm517, %v271, 0
  %v1690 = vsel %vm761, %v272, 0
  %1692 = vmatprep.subr.bf16.mxu0 0
  %1693 = vmatpush1.bf16.msra.mxu0 %v1690
  %1694 = vmatprep.subr.bf16.mxu0 0
  %1695 = vmatpush1.bf16.msra.mxu0 0
  %1696 = vmatprep.subr.bf16.mxu0 0
  %1697 = vmatpush1.bf16.msra.mxu0 0
  %1698 = vmatprep.subr.bf16.mxu0 0
  %1699 = vmatpush1.bf16.msra.mxu0 0
  %1700 = vmatprep.subr.bf16.mxu0 0
  %1701 = vmatpush1.bf16.msra.mxu0 0
  %1702 = vmatprep.subr.bf16.mxu0 0
  %1703 = vmatpush1.bf16.msra.mxu0 0
  %1704 = vmatprep.subr.bf16.mxu0 0
  %1705 = vmatpush1.bf16.msra.mxu0 0
  %1706 = vmatprep.subr.bf16.mxu0 0
  %1707 = vmatpush1.bf16.msra.mxu0 0
  %1708 = vmatprep.subr.bf16.mxu0 0
  %1709 = vmatpush1.bf16.msra.mxu0 0
  %1710 = vmatprep.subr.bf16.mxu0 0
  %1711 = vmatpush1.bf16.msra.mxu0 0
  %1712 = vmatprep.subr.bf16.mxu0 0
  %1713 = vmatpush1.bf16.msra.mxu0 0
  %1714 = vmatprep.subr.bf16.mxu0 0
  %1715 = vmatpush1.bf16.msra.mxu0 0
  %1716 = vmatprep.subr.bf16.mxu0 0
  %1717 = vmatpush1.bf16.msra.mxu0 0
  %1718 = vmatprep.subr.bf16.mxu0 0
  %1719 = vmatpush1.bf16.msra.mxu0 0
  %1720 = vmatprep.subr.bf16.mxu0 0
  %1721 = vmatpush1.bf16.msra.mxu0 0
  %1722 = vmatprep.subr.bf16.mxu0 0
  %1723 = vmatpush1.bf16.msra.mxu0 0
  %1724 = vmatprep.mubr.bf16.mxu0 0
  %1725 = vmatmul.mubr.bf16.gmra.mrb[0].mxu0 %v1447
  %v1726 = vpop.f32.mrb[0].mxu0
  %v1727 = vadd.f32 %v800, %v1726
  %v1728 = vpop.f32.mrb[0].mxu0
  %v1729 = vpop.f32.mrb[0].mxu0
  %v1730 = vadd.f32 %v803, %v1729
  %v1731 = vpop.f32.mrb[0].mxu0
  %1732 = vmatprep.mubr.bf16.mxu0 0
  %1733 = vmatmul.mubr.bf16.gmra.mrb[0].mxu0 %v1450
  %v1734 = vpop.f32.mrb[0].mxu0
  %v1735 = vadd.f32 %v808, %v1734
  %v1736 = vpop.f32.mrb[0].mxu0
  %v1737 = vpop.f32.mrb[0].mxu0
  %v1738 = vadd.f32 %v811, %v1737
  %v1739 = vpop.f32.mrb[0].mxu0
  %1740 = vmatprep.mubr.bf16.mxu0 0
  %1741 = vmatmul.mubr.bf16.gmra.mrb[0].mxu0 %v1453
  %v1742 = vpop.f32.mrb[0].mxu0
  %v1743 = vadd.f32 %v816, %v1742
  %v1744 = vpop.f32.mrb[0].mxu0
  %v1745 = vpop.f32.mrb[0].mxu0
  %v1746 = vadd.f32 %v819, %v1745
  %v1747 = vpop.f32.mrb[0].mxu0
  %1748 = vmatprep.mubr.bf16.mxu0 0
  %1749 = vmatmul.mubr.bf16.gmra.mrb[0].mxu0 %v1456
  %v1750 = vpop.f32.mrb[0].mxu0
  %v1751 = vadd.f32 %v824, %v1750
  %v1752 = vpop.f32.mrb[0].mxu0
  %v1753 = vpop.f32.mrb[0].mxu0
  %v1754 = vadd.f32 %v827, %v1753
  %v1755 = vpop.f32.mrb[0].mxu0
  %1756 = vmatprep.mubr.bf16.mxu0 0
  %1757 = vmatmul.mubr.bf16.gmra.mrb[0].mxu0 %v1459
  %v1758 = vpop.f32.mrb[0].mxu0
  %v1759 = vadd.f32 %v832, %v1758
  %v1760 = vpop.f32.mrb[0].mxu0
  %v1761 = vpop.f32.mrb[0].mxu0
  %v1762 = vadd.f32 %v835, %v1761
  %v1763 = vpop.f32.mrb[0].mxu0
  %1764 = vmatprep.mubr.bf16.mxu0 0
  %1765 = vmatmul.mubr.bf16.gmra.mrb[0].mxu0 %v1462
  %v1766 = vpop.f32.mrb[0].mxu0
  %v1767 = vadd.f32 %v840, %v1766
  %v1768 = vpop.f32.mrb[0].mxu0
  %v1769 = vpop.f32.mrb[0].mxu0
  %v1770 = vadd.f32 %v843, %v1769
  %v1771 = vpop.f32.mrb[0].mxu0
  %1772 = vmatprep.mubr.bf16.mxu0 0
  %1773 = vmatmul.mubr.bf16.gmra.mrb[0].mxu0 %v1465
  %v1774 = vpop.f32.mrb[0].mxu0
  %v1775 = vadd.f32 %v848, %v1774
  %v1776 = vpop.f32.mrb[0].mxu0
  %v1777 = vpop.f32.mrb[0].mxu0
  %v1778 = vadd.f32 %v851, %v1777
  %v1779 = vpop.f32.mrb[0].mxu0
  %1780 = vmatprep.mubr.bf16.mxu0 0
  %1781 = vmatmul.mubr.bf16.gmra.mrb[0].mxu0 %v1468
  %v1782 = vpop.f32.mrb[0].mxu0
  %v1783 = vadd.f32 %v856, %v1782
  %v1784 = vpop.f32.mrb[0].mxu0
  %v1785 = vpop.f32.mrb[0].mxu0
  %v1786 = vadd.f32 %v859, %v1785
  %v1787 = vpop.f32.mrb[0].mxu0
  %1788 = vmatprep.mubr.bf16.mxu0 0
  %1789 = vmatmul.mubr.bf16.gmra.mrb[0].mxu0 %v1471
  %v1790 = vpop.f32.mrb[0].mxu0
  %v1791 = vadd.f32 %v864, %v1790
  %v1792 = vpop.f32.mrb[0].mxu0
  %v1793 = vpop.f32.mrb[0].mxu0
  %v1794 = vadd.f32 %v867, %v1793
  %v1795 = vpop.f32.mrb[0].mxu0
  %1796 = vmatprep.mubr.bf16.mxu0 0
  %1797 = vmatmul.mubr.bf16.gmra.mrb[0].mxu0 %v1474
  %v1798 = vpop.f32.mrb[0].mxu0
  %v1799 = vadd.f32 %v872, %v1798
  %v1800 = vpop.f32.mrb[0].mxu0
  %v1801 = vpop.f32.mrb[0].mxu0
  %v1802 = vadd.f32 %v875, %v1801
  %v1803 = vpop.f32.mrb[0].mxu0
  %1804 = vmatprep.mubr.bf16.mxu0 0
  %1805 = vmatmul.mubr.bf16.gmra.mrb[0].mxu0 %v1477
  %v1806 = vpop.f32.mrb[0].mxu0
  %v1807 = vadd.f32 %v880, %v1806
  %v1808 = vpop.f32.mrb[0].mxu0
  %v1809 = vpop.f32.mrb[0].mxu0
  %v1810 = vadd.f32 %v883, %v1809
  %v1811 = vpop.f32.mrb[0].mxu0
  %1812 = vmatprep.mubr.bf16.mxu0 0
  %1813 = vmatmul.mubr.bf16.gmra.mrb[0].mxu0 %v1480
  %v1814 = vpop.f32.mrb[0].mxu0
  %v1815 = vadd.f32 %v888, %v1814
  %v1816 = vpop.f32.mrb[0].mxu0
  %v1817 = vpop.f32.mrb[0].mxu0
  %v1818 = vadd.f32 %v891, %v1817
  %v1819 = vpop.f32.mrb[0].mxu0
  %1820 = vmatprep.mubr.bf16.mxu0 0
  %1821 = vmatmul.mubr.bf16.gmra.mrb[0].mxu0 %v1483
  %v1822 = vpop.f32.mrb[0].mxu0
  %v1823 = vadd.f32 %v896, %v1822
  %v1824 = vpop.f32.mrb[0].mxu0
  %v1825 = vpop.f32.mrb[0].mxu0
  %v1826 = vadd.f32 %v899, %v1825
  %v1827 = vpop.f32.mrb[0].mxu0
  %1828 = vmatprep.mubr.bf16.mxu0 0
  %1829 = vmatmul.mubr.bf16.gmra.mrb[0].mxu0 %v1486
  %v1830 = vpop.f32.mrb[0].mxu0
  %v1831 = vadd.f32 %v904, %v1830
  %v1832 = vpop.f32.mrb[0].mxu0
  %v1833 = vpop.f32.mrb[0].mxu0
  %v1834 = vadd.f32 %v907, %v1833
  %v1835 = vpop.f32.mrb[0].mxu0
  %1836 = vmatprep.mubr.bf16.mxu0 0
  %1837 = vmatmul.mubr.bf16.gmra.mrb[0].mxu0 %v1489
  %v1838 = vpop.f32.mrb[0].mxu0
  %v1839 = vadd.f32 %v912, %v1838
  %v1840 = vpop.f32.mrb[0].mxu0
  %v1841 = vpop.f32.mrb[0].mxu0
  %v1842 = vadd.f32 %v915, %v1841
  %v1843 = vpop.f32.mrb[0].mxu0
  %1844 = vmatprep.mubr.bf16.mxu0 0
  %1845 = vmatmul.mubr.bf16.gmra.mrb[0].mxu0 %v1492
  %v1846 = vpop.f32.mrb[0].mxu0
  %v1847 = vadd.f32 %v920, %v1846
  %v1848 = vpop.f32.mrb[0].mxu0
  %v1849 = vpop.f32.mrb[0].mxu0
  %v1850 = vadd.f32 %v923, %v1849
  %v1851 = vpop.f32.mrb[0].mxu0
  %1852 = vmatprep.mubr.bf16.mxu0 0
  %1853 = vmatmul.mubr.bf16.gmra.mrb[0].mxu0 %v1495
  %v1854 = vpop.f32.mrb[0].mxu0
  %v1855 = vadd.f32 %v928, %v1854
  %v1856 = vpop.f32.mrb[0].mxu0
  %v1857 = vpop.f32.mrb[0].mxu0
  %v1858 = vadd.f32 %v931, %v1857
  %v1859 = vpop.f32.mrb[0].mxu0
  %1860 = vmatprep.mubr.bf16.mxu0 0
  %1861 = vmatmul.mubr.bf16.gmra.mrb[0].mxu0 %v1498
  %v1862 = vpop.f32.mrb[0].mxu0
  %v1863 = vadd.f32 %v936, %v1862
  %v1864 = vpop.f32.mrb[0].mxu0
  %v1865 = vpop.f32.mrb[0].mxu0
  %v1866 = vadd.f32 %v939, %v1865
  %v1867 = vpop.f32.mrb[0].mxu0
  %1868 = vmatprep.mubr.bf16.mxu0 0
  %1869 = vmatmul.mubr.bf16.gmra.mrb[0].mxu0 %v1501
  %v1870 = vpop.f32.mrb[0].mxu0
  %v1871 = vadd.f32 %v944, %v1870
  %v1872 = vpop.f32.mrb[0].mxu0
  %v1873 = vpop.f32.mrb[0].mxu0
  %v1874 = vadd.f32 %v947, %v1873
  %v1875 = vpop.f32.mrb[0].mxu0
  %1876 = vmatprep.mubr.bf16.mxu0 0
  %1877 = vmatmul.mubr.bf16.gmra.mrb[0].mxu0 %v1504
  %v1878 = vpop.f32.mrb[0].mxu0
  %v1879 = vadd.f32 %v952, %v1878
  %v1880 = vpop.f32.mrb[0].mxu0
  %v1881 = vpop.f32.mrb[0].mxu0
  %v1882 = vadd.f32 %v955, %v1881
  %v1883 = vpop.f32.mrb[0].mxu0
  %1884 = vmatprep.mubr.bf16.mxu0 0
  %1885 = vmatmul.mubr.bf16.gmra.mrb[0].mxu0 %v1507
  %v1886 = vpop.f32.mrb[0].mxu0
  %v1887 = vadd.f32 %v960, %v1886
  %v1888 = vpop.f32.mrb[0].mxu0
  %v1889 = vpop.f32.mrb[0].mxu0
  %v1890 = vadd.f32 %v963, %v1889
  %v1891 = vpop.f32.mrb[0].mxu0
  %1892 = vmatprep.mubr.bf16.mxu0 0
  %1893 = vmatmul.mubr.bf16.gmra.mrb[0].mxu0 %v1510
  %v1894 = vpop.f32.mrb[0].mxu0
  %v1895 = vadd.f32 %v968, %v1894
  %v1896 = vpop.f32.mrb[0].mxu0
  %v1897 = vpop.f32.mrb[0].mxu0
  %v1898 = vadd.f32 %v971, %v1897
  %v1899 = vpop.f32.mrb[0].mxu0
  %1900 = vmatprep.mubr.bf16.mxu0 0
  %1901 = vmatmul.mubr.bf16.gmra.mrb[0].mxu0 %v1513
  %v1902 = vpop.f32.mrb[0].mxu0
  %v1903 = vadd.f32 %v976, %v1902
  %v1904 = vpop.f32.mrb[0].mxu0
  %v1905 = vpop.f32.mrb[0].mxu0
  %v1906 = vadd.f32 %v979, %v1905
  %v1907 = vpop.f32.mrb[0].mxu0
  %1908 = vmatprep.mubr.bf16.mxu0 0
  %1909 = vmatmul.mubr.bf16.gmra.mrb[0].mxu0 %v1516
  %v1910 = vpop.f32.mrb[0].mxu0
  %v1911 = vadd.f32 %v984, %v1910
  %v1912 = vpop.f32.mrb[0].mxu0
  %v1913 = vpop.f32.mrb[0].mxu0
  %v1914 = vadd.f32 %v987, %v1913
  %v1915 = vpop.f32.mrb[0].mxu0
  %1916 = vmatprep.mubr.bf16.mxu0 0
  %1917 = vmatmul.mubr.bf16.gmra.mrb[0].mxu0 %v1519
  %v1918 = vpop.f32.mrb[0].mxu0
  %v1919 = vadd.f32 %v992, %v1918
  %v1920 = vpop.f32.mrb[0].mxu0
  %v1921 = vpop.f32.mrb[0].mxu0
  %v1922 = vadd.f32 %v995, %v1921
  %v1923 = vpop.f32.mrb[0].mxu0
  %1924 = vmatprep.mubr.bf16.mxu0 0
  %1925 = vmatmul.mubr.bf16.gmra.mrb[0].mxu0 %v1522
  %v1926 = vpop.f32.mrb[0].mxu0
  %v1927 = vadd.f32 %v1000, %v1926
  %v1928 = vpop.f32.mrb[0].mxu0
  %v1929 = vpop.f32.mrb[0].mxu0
  %v1930 = vadd.f32 %v1003, %v1929
  %v1931 = vpop.f32.mrb[0].mxu0
  %1932 = vmatprep.mubr.bf16.mxu0 0
  %1933 = vmatmul.mubr.bf16.gmra.mrb[0].mxu0 %v1525
  %v1934 = vpop.f32.mrb[0].mxu0
  %v1935 = vadd.f32 %v1008, %v1934
  %v1936 = vpop.f32.mrb[0].mxu0
  %v1937 = vpop.f32.mrb[0].mxu0
  %v1938 = vadd.f32 %v1011, %v1937
  %v1939 = vpop.f32.mrb[0].mxu0
  %1940 = vmatprep.mubr.bf16.mxu0 0
  %1941 = vmatmul.mubr.bf16.gmra.mrb[0].mxu0 %v1528
  %v1942 = vpop.f32.mrb[0].mxu0
  %v1943 = vadd.f32 %v1016, %v1942
  %v1944 = vpop.f32.mrb[0].mxu0
  %v1945 = vpop.f32.mrb[0].mxu0
  %v1946 = vadd.f32 %v1019, %v1945
  %v1947 = vpop.f32.mrb[0].mxu0
  %1948 = vmatprep.mubr.bf16.mxu0 0
  %1949 = vmatmul.mubr.bf16.gmra.mrb[0].mxu0 %v1531
  %v1950 = vpop.f32.mrb[0].mxu0
  %v1951 = vadd.f32 %v1024, %v1950
  %v1952 = vpop.f32.mrb[0].mxu0
  %v1953 = vpop.f32.mrb[0].mxu0
  %v1954 = vadd.f32 %v1027, %v1953
  %v1955 = vpop.f32.mrb[0].mxu0
  %1956 = vmatprep.mubr.bf16.mxu0 0
  %1957 = vmatmul.mubr.bf16.gmra.mrb[0].mxu0 %v1534
  %v1958 = vpop.f32.mrb[0].mxu0
  %v1959 = vadd.f32 %v1032, %v1958
  %v1960 = vpop.f32.mrb[0].mxu0
  %v1961 = vpop.f32.mrb[0].mxu0
  %v1962 = vadd.f32 %v1035, %v1961
  %v1963 = vpop.f32.mrb[0].mxu0
  %1964 = vmatprep.mubr.bf16.mxu0 0
  %1965 = vmatmul.mubr.bf16.gmra.mrb[0].mxu0 %v1537
  %v1966 = vpop.f32.mrb[0].mxu0
  %v1967 = vadd.f32 %v1040, %v1966
  %v1968 = vpop.f32.mrb[0].mxu0
  %v1969 = vpop.f32.mrb[0].mxu0
  %v1970 = vadd.f32 %v1043, %v1969
  %v1971 = vpop.f32.mrb[0].mxu0
  %1972 = vmatprep.mubr.bf16.mxu0 0
  %1973 = vmatmul.mubr.bf16.gmra.mrb[0].mxu0 %v1540
  %v1974 = vpop.f32.mrb[0].mxu0
  %v1975 = vadd.f32 %v1048, %v1974
  %v1976 = vpop.f32.mrb[0].mxu0
  %v1977 = vpop.f32.mrb[0].mxu0
  %v1978 = vadd.f32 %v1051, %v1977
  %v1979 = vpop.f32.mrb[0].mxu0
  %1980 = vmatprep.mubr.bf16.mxu0 0
  %1981 = vmatmul.mubr.bf16.gmra.mrb[0].mxu0 %v1543
  %v1982 = vpop.f32.mrb[0].mxu0
  %v1983 = vadd.f32 %v1056, %v1982
  %v1984 = vpop.f32.mrb[0].mxu0
  %v1985 = vpop.f32.mrb[0].mxu0
  %v1986 = vadd.f32 %v1059, %v1985
  %v1987 = vpop.f32.mrb[0].mxu0
  %1988 = vmatprep.mubr.bf16.mxu0 0
  %1989 = vmatmul.mubr.bf16.gmra.mrb[0].mxu0 %v1546
  %v1990 = vpop.f32.mrb[0].mxu0
  %v1991 = vadd.f32 %v1064, %v1990
  %v1992 = vpop.f32.mrb[0].mxu0
  %v1993 = vpop.f32.mrb[0].mxu0
  %v1994 = vadd.f32 %v1067, %v1993
  %v1995 = vpop.f32.mrb[0].mxu0
  %1996 = vmatprep.mubr.bf16.mxu0 0
  %1997 = vmatmul.mubr.bf16.gmra.mrb[0].mxu0 %v1549
  %v1998 = vpop.f32.mrb[0].mxu0
  %v1999 = vadd.f32 %v1072, %v1998
  %v2000 = vpop.f32.mrb[0].mxu0
  %v2001 = vpop.f32.mrb[0].mxu0
  %v2002 = vadd.f32 %v1075, %v2001
  %v2003 = vpop.f32.mrb[0].mxu0
  %2004 = vmatprep.mubr.bf16.mxu0 0
  %2005 = vmatmul.mubr.bf16.gmra.mrb[0].mxu0 %v1552
  %v2006 = vpop.f32.mrb[0].mxu0
  %v2007 = vadd.f32 %v1080, %v2006
  %v2008 = vpop.f32.mrb[0].mxu0
  %v2009 = vpop.f32.mrb[0].mxu0
  %v2010 = vadd.f32 %v1083, %v2009
  %v2011 = vpop.f32.mrb[0].mxu0
  %2012 = vmatprep.mubr.bf16.mxu0 0
  %2013 = vmatmul.mubr.bf16.gmra.mrb[0].mxu0 %v1555
  %v2014 = vpop.f32.mrb[0].mxu0
  %v2015 = vadd.f32 %v1088, %v2014
  %v2016 = vpop.f32.mrb[0].mxu0
  %v2017 = vpop.f32.mrb[0].mxu0
  %v2018 = vadd.f32 %v1091, %v2017
  %v2019 = vpop.f32.mrb[0].mxu0
  %2020 = vmatprep.mubr.bf16.mxu0 0
  %2021 = vmatmul.mubr.bf16.gmra.mrb[0].mxu0 %v1558
  %v2022 = vpop.f32.mrb[0].mxu0
  %v2023 = vadd.f32 %v1096, %v2022
  %v2024 = vpop.f32.mrb[0].mxu0
  %v2025 = vpop.f32.mrb[0].mxu0
  %v2026 = vadd.f32 %v1099, %v2025
  %v2027 = vpop.f32.mrb[0].mxu0
  %2028 = vmatprep.mubr.bf16.mxu0 0
  %2029 = vmatmul.mubr.bf16.gmra.mrb[0].mxu0 %v1561
  %v2030 = vpop.f32.mrb[0].mxu0
  %v2031 = vadd.f32 %v1104, %v2030
  %v2032 = vpop.f32.mrb[0].mxu0
  %v2033 = vpop.f32.mrb[0].mxu0
  %v2034 = vadd.f32 %v1107, %v2033
  %v2035 = vpop.f32.mrb[0].mxu0
  %2036 = vmatprep.mubr.bf16.mxu0 0
  %2037 = vmatmul.mubr.bf16.gmra.mrb[0].mxu0 %v1564
  %v2038 = vpop.f32.mrb[0].mxu0
  %v2039 = vadd.f32 %v1112, %v2038
  %v2040 = vpop.f32.mrb[0].mxu0
  %v2041 = vpop.f32.mrb[0].mxu0
  %v2042 = vadd.f32 %v1115, %v2041
  %v2043 = vpop.f32.mrb[0].mxu0
  %2044 = vmatprep.mubr.bf16.mxu0 0
  %2045 = vmatmul.mubr.bf16.gmra.mrb[0].mxu0 %v1567
  %v2046 = vpop.f32.mrb[0].mxu0
  %v2047 = vadd.f32 %v1120, %v2046
  %v2048 = vpop.f32.mrb[0].mxu0
  %v2049 = vpop.f32.mrb[0].mxu0
  %v2050 = vadd.f32 %v1123, %v2049
  %v2051 = vpop.f32.mrb[0].mxu0
  %2052 = vmatprep.mubr.bf16.mxu0 0
  %2053 = vmatmul.mubr.bf16.gmra.mrb[0].mxu0 %v1570
  %v2054 = vpop.f32.mrb[0].mxu0
  %v2055 = vadd.f32 %v1128, %v2054
  %v2056 = vpop.f32.mrb[0].mxu0
  %v2057 = vpop.f32.mrb[0].mxu0
  %v2058 = vadd.f32 %v1131, %v2057
  %v2059 = vpop.f32.mrb[0].mxu0
  %2060 = vmatprep.mubr.bf16.mxu0 0
  %2061 = vmatmul.mubr.bf16.gmra.mrb[0].mxu0 %v1573
  %v2062 = vpop.f32.mrb[0].mxu0
  %v2063 = vadd.f32 %v1136, %v2062
  %v2064 = vpop.f32.mrb[0].mxu0
  %v2065 = vpop.f32.mrb[0].mxu0
  %v2066 = vadd.f32 %v1139, %v2065
  %v2067 = vpop.f32.mrb[0].mxu0
  %2068 = vmatprep.mubr.bf16.mxu0 0
  %2069 = vmatmul.mubr.bf16.gmra.mrb[0].mxu0 %v1576
  %v2070 = vpop.f32.mrb[0].mxu0
  %v2071 = vadd.f32 %v1144, %v2070
  %v2072 = vpop.f32.mrb[0].mxu0
  %v2073 = vpop.f32.mrb[0].mxu0
  %v2074 = vadd.f32 %v1147, %v2073
  %v2075 = vpop.f32.mrb[0].mxu0
  %2076 = vmatprep.mubr.bf16.mxu0 0
  %2077 = vmatmul.mubr.bf16.gmra.mrb[0].mxu0 %v1579
  %v2078 = vpop.f32.mrb[0].mxu0
  %v2079 = vadd.f32 %v1152, %v2078
  %v2080 = vpop.f32.mrb[0].mxu0
  %v2081 = vpop.f32.mrb[0].mxu0
  %v2082 = vadd.f32 %v1155, %v2081
  %v2083 = vpop.f32.mrb[0].mxu0
  %2084 = vmatprep.mubr.bf16.mxu0 0
  %2085 = vmatmul.mubr.bf16.gmra.mrb[0].mxu0 %v1582
  %v2086 = vpop.f32.mrb[0].mxu0
  %v2087 = vadd.f32 %v1160, %v2086
  %v2088 = vpop.f32.mrb[0].mxu0
  %v2089 = vpop.f32.mrb[0].mxu0
  %v2090 = vadd.f32 %v1163, %v2089
  %v2091 = vpop.f32.mrb[0].mxu0
  %2092 = vmatprep.mubr.bf16.mxu0 0
  %2093 = vmatmul.mubr.bf16.gmra.mrb[0].mxu0 %v1585
  %v2094 = vpop.f32.mrb[0].mxu0
  %v2095 = vadd.f32 %v1168, %v2094
  %v2096 = vpop.f32.mrb[0].mxu0
  %v2097 = vpop.f32.mrb[0].mxu0
  %v2098 = vadd.f32 %v1171, %v2097
  %v2099 = vpop.f32.mrb[0].mxu0
  %2100 = vmatprep.mubr.bf16.mxu0 0
  %2101 = vmatmul.mubr.bf16.gmra.mrb[0].mxu0 %v1588
  %v2102 = vpop.f32.mrb[0].mxu0
  %v2103 = vadd.f32 %v1176, %v2102
  %v2104 = vpop.f32.mrb[0].mxu0
  %v2105 = vpop.f32.mrb[0].mxu0
  %v2106 = vadd.f32 %v1179, %v2105
  %v2107 = vpop.f32.mrb[0].mxu0
  %2108 = vmatprep.mubr.bf16.mxu0 0
  %2109 = vmatmul.mubr.bf16.gmra.mrb[0].mxu0 %v1591
  %v2110 = vpop.f32.mrb[0].mxu0
  %v2111 = vadd.f32 %v1184, %v2110
  %v2112 = vpop.f32.mrb[0].mxu0
  %v2113 = vpop.f32.mrb[0].mxu0
  %v2114 = vadd.f32 %v1187, %v2113
  %v2115 = vpop.f32.mrb[0].mxu0
  %2116 = vmatprep.mubr.bf16.mxu0 0
  %2117 = vmatmul.mubr.bf16.gmra.mrb[0].mxu0 %v1594
  %v2118 = vpop.f32.mrb[0].mxu0
  %v2119 = vadd.f32 %v1192, %v2118
  %v2120 = vpop.f32.mrb[0].mxu0
  %v2121 = vpop.f32.mrb[0].mxu0
  %v2122 = vadd.f32 %v1195, %v2121
  %v2123 = vpop.f32.mrb[0].mxu0
  %2124 = vmatprep.mubr.bf16.mxu0 0
  %2125 = vmatmul.mubr.bf16.gmra.mrb[0].mxu0 %v1597
  %v2126 = vpop.f32.mrb[0].mxu0
  %v2127 = vadd.f32 %v1200, %v2126
  %v2128 = vpop.f32.mrb[0].mxu0
  %v2129 = vpop.f32.mrb[0].mxu0
  %v2130 = vadd.f32 %v1203, %v2129
  %v2131 = vpop.f32.mrb[0].mxu0
  %2132 = vmatprep.mubr.bf16.mxu0 0
  %2133 = vmatmul.mubr.bf16.gmra.mrb[0].mxu0 %v1600
  %v2134 = vpop.f32.mrb[0].mxu0
  %v2135 = vadd.f32 %v1208, %v2134
  %v2136 = vpop.f32.mrb[0].mxu0
  %v2137 = vpop.f32.mrb[0].mxu0
  %v2138 = vadd.f32 %v1211, %v2137
  %v2139 = vpop.f32.mrb[0].mxu0
  %2140 = vmatprep.mubr.bf16.mxu0 0
  %2141 = vmatmul.mubr.bf16.gmra.mrb[0].mxu0 %v1603
  %v2142 = vpop.f32.mrb[0].mxu0
  %v2143 = vadd.f32 %v1216, %v2142
  %v2144 = vpop.f32.mrb[0].mxu0
  %v2145 = vpop.f32.mrb[0].mxu0
  %v2146 = vadd.f32 %v1219, %v2145
  %v2147 = vpop.f32.mrb[0].mxu0
  %2148 = vmatprep.mubr.bf16.mxu0 0
  %2149 = vmatmul.mubr.bf16.gmra.mrb[0].mxu0 %v1606
  %v2150 = vpop.f32.mrb[0].mxu0
  %v2151 = vadd.f32 %v1224, %v2150
  %v2152 = vpop.f32.mrb[0].mxu0
  %v2153 = vpop.f32.mrb[0].mxu0
  %v2154 = vadd.f32 %v1227, %v2153
  %v2155 = vpop.f32.mrb[0].mxu0
  %2156 = vmatprep.mubr.bf16.mxu0 0
  %2157 = vmatmul.mubr.bf16.gmra.mrb[0].mxu0 %v1609
  %v2158 = vpop.f32.mrb[0].mxu0
  %v2159 = vadd.f32 %v1232, %v2158
  %v2160 = vpop.f32.mrb[0].mxu0
  %v2161 = vpop.f32.mrb[0].mxu0
  %v2162 = vadd.f32 %v1235, %v2161
  %v2163 = vpop.f32.mrb[0].mxu0
  %2164 = vmatprep.mubr.bf16.mxu0 0
  %2165 = vmatmul.mubr.bf16.gmra.mrb[0].mxu0 %v1612
  %v2166 = vpop.f32.mrb[0].mxu0
  %v2167 = vadd.f32 %v1240, %v2166
  %v2168 = vpop.f32.mrb[0].mxu0
  %v2169 = vpop.f32.mrb[0].mxu0
  %v2170 = vadd.f32 %v1243, %v2169
  %v2171 = vpop.f32.mrb[0].mxu0
  %2172 = vmatprep.mubr.bf16.mxu0 0
  %2173 = vmatmul.mubr.bf16.gmra.mrb[0].mxu0 %v1615
  %v2174 = vpop.f32.mrb[0].mxu0
  %v2175 = vadd.f32 %v1248, %v2174
  %v2176 = vpop.f32.mrb[0].mxu0
  %v2177 = vpop.f32.mrb[0].mxu0
  %v2178 = vadd.f32 %v1251, %v2177
  %v2179 = vpop.f32.mrb[0].mxu0
  %2180 = vmatprep.mubr.bf16.mxu0 0
  %2181 = vmatmul.mubr.bf16.gmra.mrb[0].mxu0 %v1618
  %v2182 = vpop.f32.mrb[0].mxu0
  %v2183 = vadd.f32 %v1256, %v2182
  %v2184 = vpop.f32.mrb[0].mxu0
  %v2185 = vpop.f32.mrb[0].mxu0
  %v2186 = vadd.f32 %v1259, %v2185
  %v2187 = vpop.f32.mrb[0].mxu0
  %2188 = vmatprep.mubr.bf16.mxu0 0
  %2189 = vmatmul.mubr.bf16.gmra.mrb[0].mxu0 %v1621
  %v2190 = vpop.f32.mrb[0].mxu0
  %v2191 = vadd.f32 %v1264, %v2190
  %v2192 = vpop.f32.mrb[0].mxu0
  %v2193 = vpop.f32.mrb[0].mxu0
  %v2194 = vadd.f32 %v1267, %v2193
  %v2195 = vpop.f32.mrb[0].mxu0
  %2196 = vmatprep.mubr.bf16.mxu0 0
  %2197 = vmatmul.mubr.bf16.gmra.mrb[0].mxu0 %v1624
  %v2198 = vpop.f32.mrb[0].mxu0
  %v2199 = vadd.f32 %v1272, %v2198
  %v2200 = vpop.f32.mrb[0].mxu0
  %v2201 = vpop.f32.mrb[0].mxu0
  %v2202 = vadd.f32 %v1275, %v2201
  %v2203 = vpop.f32.mrb[0].mxu0
  %2204 = vmatprep.mubr.bf16.mxu0 0
  %2205 = vmatmul.mubr.bf16.gmra.mrb[0].mxu0 %v1627
  %v2206 = vpop.f32.mrb[0].mxu0
  %v2207 = vadd.f32 %v1280, %v2206
  %v2208 = vpop.f32.mrb[0].mxu0
  %v2209 = vpop.f32.mrb[0].mxu0
  %v2210 = vadd.f32 %v1283, %v2209
  %v2211 = vpop.f32.mrb[0].mxu0
  %2212 = vmatprep.mubr.bf16.mxu0 0
  %2213 = vmatmul.mubr.bf16.gmra.mrb[0].mxu0 %v1630
  %v2214 = vpop.f32.mrb[0].mxu0
  %v2215 = vadd.f32 %v1288, %v2214
  %v2216 = vpop.f32.mrb[0].mxu0
  %v2217 = vpop.f32.mrb[0].mxu0
  %v2218 = vadd.f32 %v1291, %v2217
  %v2219 = vpop.f32.mrb[0].mxu0
  %2220 = vmatprep.mubr.bf16.mxu0 0
  %2221 = vmatmul.mubr.bf16.gmra.mrb[0].mxu0 %v1633
  %v2222 = vpop.f32.mrb[0].mxu0
  %v2223 = vadd.f32 %v1296, %v2222
  %v2224 = vpop.f32.mrb[0].mxu0
  %v2225 = vpop.f32.mrb[0].mxu0
  %v2226 = vadd.f32 %v1299, %v2225
  %v2227 = vpop.f32.mrb[0].mxu0
  %2228 = vmatprep.mubr.bf16.mxu0 0
  %2229 = vmatmul.mubr.bf16.gmra.mrb[0].mxu0 %v1636
  %v2230 = vpop.f32.mrb[0].mxu0
  %v2231 = vadd.f32 %v1304, %v2230
  %v2232 = vpop.f32.mrb[0].mxu0
  %v2233 = vpop.f32.mrb[0].mxu0
  %v2234 = vadd.f32 %v1307, %v2233
  %v2235 = vpop.f32.mrb[0].mxu0
  %2236 = vmatprep.mubr.bf16.mxu0 0
  %2237 = vmatmul.mubr.bf16.gmra.mrb[0].mxu0 %v1639
  %v2238 = vpop.f32.mrb[0].mxu0
  %v2239 = vadd.f32 %v1312, %v2238
  %v2240 = vpop.f32.mrb[0].mxu0
  %v2241 = vpop.f32.mrb[0].mxu0
  %v2242 = vadd.f32 %v1315, %v2241
  %v2243 = vpop.f32.mrb[0].mxu0
  %2244 = vmatprep.mubr.bf16.mxu0 0
  %2245 = vmatmul.mubr.bf16.gmra.mrb[0].mxu0 %v1642
  %v2246 = vpop.f32.mrb[0].mxu0
  %v2247 = vadd.f32 %v1320, %v2246
  %v2248 = vpop.f32.mrb[0].mxu0
  %v2249 = vpop.f32.mrb[0].mxu0
  %v2250 = vadd.f32 %v1323, %v2249
  %v2251 = vpop.f32.mrb[0].mxu0
  %2252 = vmatprep.mubr.bf16.mxu0 0
  %2253 = vmatmul.mubr.bf16.gmra.mrb[0].mxu0 %v1645
  %v2254 = vpop.f32.mrb[0].mxu0
  %v2255 = vadd.f32 %v1328, %v2254
  %v2256 = vpop.f32.mrb[0].mxu0
  %v2257 = vpop.f32.mrb[0].mxu0
  %v2258 = vadd.f32 %v1331, %v2257
  %v2259 = vpop.f32.mrb[0].mxu0
  %2260 = vmatprep.mubr.bf16.mxu0 0
  %2261 = vmatmul.mubr.bf16.gmra.mrb[0].mxu0 %v1648
  %v2262 = vpop.f32.mrb[0].mxu0
  %v2263 = vadd.f32 %v1336, %v2262
  %v2264 = vpop.f32.mrb[0].mxu0
  %v2265 = vpop.f32.mrb[0].mxu0
  %v2266 = vadd.f32 %v1339, %v2265
  %v2267 = vpop.f32.mrb[0].mxu0
  %2268 = vmatprep.mubr.bf16.mxu0 0
  %2269 = vmatmul.mubr.bf16.gmra.mrb[0].mxu0 %v1651
  %v2270 = vpop.f32.mrb[0].mxu0
  %v2271 = vadd.f32 %v1344, %v2270
  %v2272 = vpop.f32.mrb[0].mxu0
  %v2273 = vpop.f32.mrb[0].mxu0
  %v2274 = vadd.f32 %v1347, %v2273
  %v2275 = vpop.f32.mrb[0].mxu0
  %2276 = vmatprep.mubr.bf16.mxu0 0
  %2277 = vmatmul.mubr.bf16.gmra.mrb[0].mxu0 %v1654
  %v2278 = vpop.f32.mrb[0].mxu0
  %v2279 = vadd.f32 %v1352, %v2278
  %v2280 = vpop.f32.mrb[0].mxu0
  %v2281 = vpop.f32.mrb[0].mxu0
  %v2282 = vadd.f32 %v1355, %v2281
  %v2283 = vpop.f32.mrb[0].mxu0
  %2284 = vmatprep.mubr.bf16.mxu0 0
  %2285 = vmatmul.mubr.bf16.gmra.mrb[0].mxu0 %v1657
  %v2286 = vpop.f32.mrb[0].mxu0
  %v2287 = vadd.f32 %v1360, %v2286
  %v2288 = vpop.f32.mrb[0].mxu0
  %v2289 = vpop.f32.mrb[0].mxu0
  %v2290 = vadd.f32 %v1363, %v2289
  %v2291 = vpop.f32.mrb[0].mxu0
  %2292 = vmatprep.mubr.bf16.mxu0 0
  %2293 = vmatmul.mubr.bf16.gmra.mrb[0].mxu0 %v1660
  %v2294 = vpop.f32.mrb[0].mxu0
  %v2295 = vadd.f32 %v1368, %v2294
  %v2296 = vpop.f32.mrb[0].mxu0
  %v2297 = vpop.f32.mrb[0].mxu0
  %v2298 = vadd.f32 %v1371, %v2297
  %v2299 = vpop.f32.mrb[0].mxu0
  %2300 = vmatprep.mubr.bf16.mxu0 0
  %2301 = vmatmul.mubr.bf16.gmra.mrb[0].mxu0 %v1663
  %v2302 = vpop.f32.mrb[0].mxu0
  %v2303 = vadd.f32 %v1376, %v2302
  %v2304 = vpop.f32.mrb[0].mxu0
  %v2305 = vpop.f32.mrb[0].mxu0
  %v2306 = vadd.f32 %v1379, %v2305
  %v2307 = vpop.f32.mrb[0].mxu0
  %2308 = vmatprep.mubr.bf16.mxu0 0
  %2309 = vmatmul.mubr.bf16.gmra.mrb[0].mxu0 %v1666
  %v2310 = vpop.f32.mrb[0].mxu0
  %v2311 = vadd.f32 %v1384, %v2310
  %v2312 = vpop.f32.mrb[0].mxu0
  %v2313 = vpop.f32.mrb[0].mxu0
  %v2314 = vadd.f32 %v1387, %v2313
  %v2315 = vpop.f32.mrb[0].mxu0
  %2316 = vmatprep.mubr.bf16.mxu0 0
  %2317 = vmatmul.mubr.bf16.gmra.mrb[0].mxu0 %v1669
  %v2318 = vpop.f32.mrb[0].mxu0
  %v2319 = vadd.f32 %v1392, %v2318
  %v2320 = vpop.f32.mrb[0].mxu0
  %v2321 = vpop.f32.mrb[0].mxu0
  %v2322 = vadd.f32 %v1395, %v2321
  %v2323 = vpop.f32.mrb[0].mxu0
  %2324 = vmatprep.mubr.bf16.mxu0 0
  %2325 = vmatmul.mubr.bf16.gmra.mrb[0].mxu0 %v1672
  %v2326 = vpop.f32.mrb[0].mxu0
  %v2327 = vadd.f32 %v1400, %v2326
  %v2328 = vpop.f32.mrb[0].mxu0
  %v2329 = vpop.f32.mrb[0].mxu0
  %v2330 = vadd.f32 %v1403, %v2329
  %v2331 = vpop.f32.mrb[0].mxu0
  %2332 = vmatprep.mubr.bf16.mxu0 0
  %2333 = vmatmul.mubr.bf16.gmra.mrb[0].mxu0 %v1675
  %v2334 = vpop.f32.mrb[0].mxu0
  %v2335 = vadd.f32 %v1408, %v2334
  %v2336 = vpop.f32.mrb[0].mxu0
  %v2337 = vpop.f32.mrb[0].mxu0
  %v2338 = vadd.f32 %v1411, %v2337
  %v2339 = vpop.f32.mrb[0].mxu0
  %2340 = vmatprep.mubr.bf16.mxu0 0
  %2341 = vmatmul.mubr.bf16.gmra.mrb[0].mxu0 %v1678
  %v2342 = vpop.f32.mrb[0].mxu0
  %v2343 = vadd.f32 %v1416, %v2342
  %v2344 = vpop.f32.mrb[0].mxu0
  %v2345 = vpop.f32.mrb[0].mxu0
  %v2346 = vadd.f32 %v1419, %v2345
  %v2347 = vpop.f32.mrb[0].mxu0
  %2348 = vmatprep.mubr.bf16.mxu0 0
  %2349 = vmatmul.mubr.bf16.gmra.mrb[0].mxu0 %v1681
  %v2350 = vpop.f32.mrb[0].mxu0
  %v2351 = vadd.f32 %v1424, %v2350
  %v2352 = vpop.f32.mrb[0].mxu0
  %v2353 = vpop.f32.mrb[0].mxu0
  %v2354 = vadd.f32 %v1427, %v2353
  %v2355 = vpop.f32.mrb[0].mxu0
  %2356 = vmatprep.mubr.bf16.mxu0 0
  %2357 = vmatmul.mubr.bf16.gmra.mrb[0].mxu0 %v1684
  %v2358 = vpop.f32.mrb[0].mxu0
  %v2359 = vadd.f32 %v1432, %v2358
  %v2360 = vpop.f32.mrb[0].mxu0
  %v2361 = vpop.f32.mrb[0].mxu0
  %v2362 = vadd.f32 %v1435, %v2361
  %v2363 = vpop.f32.mrb[0].mxu0
  %2364 = vmatprep.mubr.bf16.mxu0 0
  %2365 = vmatmul.mubr.bf16.gmra.mrb[0].mxu0 %v1687
  %v2366 = vpop.f32.mrb[0].mxu0
  %v2367 = vadd.f32 %v1440, %v2366
  %v2368 = vpop.f32.mrb[0].mxu0
  %v2369 = vpop.f32.mrb[0].mxu0
  %v2370 = vadd.f32 %v1443, %v2369
  %v2371 = vpop.f32.mrb[0].mxu0
  %2372 = vdwg.mxu0
  %v2373 = vld [vmem:[%s0 + $0x2] sm:$0xff]
  %v2374 = vld [vmem:[%s0 + $0xa] sm:$0xff]
  %v2375 = vld [vmem:[%s0 + $0x12] sm:$0xff]
  %v2376 = vld [vmem:[%s0 + $0x1a] sm:$0xff]
  %v2377 = vld [vmem:[%s0 + $0x22] sm:$0xff]
  %v2378 = vld [vmem:[%s0 + $0x2a] sm:$0xff]
  %v2379 = vld [vmem:[%s0 + $0x32] sm:$0xff]
  %v2380 = vld [vmem:[%s0 + $0x3a] sm:$0xff]
  %v2381 = vld [vmem:[%s0 + $0x42] sm:$0xff]
  %v2382 = vld [vmem:[%s0 + $0x4a] sm:$0xff]
  %v2383 = vld [vmem:[%s0 + $0x52] sm:$0xff]
  %v2384 = vld [vmem:[%s0 + $0x5a] sm:$0xff]
  %v2385 = vld [vmem:[%s0 + $0x62] sm:$0xff]
  %v2386 = vld [vmem:[%s0 + $0x6a] sm:$0xff]
  %v2387 = vld [vmem:[%s0 + $0x72] sm:$0xff]
  %v2388 = vld [vmem:[%s0 + $0x7a] sm:$0xff]
  %v2389 = vld [vmem:[%s0 + $0x82] sm:$0xff]
  %v2390 = vld [vmem:[%s0 + $0x8a] sm:$0xff]
  %v2391 = vld [vmem:[%s0 + $0x92] sm:$0xff]
  %v2392 = vld [vmem:[%s0 + $0x9a] sm:$0xff]
  %v2393 = vld [vmem:[%s0 + $0xa2] sm:$0xff]
  %v2394 = vld [vmem:[%s0 + $0xaa] sm:$0xff]
  %v2395 = vld [vmem:[%s0 + $0xb2] sm:$0xff]
  %v2396 = vld [vmem:[%s0 + $0xba] sm:$0xff]
  %v2397 = vld [vmem:[%s0 + $0xc2] sm:$0xff]
  %v2398 = vld [vmem:[%s0 + $0xca] sm:$0xff]
  %v2399 = vld [vmem:[%s0 + $0xd2] sm:$0xff]
  %v2400 = vld [vmem:[%s0 + $0xda] sm:$0xff]
  %v2401 = vld [vmem:[%s0 + $0xe2] sm:$0xff]
  %v2402 = vld [vmem:[%s0 + $0xea] sm:$0xff]
  %v2403 = vld [vmem:[%s0 + $0xf2] sm:$0xff]
  %v2404 = vld [vmem:[%s0 + $0xfa] sm:$0xff]
  %v2405 = vld [vmem:[%s0 + $0x102] sm:$0xff]
  %v2406 = vld [vmem:[%s0 + $0x10a] sm:$0xff]
  %v2407 = vld [vmem:[%s0 + $0x112] sm:$0xff]
  %v2408 = vld [vmem:[%s0 + $0x11a] sm:$0xff]
  %v2409 = vld [vmem:[%s0 + $0x122] sm:$0xff]
  %v2410 = vld [vmem:[%s0 + $0x12a] sm:$0xff]
  %v2411 = vld [vmem:[%s0 + $0x132] sm:$0xff]
  %v2412 = vld [vmem:[%s0 + $0x13a] sm:$0xff]
  %v2413 = vld [vmem:[%s0 + $0x142] sm:$0xff]
  %v2414 = vld [vmem:[%s0 + $0x14a] sm:$0xff]
  %v2415 = vld [vmem:[%s0 + $0x152] sm:$0xff]
  %v2416 = vld [vmem:[%s0 + $0x15a] sm:$0xff]
  %v2417 = vld [vmem:[%s0 + $0x162] sm:$0xff]
  %v2418 = vld [vmem:[%s0 + $0x16a] sm:$0xff]
  %v2419 = vld [vmem:[%s0 + $0x172] sm:$0xff]
  %v2420 = vld [vmem:[%s0 + $0x17a] sm:$0xff]
  %v2421 = vld [vmem:[%s0 + $0x182] sm:$0xff]
  %v2422 = vld [vmem:[%s0 + $0x18a] sm:$0xff]
  %v2423 = vld [vmem:[%s0 + $0x192] sm:$0xff]
  %v2424 = vld [vmem:[%s0 + $0x19a] sm:$0xff]
  %v2425 = vld [vmem:[%s0 + $0x1a2] sm:$0xff]
  %v2426 = vld [vmem:[%s0 + $0x1aa] sm:$0xff]
  %v2427 = vld [vmem:[%s0 + $0x1b2] sm:$0xff]
  %v2428 = vld [vmem:[%s0 + $0x1ba] sm:$0xff]
  %v2429 = vld [vmem:[%s0 + $0x1c2] sm:$0xff]
  %v2430 = vld [vmem:[%s0 + $0x1ca] sm:$0xff]
  %v2431 = vld [vmem:[%s0 + $0x1d2] sm:$0xff]
  %v2432 = vld [vmem:[%s0 + $0x1da] sm:$0xff]
  %v2433 = vld [vmem:[%s0 + $0x1e2] sm:$0xff]
  %v2434 = vld [vmem:[%s0 + $0x1ea] sm:$0xff]
  %v2435 = vld [vmem:[%s0 + $0x1f2] sm:$0xff]
  %v2436 = vld [vmem:[%s0 + $0x1fa] sm:$0xff]
  %v2437 = vld [vmem:[%s0 + $0x202] sm:$0xff]
  %v2438 = vld [vmem:[%s0 + $0x20a] sm:$0xff]
  %v2439 = vld [vmem:[%s0 + $0x212] sm:$0xff]
  %v2440 = vld [vmem:[%s0 + $0x21a] sm:$0xff]
  %v2441 = vld [vmem:[%s0 + $0x222] sm:$0xff]
  %v2442 = vld [vmem:[%s0 + $0x22a] sm:$0xff]
  %v2443 = vld [vmem:[%s0 + $0x232] sm:$0xff]
  %v2444 = vld [vmem:[%s0 + $0x23a] sm:$0xff]
  %v2445 = vld [vmem:[%s0 + $0x242] sm:$0xff]
  %v2446 = vld [vmem:[%s0 + $0x24a] sm:$0xff]
  %v2447 = vld [vmem:[%s0 + $0x252] sm:$0xff]
  %v2448 = vld [vmem:[%s0 + $0x25a] sm:$0xff]
  %v2449 = vld [vmem:[%s0 + $0x262] sm:$0xff]
  %v2450 = vld [vmem:[%s0 + $0x26a] sm:$0xff]
  %v2451 = vld [vmem:[%s0 + $0x272] sm:$0xff]
  %v2452 = vld [vmem:[%s0 + $0x27a] sm:$0xff]
  %v2453 = vld [vmem:[%s0 + $0x282] sm:$0xff]
  %v2454 = vld [vmem:[%s0 + $0x28a] sm:$0xff]
  %v2455 = vld [vmem:[%s0 + $0x292] sm:$0xff]
  %v2456 = vld [vmem:[%s0 + $0x29a] sm:$0xff]
  %v2457 = vld [vmem:[%s0 + $0x2a2] sm:$0xff]
  %v2458 = vld [vmem:[%s0 + $0x2aa] sm:$0xff]
  %v2459 = vld [vmem:[%s0 + $0x2b2] sm:$0xff]
  %v2460 = vld [vmem:[%s0 + $0x2ba] sm:$0xff]
  %v2461 = vld [vmem:[%s0 + $0x2c2] sm:$0xff]
  %v2462 = vld [vmem:[%s0 + $0x2ca] sm:$0xff]
  %v2463 = vld [vmem:[%s0 + $0x2d2] sm:$0xff]
  %v2464 = vld [vmem:[%s0 + $0x2da] sm:$0xff]
  %v2465 = vld [vmem:[%s0 + $0x2e2] sm:$0xff]
  %v2466 = vld [vmem:[%s0 + $0x2ea] sm:$0xff]
  %v2467 = vld [vmem:[%s0 + $0x2f2] sm:$0xff]
  %v2468 = vld [vmem:[%s0 + $0x2fa] sm:$0xff]
  %v2469 = vld [vmem:[%s0 + $0x302] sm:$0xff]
  %v2470 = vld [vmem:[%s0 + $0x30a] sm:$0xff]
  %v2471 = vld [vmem:[%s0 + $0x312] sm:$0xff]
  %v2472 = vld [vmem:[%s0 + $0x31a] sm:$0xff]
  %v2473 = vld [vmem:[%s0 + $0x322] sm:$0xff]
  %v2474 = vld [vmem:[%s0 + $0x32a] sm:$0xff]
  %v2475 = vld [vmem:[%s0 + $0x332] sm:$0xff]
  %v2476 = vld [vmem:[%s0 + $0x33a] sm:$0xff]
  %v2477 = vld [vmem:[%s0 + $0x342] sm:$0xff]
  %v2478 = vld [vmem:[%s0 + $0x34a] sm:$0xff]
  %v2479 = vld [vmem:[%s0 + $0x352] sm:$0xff]
  %v2480 = vld [vmem:[%s0 + $0x35a] sm:$0xff]
  %v2481 = vld [vmem:[%s0 + $0x362] sm:$0xff]
  %v2482 = vld [vmem:[%s0 + $0x36a] sm:$0xff]
  %v2483 = vld [vmem:[%s0 + $0x372] sm:$0xff]
  %v2484 = vld [vmem:[%s0 + $0x37a] sm:$0xff]
  %v2485 = vld [vmem:[%s0 + $0x382] sm:$0xff]
  %v2486 = vld [vmem:[%s0 + $0x38a] sm:$0xff]
  %v2487 = vld [vmem:[%s0 + $0x392] sm:$0xff]
  %v2488 = vld [vmem:[%s0 + $0x39a] sm:$0xff]
  %v2489 = vld [vmem:[%s0 + $0x3a2] sm:$0xff]
  %v2490 = vld [vmem:[%s0 + $0x3aa] sm:$0xff]
  %v2491 = vld [vmem:[%s0 + $0x3b2] sm:$0xff]
  %v2492 = vld [vmem:[%s0 + $0x3ba] sm:$0xff]
  %v2493 = vld [vmem:[%s0 + $0x3c2] sm:$0xff]
  %v2494 = vld [vmem:[%s0 + $0x3ca] sm:$0xff]
  %v2495 = vld [vmem:[%s0 + $0x3d2] sm:$0xff]
  %v2496 = vld [vmem:[%s0 + $0x3da] sm:$0xff]
  %v2497 = vld [vmem:[%s0 + $0x3e2] sm:$0xff]
  %v2498 = vld [vmem:[%s0 + $0x3ea] sm:$0xff]
  %v2499 = vld [vmem:[%s0 + $0x3f2] sm:$0xff]
  %v2500 = vld [vmem:[%s0 + $0x3fa] sm:$0xff]
  %v2501 = vld [vmem:[%s0 + $0x402] sm:$0xff]
  %v2502 = vld [vmem:[%s0 + $0x40a] sm:$0xff]
  %v2503 = vld [vmem:[%s0 + $0x412] sm:$0xff]
  %v2504 = vld [vmem:[%s0 + $0x41a] sm:$0xff]
  %v2505 = vld [vmem:[%s0 + $0x422] sm:$0xff]
  %v2506 = vld [vmem:[%s0 + $0x42a] sm:$0xff]
  %v2507 = vld [vmem:[%s0 + $0x432] sm:$0xff]
  %v2508 = vld [vmem:[%s0 + $0x43a] sm:$0xff]
  %v2509 = vld [vmem:[%s0 + $0x442] sm:$0xff]
  %v2510 = vld [vmem:[%s0 + $0x44a] sm:$0xff]
  %v2511 = vld [vmem:[%s0 + $0x452] sm:$0xff]
  %v2512 = vld [vmem:[%s0 + $0x45a] sm:$0xff]
  %v2513 = vld [vmem:[%s0 + $0x462] sm:$0xff]
  %v2514 = vld [vmem:[%s0 + $0x46a] sm:$0xff]
  %v2515 = vld [vmem:[%s0 + $0x472] sm:$0xff]
  %v2516 = vld [vmem:[%s0 + $0x47a] sm:$0xff]
  %v2517 = vld [vmem:[%s0 + $0x482] sm:$0xff]
  %v2518 = vld [vmem:[%s0 + $0x48a] sm:$0xff]
  %v2519 = vld [vmem:[%s0 + $0x492] sm:$0xff]
  %v2520 = vld [vmem:[%s0 + $0x49a] sm:$0xff]
  %v2521 = vld [vmem:[%s0 + $0x4a2] sm:$0xff]
  %v2522 = vld [vmem:[%s0 + $0x4aa] sm:$0xff]
  %v2523 = vld [vmem:[%s0 + $0x4b2] sm:$0xff]
  %v2524 = vld [vmem:[%s0 + $0x4ba] sm:$0xff]
  %v2525 = vld [vmem:[%s0 + $0x4c2] sm:$0xff]
  %v2526 = vld [vmem:[%s0 + $0x4ca] sm:$0xff]
  %v2527 = vld [vmem:[%s0 + $0x4d2] sm:$0xff]
  %v2528 = vld [vmem:[%s0 + $0x4da] sm:$0xff]
  %v2529 = vld [vmem:[%s0 + $0x4e2] sm:$0xff]
  %v2530 = vld [vmem:[%s0 + $0x4ea] sm:$0xff]
  %v2531 = vld [vmem:[%s0 + $0x4f2] sm:$0xff]
  %v2532 = vld [vmem:[%s0 + $0x4fa] sm:$0xff]
  %v2533 = vld [vmem:[%s0 + $0x502] sm:$0xff]
  %v2534 = vld [vmem:[%s0 + $0x50a] sm:$0xff]
  %v2535 = vpack.c.bf16 %v2374, %v2373
  %v2536 = vpack.c.bf16 %v2376, %v2375
  %v2537 = vpack.c.bf16 %v2378, %v2377
  %v2538 = vpack.c.bf16 %v2380, %v2379
  %v2539 = vpack.c.bf16 %v2382, %v2381
  %v2540 = vpack.c.bf16 %v2384, %v2383
  %v2541 = vpack.c.bf16 %v2386, %v2385
  %v2542 = vpack.c.bf16 %v2388, %v2387
  %v2543 = vpack.c.bf16 %v2390, %v2389
  %v2544 = vpack.c.bf16 %v2392, %v2391
  %v2545 = vpack.c.bf16 %v2394, %v2393
  %v2546 = vpack.c.bf16 %v2396, %v2395
  %v2547 = vpack.c.bf16 %v2398, %v2397
  %v2548 = vpack.c.bf16 %v2400, %v2399
  %v2549 = vpack.c.bf16 %v2402, %v2401
  %v2550 = vpack.c.bf16 %v2404, %v2403
  %v2551 = vpack.c.bf16 %v2406, %v2405
  %v2552 = vpack.c.bf16 %v2408, %v2407
  %v2553 = vpack.c.bf16 %v2410, %v2409
  %v2554 = vpack.c.bf16 %v2412, %v2411
  %v2555 = vpack.c.bf16 %v2414, %v2413
  %v2556 = vpack.c.bf16 %v2416, %v2415
  %v2557 = vpack.c.bf16 %v2418, %v2417
  %v2558 = vpack.c.bf16 %v2420, %v2419
  %v2559 = vpack.c.bf16 %v2422, %v2421
  %v2560 = vpack.c.bf16 %v2424, %v2423
  %v2561 = vpack.c.bf16 %v2426, %v2425
  %v2562 = vpack.c.bf16 %v2428, %v2427
  %v2563 = vpack.c.bf16 %v2430, %v2429
  %v2564 = vpack.c.bf16 %v2432, %v2431
  %v2565 = vpack.c.bf16 %v2434, %v2433
  %v2566 = vpack.c.bf16 %v2436, %v2435
  %v2567 = vpack.c.bf16 %v2438, %v2437
  %v2568 = vpack.c.bf16 %v2440, %v2439
  %v2569 = vpack.c.bf16 %v2442, %v2441
  %v2570 = vpack.c.bf16 %v2444, %v2443
  %v2571 = vpack.c.bf16 %v2446, %v2445
  %v2572 = vpack.c.bf16 %v2448, %v2447
  %v2573 = vpack.c.bf16 %v2450, %v2449
  %v2574 = vpack.c.bf16 %v2452, %v2451
  %v2575 = vpack.c.bf16 %v2454, %v2453
  %v2576 = vpack.c.bf16 %v2456, %v2455
  %v2577 = vpack.c.bf16 %v2458, %v2457
  %v2578 = vpack.c.bf16 %v2460, %v2459
  %v2579 = vpack.c.bf16 %v2462, %v2461
  %v2580 = vpack.c.bf16 %v2464, %v2463
  %v2581 = vpack.c.bf16 %v2466, %v2465
  %v2582 = vpack.c.bf16 %v2468, %v2467
  %v2583 = vpack.c.bf16 %v2470, %v2469
  %v2584 = vpack.c.bf16 %v2472, %v2471
  %v2585 = vpack.c.bf16 %v2474, %v2473
  %v2586 = vpack.c.bf16 %v2476, %v2475
  %v2587 = vpack.c.bf16 %v2478, %v2477
  %v2588 = vpack.c.bf16 %v2480, %v2479
  %v2589 = vpack.c.bf16 %v2482, %v2481
  %v2590 = vpack.c.bf16 %v2484, %v2483
  %v2591 = vpack.c.bf16 %v2486, %v2485
  %v2592 = vpack.c.bf16 %v2488, %v2487
  %v2593 = vpack.c.bf16 %v2490, %v2489
  %v2594 = vpack.c.bf16 %v2492, %v2491
  %v2595 = vpack.c.bf16 %v2494, %v2493
  %v2596 = vpack.c.bf16 %v2496, %v2495
  %v2597 = vpack.c.bf16 %v2498, %v2497
  %v2598 = vpack.c.bf16 %v2500, %v2499
  %v2599 = vpack.c.bf16 %v2502, %v2501
  %v2600 = vpack.c.bf16 %v2504, %v2503
  %v2601 = vpack.c.bf16 %v2506, %v2505
  %v2602 = vpack.c.bf16 %v2508, %v2507
  %v2603 = vpack.c.bf16 %v2510, %v2509
  %v2604 = vpack.c.bf16 %v2512, %v2511
  %v2605 = vpack.c.bf16 %v2514, %v2513
  %v2606 = vpack.c.bf16 %v2516, %v2515
  %v2607 = vpack.c.bf16 %v2518, %v2517
  %v2608 = vpack.c.bf16 %v2520, %v2519
  %v2609 = vpack.c.bf16 %v2522, %v2521
  %v2610 = vpack.c.bf16 %v2524, %v2523
  %v2611 = vpack.c.bf16 %v2526, %v2525
  %v2612 = vpack.c.bf16 %v2528, %v2527
  %v2613 = vpack.c.bf16 %v2530, %v2529
  %v2614 = vpack.c.bf16 %v2532, %v2531
  %v2615 = vpack.c.bf16 %v2534, %v2533
  %v2616 = vld [vmem:[%s1 + $0x8] sm:$0xf]
  %v2618 = vsel %vm517, %v2535, 0
  %v2621 = vsel %vm517, %v2536, 0
  %v2624 = vsel %vm517, %v2537, 0
  %v2627 = vsel %vm517, %v2538, 0
  %v2630 = vsel %vm517, %v2539, 0
  %v2633 = vsel %vm517, %v2540, 0
  %v2636 = vsel %vm517, %v2541, 0
  %v2639 = vsel %vm517, %v2542, 0
  %v2642 = vsel %vm517, %v2543, 0
  %v2645 = vsel %vm517, %v2544, 0
  %v2648 = vsel %vm517, %v2545, 0
  %v2651 = vsel %vm517, %v2546, 0
  %v2654 = vsel %vm517, %v2547, 0
  %v2657 = vsel %vm517, %v2548, 0
  %v2660 = vsel %vm517, %v2549, 0
  %v2663 = vsel %vm517, %v2550, 0
  %v2666 = vsel %vm517, %v2551, 0
  %v2669 = vsel %vm517, %v2552, 0
  %v2672 = vsel %vm517, %v2553, 0
  %v2675 = vsel %vm517, %v2554, 0
  %v2678 = vsel %vm517, %v2555, 0
  %v2681 = vsel %vm517, %v2556, 0
  %v2684 = vsel %vm517, %v2557, 0
  %v2687 = vsel %vm517, %v2558, 0
  %v2690 = vsel %vm517, %v2559, 0
  %v2693 = vsel %vm517, %v2560, 0
  %v2696 = vsel %vm517, %v2561, 0
  %v2699 = vsel %vm517, %v2562, 0
  %v2702 = vsel %vm517, %v2563, 0
  %v2705 = vsel %vm517, %v2564, 0
  %v2708 = vsel %vm517, %v2565, 0
  %v2711 = vsel %vm517, %v2566, 0
  %v2714 = vsel %vm517, %v2567, 0
  %v2717 = vsel %vm517, %v2568, 0
  %v2720 = vsel %vm517, %v2569, 0
  %v2723 = vsel %vm517, %v2570, 0
  %v2726 = vsel %vm517, %v2571, 0
  %v2729 = vsel %vm517, %v2572, 0
  %v2732 = vsel %vm517, %v2573, 0
  %v2735 = vsel %vm517, %v2574, 0
  %v2738 = vsel %vm517, %v2575, 0
  %v2741 = vsel %vm517, %v2576, 0
  %v2744 = vsel %vm517, %v2577, 0
  %v2747 = vsel %vm517, %v2578, 0
  %v2750 = vsel %vm517, %v2579, 0
  %v2753 = vsel %vm517, %v2580, 0
  %v2756 = vsel %vm517, %v2581, 0
  %v2759 = vsel %vm517, %v2582, 0
  %v2762 = vsel %vm517, %v2583, 0
  %v2765 = vsel %vm517, %v2584, 0
  %v2768 = vsel %vm517, %v2585, 0
  %v2771 = vsel %vm517, %v2586, 0
  %v2774 = vsel %vm517, %v2587, 0
  %v2777 = vsel %vm517, %v2588, 0
  %v2780 = vsel %vm517, %v2589, 0
  %v2783 = vsel %vm517, %v2590, 0
  %v2786 = vsel %vm517, %v2591, 0
  %v2789 = vsel %vm517, %v2592, 0
  %v2792 = vsel %vm517, %v2593, 0
  %v2795 = vsel %vm517, %v2594, 0
  %v2798 = vsel %vm517, %v2595, 0
  %v2801 = vsel %vm517, %v2596, 0
  %v2804 = vsel %vm517, %v2597, 0
  %v2807 = vsel %vm517, %v2598, 0
  %v2810 = vsel %vm517, %v2599, 0
  %v2813 = vsel %vm517, %v2600, 0
  %v2816 = vsel %vm517, %v2601, 0
  %v2819 = vsel %vm517, %v2602, 0
  %v2822 = vsel %vm517, %v2603, 0
  %v2825 = vsel %vm517, %v2604, 0
  %v2828 = vsel %vm517, %v2605, 0
  %v2831 = vsel %vm517, %v2606, 0
  %v2834 = vsel %vm517, %v2607, 0
  %v2837 = vsel %vm517, %v2608, 0
  %v2840 = vsel %vm517, %v2609, 0
  %v2843 = vsel %vm517, %v2610, 0
  %v2846 = vsel %vm517, %v2611, 0
  %v2849 = vsel %vm517, %v2612, 0
  %v2852 = vsel %vm517, %v2613, 0
  %v2855 = vsel %vm517, %v2614, 0
  %v2858 = vsel %vm517, %v2615, 0
  %v2861 = vsel %vm761, %v2616, 0
  %2863 = vmatprep.subr.bf16.mxu0 0
  %2864 = vmatpush1.bf16.msra.mxu0 %v2861
  %2865 = vmatprep.subr.bf16.mxu0 0
  %2866 = vmatpush1.bf16.msra.mxu0 0
  %2867 = vmatprep.subr.bf16.mxu0 0
  %2868 = vmatpush1.bf16.msra.mxu0 0
  %2869 = vmatprep.subr.bf16.mxu0 0
  %2870 = vmatpush1.bf16.msra.mxu0 0
  %2871 = vmatprep.subr.bf16.mxu0 0
  %2872 = vmatpush1.bf16.msra.mxu0 0
  %2873 = vmatprep.subr.bf16.mxu0 0
  %2874 = vmatpush1.bf16.msra.mxu0 0
  %2875 = vmatprep.subr.bf16.mxu0 0
  %2876 = vmatpush1.bf16.msra.mxu0 0
  %2877 = vmatprep.subr.bf16.mxu0 0
  %2878 = vmatpush1.bf16.msra.mxu0 0
  %2879 = vmatprep.subr.bf16.mxu0 0
  %2880 = vmatpush1.bf16.msra.mxu0 0
  %2881 = vmatprep.subr.bf16.mxu0 0
  %2882 = vmatpush1.bf16.msra.mxu0 0
  %2883 = vmatprep.subr.bf16.mxu0 0
  %2884 = vmatpush1.bf16.msra.mxu0 0
  %2885 = vmatprep.subr.bf16.mxu0 0
  %2886 = vmatpush1.bf16.msra.mxu0 0
  %2887 = vmatprep.subr.bf16.mxu0 0
  %2888 = vmatpush1.bf16.msra.mxu0 0
  %2889 = vmatprep.subr.bf16.mxu0 0
  %2890 = vmatpush1.bf16.msra.mxu0 0
  %2891 = vmatprep.subr.bf16.mxu0 0
  %2892 = vmatpush1.bf16.msra.mxu0 0
  %2893 = vmatprep.subr.bf16.mxu0 0
  %2894 = vmatpush1.bf16.msra.mxu0 0
  %2895 = vmatprep.mubr.bf16.mxu0 0
  %2896 = vmatmul.mubr.bf16.gmra.mrb[0].mxu0 %v2618
  %v2897 = vpop.f32.mrb[0].mxu0
  %v2898 = vadd.f32 0.0, %v2897
  %v2899 = vpop.f32.mrb[0].mxu0
  %v2900 = vpop.f32.mrb[0].mxu0
  %v2901 = vadd.f32 0.0, %v2900
  %v2902 = vpop.f32.mrb[0].mxu0
  %2903 = vmatprep.mubr.bf16.mxu0 0
  %2904 = vmatmul.mubr.bf16.gmra.mrb[0].mxu0 %v2621
  %v2905 = vpop.f32.mrb[0].mxu0
  %v2906 = vadd.f32 0.0, %v2905
  %v2907 = vpop.f32.mrb[0].mxu0
  %v2908 = vpop.f32.mrb[0].mxu0
  %v2909 = vadd.f32 0.0, %v2908
  %v2910 = vpop.f32.mrb[0].mxu0
  %2911 = vmatprep.mubr.bf16.mxu0 0
  %2912 = vmatmul.mubr.bf16.gmra.mrb[0].mxu0 %v2624
  %v2913 = vpop.f32.mrb[0].mxu0
  %v2914 = vadd.f32 0.0, %v2913
  %v2915 = vpop.f32.mrb[0].mxu0
  %v2916 = vpop.f32.mrb[0].mxu0
  %v2917 = vadd.f32 0.0, %v2916
  %v2918 = vpop.f32.mrb[0].mxu0
  %2919 = vmatprep.mubr.bf16.mxu0 0
  %2920 = vmatmul.mubr.bf16.gmra.mrb[0].mxu0 %v2627
  %v2921 = vpop.f32.mrb[0].mxu0
  %v2922 = vadd.f32 0.0, %v2921
  %v2923 = vpop.f32.mrb[0].mxu0
  %v2924 = vpop.f32.mrb[0].mxu0
  %v2925 = vadd.f32 0.0, %v2924
  %v2926 = vpop.f32.mrb[0].mxu0
  %2927 = vmatprep.mubr.bf16.mxu0 0
  %2928 = vmatmul.mubr.bf16.gmra.mrb[0].mxu0 %v2630
  %v2929 = vpop.f32.mrb[0].mxu0
  %v2930 = vadd.f32 0.0, %v2929
  %v2931 = vpop.f32.mrb[0].mxu0
  %v2932 = vpop.f32.mrb[0].mxu0
  %v2933 = vadd.f32 0.0, %v2932
  %v2934 = vpop.f32.mrb[0].mxu0
  %2935 = vmatprep.mubr.bf16.mxu0 0
  %2936 = vmatmul.mubr.bf16.gmra.mrb[0].mxu0 %v2633
  %v2937 = vpop.f32.mrb[0].mxu0
  %v2938 = vadd.f32 0.0, %v2937
  %v2939 = vpop.f32.mrb[0].mxu0
  %v2940 = vpop.f32.mrb[0].mxu0
  %v2941 = vadd.f32 0.0, %v2940
  %v2942 = vpop.f32.mrb[0].mxu0
  %2943 = vmatprep.mubr.bf16.mxu0 0
  %2944 = vmatmul.mubr.bf16.gmra.mrb[0].mxu0 %v2636
  %v2945 = vpop.f32.mrb[0].mxu0
  %v2946 = vadd.f32 0.0, %v2945
  %v2947 = vpop.f32.mrb[0].mxu0
  %v2948 = vpop.f32.mrb[0].mxu0
  %v2949 = vadd.f32 0.0, %v2948
  %v2950 = vpop.f32.mrb[0].mxu0
  %2951 = vmatprep.mubr.bf16.mxu0 0
  %2952 = vmatmul.mubr.bf16.gmra.mrb[0].mxu0 %v2639
  %v2953 = vpop.f32.mrb[0].mxu0
  %v2954 = vadd.f32 0.0, %v2953
  %v2955 = vpop.f32.mrb[0].mxu0
  %v2956 = vpop.f32.mrb[0].mxu0
  %v2957 = vadd.f32 0.0, %v2956
  %v2958 = vpop.f32.mrb[0].mxu0
  %2959 = vmatprep.mubr.bf16.mxu0 0
  %2960 = vmatmul.mubr.bf16.gmra.mrb[0].mxu0 %v2642
  %v2961 = vpop.f32.mrb[0].mxu0
  %v2962 = vadd.f32 0.0, %v2961
  %v2963 = vpop.f32.mrb[0].mxu0
  %v2964 = vpop.f32.mrb[0].mxu0
  %v2965 = vadd.f32 0.0, %v2964
  %v2966 = vpop.f32.mrb[0].mxu0
  %2967 = vmatprep.mubr.bf16.mxu0 0
  %2968 = vmatmul.mubr.bf16.gmra.mrb[0].mxu0 %v2645
  %v2969 = vpop.f32.mrb[0].mxu0
  %v2970 = vadd.f32 0.0, %v2969
  %v2971 = vpop.f32.mrb[0].mxu0
  %v2972 = vpop.f32.mrb[0].mxu0
  %v2973 = vadd.f32 0.0, %v2972
  %v2974 = vpop.f32.mrb[0].mxu0
  %2975 = vmatprep.mubr.bf16.mxu0 0
  %2976 = vmatmul.mubr.bf16.gmra.mrb[0].mxu0 %v2648
  %v2977 = vpop.f32.mrb[0].mxu0
  %v2978 = vadd.f32 0.0, %v2977
  %v2979 = vpop.f32.mrb[0].mxu0
  %v2980 = vpop.f32.mrb[0].mxu0
  %v2981 = vadd.f32 0.0, %v2980
  %v2982 = vpop.f32.mrb[0].mxu0
  %2983 = vmatprep.mubr.bf16.mxu0 0
  %2984 = vmatmul.mubr.bf16.gmra.mrb[0].mxu0 %v2651
  %v2985 = vpop.f32.mrb[0].mxu0
  %v2986 = vadd.f32 0.0, %v2985
  %v2987 = vpop.f32.mrb[0].mxu0
  %v2988 = vpop.f32.mrb[0].mxu0
  %v2989 = vadd.f32 0.0, %v2988
  %v2990 = vpop.f32.mrb[0].mxu0
  %2991 = vmatprep.mubr.bf16.mxu0 0
  %2992 = vmatmul.mubr.bf16.gmra.mrb[0].mxu0 %v2654
  %v2993 = vpop.f32.mrb[0].mxu0
  %v2994 = vadd.f32 0.0, %v2993
  %v2995 = vpop.f32.mrb[0].mxu0
  %v2996 = vpop.f32.mrb[0].mxu0
  %v2997 = vadd.f32 0.0, %v2996
  %v2998 = vpop.f32.mrb[0].mxu0
  %2999 = vmatprep.mubr.bf16.mxu0 0
  %3000 = vmatmul.mubr.bf16.gmra.mrb[0].mxu0 %v2657
  %v3001 = vpop.f32.mrb[0].mxu0
  %v3002 = vadd.f32 0.0, %v3001
  %v3003 = vpop.f32.mrb[0].mxu0
  %v3004 = vpop.f32.mrb[0].mxu0
  %v3005 = vadd.f32 0.0, %v3004
  %v3006 = vpop.f32.mrb[0].mxu0
  %3007 = vmatprep.mubr.bf16.mxu0 0
  %3008 = vmatmul.mubr.bf16.gmra.mrb[0].mxu0 %v2660
  %v3009 = vpop.f32.mrb[0].mxu0
  %v3010 = vadd.f32 0.0, %v3009
  %v3011 = vpop.f32.mrb[0].mxu0
  %v3012 = vpop.f32.mrb[0].mxu0
  %v3013 = vadd.f32 0.0, %v3012
  %v3014 = vpop.f32.mrb[0].mxu0
  %3015 = vmatprep.mubr.bf16.mxu0 0
  %3016 = vmatmul.mubr.bf16.gmra.mrb[0].mxu0 %v2663
  %v3017 = vpop.f32.mrb[0].mxu0
  %v3018 = vadd.f32 0.0, %v3017
  %v3019 = vpop.f32.mrb[0].mxu0
  %v3020 = vpop.f32.mrb[0].mxu0
  %v3021 = vadd.f32 0.0, %v3020
  %v3022 = vpop.f32.mrb[0].mxu0
  %3023 = vmatprep.mubr.bf16.mxu0 0
  %3024 = vmatmul.mubr.bf16.gmra.mrb[0].mxu0 %v2666
  %v3025 = vpop.f32.mrb[0].mxu0
  %v3026 = vadd.f32 0.0, %v3025
  %v3027 = vpop.f32.mrb[0].mxu0
  %v3028 = vpop.f32.mrb[0].mxu0
  %v3029 = vadd.f32 0.0, %v3028
  %v3030 = vpop.f32.mrb[0].mxu0
  %3031 = vmatprep.mubr.bf16.mxu0 0
  %3032 = vmatmul.mubr.bf16.gmra.mrb[0].mxu0 %v2669
  %v3033 = vpop.f32.mrb[0].mxu0
  %v3034 = vadd.f32 0.0, %v3033
  %v3035 = vpop.f32.mrb[0].mxu0
  %v3036 = vpop.f32.mrb[0].mxu0
  %v3037 = vadd.f32 0.0, %v3036
  %v3038 = vpop.f32.mrb[0].mxu0
  %3039 = vmatprep.mubr.bf16.mxu0 0
  %3040 = vmatmul.mubr.bf16.gmra.mrb[0].mxu0 %v2672
  %v3041 = vpop.f32.mrb[0].mxu0
  %v3042 = vadd.f32 0.0, %v3041
  %v3043 = vpop.f32.mrb[0].mxu0
  %v3044 = vpop.f32.mrb[0].mxu0
  %v3045 = vadd.f32 0.0, %v3044
  %v3046 = vpop.f32.mrb[0].mxu0
  %3047 = vmatprep.mubr.bf16.mxu0 0
  %3048 = vmatmul.mubr.bf16.gmra.mrb[0].mxu0 %v2675
  %v3049 = vpop.f32.mrb[0].mxu0
  %v3050 = vadd.f32 0.0, %v3049
  %v3051 = vpop.f32.mrb[0].mxu0
  %v3052 = vpop.f32.mrb[0].mxu0
  %v3053 = vadd.f32 0.0, %v3052
  %v3054 = vpop.f32.mrb[0].mxu0
  %3055 = vmatprep.mubr.bf16.mxu0 0
  %3056 = vmatmul.mubr.bf16.gmra.mrb[0].mxu0 %v2678
  %v3057 = vpop.f32.mrb[0].mxu0
  %v3058 = vadd.f32 0.0, %v3057
  %v3059 = vpop.f32.mrb[0].mxu0
  %v3060 = vpop.f32.mrb[0].mxu0
  %v3061 = vadd.f32 0.0, %v3060
  %v3062 = vpop.f32.mrb[0].mxu0
  %3063 = vmatprep.mubr.bf16.mxu0 0
  %3064 = vmatmul.mubr.bf16.gmra.mrb[0].mxu0 %v2681
  %v3065 = vpop.f32.mrb[0].mxu0
  %v3066 = vadd.f32 0.0, %v3065
  %v3067 = vpop.f32.mrb[0].mxu0
  %v3068 = vpop.f32.mrb[0].mxu0
  %v3069 = vadd.f32 0.0, %v3068
  %v3070 = vpop.f32.mrb[0].mxu0
  %3071 = vmatprep.mubr.bf16.mxu0 0
  %3072 = vmatmul.mubr.bf16.gmra.mrb[0].mxu0 %v2684
  %v3073 = vpop.f32.mrb[0].mxu0
  %v3074 = vadd.f32 0.0, %v3073
  %v3075 = vpop.f32.mrb[0].mxu0
  %v3076 = vpop.f32.mrb[0].mxu0
  %v3077 = vadd.f32 0.0, %v3076
  %v3078 = vpop.f32.mrb[0].mxu0
  %3079 = vmatprep.mubr.bf16.mxu0 0
  %3080 = vmatmul.mubr.bf16.gmra.mrb[0].mxu0 %v2687
  %v3081 = vpop.f32.mrb[0].mxu0
  %v3082 = vadd.f32 0.0, %v3081
  %v3083 = vpop.f32.mrb[0].mxu0
  %v3084 = vpop.f32.mrb[0].mxu0
  %v3085 = vadd.f32 0.0, %v3084
  %v3086 = vpop.f32.mrb[0].mxu0
  %3087 = vmatprep.mubr.bf16.mxu0 0
  %3088 = vmatmul.mubr.bf16.gmra.mrb[0].mxu0 %v2690
  %v3089 = vpop.f32.mrb[0].mxu0
  %v3090 = vadd.f32 0.0, %v3089
  %v3091 = vpop.f32.mrb[0].mxu0
  %v3092 = vpop.f32.mrb[0].mxu0
  %v3093 = vadd.f32 0.0, %v3092
  %v3094 = vpop.f32.mrb[0].mxu0
  %3095 = vmatprep.mubr.bf16.mxu0 0
  %3096 = vmatmul.mubr.bf16.gmra.mrb[0].mxu0 %v2693
  %v3097 = vpop.f32.mrb[0].mxu0
  %v3098 = vadd.f32 0.0, %v3097
  %v3099 = vpop.f32.mrb[0].mxu0
  %v3100 = vpop.f32.mrb[0].mxu0
  %v3101 = vadd.f32 0.0, %v3100
  %v3102 = vpop.f32.mrb[0].mxu0
  %3103 = vmatprep.mubr.bf16.mxu0 0
  %3104 = vmatmul.mubr.bf16.gmra.mrb[0].mxu0 %v2696
  %v3105 = vpop.f32.mrb[0].mxu0
  %v3106 = vadd.f32 0.0, %v3105
  %v3107 = vpop.f32.mrb[0].mxu0
  %v3108 = vpop.f32.mrb[0].mxu0
  %v3109 = vadd.f32 0.0, %v3108
  %v3110 = vpop.f32.mrb[0].mxu0
  %3111 = vmatprep.mubr.bf16.mxu0 0
  %3112 = vmatmul.mubr.bf16.gmra.mrb[0].mxu0 %v2699
  %v3113 = vpop.f32.mrb[0].mxu0
  %v3114 = vadd.f32 0.0, %v3113
  %v3115 = vpop.f32.mrb[0].mxu0
  %v3116 = vpop.f32.mrb[0].mxu0
  %v3117 = vadd.f32 0.0, %v3116
  %v3118 = vpop.f32.mrb[0].mxu0
  %3119 = vmatprep.mubr.bf16.mxu0 0
  %3120 = vmatmul.mubr.bf16.gmra.mrb[0].mxu0 %v2702
  %v3121 = vpop.f32.mrb[0].mxu0
  %v3122 = vadd.f32 0.0, %v3121
  %v3123 = vpop.f32.mrb[0].mxu0
  %v3124 = vpop.f32.mrb[0].mxu0
  %v3125 = vadd.f32 0.0, %v3124
  %v3126 = vpop.f32.mrb[0].mxu0
  %3127 = vmatprep.mubr.bf16.mxu0 0
  %3128 = vmatmul.mubr.bf16.gmra.mrb[0].mxu0 %v2705
  %v3129 = vpop.f32.mrb[0].mxu0
  %v3130 = vadd.f32 0.0, %v3129
  %v3131 = vpop.f32.mrb[0].mxu0
  %v3132 = vpop.f32.mrb[0].mxu0
  %v3133 = vadd.f32 0.0, %v3132
  %v3134 = vpop.f32.mrb[0].mxu0
  %3135 = vmatprep.mubr.bf16.mxu0 0
  %3136 = vmatmul.mubr.bf16.gmra.mrb[0].mxu0 %v2708
  %v3137 = vpop.f32.mrb[0].mxu0
  %v3138 = vadd.f32 0.0, %v3137
  %v3139 = vpop.f32.mrb[0].mxu0
  %v3140 = vpop.f32.mrb[0].mxu0
  %v3141 = vadd.f32 0.0, %v3140
  %v3142 = vpop.f32.mrb[0].mxu0
  %3143 = vmatprep.mubr.bf16.mxu0 0
  %3144 = vmatmul.mubr.bf16.gmra.mrb[0].mxu0 %v2711
  %v3145 = vpop.f32.mrb[0].mxu0
  %v3146 = vadd.f32 0.0, %v3145
  %v3147 = vpop.f32.mrb[0].mxu0
  %v3148 = vpop.f32.mrb[0].mxu0
  %v3149 = vadd.f32 0.0, %v3148
  %v3150 = vpop.f32.mrb[0].mxu0
  %3151 = vmatprep.mubr.bf16.mxu0 0
  %3152 = vmatmul.mubr.bf16.gmra.mrb[0].mxu0 %v2714
  %v3153 = vpop.f32.mrb[0].mxu0
  %v3154 = vadd.f32 0.0, %v3153
  %v3155 = vpop.f32.mrb[0].mxu0
  %v3156 = vpop.f32.mrb[0].mxu0
  %v3157 = vadd.f32 0.0, %v3156
  %v3158 = vpop.f32.mrb[0].mxu0
  %3159 = vmatprep.mubr.bf16.mxu0 0
  %3160 = vmatmul.mubr.bf16.gmra.mrb[0].mxu0 %v2717
  %v3161 = vpop.f32.mrb[0].mxu0
  %v3162 = vadd.f32 0.0, %v3161
  %v3163 = vpop.f32.mrb[0].mxu0
  %v3164 = vpop.f32.mrb[0].mxu0
  %v3165 = vadd.f32 0.0, %v3164
  %v3166 = vpop.f32.mrb[0].mxu0
  %3167 = vmatprep.mubr.bf16.mxu0 0
  %3168 = vmatmul.mubr.bf16.gmra.mrb[0].mxu0 %v2720
  %v3169 = vpop.f32.mrb[0].mxu0
  %v3170 = vadd.f32 0.0, %v3169
  %v3171 = vpop.f32.mrb[0].mxu0
  %v3172 = vpop.f32.mrb[0].mxu0
  %v3173 = vadd.f32 0.0, %v3172
  %v3174 = vpop.f32.mrb[0].mxu0
  %3175 = vmatprep.mubr.bf16.mxu0 0
  %3176 = vmatmul.mubr.bf16.gmra.mrb[0].mxu0 %v2723
  %v3177 = vpop.f32.mrb[0].mxu0
  %v3178 = vadd.f32 0.0, %v3177
  %v3179 = vpop.f32.mrb[0].mxu0
  %v3180 = vpop.f32.mrb[0].mxu0
  %v3181 = vadd.f32 0.0, %v3180
  %v3182 = vpop.f32.mrb[0].mxu0
  %3183 = vmatprep.mubr.bf16.mxu0 0
  %3184 = vmatmul.mubr.bf16.gmra.mrb[0].mxu0 %v2726
  %v3185 = vpop.f32.mrb[0].mxu0
  %v3186 = vadd.f32 0.0, %v3185
  %v3187 = vpop.f32.mrb[0].mxu0
  %v3188 = vpop.f32.mrb[0].mxu0
  %v3189 = vadd.f32 0.0, %v3188
  %v3190 = vpop.f32.mrb[0].mxu0
  %3191 = vmatprep.mubr.bf16.mxu0 0
  %3192 = vmatmul.mubr.bf16.gmra.mrb[0].mxu0 %v2729
  %v3193 = vpop.f32.mrb[0].mxu0
  %v3194 = vadd.f32 0.0, %v3193
  %v3195 = vpop.f32.mrb[0].mxu0
  %v3196 = vpop.f32.mrb[0].mxu0
  %v3197 = vadd.f32 0.0, %v3196
  %v3198 = vpop.f32.mrb[0].mxu0
  %3199 = vmatprep.mubr.bf16.mxu0 0
  %3200 = vmatmul.mubr.bf16.gmra.mrb[0].mxu0 %v2732
  %v3201 = vpop.f32.mrb[0].mxu0
  %v3202 = vadd.f32 0.0, %v3201
  %v3203 = vpop.f32.mrb[0].mxu0
  %v3204 = vpop.f32.mrb[0].mxu0
  %v3205 = vadd.f32 0.0, %v3204
  %v3206 = vpop.f32.mrb[0].mxu0
  %3207 = vmatprep.mubr.bf16.mxu0 0
  %3208 = vmatmul.mubr.bf16.gmra.mrb[0].mxu0 %v2735
  %v3209 = vpop.f32.mrb[0].mxu0
  %v3210 = vadd.f32 0.0, %v3209
  %v3211 = vpop.f32.mrb[0].mxu0
  %v3212 = vpop.f32.mrb[0].mxu0
  %v3213 = vadd.f32 0.0, %v3212
  %v3214 = vpop.f32.mrb[0].mxu0
  %3215 = vmatprep.mubr.bf16.mxu0 0
  %3216 = vmatmul.mubr.bf16.gmra.mrb[0].mxu0 %v2738
  %v3217 = vpop.f32.mrb[0].mxu0
  %v3218 = vadd.f32 0.0, %v3217
  %v3219 = vpop.f32.mrb[0].mxu0
  %v3220 = vpop.f32.mrb[0].mxu0
  %v3221 = vadd.f32 0.0, %v3220
  %v3222 = vpop.f32.mrb[0].mxu0
  %3223 = vmatprep.mubr.bf16.mxu0 0
  %3224 = vmatmul.mubr.bf16.gmra.mrb[0].mxu0 %v2741
  %v3225 = vpop.f32.mrb[0].mxu0
  %v3226 = vadd.f32 0.0, %v3225
  %v3227 = vpop.f32.mrb[0].mxu0
  %v3228 = vpop.f32.mrb[0].mxu0
  %v3229 = vadd.f32 0.0, %v3228
  %v3230 = vpop.f32.mrb[0].mxu0
  %3231 = vmatprep.mubr.bf16.mxu0 0
  %3232 = vmatmul.mubr.bf16.gmra.mrb[0].mxu0 %v2744
  %v3233 = vpop.f32.mrb[0].mxu0
  %v3234 = vadd.f32 0.0, %v3233
  %v3235 = vpop.f32.mrb[0].mxu0
  %v3236 = vpop.f32.mrb[0].mxu0
  %v3237 = vadd.f32 0.0, %v3236
  %v3238 = vpop.f32.mrb[0].mxu0
  %3239 = vmatprep.mubr.bf16.mxu0 0
  %3240 = vmatmul.mubr.bf16.gmra.mrb[0].mxu0 %v2747
  %v3241 = vpop.f32.mrb[0].mxu0
  %v3242 = vadd.f32 0.0, %v3241
  %v3243 = vpop.f32.mrb[0].mxu0
  %v3244 = vpop.f32.mrb[0].mxu0
  %v3245 = vadd.f32 0.0, %v3244
  %v3246 = vpop.f32.mrb[0].mxu0
  %3247 = vmatprep.mubr.bf16.mxu0 0
  %3248 = vmatmul.mubr.bf16.gmra.mrb[0].mxu0 %v2750
  %v3249 = vpop.f32.mrb[0].mxu0
  %v3250 = vadd.f32 0.0, %v3249
  %v3251 = vpop.f32.mrb[0].mxu0
  %v3252 = vpop.f32.mrb[0].mxu0
  %v3253 = vadd.f32 0.0, %v3252
  %v3254 = vpop.f32.mrb[0].mxu0
  %3255 = vmatprep.mubr.bf16.mxu0 0
  %3256 = vmatmul.mubr.bf16.gmra.mrb[0].mxu0 %v2753
  %v3257 = vpop.f32.mrb[0].mxu0
  %v3258 = vadd.f32 0.0, %v3257
  %v3259 = vpop.f32.mrb[0].mxu0
  %v3260 = vpop.f32.mrb[0].mxu0
  %v3261 = vadd.f32 0.0, %v3260
  %v3262 = vpop.f32.mrb[0].mxu0
  %3263 = vmatprep.mubr.bf16.mxu0 0
  %3264 = vmatmul.mubr.bf16.gmra.mrb[0].mxu0 %v2756
  %v3265 = vpop.f32.mrb[0].mxu0
  %v3266 = vadd.f32 0.0, %v3265
  %v3267 = vpop.f32.mrb[0].mxu0
  %v3268 = vpop.f32.mrb[0].mxu0
  %v3269 = vadd.f32 0.0, %v3268
  %v3270 = vpop.f32.mrb[0].mxu0
  %3271 = vmatprep.mubr.bf16.mxu0 0
  %3272 = vmatmul.mubr.bf16.gmra.mrb[0].mxu0 %v2759
  %v3273 = vpop.f32.mrb[0].mxu0
  %v3274 = vadd.f32 0.0, %v3273
  %v3275 = vpop.f32.mrb[0].mxu0
  %v3276 = vpop.f32.mrb[0].mxu0
  %v3277 = vadd.f32 0.0, %v3276
  %v3278 = vpop.f32.mrb[0].mxu0
  %3279 = vmatprep.mubr.bf16.mxu0 0
  %3280 = vmatmul.mubr.bf16.gmra.mrb[0].mxu0 %v2762
  %v3281 = vpop.f32.mrb[0].mxu0
  %v3282 = vadd.f32 0.0, %v3281
  %v3283 = vpop.f32.mrb[0].mxu0
  %v3284 = vpop.f32.mrb[0].mxu0
  %v3285 = vadd.f32 0.0, %v3284
  %v3286 = vpop.f32.mrb[0].mxu0
  %3287 = vmatprep.mubr.bf16.mxu0 0
  %3288 = vmatmul.mubr.bf16.gmra.mrb[0].mxu0 %v2765
  %v3289 = vpop.f32.mrb[0].mxu0
  %v3290 = vadd.f32 0.0, %v3289
  %v3291 = vpop.f32.mrb[0].mxu0
  %v3292 = vpop.f32.mrb[0].mxu0
  %v3293 = vadd.f32 0.0, %v3292
  %v3294 = vpop.f32.mrb[0].mxu0
  %3295 = vmatprep.mubr.bf16.mxu0 0
  %3296 = vmatmul.mubr.bf16.gmra.mrb[0].mxu0 %v2768
  %v3297 = vpop.f32.mrb[0].mxu0
  %v3298 = vadd.f32 0.0, %v3297
  %v3299 = vpop.f32.mrb[0].mxu0
  %v3300 = vpop.f32.mrb[0].mxu0
  %v3301 = vadd.f32 0.0, %v3300
  %v3302 = vpop.f32.mrb[0].mxu0
  %3303 = vmatprep.mubr.bf16.mxu0 0
  %3304 = vmatmul.mubr.bf16.gmra.mrb[0].mxu0 %v2771
  %v3305 = vpop.f32.mrb[0].mxu0
  %v3306 = vadd.f32 0.0, %v3305
  %v3307 = vpop.f32.mrb[0].mxu0
  %v3308 = vpop.f32.mrb[0].mxu0
  %v3309 = vadd.f32 0.0, %v3308
  %v3310 = vpop.f32.mrb[0].mxu0
  %3311 = vmatprep.mubr.bf16.mxu0 0
  %3312 = vmatmul.mubr.bf16.gmra.mrb[0].mxu0 %v2774
  %v3313 = vpop.f32.mrb[0].mxu0
  %v3314 = vadd.f32 0.0, %v3313
  %v3315 = vpop.f32.mrb[0].mxu0
  %v3316 = vpop.f32.mrb[0].mxu0
  %v3317 = vadd.f32 0.0, %v3316
  %v3318 = vpop.f32.mrb[0].mxu0
  %3319 = vmatprep.mubr.bf16.mxu0 0
  %3320 = vmatmul.mubr.bf16.gmra.mrb[0].mxu0 %v2777
  %v3321 = vpop.f32.mrb[0].mxu0
  %v3322 = vadd.f32 0.0, %v3321
  %v3323 = vpop.f32.mrb[0].mxu0
  %v3324 = vpop.f32.mrb[0].mxu0
  %v3325 = vadd.f32 0.0, %v3324
  %v3326 = vpop.f32.mrb[0].mxu0
  %3327 = vmatprep.mubr.bf16.mxu0 0
  %3328 = vmatmul.mubr.bf16.gmra.mrb[0].mxu0 %v2780
  %v3329 = vpop.f32.mrb[0].mxu0
  %v3330 = vadd.f32 0.0, %v3329
  %v3331 = vpop.f32.mrb[0].mxu0
  %v3332 = vpop.f32.mrb[0].mxu0
  %v3333 = vadd.f32 0.0, %v3332
  %v3334 = vpop.f32.mrb[0].mxu0
  %3335 = vmatprep.mubr.bf16.mxu0 0
  %3336 = vmatmul.mubr.bf16.gmra.mrb[0].mxu0 %v2783
  %v3337 = vpop.f32.mrb[0].mxu0
  %v3338 = vadd.f32 0.0, %v3337
  %v3339 = vpop.f32.mrb[0].mxu0
  %v3340 = vpop.f32.mrb[0].mxu0
  %v3341 = vadd.f32 0.0, %v3340
  %v3342 = vpop.f32.mrb[0].mxu0
  %3343 = vmatprep.mubr.bf16.mxu0 0
  %3344 = vmatmul.mubr.bf16.gmra.mrb[0].mxu0 %v2786
  %v3345 = vpop.f32.mrb[0].mxu0
  %v3346 = vadd.f32 0.0, %v3345
  %v3347 = vpop.f32.mrb[0].mxu0
  %v3348 = vpop.f32.mrb[0].mxu0
  %v3349 = vadd.f32 0.0, %v3348
  %v3350 = vpop.f32.mrb[0].mxu0
  %3351 = vmatprep.mubr.bf16.mxu0 0
  %3352 = vmatmul.mubr.bf16.gmra.mrb[0].mxu0 %v2789
  %v3353 = vpop.f32.mrb[0].mxu0
  %v3354 = vadd.f32 0.0, %v3353
  %v3355 = vpop.f32.mrb[0].mxu0
  %v3356 = vpop.f32.mrb[0].mxu0
  %v3357 = vadd.f32 0.0, %v3356
  %v3358 = vpop.f32.mrb[0].mxu0
  %3359 = vmatprep.mubr.bf16.mxu0 0
  %3360 = vmatmul.mubr.bf16.gmra.mrb[0].mxu0 %v2792
  %v3361 = vpop.f32.mrb[0].mxu0
  %v3362 = vadd.f32 0.0, %v3361
  %v3363 = vpop.f32.mrb[0].mxu0
  %v3364 = vpop.f32.mrb[0].mxu0
  %v3365 = vadd.f32 0.0, %v3364
  %v3366 = vpop.f32.mrb[0].mxu0
  %3367 = vmatprep.mubr.bf16.mxu0 0
  %3368 = vmatmul.mubr.bf16.gmra.mrb[0].mxu0 %v2795
  %v3369 = vpop.f32.mrb[0].mxu0
  %v3370 = vadd.f32 0.0, %v3369
  %v3371 = vpop.f32.mrb[0].mxu0
  %v3372 = vpop.f32.mrb[0].mxu0
  %v3373 = vadd.f32 0.0, %v3372
  %v3374 = vpop.f32.mrb[0].mxu0
  %3375 = vmatprep.mubr.bf16.mxu0 0
  %3376 = vmatmul.mubr.bf16.gmra.mrb[0].mxu0 %v2798
  %v3377 = vpop.f32.mrb[0].mxu0
  %v3378 = vadd.f32 0.0, %v3377
  %v3379 = vpop.f32.mrb[0].mxu0
  %v3380 = vpop.f32.mrb[0].mxu0
  %v3381 = vadd.f32 0.0, %v3380
  %v3382 = vpop.f32.mrb[0].mxu0
  %3383 = vmatprep.mubr.bf16.mxu0 0
  %3384 = vmatmul.mubr.bf16.gmra.mrb[0].mxu0 %v2801
  %v3385 = vpop.f32.mrb[0].mxu0
  %v3386 = vadd.f32 0.0, %v3385
  %v3387 = vpop.f32.mrb[0].mxu0
  %v3388 = vpop.f32.mrb[0].mxu0
  %v3389 = vadd.f32 0.0, %v3388
  %v3390 = vpop.f32.mrb[0].mxu0
  %3391 = vmatprep.mubr.bf16.mxu0 0
  %3392 = vmatmul.mubr.bf16.gmra.mrb[0].mxu0 %v2804
  %v3393 = vpop.f32.mrb[0].mxu0
  %v3394 = vadd.f32 0.0, %v3393
  %v3395 = vpop.f32.mrb[0].mxu0
  %v3396 = vpop.f32.mrb[0].mxu0
  %v3397 = vadd.f32 0.0, %v3396
  %v3398 = vpop.f32.mrb[0].mxu0
  %3399 = vmatprep.mubr.bf16.mxu0 0
  %3400 = vmatmul.mubr.bf16.gmra.mrb[0].mxu0 %v2807
  %v3401 = vpop.f32.mrb[0].mxu0
  %v3402 = vadd.f32 0.0, %v3401
  %v3403 = vpop.f32.mrb[0].mxu0
  %v3404 = vpop.f32.mrb[0].mxu0
  %v3405 = vadd.f32 0.0, %v3404
  %v3406 = vpop.f32.mrb[0].mxu0
  %3407 = vmatprep.mubr.bf16.mxu0 0
  %3408 = vmatmul.mubr.bf16.gmra.mrb[0].mxu0 %v2810
  %v3409 = vpop.f32.mrb[0].mxu0
  %v3410 = vadd.f32 0.0, %v3409
  %v3411 = vpop.f32.mrb[0].mxu0
  %v3412 = vpop.f32.mrb[0].mxu0
  %v3413 = vadd.f32 0.0, %v3412
  %v3414 = vpop.f32.mrb[0].mxu0
  %3415 = vmatprep.mubr.bf16.mxu0 0
  %3416 = vmatmul.mubr.bf16.gmra.mrb[0].mxu0 %v2813
  %v3417 = vpop.f32.mrb[0].mxu0
  %v3418 = vadd.f32 0.0, %v3417
  %v3419 = vpop.f32.mrb[0].mxu0
  %v3420 = vpop.f32.mrb[0].mxu0
  %v3421 = vadd.f32 0.0, %v3420
  %v3422 = vpop.f32.mrb[0].mxu0
  %3423 = vmatprep.mubr.bf16.mxu0 0
  %3424 = vmatmul.mubr.bf16.gmra.mrb[0].mxu0 %v2816
  %v3425 = vpop.f32.mrb[0].mxu0
  %v3426 = vadd.f32 0.0, %v3425
  %v3427 = vpop.f32.mrb[0].mxu0
  %v3428 = vpop.f32.mrb[0].mxu0
  %v3429 = vadd.f32 0.0, %v3428
  %v3430 = vpop.f32.mrb[0].mxu0
  %3431 = vmatprep.mubr.bf16.mxu0 0
  %3432 = vmatmul.mubr.bf16.gmra.mrb[0].mxu0 %v2819
  %v3433 = vpop.f32.mrb[0].mxu0
  %v3434 = vadd.f32 0.0, %v3433
  %v3435 = vpop.f32.mrb[0].mxu0
  %v3436 = vpop.f32.mrb[0].mxu0
  %v3437 = vadd.f32 0.0, %v3436
  %v3438 = vpop.f32.mrb[0].mxu0
  %3439 = vmatprep.mubr.bf16.mxu0 0
  %3440 = vmatmul.mubr.bf16.gmra.mrb[0].mxu0 %v2822
  %v3441 = vpop.f32.mrb[0].mxu0
  %v3442 = vadd.f32 0.0, %v3441
  %v3443 = vpop.f32.mrb[0].mxu0
  %v3444 = vpop.f32.mrb[0].mxu0
  %v3445 = vadd.f32 0.0, %v3444
  %v3446 = vpop.f32.mrb[0].mxu0
  %3447 = vmatprep.mubr.bf16.mxu0 0
  %3448 = vmatmul.mubr.bf16.gmra.mrb[0].mxu0 %v2825
  %v3449 = vpop.f32.mrb[0].mxu0
  %v3450 = vadd.f32 0.0, %v3449
  %v3451 = vpop.f32.mrb[0].mxu0
  %v3452 = vpop.f32.mrb[0].mxu0
  %v3453 = vadd.f32 0.0, %v3452
  %v3454 = vpop.f32.mrb[0].mxu0
  %3455 = vmatprep.mubr.bf16.mxu0 0
  %3456 = vmatmul.mubr.bf16.gmra.mrb[0].mxu0 %v2828
  %v3457 = vpop.f32.mrb[0].mxu0
  %v3458 = vadd.f32 0.0, %v3457
  %v3459 = vpop.f32.mrb[0].mxu0
  %v3460 = vpop.f32.mrb[0].mxu0
  %v3461 = vadd.f32 0.0, %v3460
  %v3462 = vpop.f32.mrb[0].mxu0
  %3463 = vmatprep.mubr.bf16.mxu0 0
  %3464 = vmatmul.mubr.bf16.gmra.mrb[0].mxu0 %v2831
  %v3465 = vpop.f32.mrb[0].mxu0
  %v3466 = vadd.f32 0.0, %v3465
  %v3467 = vpop.f32.mrb[0].mxu0
  %v3468 = vpop.f32.mrb[0].mxu0
  %v3469 = vadd.f32 0.0, %v3468
  %v3470 = vpop.f32.mrb[0].mxu0
  %3471 = vmatprep.mubr.bf16.mxu0 0
  %3472 = vmatmul.mubr.bf16.gmra.mrb[0].mxu0 %v2834
  %v3473 = vpop.f32.mrb[0].mxu0
  %v3474 = vadd.f32 0.0, %v3473
  %v3475 = vpop.f32.mrb[0].mxu0
  %v3476 = vpop.f32.mrb[0].mxu0
  %v3477 = vadd.f32 0.0, %v3476
  %v3478 = vpop.f32.mrb[0].mxu0
  %3479 = vmatprep.mubr.bf16.mxu0 0
  %3480 = vmatmul.mubr.bf16.gmra.mrb[0].mxu0 %v2837
  %v3481 = vpop.f32.mrb[0].mxu0
  %v3482 = vadd.f32 0.0, %v3481
  %v3483 = vpop.f32.mrb[0].mxu0
  %v3484 = vpop.f32.mrb[0].mxu0
  %v3485 = vadd.f32 0.0, %v3484
  %v3486 = vpop.f32.mrb[0].mxu0
  %3487 = vmatprep.mubr.bf16.mxu0 0
  %3488 = vmatmul.mubr.bf16.gmra.mrb[0].mxu0 %v2840
  %v3489 = vpop.f32.mrb[0].mxu0
  %v3490 = vadd.f32 0.0, %v3489
  %v3491 = vpop.f32.mrb[0].mxu0
  %v3492 = vpop.f32.mrb[0].mxu0
  %v3493 = vadd.f32 0.0, %v3492
  %v3494 = vpop.f32.mrb[0].mxu0
  %3495 = vmatprep.mubr.bf16.mxu0 0
  %3496 = vmatmul.mubr.bf16.gmra.mrb[0].mxu0 %v2843
  %v3497 = vpop.f32.mrb[0].mxu0
  %v3498 = vadd.f32 0.0, %v3497
  %v3499 = vpop.f32.mrb[0].mxu0
  %v3500 = vpop.f32.mrb[0].mxu0
  %v3501 = vadd.f32 0.0, %v3500
  %v3502 = vpop.f32.mrb[0].mxu0
  %3503 = vmatprep.mubr.bf16.mxu0 0
  %3504 = vmatmul.mubr.bf16.gmra.mrb[0].mxu0 %v2846
  %v3505 = vpop.f32.mrb[0].mxu0
  %v3506 = vadd.f32 0.0, %v3505
  %v3507 = vpop.f32.mrb[0].mxu0
  %v3508 = vpop.f32.mrb[0].mxu0
  %v3509 = vadd.f32 0.0, %v3508
  %v3510 = vpop.f32.mrb[0].mxu0
  %3511 = vmatprep.mubr.bf16.mxu0 0
  %3512 = vmatmul.mubr.bf16.gmra.mrb[0].mxu0 %v2849
  %v3513 = vpop.f32.mrb[0].mxu0
  %v3514 = vadd.f32 0.0, %v3513
  %v3515 = vpop.f32.mrb[0].mxu0
  %v3516 = vpop.f32.mrb[0].mxu0
  %v3517 = vadd.f32 0.0, %v3516
  %v3518 = vpop.f32.mrb[0].mxu0
  %3519 = vmatprep.mubr.bf16.mxu0 0
  %3520 = vmatmul.mubr.bf16.gmra.mrb[0].mxu0 %v2852
  %v3521 = vpop.f32.mrb[0].mxu0
  %v3522 = vadd.f32 0.0, %v3521
  %v3523 = vpop.f32.mrb[0].mxu0
  %v3524 = vpop.f32.mrb[0].mxu0
  %v3525 = vadd.f32 0.0, %v3524
  %v3526 = vpop.f32.mrb[0].mxu0
  %3527 = vmatprep.mubr.bf16.mxu0 0
  %3528 = vmatmul.mubr.bf16.gmra.mrb[0].mxu0 %v2855
  %v3529 = vpop.f32.mrb[0].mxu0
  %v3530 = vadd.f32 0.0, %v3529
  %v3531 = vpop.f32.mrb[0].mxu0
  %v3532 = vpop.f32.mrb[0].mxu0
  %v3533 = vadd.f32 0.0, %v3532
  %v3534 = vpop.f32.mrb[0].mxu0
  %3535 = vmatprep.mubr.bf16.mxu0 0
  %3536 = vmatmul.mubr.bf16.gmra.mrb[0].mxu0 %v2858
  %v3537 = vpop.f32.mrb[0].mxu0
  %v3538 = vadd.f32 0.0, %v3537
  %v3539 = vpop.f32.mrb[0].mxu0
  %v3540 = vpop.f32.mrb[0].mxu0
  %v3541 = vadd.f32 0.0, %v3540
  %v3542 = vpop.f32.mrb[0].mxu0
  %3543 = vdwg.mxu0
  %v3544 = vadd.f32 %v1727, %v2898
  %v3545 = vadd.f32 %v1730, %v2901
  %v3546 = vadd.f32 %v1735, %v2906
  %v3547 = vadd.f32 %v1738, %v2909
  %v3548 = vadd.f32 %v1743, %v2914
  %v3549 = vadd.f32 %v1746, %v2917
  %v3550 = vadd.f32 %v1751, %v2922
  %v3551 = vadd.f32 %v1754, %v2925
  %v3552 = vadd.f32 %v1759, %v2930
  %v3553 = vadd.f32 %v1762, %v2933
  %v3554 = vadd.f32 %v1767, %v2938
  %v3555 = vadd.f32 %v1770, %v2941
  %v3556 = vadd.f32 %v1775, %v2946
  %v3557 = vadd.f32 %v1778, %v2949
  %v3558 = vadd.f32 %v1783, %v2954
  %v3559 = vadd.f32 %v1786, %v2957
  %v3560 = vadd.f32 %v1791, %v2962
  %v3561 = vadd.f32 %v1794, %v2965
  %v3562 = vadd.f32 %v1799, %v2970
  %v3563 = vadd.f32 %v1802, %v2973
  %v3564 = vadd.f32 %v1807, %v2978
  %v3565 = vadd.f32 %v1810, %v2981
  %v3566 = vadd.f32 %v1815, %v2986
  %v3567 = vadd.f32 %v1818, %v2989
  %v3568 = vadd.f32 %v1823, %v2994
  %v3569 = vadd.f32 %v1826, %v2997
  %v3570 = vadd.f32 %v1831, %v3002
  %v3571 = vadd.f32 %v1834, %v3005
  %v3572 = vadd.f32 %v1839, %v3010
  %v3573 = vadd.f32 %v1842, %v3013
  %v3574 = vadd.f32 %v1847, %v3018
  %v3575 = vadd.f32 %v1850, %v3021
  %v3576 = vadd.f32 %v1855, %v3026
  %v3577 = vadd.f32 %v1858, %v3029
  %v3578 = vadd.f32 %v1863, %v3034
  %v3579 = vadd.f32 %v1866, %v3037
  %v3580 = vadd.f32 %v1871, %v3042
  %v3581 = vadd.f32 %v1874, %v3045
  %v3582 = vadd.f32 %v1879, %v3050
  %v3583 = vadd.f32 %v1882, %v3053
  %v3584 = vadd.f32 %v1887, %v3058
  %v3585 = vadd.f32 %v1890, %v3061
  %v3586 = vadd.f32 %v1895, %v3066
  %v3587 = vadd.f32 %v1898, %v3069
  %v3588 = vadd.f32 %v1903, %v3074
  %v3589 = vadd.f32 %v1906, %v3077
  %v3590 = vadd.f32 %v1911, %v3082
  %v3591 = vadd.f32 %v1914, %v3085
  %v3592 = vadd.f32 %v1919, %v3090
  %v3593 = vadd.f32 %v1922, %v3093
  %v3594 = vadd.f32 %v1927, %v3098
  %v3595 = vadd.f32 %v1930, %v3101
  %v3596 = vadd.f32 %v1935, %v3106
  %v3597 = vadd.f32 %v1938, %v3109
  %v3598 = vadd.f32 %v1943, %v3114
  %v3599 = vadd.f32 %v1946, %v3117
  %v3600 = vadd.f32 %v1951, %v3122
  %v3601 = vadd.f32 %v1954, %v3125
  %v3602 = vadd.f32 %v1959, %v3130
  %v3603 = vadd.f32 %v1962, %v3133
  %v3604 = vadd.f32 %v1967, %v3138
  %v3605 = vadd.f32 %v1970, %v3141
  %v3606 = vadd.f32 %v1975, %v3146
  %v3607 = vadd.f32 %v1978, %v3149
  %v3608 = vadd.f32 %v1983, %v3154
  %v3609 = vadd.f32 %v1986, %v3157
  %v3610 = vadd.f32 %v1991, %v3162
  %v3611 = vadd.f32 %v1994, %v3165
  %v3612 = vadd.f32 %v1999, %v3170
  %v3613 = vadd.f32 %v2002, %v3173
  %v3614 = vadd.f32 %v2007, %v3178
  %v3615 = vadd.f32 %v2010, %v3181
  %v3616 = vadd.f32 %v2015, %v3186
  %v3617 = vadd.f32 %v2018, %v3189
  %v3618 = vadd.f32 %v2023, %v3194
  %v3619 = vadd.f32 %v2026, %v3197
  %v3620 = vadd.f32 %v2031, %v3202
  %v3621 = vadd.f32 %v2034, %v3205
  %v3622 = vadd.f32 %v2039, %v3210
  %v3623 = vadd.f32 %v2042, %v3213
  %v3624 = vadd.f32 %v2047, %v3218
  %v3625 = vadd.f32 %v2050, %v3221
  %v3626 = vadd.f32 %v2055, %v3226
  %v3627 = vadd.f32 %v2058, %v3229
  %v3628 = vadd.f32 %v2063, %v3234
  %v3629 = vadd.f32 %v2066, %v3237
  %v3630 = vadd.f32 %v2071, %v3242
  %v3631 = vadd.f32 %v2074, %v3245
  %v3632 = vadd.f32 %v2079, %v3250
  %v3633 = vadd.f32 %v2082, %v3253
  %v3634 = vadd.f32 %v2087, %v3258
  %v3635 = vadd.f32 %v2090, %v3261
  %v3636 = vadd.f32 %v2095, %v3266
  %v3637 = vadd.f32 %v2098, %v3269
  %v3638 = vadd.f32 %v2103, %v3274
  %v3639 = vadd.f32 %v2106, %v3277
  %v3640 = vadd.f32 %v2111, %v3282
  %v3641 = vadd.f32 %v2114, %v3285
  %v3642 = vadd.f32 %v2119, %v3290
  %v3643 = vadd.f32 %v2122, %v3293
  %v3644 = vadd.f32 %v2127, %v3298
  %v3645 = vadd.f32 %v2130, %v3301
  %v3646 = vadd.f32 %v2135, %v3306
  %v3647 = vadd.f32 %v2138, %v3309
  %v3648 = vadd.f32 %v2143, %v3314
  %v3649 = vadd.f32 %v2146, %v3317
  %v3650 = vadd.f32 %v2151, %v3322
  %v3651 = vadd.f32 %v2154, %v3325
  %v3652 = vadd.f32 %v2159, %v3330
  %v3653 = vadd.f32 %v2162, %v3333
  %v3654 = vadd.f32 %v2167, %v3338
  %v3655 = vadd.f32 %v2170, %v3341
  %v3656 = vadd.f32 %v2175, %v3346
  %v3657 = vadd.f32 %v2178, %v3349
  %v3658 = vadd.f32 %v2183, %v3354
  %v3659 = vadd.f32 %v2186, %v3357
  %v3660 = vadd.f32 %v2191, %v3362
  %v3661 = vadd.f32 %v2194, %v3365
  %v3662 = vadd.f32 %v2199, %v3370
  %v3663 = vadd.f32 %v2202, %v3373
  %v3664 = vadd.f32 %v2207, %v3378
  %v3665 = vadd.f32 %v2210, %v3381
  %v3666 = vadd.f32 %v2215, %v3386
  %v3667 = vadd.f32 %v2218, %v3389
  %v3668 = vadd.f32 %v2223, %v3394
  %v3669 = vadd.f32 %v2226, %v3397
  %v3670 = vadd.f32 %v2231, %v3402
  %v3671 = vadd.f32 %v2234, %v3405
  %v3672 = vadd.f32 %v2239, %v3410
  %v3673 = vadd.f32 %v2242, %v3413
  %v3674 = vadd.f32 %v2247, %v3418
  %v3675 = vadd.f32 %v2250, %v3421
  %v3676 = vadd.f32 %v2255, %v3426
  %v3677 = vadd.f32 %v2258, %v3429
  %v3678 = vadd.f32 %v2263, %v3434
  %v3679 = vadd.f32 %v2266, %v3437
  %v3680 = vadd.f32 %v2271, %v3442
  %v3681 = vadd.f32 %v2274, %v3445
  %v3682 = vadd.f32 %v2279, %v3450
  %v3683 = vadd.f32 %v2282, %v3453
  %v3684 = vadd.f32 %v2287, %v3458
  %v3685 = vadd.f32 %v2290, %v3461
  %v3686 = vadd.f32 %v2295, %v3466
  %v3687 = vadd.f32 %v2298, %v3469
  %v3688 = vadd.f32 %v2303, %v3474
  %v3689 = vadd.f32 %v2306, %v3477
  %v3690 = vadd.f32 %v2311, %v3482
  %v3691 = vadd.f32 %v2314, %v3485
  %v3692 = vadd.f32 %v2319, %v3490
  %v3693 = vadd.f32 %v2322, %v3493
  %v3694 = vadd.f32 %v2327, %v3498
  %v3695 = vadd.f32 %v2330, %v3501
  %v3696 = vadd.f32 %v2335, %v3506
  %v3697 = vadd.f32 %v2338, %v3509
  %v3698 = vadd.f32 %v2343, %v3514
  %v3699 = vadd.f32 %v2346, %v3517
  %v3700 = vadd.f32 %v2351, %v3522
  %v3701 = vadd.f32 %v2354, %v3525
  %v3702 = vadd.f32 %v2359, %v3530
  %v3703 = vadd.f32 %v2362, %v3533
  %v3704 = vadd.f32 %v2367, %v3538
  %v3705 = vadd.f32 %v2370, %v3541
  %v3706 = vld [vmem:[%s0 + $0x12] sm:$0xff]
  %v3707 = vld [vmem:[%s0 + $0x1a] sm:$0xff]
  %v3708 = vld [vmem:[%s0 + $0x22] sm:$0xff]
  %v3709 = vld [vmem:[%s0 + $0x2a] sm:$0xff]
  %v3710 = vld [vmem:[%s0 + $0x32] sm:$0xff]
  %v3711 = vld [vmem:[%s0 + $0x3a] sm:$0xff]
  %v3712 = vld [vmem:[%s0 + $0x42] sm:$0xff]
  %v3713 = vld [vmem:[%s0 + $0x4a] sm:$0xff]
  %v3714 = vld [vmem:[%s0 + $0x52] sm:$0xff]
  %v3715 = vld [vmem:[%s0 + $0x5a] sm:$0xff]
  %v3716 = vld [vmem:[%s0 + $0x62] sm:$0xff]
  %v3717 = vld [vmem:[%s0 + $0x6a] sm:$0xff]
  %v3718 = vld [vmem:[%s0 + $0x72] sm:$0xff]
  %v3719 = vld [vmem:[%s0 + $0x7a] sm:$0xff]
  %v3720 = vld [vmem:[%s0 + $0x82] sm:$0xff]
  %v3721 = vld [vmem:[%s0 + $0x8a] sm:$0xff]
  %v3722 = vld [vmem:[%s0 + $0x92] sm:$0xff]
  %v3723 = vld [vmem:[%s0 + $0x9a] sm:$0xff]
  %v3724 = vld [vmem:[%s0 + $0xa2] sm:$0xff]
  %v3725 = vld [vmem:[%s0 + $0xaa] sm:$0xff]
  %v3726 = vld [vmem:[%s0 + $0xb2] sm:$0xff]
  %v3727 = vld [vmem:[%s0 + $0xba] sm:$0xff]
  %v3728 = vld [vmem:[%s0 + $0xc2] sm:$0xff]
  %v3729 = vld [vmem:[%s0 + $0xca] sm:$0xff]
  %v3730 = vld [vmem:[%s0 + $0xd2] sm:$0xff]
  %v3731 = vld [vmem:[%s0 + $0xda] sm:$0xff]
  %v3732 = vld [vmem:[%s0 + $0xe2] sm:$0xff]
  %v3733 = vld [vmem:[%s0 + $0xea] sm:$0xff]
  %v3734 = vld [vmem:[%s0 + $0xf2] sm:$0xff]
  %v3735 = vld [vmem:[%s0 + $0xfa] sm:$0xff]
  %v3736 = vld [vmem:[%s0 + $0x102] sm:$0xff]
  %v3737 = vld [vmem:[%s0 + $0x10a] sm:$0xff]
  %v3738 = vld [vmem:[%s0 + $0x112] sm:$0xff]
  %v3739 = vld [vmem:[%s0 + $0x11a] sm:$0xff]
  %v3740 = vld [vmem:[%s0 + $0x122] sm:$0xff]
  %v3741 = vld [vmem:[%s0 + $0x12a] sm:$0xff]
  %v3742 = vld [vmem:[%s0 + $0x132] sm:$0xff]
  %v3743 = vld [vmem:[%s0 + $0x13a] sm:$0xff]
  %v3744 = vld [vmem:[%s0 + $0x142] sm:$0xff]
  %v3745 = vld [vmem:[%s0 + $0x14a] sm:$0xff]
  %v3746 = vld [vmem:[%s0 + $0x152] sm:$0xff]
  %v3747 = vld [vmem:[%s0 + $0x15a] sm:$0xff]
  %v3748 = vld [vmem:[%s0 + $0x162] sm:$0xff]
  %v3749 = vld [vmem:[%s0 + $0x16a] sm:$0xff]
  %v3750 = vld [vmem:[%s0 + $0x172] sm:$0xff]
  %v3751 = vld [vmem:[%s0 + $0x17a] sm:$0xff]
  %v3752 = vld [vmem:[%s0 + $0x182] sm:$0xff]
  %v3753 = vld [vmem:[%s0 + $0x18a] sm:$0xff]
  %v3754 = vld [vmem:[%s0 + $0x192] sm:$0xff]
  %v3755 = vld [vmem:[%s0 + $0x19a] sm:$0xff]
  %v3756 = vld [vmem:[%s0 + $0x1a2] sm:$0xff]
  %v3757 = vld [vmem:[%s0 + $0x1aa] sm:$0xff]
  %v3758 = vld [vmem:[%s0 + $0x1b2] sm:$0xff]
  %v3759 = vld [vmem:[%s0 + $0x1ba] sm:$0xff]
  %v3760 = vld [vmem:[%s0 + $0x1c2] sm:$0xff]
  %v3761 = vld [vmem:[%s0 + $0x1ca] sm:$0xff]
  %v3762 = vld [vmem:[%s0 + $0x1d2] sm:$0xff]
  %v3763 = vld [vmem:[%s0 + $0x1da] sm:$0xff]
  %v3764 = vld [vmem:[%s0 + $0x1e2] sm:$0xff]
  %v3765 = vld [vmem:[%s0 + $0x1ea] sm:$0xff]
  %v3766 = vld [vmem:[%s0 + $0x1f2] sm:$0xff]
  %v3767 = vld [vmem:[%s0 + $0x1fa] sm:$0xff]
  %v3768 = vld [vmem:[%s0 + $0x202] sm:$0xff]
  %v3769 = vld [vmem:[%s0 + $0x20a] sm:$0xff]
  %v3770 = vld [vmem:[%s0 + $0x212] sm:$0xff]
  %v3771 = vld [vmem:[%s0 + $0x21a] sm:$0xff]
  %v3772 = vld [vmem:[%s0 + $0x222] sm:$0xff]
  %v3773 = vld [vmem:[%s0 + $0x22a] sm:$0xff]
  %v3774 = vld [vmem:[%s0 + $0x232] sm:$0xff]
  %v3775 = vld [vmem:[%s0 + $0x23a] sm:$0xff]
  %v3776 = vld [vmem:[%s0 + $0x242] sm:$0xff]
  %v3777 = vld [vmem:[%s0 + $0x24a] sm:$0xff]
  %v3778 = vld [vmem:[%s0 + $0x252] sm:$0xff]
  %v3779 = vld [vmem:[%s0 + $0x25a] sm:$0xff]
  %v3780 = vld [vmem:[%s0 + $0x262] sm:$0xff]
  %v3781 = vld [vmem:[%s0 + $0x26a] sm:$0xff]
  %v3782 = vld [vmem:[%s0 + $0x272] sm:$0xff]
  %v3783 = vld [vmem:[%s0 + $0x27a] sm:$0xff]
  %v3784 = vld [vmem:[%s0 + $0x282] sm:$0xff]
  %v3785 = vld [vmem:[%s0 + $0x28a] sm:$0xff]
  %v3786 = vld [vmem:[%s0 + $0x292] sm:$0xff]
  %v3787 = vld [vmem:[%s0 + $0x29a] sm:$0xff]
  %v3788 = vld [vmem:[%s0 + $0x2a2] sm:$0xff]
  %v3789 = vld [vmem:[%s0 + $0x2aa] sm:$0xff]
  %v3790 = vld [vmem:[%s0 + $0x2b2] sm:$0xff]
  %v3791 = vld [vmem:[%s0 + $0x2ba] sm:$0xff]
  %v3792 = vld [vmem:[%s0 + $0x2c2] sm:$0xff]
  %v3793 = vld [vmem:[%s0 + $0x2ca] sm:$0xff]
  %v3794 = vld [vmem:[%s0 + $0x2d2] sm:$0xff]
  %v3795 = vld [vmem:[%s0 + $0x2da] sm:$0xff]
  %v3796 = vld [vmem:[%s0 + $0x2e2] sm:$0xff]
  %v3797 = vld [vmem:[%s0 + $0x2ea] sm:$0xff]
  %v3798 = vld [vmem:[%s0 + $0x2f2] sm:$0xff]
  %v3799 = vld [vmem:[%s0 + $0x2fa] sm:$0xff]
  %v3800 = vld [vmem:[%s0 + $0x302] sm:$0xff]
  %v3801 = vld [vmem:[%s0 + $0x30a] sm:$0xff]
  %v3802 = vld [vmem:[%s0 + $0x312] sm:$0xff]
  %v3803 = vld [vmem:[%s0 + $0x31a] sm:$0xff]
  %v3804 = vld [vmem:[%s0 + $0x322] sm:$0xff]
  %v3805 = vld [vmem:[%s0 + $0x32a] sm:$0xff]
  %v3806 = vld [vmem:[%s0 + $0x332] sm:$0xff]
  %v3807 = vld [vmem:[%s0 + $0x33a] sm:$0xff]
  %v3808 = vld [vmem:[%s0 + $0x342] sm:$0xff]
  %v3809 = vld [vmem:[%s0 + $0x34a] sm:$0xff]
  %v3810 = vld [vmem:[%s0 + $0x352] sm:$0xff]
  %v3811 = vld [vmem:[%s0 + $0x35a] sm:$0xff]
  %v3812 = vld [vmem:[%s0 + $0x362] sm:$0xff]
  %v3813 = vld [vmem:[%s0 + $0x36a] sm:$0xff]
  %v3814 = vld [vmem:[%s0 + $0x372] sm:$0xff]
  %v3815 = vld [vmem:[%s0 + $0x37a] sm:$0xff]
  %v3816 = vld [vmem:[%s0 + $0x382] sm:$0xff]
  %v3817 = vld [vmem:[%s0 + $0x38a] sm:$0xff]
  %v3818 = vld [vmem:[%s0 + $0x392] sm:$0xff]
  %v3819 = vld [vmem:[%s0 + $0x39a] sm:$0xff]
  %v3820 = vld [vmem:[%s0 + $0x3a2] sm:$0xff]
  %v3821 = vld [vmem:[%s0 + $0x3aa] sm:$0xff]
  %v3822 = vld [vmem:[%s0 + $0x3b2] sm:$0xff]
  %v3823 = vld [vmem:[%s0 + $0x3ba] sm:$0xff]
  %v3824 = vld [vmem:[%s0 + $0x3c2] sm:$0xff]
  %v3825 = vld [vmem:[%s0 + $0x3ca] sm:$0xff]
  %v3826 = vld [vmem:[%s0 + $0x3d2] sm:$0xff]
  %v3827 = vld [vmem:[%s0 + $0x3da] sm:$0xff]
  %v3828 = vld [vmem:[%s0 + $0x3e2] sm:$0xff]
  %v3829 = vld [vmem:[%s0 + $0x3ea] sm:$0xff]
  %v3830 = vld [vmem:[%s0 + $0x3f2] sm:$0xff]
  %v3831 = vld [vmem:[%s0 + $0x3fa] sm:$0xff]
  %v3832 = vld [vmem:[%s0 + $0x402] sm:$0xff]
  %v3833 = vld [vmem:[%s0 + $0x40a] sm:$0xff]
  %v3834 = vld [vmem:[%s0 + $0x412] sm:$0xff]
  %v3835 = vld [vmem:[%s0 + $0x41a] sm:$0xff]
  %v3836 = vld [vmem:[%s0 + $0x422] sm:$0xff]
  %v3837 = vld [vmem:[%s0 + $0x42a] sm:$0xff]
  %v3838 = vld [vmem:[%s0 + $0x432] sm:$0xff]
  %v3839 = vld [vmem:[%s0 + $0x43a] sm:$0xff]
  %v3840 = vld [vmem:[%s0 + $0x442] sm:$0xff]
  %v3841 = vld [vmem:[%s0 + $0x44a] sm:$0xff]
  %v3842 = vld [vmem:[%s0 + $0x452] sm:$0xff]
  %v3843 = vld [vmem:[%s0 + $0x45a] sm:$0xff]
  %v3844 = vld [vmem:[%s0 + $0x462] sm:$0xff]
  %v3845 = vld [vmem:[%s0 + $0x46a] sm:$0xff]
  %v3846 = vld [vmem:[%s0 + $0x472] sm:$0xff]
  %v3847 = vld [vmem:[%s0 + $0x47a] sm:$0xff]
  %v3848 = vld [vmem:[%s0 + $0x482] sm:$0xff]
  %v3849 = vld [vmem:[%s0 + $0x48a] sm:$0xff]
  %v3850 = vld [vmem:[%s0 + $0x492] sm:$0xff]
  %v3851 = vld [vmem:[%s0 + $0x49a] sm:$0xff]
  %v3852 = vld [vmem:[%s0 + $0x4a2] sm:$0xff]
  %v3853 = vld [vmem:[%s0 + $0x4aa] sm:$0xff]
  %v3854 = vld [vmem:[%s0 + $0x4b2] sm:$0xff]
  %v3855 = vld [vmem:[%s0 + $0x4ba] sm:$0xff]
  %v3856 = vld [vmem:[%s0 + $0x4c2] sm:$0xff]
  %v3857 = vld [vmem:[%s0 + $0x4ca] sm:$0xff]
  %v3858 = vld [vmem:[%s0 + $0x4d2] sm:$0xff]
  %v3859 = vld [vmem:[%s0 + $0x4da] sm:$0xff]
  %v3860 = vld [vmem:[%s0 + $0x4e2] sm:$0xff]
  %v3861 = vld [vmem:[%s0 + $0x4ea] sm:$0xff]
  %v3862 = vld [vmem:[%s0 + $0x4f2] sm:$0xff]
  %v3863 = vld [vmem:[%s0 + $0x4fa] sm:$0xff]
  %v3864 = vld [vmem:[%s0 + $0x502] sm:$0xff]
  %v3865 = vld [vmem:[%s0 + $0x50a] sm:$0xff]
  %v3866 = vld [vmem:[%s0 + $0x512] sm:$0xff]
  %v3867 = vld [vmem:[%s0 + $0x51a] sm:$0xff]
  %v3868 = vpack.c.bf16 %v3707, %v3706
  %v3869 = vpack.c.bf16 %v3709, %v3708
  %v3870 = vpack.c.bf16 %v3711, %v3710
  %v3871 = vpack.c.bf16 %v3713, %v3712
  %v3872 = vpack.c.bf16 %v3715, %v3714
  %v3873 = vpack.c.bf16 %v3717, %v3716
  %v3874 = vpack.c.bf16 %v3719, %v3718
  %v3875 = vpack.c.bf16 %v3721, %v3720
  %v3876 = vpack.c.bf16 %v3723, %v3722
  %v3877 = vpack.c.bf16 %v3725, %v3724
  %v3878 = vpack.c.bf16 %v3727, %v3726
  %v3879 = vpack.c.bf16 %v3729, %v3728
  %v3880 = vpack.c.bf16 %v3731, %v3730
  %v3881 = vpack.c.bf16 %v3733, %v3732
  %v3882 = vpack.c.bf16 %v3735, %v3734
  %v3883 = vpack.c.bf16 %v3737, %v3736
  %v3884 = vpack.c.bf16 %v3739, %v3738
  %v3885 = vpack.c.bf16 %v3741, %v3740
  %v3886 = vpack.c.bf16 %v3743, %v3742
  %v3887 = vpack.c.bf16 %v3745, %v3744
  %v3888 = vpack.c.bf16 %v3747, %v3746
  %v3889 = vpack.c.bf16 %v3749, %v3748
  %v3890 = vpack.c.bf16 %v3751, %v3750
  %v3891 = vpack.c.bf16 %v3753, %v3752
  %v3892 = vpack.c.bf16 %v3755, %v3754
  %v3893 = vpack.c.bf16 %v3757, %v3756
  %v3894 = vpack.c.bf16 %v3759, %v3758
  %v3895 = vpack.c.bf16 %v3761, %v3760
  %v3896 = vpack.c.bf16 %v3763, %v3762
  %v3897 = vpack.c.bf16 %v3765, %v3764
  %v3898 = vpack.c.bf16 %v3767, %v3766
  %v3899 = vpack.c.bf16 %v3769, %v3768
  %v3900 = vpack.c.bf16 %v3771, %v3770
  %v3901 = vpack.c.bf16 %v3773, %v3772
  %v3902 = vpack.c.bf16 %v3775, %v3774
  %v3903 = vpack.c.bf16 %v3777, %v3776
  %v3904 = vpack.c.bf16 %v3779, %v3778
  %v3905 = vpack.c.bf16 %v3781, %v3780
  %v3906 = vpack.c.bf16 %v3783, %v3782
  %v3907 = vpack.c.bf16 %v3785, %v3784
  %v3908 = vpack.c.bf16 %v3787, %v3786
  %v3909 = vpack.c.bf16 %v3789, %v3788
  %v3910 = vpack.c.bf16 %v3791, %v3790
  %v3911 = vpack.c.bf16 %v3793, %v3792
  %v3912 = vpack.c.bf16 %v3795, %v3794
  %v3913 = vpack.c.bf16 %v3797, %v3796
  %v3914 = vpack.c.bf16 %v3799, %v3798
  %v3915 = vpack.c.bf16 %v3801, %v3800
  %v3916 = vpack.c.bf16 %v3803, %v3802
  %v3917 = vpack.c.bf16 %v3805, %v3804
  %v3918 = vpack.c.bf16 %v3807, %v3806
  %v3919 = vpack.c.bf16 %v3809, %v3808
  %v3920 = vpack.c.bf16 %v3811, %v3810
  %v3921 = vpack.c.bf16 %v3813, %v3812
  %v3922 = vpack.c.bf16 %v3815, %v3814
  %v3923 = vpack.c.bf16 %v3817, %v3816
  %v3924 = vpack.c.bf16 %v3819, %v3818
  %v3925 = vpack.c.bf16 %v3821, %v3820
  %v3926 = vpack.c.bf16 %v3823, %v3822
  %v3927 = vpack.c.bf16 %v3825, %v3824
  %v3928 = vpack.c.bf16 %v3827, %v3826
  %v3929 = vpack.c.bf16 %v3829, %v3828
  %v3930 = vpack.c.bf16 %v3831, %v3830
  %v3931 = vpack.c.bf16 %v3833, %v3832
  %v3932 = vpack.c.bf16 %v3835, %v3834
  %v3933 = vpack.c.bf16 %v3837, %v3836
  %v3934 = vpack.c.bf16 %v3839, %v3838
  %v3935 = vpack.c.bf16 %v3841, %v3840
  %v3936 = vpack.c.bf16 %v3843, %v3842
  %v3937 = vpack.c.bf16 %v3845, %v3844
  %v3938 = vpack.c.bf16 %v3847, %v3846
  %v3939 = vpack.c.bf16 %v3849, %v3848
  %v3940 = vpack.c.bf16 %v3851, %v3850
  %v3941 = vpack.c.bf16 %v3853, %v3852
  %v3942 = vpack.c.bf16 %v3855, %v3854
  %v3943 = vpack.c.bf16 %v3857, %v3856
  %v3944 = vpack.c.bf16 %v3859, %v3858
  %v3945 = vpack.c.bf16 %v3861, %v3860
  %v3946 = vpack.c.bf16 %v3863, %v3862
  %v3947 = vpack.c.bf16 %v3865, %v3864
  %v3948 = vpack.c.bf16 %v3867, %v3866
  %v3949 = vld [vmem:[%s1 + $0xc] sm:$0xf]
  %v3951 = vsel %vm517, %v3868, 0
  %v3954 = vsel %vm517, %v3869, 0
  %v3957 = vsel %vm517, %v3870, 0
  %v3960 = vsel %vm517, %v3871, 0
  %v3963 = vsel %vm517, %v3872, 0
  %v3966 = vsel %vm517, %v3873, 0
  %v3969 = vsel %vm517, %v3874, 0
  %v3972 = vsel %vm517, %v3875, 0
  %v3975 = vsel %vm517, %v3876, 0
  %v3978 = vsel %vm517, %v3877, 0
  %v3981 = vsel %vm517, %v3878, 0
  %v3984 = vsel %vm517, %v3879, 0
  %v3987 = vsel %vm517, %v3880, 0
  %v3990 = vsel %vm517, %v3881, 0
  %v3993 = vsel %vm517, %v3882, 0
  %v3996 = vsel %vm517, %v3883, 0
  %v3999 = vsel %vm517, %v3884, 0
  %v4002 = vsel %vm517, %v3885, 0
  %v4005 = vsel %vm517, %v3886, 0
  %v4008 = vsel %vm517, %v3887, 0
  %v4011 = vsel %vm517, %v3888, 0
  %v4014 = vsel %vm517, %v3889, 0
  %v4017 = vsel %vm517, %v3890, 0
  %v4020 = vsel %vm517, %v3891, 0
  %v4023 = vsel %vm517, %v3892, 0
  %v4026 = vsel %vm517, %v3893, 0
  %v4029 = vsel %vm517, %v3894, 0
  %v4032 = vsel %vm517, %v3895, 0
  %v4035 = vsel %vm517, %v3896, 0
  %v4038 = vsel %vm517, %v3897, 0
  %v4041 = vsel %vm517, %v3898, 0
  %v4044 = vsel %vm517, %v3899, 0
  %v4047 = vsel %vm517, %v3900, 0
  %v4050 = vsel %vm517, %v3901, 0
  %v4053 = vsel %vm517, %v3902, 0
  %v4056 = vsel %vm517, %v3903, 0
  %v4059 = vsel %vm517, %v3904, 0
  %v4062 = vsel %vm517, %v3905, 0
  %v4065 = vsel %vm517, %v3906, 0
  %v4068 = vsel %vm517, %v3907, 0
  %v4071 = vsel %vm517, %v3908, 0
  %v4074 = vsel %vm517, %v3909, 0
  %v4077 = vsel %vm517, %v3910, 0
  %v4080 = vsel %vm517, %v3911, 0
  %v4083 = vsel %vm517, %v3912, 0
  %v4086 = vsel %vm517, %v3913, 0
  %v4089 = vsel %vm517, %v3914, 0
  %v4092 = vsel %vm517, %v3915, 0
  %v4095 = vsel %vm517, %v3916, 0
  %v4098 = vsel %vm517, %v3917, 0
  %v4101 = vsel %vm517, %v3918, 0
  %v4104 = vsel %vm517, %v3919, 0
  %v4107 = vsel %vm517, %v3920, 0
  %v4110 = vsel %vm517, %v3921, 0
  %v4113 = vsel %vm517, %v3922, 0
  %v4116 = vsel %vm517, %v3923, 0
  %v4119 = vsel %vm517, %v3924, 0
  %v4122 = vsel %vm517, %v3925, 0
  %v4125 = vsel %vm517, %v3926, 0
  %v4128 = vsel %vm517, %v3927, 0
  %v4131 = vsel %vm517, %v3928, 0
  %v4134 = vsel %vm517, %v3929, 0
  %v4137 = vsel %vm517, %v3930, 0
  %v4140 = vsel %vm517, %v3931, 0
  %v4143 = vsel %vm517, %v3932, 0
  %v4146 = vsel %vm517, %v3933, 0
  %v4149 = vsel %vm517, %v3934, 0
  %v4152 = vsel %vm517, %v3935, 0
  %v4155 = vsel %vm517, %v3936, 0
  %v4158 = vsel %vm517, %v3937, 0
  %v4161 = vsel %vm517, %v3938, 0
  %v4164 = vsel %vm517, %v3939, 0
  %v4167 = vsel %vm517, %v3940, 0
  %v4170 = vsel %vm517, %v3941, 0
  %v4173 = vsel %vm517, %v3942, 0
  %v4176 = vsel %vm517, %v3943, 0
  %v4179 = vsel %vm517, %v3944, 0
  %v4182 = vsel %vm517, %v3945, 0
  %v4185 = vsel %vm517, %v3946, 0
  %v4188 = vsel %vm517, %v3947, 0
  %v4191 = vsel %vm517, %v3948, 0
  %v4194 = vsel %vm761, %v3949, 0
  %4196 = vmatprep.subr.bf16.mxu0 0
  %4197 = vmatpush1.bf16.msra.mxu0 %v4194
  %4198 = vmatprep.subr.bf16.mxu0 0
  %4199 = vmatpush1.bf16.msra.mxu0 0
  %4200 = vmatprep.subr.bf16.mxu0 0
  %4201 = vmatpush1.bf16.msra.mxu0 0
  %4202 = vmatprep.subr.bf16.mxu0 0
  %4203 = vmatpush1.bf16.msra.mxu0 0
  %4204 = vmatprep.subr.bf16.mxu0 0
  %4205 = vmatpush1.bf16.msra.mxu0 0
  %4206 = vmatprep.subr.bf16.mxu0 0
  %4207 = vmatpush1.bf16.msra.mxu0 0
  %4208 = vmatprep.subr.bf16.mxu0 0
  %4209 = vmatpush1.bf16.msra.mxu0 0
  %4210 = vmatprep.subr.bf16.mxu0 0
  %4211 = vmatpush1.bf16.msra.mxu0 0
  %4212 = vmatprep.subr.bf16.mxu0 0
  %4213 = vmatpush1.bf16.msra.mxu0 0
  %4214 = vmatprep.subr.bf16.mxu0 0
  %4215 = vmatpush1.bf16.msra.mxu0 0
  %4216 = vmatprep.subr.bf16.mxu0 0
  %4217 = vmatpush1.bf16.msra.mxu0 0
  %4218 = vmatprep.subr.bf16.mxu0 0
  %4219 = vmatpush1.bf16.msra.mxu0 0
  %4220 = vmatprep.subr.bf16.mxu0 0
  %4221 = vmatpush1.bf16.msra.mxu0 0
  %4222 = vmatprep.subr.bf16.mxu0 0
  %4223 = vmatpush1.bf16.msra.mxu0 0
  %4224 = vmatprep.subr.bf16.mxu0 0
  %4225 = vmatpush1.bf16.msra.mxu0 0
  %4226 = vmatprep.subr.bf16.mxu0 0
  %4227 = vmatpush1.bf16.msra.mxu0 0
  %4228 = vmatprep.mubr.bf16.mxu0 0
  %4229 = vmatmul.mubr.bf16.gmra.mrb[0].mxu0 %v3951
  %v4230 = vpop.f32.mrb[0].mxu0
  %v4231 = vadd.f32 0.0, %v4230
  %v4232 = vpop.f32.mrb[0].mxu0
  %v4233 = vpop.f32.mrb[0].mxu0
  %v4234 = vadd.f32 0.0, %v4233
  %v4235 = vpop.f32.mrb[0].mxu0
  %4236 = vmatprep.mubr.bf16.mxu0 0
  %4237 = vmatmul.mubr.bf16.gmra.mrb[0].mxu0 %v3954
  %v4238 = vpop.f32.mrb[0].mxu0
  %v4239 = vadd.f32 0.0, %v4238
  %v4240 = vpop.f32.mrb[0].mxu0
  %v4241 = vpop.f32.mrb[0].mxu0
  %v4242 = vadd.f32 0.0, %v4241
  %v4243 = vpop.f32.mrb[0].mxu0
  %4244 = vmatprep.mubr.bf16.mxu0 0
  %4245 = vmatmul.mubr.bf16.gmra.mrb[0].mxu0 %v3957
  %v4246 = vpop.f32.mrb[0].mxu0
  %v4247 = vadd.f32 0.0, %v4246
  %v4248 = vpop.f32.mrb[0].mxu0
  %v4249 = vpop.f32.mrb[0].mxu0
  %v4250 = vadd.f32 0.0, %v4249
  %v4251 = vpop.f32.mrb[0].mxu0
  %4252 = vmatprep.mubr.bf16.mxu0 0
  %4253 = vmatmul.mubr.bf16.gmra.mrb[0].mxu0 %v3960
  %v4254 = vpop.f32.mrb[0].mxu0
  %v4255 = vadd.f32 0.0, %v4254
  %v4256 = vpop.f32.mrb[0].mxu0
  %v4257 = vpop.f32.mrb[0].mxu0
  %v4258 = vadd.f32 0.0, %v4257
  %v4259 = vpop.f32.mrb[0].mxu0
  %4260 = vmatprep.mubr.bf16.mxu0 0
  %4261 = vmatmul.mubr.bf16.gmra.mrb[0].mxu0 %v3963
  %v4262 = vpop.f32.mrb[0].mxu0
  %v4263 = vadd.f32 0.0, %v4262
  %v4264 = vpop.f32.mrb[0].mxu0
  %v4265 = vpop.f32.mrb[0].mxu0
  %v4266 = vadd.f32 0.0, %v4265
  %v4267 = vpop.f32.mrb[0].mxu0
  %4268 = vmatprep.mubr.bf16.mxu0 0
  %4269 = vmatmul.mubr.bf16.gmra.mrb[0].mxu0 %v3966
  %v4270 = vpop.f32.mrb[0].mxu0
  %v4271 = vadd.f32 0.0, %v4270
  %v4272 = vpop.f32.mrb[0].mxu0
  %v4273 = vpop.f32.mrb[0].mxu0
  %v4274 = vadd.f32 0.0, %v4273
  %v4275 = vpop.f32.mrb[0].mxu0
  %4276 = vmatprep.mubr.bf16.mxu0 0
  %4277 = vmatmul.mubr.bf16.gmra.mrb[0].mxu0 %v3969
  %v4278 = vpop.f32.mrb[0].mxu0
  %v4279 = vadd.f32 0.0, %v4278
  %v4280 = vpop.f32.mrb[0].mxu0
  %v4281 = vpop.f32.mrb[0].mxu0
  %v4282 = vadd.f32 0.0, %v4281
  %v4283 = vpop.f32.mrb[0].mxu0
  %4284 = vmatprep.mubr.bf16.mxu0 0
  %4285 = vmatmul.mubr.bf16.gmra.mrb[0].mxu0 %v3972
  %v4286 = vpop.f32.mrb[0].mxu0
  %v4287 = vadd.f32 0.0, %v4286
  %v4288 = vpop.f32.mrb[0].mxu0
  %v4289 = vpop.f32.mrb[0].mxu0
  %v4290 = vadd.f32 0.0, %v4289
  %v4291 = vpop.f32.mrb[0].mxu0
  %4292 = vmatprep.mubr.bf16.mxu0 0
  %4293 = vmatmul.mubr.bf16.gmra.mrb[0].mxu0 %v3975
  %v4294 = vpop.f32.mrb[0].mxu0
  %v4295 = vadd.f32 0.0, %v4294
  %v4296 = vpop.f32.mrb[0].mxu0
  %v4297 = vpop.f32.mrb[0].mxu0
  %v4298 = vadd.f32 0.0, %v4297
  %v4299 = vpop.f32.mrb[0].mxu0
  %4300 = vmatprep.mubr.bf16.mxu0 0
  %4301 = vmatmul.mubr.bf16.gmra.mrb[0].mxu0 %v3978
  %v4302 = vpop.f32.mrb[0].mxu0
  %v4303 = vadd.f32 0.0, %v4302
  %v4304 = vpop.f32.mrb[0].mxu0
  %v4305 = vpop.f32.mrb[0].mxu0
  %v4306 = vadd.f32 0.0, %v4305
  %v4307 = vpop.f32.mrb[0].mxu0
  %4308 = vmatprep.mubr.bf16.mxu0 0
  %4309 = vmatmul.mubr.bf16.gmra.mrb[0].mxu0 %v3981
  %v4310 = vpop.f32.mrb[0].mxu0
  %v4311 = vadd.f32 0.0, %v4310
  %v4312 = vpop.f32.mrb[0].mxu0
  %v4313 = vpop.f32.mrb[0].mxu0
  %v4314 = vadd.f32 0.0, %v4313
  %v4315 = vpop.f32.mrb[0].mxu0
  %4316 = vmatprep.mubr.bf16.mxu0 0
  %4317 = vmatmul.mubr.bf16.gmra.mrb[0].mxu0 %v3984
  %v4318 = vpop.f32.mrb[0].mxu0
  %v4319 = vadd.f32 0.0, %v4318
  %v4320 = vpop.f32.mrb[0].mxu0
  %v4321 = vpop.f32.mrb[0].mxu0
  %v4322 = vadd.f32 0.0, %v4321
  %v4323 = vpop.f32.mrb[0].mxu0
  %4324 = vmatprep.mubr.bf16.mxu0 0
  %4325 = vmatmul.mubr.bf16.gmra.mrb[0].mxu0 %v3987
  %v4326 = vpop.f32.mrb[0].mxu0
  %v4327 = vadd.f32 0.0, %v4326
  %v4328 = vpop.f32.mrb[0].mxu0
  %v4329 = vpop.f32.mrb[0].mxu0
  %v4330 = vadd.f32 0.0, %v4329
  %v4331 = vpop.f32.mrb[0].mxu0
  %4332 = vmatprep.mubr.bf16.mxu0 0
  %4333 = vmatmul.mubr.bf16.gmra.mrb[0].mxu0 %v3990
  %v4334 = vpop.f32.mrb[0].mxu0
  %v4335 = vadd.f32 0.0, %v4334
  %v4336 = vpop.f32.mrb[0].mxu0
  %v4337 = vpop.f32.mrb[0].mxu0
  %v4338 = vadd.f32 0.0, %v4337
  %v4339 = vpop.f32.mrb[0].mxu0
  %4340 = vmatprep.mubr.bf16.mxu0 0
  %4341 = vmatmul.mubr.bf16.gmra.mrb[0].mxu0 %v3993
  %v4342 = vpop.f32.mrb[0].mxu0
  %v4343 = vadd.f32 0.0, %v4342
  %v4344 = vpop.f32.mrb[0].mxu0
  %v4345 = vpop.f32.mrb[0].mxu0
  %v4346 = vadd.f32 0.0, %v4345
  %v4347 = vpop.f32.mrb[0].mxu0
  %4348 = vmatprep.mubr.bf16.mxu0 0
  %4349 = vmatmul.mubr.bf16.gmra.mrb[0].mxu0 %v3996
  %v4350 = vpop.f32.mrb[0].mxu0
  %v4351 = vadd.f32 0.0, %v4350
  %v4352 = vpop.f32.mrb[0].mxu0
  %v4353 = vpop.f32.mrb[0].mxu0
  %v4354 = vadd.f32 0.0, %v4353
  %v4355 = vpop.f32.mrb[0].mxu0
  %4356 = vmatprep.mubr.bf16.mxu0 0
  %4357 = vmatmul.mubr.bf16.gmra.mrb[0].mxu0 %v3999
  %v4358 = vpop.f32.mrb[0].mxu0
  %v4359 = vadd.f32 0.0, %v4358
  %v4360 = vpop.f32.mrb[0].mxu0
  %v4361 = vpop.f32.mrb[0].mxu0
  %v4362 = vadd.f32 0.0, %v4361
  %v4363 = vpop.f32.mrb[0].mxu0
  %4364 = vmatprep.mubr.bf16.mxu0 0
  %4365 = vmatmul.mubr.bf16.gmra.mrb[0].mxu0 %v4002
  %v4366 = vpop.f32.mrb[0].mxu0
  %v4367 = vadd.f32 0.0, %v4366
  %v4368 = vpop.f32.mrb[0].mxu0
  %v4369 = vpop.f32.mrb[0].mxu0
  %v4370 = vadd.f32 0.0, %v4369
  %v4371 = vpop.f32.mrb[0].mxu0
  %4372 = vmatprep.mubr.bf16.mxu0 0
  %4373 = vmatmul.mubr.bf16.gmra.mrb[0].mxu0 %v4005
  %v4374 = vpop.f32.mrb[0].mxu0
  %v4375 = vadd.f32 0.0, %v4374
  %v4376 = vpop.f32.mrb[0].mxu0
  %v4377 = vpop.f32.mrb[0].mxu0
  %v4378 = vadd.f32 0.0, %v4377
  %v4379 = vpop.f32.mrb[0].mxu0
  %4380 = vmatprep.mubr.bf16.mxu0 0
  %4381 = vmatmul.mubr.bf16.gmra.mrb[0].mxu0 %v4008
  %v4382 = vpop.f32.mrb[0].mxu0
  %v4383 = vadd.f32 0.0, %v4382
  %v4384 = vpop.f32.mrb[0].mxu0
  %v4385 = vpop.f32.mrb[0].mxu0
  %v4386 = vadd.f32 0.0, %v4385
  %v4387 = vpop.f32.mrb[0].mxu0
  %4388 = vmatprep.mubr.bf16.mxu0 0
  %4389 = vmatmul.mubr.bf16.gmra.mrb[0].mxu0 %v4011
  %v4390 = vpop.f32.mrb[0].mxu0
  %v4391 = vadd.f32 0.0, %v4390
  %v4392 = vpop.f32.mrb[0].mxu0
  %v4393 = vpop.f32.mrb[0].mxu0
  %v4394 = vadd.f32 0.0, %v4393
  %v4395 = vpop.f32.mrb[0].mxu0
  %4396 = vmatprep.mubr.bf16.mxu0 0
  %4397 = vmatmul.mubr.bf16.gmra.mrb[0].mxu0 %v4014
  %v4398 = vpop.f32.mrb[0].mxu0
  %v4399 = vadd.f32 0.0, %v4398
  %v4400 = vpop.f32.mrb[0].mxu0
  %v4401 = vpop.f32.mrb[0].mxu0
  %v4402 = vadd.f32 0.0, %v4401
  %v4403 = vpop.f32.mrb[0].mxu0
  %4404 = vmatprep.mubr.bf16.mxu0 0
  %4405 = vmatmul.mubr.bf16.gmra.mrb[0].mxu0 %v4017
  %v4406 = vpop.f32.mrb[0].mxu0
  %v4407 = vadd.f32 0.0, %v4406
  %v4408 = vpop.f32.mrb[0].mxu0
  %v4409 = vpop.f32.mrb[0].mxu0
  %v4410 = vadd.f32 0.0, %v4409
  %v4411 = vpop.f32.mrb[0].mxu0
  %4412 = vmatprep.mubr.bf16.mxu0 0
  %4413 = vmatmul.mubr.bf16.gmra.mrb[0].mxu0 %v4020
  %v4414 = vpop.f32.mrb[0].mxu0
  %v4415 = vadd.f32 0.0, %v4414
  %v4416 = vpop.f32.mrb[0].mxu0
  %v4417 = vpop.f32.mrb[0].mxu0
  %v4418 = vadd.f32 0.0, %v4417
  %v4419 = vpop.f32.mrb[0].mxu0
  %4420 = vmatprep.mubr.bf16.mxu0 0
  %4421 = vmatmul.mubr.bf16.gmra.mrb[0].mxu0 %v4023
  %v4422 = vpop.f32.mrb[0].mxu0
  %v4423 = vadd.f32 0.0, %v4422
  %v4424 = vpop.f32.mrb[0].mxu0
  %v4425 = vpop.f32.mrb[0].mxu0
  %v4426 = vadd.f32 0.0, %v4425
  %v4427 = vpop.f32.mrb[0].mxu0
  %4428 = vmatprep.mubr.bf16.mxu0 0
  %4429 = vmatmul.mubr.bf16.gmra.mrb[0].mxu0 %v4026
  %v4430 = vpop.f32.mrb[0].mxu0
  %v4431 = vadd.f32 0.0, %v4430
  %v4432 = vpop.f32.mrb[0].mxu0
  %v4433 = vpop.f32.mrb[0].mxu0
  %v4434 = vadd.f32 0.0, %v4433
  %v4435 = vpop.f32.mrb[0].mxu0
  %4436 = vmatprep.mubr.bf16.mxu0 0
  %4437 = vmatmul.mubr.bf16.gmra.mrb[0].mxu0 %v4029
  %v4438 = vpop.f32.mrb[0].mxu0
  %v4439 = vadd.f32 0.0, %v4438
  %v4440 = vpop.f32.mrb[0].mxu0
  %v4441 = vpop.f32.mrb[0].mxu0
  %v4442 = vadd.f32 0.0, %v4441
  %v4443 = vpop.f32.mrb[0].mxu0
  %4444 = vmatprep.mubr.bf16.mxu0 0
  %4445 = vmatmul.mubr.bf16.gmra.mrb[0].mxu0 %v4032
  %v4446 = vpop.f32.mrb[0].mxu0
  %v4447 = vadd.f32 0.0, %v4446
  %v4448 = vpop.f32.mrb[0].mxu0
  %v4449 = vpop.f32.mrb[0].mxu0
  %v4450 = vadd.f32 0.0, %v4449
  %v4451 = vpop.f32.mrb[0].mxu0
  %4452 = vmatprep.mubr.bf16.mxu0 0
  %4453 = vmatmul.mubr.bf16.gmra.mrb[0].mxu0 %v4035
  %v4454 = vpop.f32.mrb[0].mxu0
  %v4455 = vadd.f32 0.0, %v4454
  %v4456 = vpop.f32.mrb[0].mxu0
  %v4457 = vpop.f32.mrb[0].mxu0
  %v4458 = vadd.f32 0.0, %v4457
  %v4459 = vpop.f32.mrb[0].mxu0
  %4460 = vmatprep.mubr.bf16.mxu0 0
  %4461 = vmatmul.mubr.bf16.gmra.mrb[0].mxu0 %v4038
  %v4462 = vpop.f32.mrb[0].mxu0
  %v4463 = vadd.f32 0.0, %v4462
  %v4464 = vpop.f32.mrb[0].mxu0
  %v4465 = vpop.f32.mrb[0].mxu0
  %v4466 = vadd.f32 0.0, %v4465
  %v4467 = vpop.f32.mrb[0].mxu0
  %4468 = vmatprep.mubr.bf16.mxu0 0
  %4469 = vmatmul.mubr.bf16.gmra.mrb[0].mxu0 %v4041
  %v4470 = vpop.f32.mrb[0].mxu0
  %v4471 = vadd.f32 0.0, %v4470
  %v4472 = vpop.f32.mrb[0].mxu0
  %v4473 = vpop.f32.mrb[0].mxu0
  %v4474 = vadd.f32 0.0, %v4473
  %v4475 = vpop.f32.mrb[0].mxu0
  %4476 = vmatprep.mubr.bf16.mxu0 0
  %4477 = vmatmul.mubr.bf16.gmra.mrb[0].mxu0 %v4044
  %v4478 = vpop.f32.mrb[0].mxu0
  %v4479 = vadd.f32 0.0, %v4478
  %v4480 = vpop.f32.mrb[0].mxu0
  %v4481 = vpop.f32.mrb[0].mxu0
  %v4482 = vadd.f32 0.0, %v4481
  %v4483 = vpop.f32.mrb[0].mxu0
  %4484 = vmatprep.mubr.bf16.mxu0 0
  %4485 = vmatmul.mubr.bf16.gmra.mrb[0].mxu0 %v4047
  %v4486 = vpop.f32.mrb[0].mxu0
  %v4487 = vadd.f32 0.0, %v4486
  %v4488 = vpop.f32.mrb[0].mxu0
  %v4489 = vpop.f32.mrb[0].mxu0
  %v4490 = vadd.f32 0.0, %v4489
  %v4491 = vpop.f32.mrb[0].mxu0
  %4492 = vmatprep.mubr.bf16.mxu0 0
  %4493 = vmatmul.mubr.bf16.gmra.mrb[0].mxu0 %v4050
  %v4494 = vpop.f32.mrb[0].mxu0
  %v4495 = vadd.f32 0.0, %v4494
  %v4496 = vpop.f32.mrb[0].mxu0
  %v4497 = vpop.f32.mrb[0].mxu0
  %v4498 = vadd.f32 0.0, %v4497
  %v4499 = vpop.f32.mrb[0].mxu0
  %4500 = vmatprep.mubr.bf16.mxu0 0
  %4501 = vmatmul.mubr.bf16.gmra.mrb[0].mxu0 %v4053
  %v4502 = vpop.f32.mrb[0].mxu0
  %v4503 = vadd.f32 0.0, %v4502
  %v4504 = vpop.f32.mrb[0].mxu0
  %v4505 = vpop.f32.mrb[0].mxu0
  %v4506 = vadd.f32 0.0, %v4505
  %v4507 = vpop.f32.mrb[0].mxu0
  %4508 = vmatprep.mubr.bf16.mxu0 0
  %4509 = vmatmul.mubr.bf16.gmra.mrb[0].mxu0 %v4056
  %v4510 = vpop.f32.mrb[0].mxu0
  %v4511 = vadd.f32 0.0, %v4510
  %v4512 = vpop.f32.mrb[0].mxu0
  %v4513 = vpop.f32.mrb[0].mxu0
  %v4514 = vadd.f32 0.0, %v4513
  %v4515 = vpop.f32.mrb[0].mxu0
  %4516 = vmatprep.mubr.bf16.mxu0 0
  %4517 = vmatmul.mubr.bf16.gmra.mrb[0].mxu0 %v4059
  %v4518 = vpop.f32.mrb[0].mxu0
  %v4519 = vadd.f32 0.0, %v4518
  %v4520 = vpop.f32.mrb[0].mxu0
  %v4521 = vpop.f32.mrb[0].mxu0
  %v4522 = vadd.f32 0.0, %v4521
  %v4523 = vpop.f32.mrb[0].mxu0
  %4524 = vmatprep.mubr.bf16.mxu0 0
  %4525 = vmatmul.mubr.bf16.gmra.mrb[0].mxu0 %v4062
  %v4526 = vpop.f32.mrb[0].mxu0
  %v4527 = vadd.f32 0.0, %v4526
  %v4528 = vpop.f32.mrb[0].mxu0
  %v4529 = vpop.f32.mrb[0].mxu0
  %v4530 = vadd.f32 0.0, %v4529
  %v4531 = vpop.f32.mrb[0].mxu0
  %4532 = vmatprep.mubr.bf16.mxu0 0
  %4533 = vmatmul.mubr.bf16.gmra.mrb[0].mxu0 %v4065
  %v4534 = vpop.f32.mrb[0].mxu0
  %v4535 = vadd.f32 0.0, %v4534
  %v4536 = vpop.f32.mrb[0].mxu0
  %v4537 = vpop.f32.mrb[0].mxu0
  %v4538 = vadd.f32 0.0, %v4537
  %v4539 = vpop.f32.mrb[0].mxu0
  %4540 = vmatprep.mubr.bf16.mxu0 0
  %4541 = vmatmul.mubr.bf16.gmra.mrb[0].mxu0 %v4068
  %v4542 = vpop.f32.mrb[0].mxu0
  %v4543 = vadd.f32 0.0, %v4542
  %v4544 = vpop.f32.mrb[0].mxu0
  %v4545 = vpop.f32.mrb[0].mxu0
  %v4546 = vadd.f32 0.0, %v4545
  %v4547 = vpop.f32.mrb[0].mxu0
  %4548 = vmatprep.mubr.bf16.mxu0 0
  %4549 = vmatmul.mubr.bf16.gmra.mrb[0].mxu0 %v4071
  %v4550 = vpop.f32.mrb[0].mxu0
  %v4551 = vadd.f32 0.0, %v4550
  %v4552 = vpop.f32.mrb[0].mxu0
  %v4553 = vpop.f32.mrb[0].mxu0
  %v4554 = vadd.f32 0.0, %v4553
  %v4555 = vpop.f32.mrb[0].mxu0
  %4556 = vmatprep.mubr.bf16.mxu0 0
  %4557 = vmatmul.mubr.bf16.gmra.mrb[0].mxu0 %v4074
  %v4558 = vpop.f32.mrb[0].mxu0
  %v4559 = vadd.f32 0.0, %v4558
  %v4560 = vpop.f32.mrb[0].mxu0
  %v4561 = vpop.f32.mrb[0].mxu0
  %v4562 = vadd.f32 0.0, %v4561
  %v4563 = vpop.f32.mrb[0].mxu0
  %4564 = vmatprep.mubr.bf16.mxu0 0
  %4565 = vmatmul.mubr.bf16.gmra.mrb[0].mxu0 %v4077
  %v4566 = vpop.f32.mrb[0].mxu0
  %v4567 = vadd.f32 0.0, %v4566
  %v4568 = vpop.f32.mrb[0].mxu0
  %v4569 = vpop.f32.mrb[0].mxu0
  %v4570 = vadd.f32 0.0, %v4569
  %v4571 = vpop.f32.mrb[0].mxu0
  %4572 = vmatprep.mubr.bf16.mxu0 0
  %4573 = vmatmul.mubr.bf16.gmra.mrb[0].mxu0 %v4080
  %v4574 = vpop.f32.mrb[0].mxu0
  %v4575 = vadd.f32 0.0, %v4574
  %v4576 = vpop.f32.mrb[0].mxu0
  %v4577 = vpop.f32.mrb[0].mxu0
  %v4578 = vadd.f32 0.0, %v4577
  %v4579 = vpop.f32.mrb[0].mxu0
  %4580 = vmatprep.mubr.bf16.mxu0 0
  %4581 = vmatmul.mubr.bf16.gmra.mrb[0].mxu0 %v4083
  %v4582 = vpop.f32.mrb[0].mxu0
  %v4583 = vadd.f32 0.0, %v4582
  %v4584 = vpop.f32.mrb[0].mxu0
  %v4585 = vpop.f32.mrb[0].mxu0
  %v4586 = vadd.f32 0.0, %v4585
  %v4587 = vpop.f32.mrb[0].mxu0
  %4588 = vmatprep.mubr.bf16.mxu0 0
  %4589 = vmatmul.mubr.bf16.gmra.mrb[0].mxu0 %v4086
  %v4590 = vpop.f32.mrb[0].mxu0
  %v4591 = vadd.f32 0.0, %v4590
  %v4592 = vpop.f32.mrb[0].mxu0
  %v4593 = vpop.f32.mrb[0].mxu0
  %v4594 = vadd.f32 0.0, %v4593
  %v4595 = vpop.f32.mrb[0].mxu0
  %4596 = vmatprep.mubr.bf16.mxu0 0
  %4597 = vmatmul.mubr.bf16.gmra.mrb[0].mxu0 %v4089
  %v4598 = vpop.f32.mrb[0].mxu0
  %v4599 = vadd.f32 0.0, %v4598
  %v4600 = vpop.f32.mrb[0].mxu0
  %v4601 = vpop.f32.mrb[0].mxu0
  %v4602 = vadd.f32 0.0, %v4601
  %v4603 = vpop.f32.mrb[0].mxu0
  %4604 = vmatprep.mubr.bf16.mxu0 0
  %4605 = vmatmul.mubr.bf16.gmra.mrb[0].mxu0 %v4092
  %v4606 = vpop.f32.mrb[0].mxu0
  %v4607 = vadd.f32 0.0, %v4606
  %v4608 = vpop.f32.mrb[0].mxu0
  %v4609 = vpop.f32.mrb[0].mxu0
  %v4610 = vadd.f32 0.0, %v4609
  %v4611 = vpop.f32.mrb[0].mxu0
  %4612 = vmatprep.mubr.bf16.mxu0 0
  %4613 = vmatmul.mubr.bf16.gmra.mrb[0].mxu0 %v4095
  %v4614 = vpop.f32.mrb[0].mxu0
  %v4615 = vadd.f32 0.0, %v4614
  %v4616 = vpop.f32.mrb[0].mxu0
  %v4617 = vpop.f32.mrb[0].mxu0
  %v4618 = vadd.f32 0.0, %v4617
  %v4619 = vpop.f32.mrb[0].mxu0
  %4620 = vmatprep.mubr.bf16.mxu0 0
  %4621 = vmatmul.mubr.bf16.gmra.mrb[0].mxu0 %v4098
  %v4622 = vpop.f32.mrb[0].mxu0
  %v4623 = vadd.f32 0.0, %v4622
  %v4624 = vpop.f32.mrb[0].mxu0
  %v4625 = vpop.f32.mrb[0].mxu0
  %v4626 = vadd.f32 0.0, %v4625
  %v4627 = vpop.f32.mrb[0].mxu0
  %4628 = vmatprep.mubr.bf16.mxu0 0
  %4629 = vmatmul.mubr.bf16.gmra.mrb[0].mxu0 %v4101
  %v4630 = vpop.f32.mrb[0].mxu0
  %v4631 = vadd.f32 0.0, %v4630
  %v4632 = vpop.f32.mrb[0].mxu0
  %v4633 = vpop.f32.mrb[0].mxu0
  %v4634 = vadd.f32 0.0, %v4633
  %v4635 = vpop.f32.mrb[0].mxu0
  %4636 = vmatprep.mubr.bf16.mxu0 0
  %4637 = vmatmul.mubr.bf16.gmra.mrb[0].mxu0 %v4104
  %v4638 = vpop.f32.mrb[0].mxu0
  %v4639 = vadd.f32 0.0, %v4638
  %v4640 = vpop.f32.mrb[0].mxu0
  %v4641 = vpop.f32.mrb[0].mxu0
  %v4642 = vadd.f32 0.0, %v4641
  %v4643 = vpop.f32.mrb[0].mxu0
  %4644 = vmatprep.mubr.bf16.mxu0 0
  %4645 = vmatmul.mubr.bf16.gmra.mrb[0].mxu0 %v4107
  %v4646 = vpop.f32.mrb[0].mxu0
  %v4647 = vadd.f32 0.0, %v4646
  %v4648 = vpop.f32.mrb[0].mxu0
  %v4649 = vpop.f32.mrb[0].mxu0
  %v4650 = vadd.f32 0.0, %v4649
  %v4651 = vpop.f32.mrb[0].mxu0
  %4652 = vmatprep.mubr.bf16.mxu0 0
  %4653 = vmatmul.mubr.bf16.gmra.mrb[0].mxu0 %v4110
  %v4654 = vpop.f32.mrb[0].mxu0
  %v4655 = vadd.f32 0.0, %v4654
  %v4656 = vpop.f32.mrb[0].mxu0
  %v4657 = vpop.f32.mrb[0].mxu0
  %v4658 = vadd.f32 0.0, %v4657
  %v4659 = vpop.f32.mrb[0].mxu0
  %4660 = vmatprep.mubr.bf16.mxu0 0
  %4661 = vmatmul.mubr.bf16.gmra.mrb[0].mxu0 %v4113
  %v4662 = vpop.f32.mrb[0].mxu0
  %v4663 = vadd.f32 0.0, %v4662
  %v4664 = vpop.f32.mrb[0].mxu0
  %v4665 = vpop.f32.mrb[0].mxu0
  %v4666 = vadd.f32 0.0, %v4665
  %v4667 = vpop.f32.mrb[0].mxu0
  %4668 = vmatprep.mubr.bf16.mxu0 0
  %4669 = vmatmul.mubr.bf16.gmra.mrb[0].mxu0 %v4116
  %v4670 = vpop.f32.mrb[0].mxu0
  %v4671 = vadd.f32 0.0, %v4670
  %v4672 = vpop.f32.mrb[0].mxu0
  %v4673 = vpop.f32.mrb[0].mxu0
  %v4674 = vadd.f32 0.0, %v4673
  %v4675 = vpop.f32.mrb[0].mxu0
  %4676 = vmatprep.mubr.bf16.mxu0 0
  %4677 = vmatmul.mubr.bf16.gmra.mrb[0].mxu0 %v4119
  %v4678 = vpop.f32.mrb[0].mxu0
  %v4679 = vadd.f32 0.0, %v4678
  %v4680 = vpop.f32.mrb[0].mxu0
  %v4681 = vpop.f32.mrb[0].mxu0
  %v4682 = vadd.f32 0.0, %v4681
  %v4683 = vpop.f32.mrb[0].mxu0
  %4684 = vmatprep.mubr.bf16.mxu0 0
  %4685 = vmatmul.mubr.bf16.gmra.mrb[0].mxu0 %v4122
  %v4686 = vpop.f32.mrb[0].mxu0
  %v4687 = vadd.f32 0.0, %v4686
  %v4688 = vpop.f32.mrb[0].mxu0
  %v4689 = vpop.f32.mrb[0].mxu0
  %v4690 = vadd.f32 0.0, %v4689
  %v4691 = vpop.f32.mrb[0].mxu0
  %4692 = vmatprep.mubr.bf16.mxu0 0
  %4693 = vmatmul.mubr.bf16.gmra.mrb[0].mxu0 %v4125
  %v4694 = vpop.f32.mrb[0].mxu0
  %v4695 = vadd.f32 0.0, %v4694
  %v4696 = vpop.f32.mrb[0].mxu0
  %v4697 = vpop.f32.mrb[0].mxu0
  %v4698 = vadd.f32 0.0, %v4697
  %v4699 = vpop.f32.mrb[0].mxu0
  %4700 = vmatprep.mubr.bf16.mxu0 0
  %4701 = vmatmul.mubr.bf16.gmra.mrb[0].mxu0 %v4128
  %v4702 = vpop.f32.mrb[0].mxu0
  %v4703 = vadd.f32 0.0, %v4702
  %v4704 = vpop.f32.mrb[0].mxu0
  %v4705 = vpop.f32.mrb[0].mxu0
  %v4706 = vadd.f32 0.0, %v4705
  %v4707 = vpop.f32.mrb[0].mxu0
  %4708 = vmatprep.mubr.bf16.mxu0 0
  %4709 = vmatmul.mubr.bf16.gmra.mrb[0].mxu0 %v4131
  %v4710 = vpop.f32.mrb[0].mxu0
  %v4711 = vadd.f32 0.0, %v4710
  %v4712 = vpop.f32.mrb[0].mxu0
  %v4713 = vpop.f32.mrb[0].mxu0
  %v4714 = vadd.f32 0.0, %v4713
  %v4715 = vpop.f32.mrb[0].mxu0
  %4716 = vmatprep.mubr.bf16.mxu0 0
  %4717 = vmatmul.mubr.bf16.gmra.mrb[0].mxu0 %v4134
  %v4718 = vpop.f32.mrb[0].mxu0
  %v4719 = vadd.f32 0.0, %v4718
  %v4720 = vpop.f32.mrb[0].mxu0
  %v4721 = vpop.f32.mrb[0].mxu0
  %v4722 = vadd.f32 0.0, %v4721
  %v4723 = vpop.f32.mrb[0].mxu0
  %4724 = vmatprep.mubr.bf16.mxu0 0
  %4725 = vmatmul.mubr.bf16.gmra.mrb[0].mxu0 %v4137
  %v4726 = vpop.f32.mrb[0].mxu0
  %v4727 = vadd.f32 0.0, %v4726
  %v4728 = vpop.f32.mrb[0].mxu0
  %v4729 = vpop.f32.mrb[0].mxu0
  %v4730 = vadd.f32 0.0, %v4729
  %v4731 = vpop.f32.mrb[0].mxu0
  %4732 = vmatprep.mubr.bf16.mxu0 0
  %4733 = vmatmul.mubr.bf16.gmra.mrb[0].mxu0 %v4140
  %v4734 = vpop.f32.mrb[0].mxu0
  %v4735 = vadd.f32 0.0, %v4734
  %v4736 = vpop.f32.mrb[0].mxu0
  %v4737 = vpop.f32.mrb[0].mxu0
  %v4738 = vadd.f32 0.0, %v4737
  %v4739 = vpop.f32.mrb[0].mxu0
  %4740 = vmatprep.mubr.bf16.mxu0 0
  %4741 = vmatmul.mubr.bf16.gmra.mrb[0].mxu0 %v4143
  %v4742 = vpop.f32.mrb[0].mxu0
  %v4743 = vadd.f32 0.0, %v4742
  %v4744 = vpop.f32.mrb[0].mxu0
  %v4745 = vpop.f32.mrb[0].mxu0
  %v4746 = vadd.f32 0.0, %v4745
  %v4747 = vpop.f32.mrb[0].mxu0
  %4748 = vmatprep.mubr.bf16.mxu0 0
  %4749 = vmatmul.mubr.bf16.gmra.mrb[0].mxu0 %v4146
  %v4750 = vpop.f32.mrb[0].mxu0
  %v4751 = vadd.f32 0.0, %v4750
  %v4752 = vpop.f32.mrb[0].mxu0
  %v4753 = vpop.f32.mrb[0].mxu0
  %v4754 = vadd.f32 0.0, %v4753
  %v4755 = vpop.f32.mrb[0].mxu0
  %4756 = vmatprep.mubr.bf16.mxu0 0
  %4757 = vmatmul.mubr.bf16.gmra.mrb[0].mxu0 %v4149
  %v4758 = vpop.f32.mrb[0].mxu0
  %v4759 = vadd.f32 0.0, %v4758
  %v4760 = vpop.f32.mrb[0].mxu0
  %v4761 = vpop.f32.mrb[0].mxu0
  %v4762 = vadd.f32 0.0, %v4761
  %v4763 = vpop.f32.mrb[0].mxu0
  %4764 = vmatprep.mubr.bf16.mxu0 0
  %4765 = vmatmul.mubr.bf16.gmra.mrb[0].mxu0 %v4152
  %v4766 = vpop.f32.mrb[0].mxu0
  %v4767 = vadd.f32 0.0, %v4766
  %v4768 = vpop.f32.mrb[0].mxu0
  %v4769 = vpop.f32.mrb[0].mxu0
  %v4770 = vadd.f32 0.0, %v4769
  %v4771 = vpop.f32.mrb[0].mxu0
  %4772 = vmatprep.mubr.bf16.mxu0 0
  %4773 = vmatmul.mubr.bf16.gmra.mrb[0].mxu0 %v4155
  %v4774 = vpop.f32.mrb[0].mxu0
  %v4775 = vadd.f32 0.0, %v4774
  %v4776 = vpop.f32.mrb[0].mxu0
  %v4777 = vpop.f32.mrb[0].mxu0
  %v4778 = vadd.f32 0.0, %v4777
  %v4779 = vpop.f32.mrb[0].mxu0
  %4780 = vmatprep.mubr.bf16.mxu0 0
  %4781 = vmatmul.mubr.bf16.gmra.mrb[0].mxu0 %v4158
  %v4782 = vpop.f32.mrb[0].mxu0
  %v4783 = vadd.f32 0.0, %v4782
  %v4784 = vpop.f32.mrb[0].mxu0
  %v4785 = vpop.f32.mrb[0].mxu0
  %v4786 = vadd.f32 0.0, %v4785
  %v4787 = vpop.f32.mrb[0].mxu0
  %4788 = vmatprep.mubr.bf16.mxu0 0
  %4789 = vmatmul.mubr.bf16.gmra.mrb[0].mxu0 %v4161
  %v4790 = vpop.f32.mrb[0].mxu0
  %v4791 = vadd.f32 0.0, %v4790
  %v4792 = vpop.f32.mrb[0].mxu0
  %v4793 = vpop.f32.mrb[0].mxu0
  %v4794 = vadd.f32 0.0, %v4793
  %v4795 = vpop.f32.mrb[0].mxu0
  %4796 = vmatprep.mubr.bf16.mxu0 0
  %4797 = vmatmul.mubr.bf16.gmra.mrb[0].mxu0 %v4164
  %v4798 = vpop.f32.mrb[0].mxu0
  %v4799 = vadd.f32 0.0, %v4798
  %v4800 = vpop.f32.mrb[0].mxu0
  %v4801 = vpop.f32.mrb[0].mxu0
  %v4802 = vadd.f32 0.0, %v4801
  %v4803 = vpop.f32.mrb[0].mxu0
  %4804 = vmatprep.mubr.bf16.mxu0 0
  %4805 = vmatmul.mubr.bf16.gmra.mrb[0].mxu0 %v4167
  %v4806 = vpop.f32.mrb[0].mxu0
  %v4807 = vadd.f32 0.0, %v4806
  %v4808 = vpop.f32.mrb[0].mxu0
  %v4809 = vpop.f32.mrb[0].mxu0
  %v4810 = vadd.f32 0.0, %v4809
  %v4811 = vpop.f32.mrb[0].mxu0
  %4812 = vmatprep.mubr.bf16.mxu0 0
  %4813 = vmatmul.mubr.bf16.gmra.mrb[0].mxu0 %v4170
  %v4814 = vpop.f32.mrb[0].mxu0
  %v4815 = vadd.f32 0.0, %v4814
  %v4816 = vpop.f32.mrb[0].mxu0
  %v4817 = vpop.f32.mrb[0].mxu0
  %v4818 = vadd.f32 0.0, %v4817
  %v4819 = vpop.f32.mrb[0].mxu0
  %4820 = vmatprep.mubr.bf16.mxu0 0
  %4821 = vmatmul.mubr.bf16.gmra.mrb[0].mxu0 %v4173
  %v4822 = vpop.f32.mrb[0].mxu0
  %v4823 = vadd.f32 0.0, %v4822
  %v4824 = vpop.f32.mrb[0].mxu0
  %v4825 = vpop.f32.mrb[0].mxu0
  %v4826 = vadd.f32 0.0, %v4825
  %v4827 = vpop.f32.mrb[0].mxu0
  %4828 = vmatprep.mubr.bf16.mxu0 0
  %4829 = vmatmul.mubr.bf16.gmra.mrb[0].mxu0 %v4176
  %v4830 = vpop.f32.mrb[0].mxu0
  %v4831 = vadd.f32 0.0, %v4830
  %v4832 = vpop.f32.mrb[0].mxu0
  %v4833 = vpop.f32.mrb[0].mxu0
  %v4834 = vadd.f32 0.0, %v4833
  %v4835 = vpop.f32.mrb[0].mxu0
  %4836 = vmatprep.mubr.bf16.mxu0 0
  %4837 = vmatmul.mubr.bf16.gmra.mrb[0].mxu0 %v4179
  %v4838 = vpop.f32.mrb[0].mxu0
  %v4839 = vadd.f32 0.0, %v4838
  %v4840 = vpop.f32.mrb[0].mxu0
  %v4841 = vpop.f32.mrb[0].mxu0
  %v4842 = vadd.f32 0.0, %v4841
  %v4843 = vpop.f32.mrb[0].mxu0
  %4844 = vmatprep.mubr.bf16.mxu0 0
  %4845 = vmatmul.mubr.bf16.gmra.mrb[0].mxu0 %v4182
  %v4846 = vpop.f32.mrb[0].mxu0
  %v4847 = vadd.f32 0.0, %v4846
  %v4848 = vpop.f32.mrb[0].mxu0
  %v4849 = vpop.f32.mrb[0].mxu0
  %v4850 = vadd.f32 0.0, %v4849
  %v4851 = vpop.f32.mrb[0].mxu0
  %4852 = vmatprep.mubr.bf16.mxu0 0
  %4853 = vmatmul.mubr.bf16.gmra.mrb[0].mxu0 %v4185
  %v4854 = vpop.f32.mrb[0].mxu0
  %v4855 = vadd.f32 0.0, %v4854
  %v4856 = vpop.f32.mrb[0].mxu0
  %v4857 = vpop.f32.mrb[0].mxu0
  %v4858 = vadd.f32 0.0, %v4857
  %v4859 = vpop.f32.mrb[0].mxu0
  %4860 = vmatprep.mubr.bf16.mxu0 0
  %4861 = vmatmul.mubr.bf16.gmra.mrb[0].mxu0 %v4188
  %v4862 = vpop.f32.mrb[0].mxu0
  %v4863 = vadd.f32 0.0, %v4862
  %v4864 = vpop.f32.mrb[0].mxu0
  %v4865 = vpop.f32.mrb[0].mxu0
  %v4866 = vadd.f32 0.0, %v4865
  %v4867 = vpop.f32.mrb[0].mxu0
  %4868 = vmatprep.mubr.bf16.mxu0 0
  %4869 = vmatmul.mubr.bf16.gmra.mrb[0].mxu0 %v4191
  %v4870 = vpop.f32.mrb[0].mxu0
  %v4871 = vadd.f32 0.0, %v4870
  %v4872 = vpop.f32.mrb[0].mxu0
  %v4873 = vpop.f32.mrb[0].mxu0
  %v4874 = vadd.f32 0.0, %v4873
  %v4875 = vpop.f32.mrb[0].mxu0
  %4876 = vdwg.mxu0
  %v4877 = vadd.f32 %v3544, %v4231
  %v4878 = vadd.f32 %v3545, %v4234
  %v4879 = vadd.f32 %v3546, %v4239
  %v4880 = vadd.f32 %v3547, %v4242
  %v4881 = vadd.f32 %v3548, %v4247
  %v4882 = vadd.f32 %v3549, %v4250
  %v4883 = vadd.f32 %v3550, %v4255
  %v4884 = vadd.f32 %v3551, %v4258
  %v4885 = vadd.f32 %v3552, %v4263
  %v4886 = vadd.f32 %v3553, %v4266
  %v4887 = vadd.f32 %v3554, %v4271
  %v4888 = vadd.f32 %v3555, %v4274
  %v4889 = vadd.f32 %v3556, %v4279
  %v4890 = vadd.f32 %v3557, %v4282
  %v4891 = vadd.f32 %v3558, %v4287
  %v4892 = vadd.f32 %v3559, %v4290
  %v4893 = vadd.f32 %v3560, %v4295
  %v4894 = vadd.f32 %v3561, %v4298
  %v4895 = vadd.f32 %v3562, %v4303
  %v4896 = vadd.f32 %v3563, %v4306
  %v4897 = vadd.f32 %v3564, %v4311
  %v4898 = vadd.f32 %v3565, %v4314
  %v4899 = vadd.f32 %v3566, %v4319
  %v4900 = vadd.f32 %v3567, %v4322
  %v4901 = vadd.f32 %v3568, %v4327
  %v4902 = vadd.f32 %v3569, %v4330
  %v4903 = vadd.f32 %v3570, %v4335
  %v4904 = vadd.f32 %v3571, %v4338
  %v4905 = vadd.f32 %v3572, %v4343
  %v4906 = vadd.f32 %v3573, %v4346
  %v4907 = vadd.f32 %v3574, %v4351
  %v4908 = vadd.f32 %v3575, %v4354
  %v4909 = vadd.f32 %v3576, %v4359
  %v4910 = vadd.f32 %v3577, %v4362
  %v4911 = vadd.f32 %v3578, %v4367
  %v4912 = vadd.f32 %v3579, %v4370
  %v4913 = vadd.f32 %v3580, %v4375
  %v4914 = vadd.f32 %v3581, %v4378
  %v4915 = vadd.f32 %v3582, %v4383
  %v4916 = vadd.f32 %v3583, %v4386
  %v4917 = vadd.f32 %v3584, %v4391
  %v4918 = vadd.f32 %v3585, %v4394
  %v4919 = vadd.f32 %v3586, %v4399
  %v4920 = vadd.f32 %v3587, %v4402
  %v4921 = vadd.f32 %v3588, %v4407
  %v4922 = vadd.f32 %v3589, %v4410
  %v4923 = vadd.f32 %v3590, %v4415
  %v4924 = vadd.f32 %v3591, %v4418
  %v4925 = vadd.f32 %v3592, %v4423
  %v4926 = vadd.f32 %v3593, %v4426
  %v4927 = vadd.f32 %v3594, %v4431
  %v4928 = vadd.f32 %v3595, %v4434
  %v4929 = vadd.f32 %v3596, %v4439
  %v4930 = vadd.f32 %v3597, %v4442
  %v4931 = vadd.f32 %v3598, %v4447
  %v4932 = vadd.f32 %v3599, %v4450
  %v4933 = vadd.f32 %v3600, %v4455
  %v4934 = vadd.f32 %v3601, %v4458
  %v4935 = vadd.f32 %v3602, %v4463
  %v4936 = vadd.f32 %v3603, %v4466
  %v4937 = vadd.f32 %v3604, %v4471
  %v4938 = vadd.f32 %v3605, %v4474
  %v4939 = vadd.f32 %v3606, %v4479
  %v4940 = vadd.f32 %v3607, %v4482
  %v4941 = vadd.f32 %v3608, %v4487
  %v4942 = vadd.f32 %v3609, %v4490
  %v4943 = vadd.f32 %v3610, %v4495
  %v4944 = vadd.f32 %v3611, %v4498
  %v4945 = vadd.f32 %v3612, %v4503
  %v4946 = vadd.f32 %v3613, %v4506
  %v4947 = vadd.f32 %v3614, %v4511
  %v4948 = vadd.f32 %v3615, %v4514
  %v4949 = vadd.f32 %v3616, %v4519
  %v4950 = vadd.f32 %v3617, %v4522
  %v4951 = vadd.f32 %v3618, %v4527
  %v4952 = vadd.f32 %v3619, %v4530
  %v4953 = vadd.f32 %v3620, %v4535
  %v4954 = vadd.f32 %v3621, %v4538
  %v4955 = vadd.f32 %v3622, %v4543
  %v4956 = vadd.f32 %v3623, %v4546
  %v4957 = vadd.f32 %v3624, %v4551
  %v4958 = vadd.f32 %v3625, %v4554
  %v4959 = vadd.f32 %v3626, %v4559
  %v4960 = vadd.f32 %v3627, %v4562
  %v4961 = vadd.f32 %v3628, %v4567
  %v4962 = vadd.f32 %v3629, %v4570
  %v4963 = vadd.f32 %v3630, %v4575
  %v4964 = vadd.f32 %v3631, %v4578
  %v4965 = vadd.f32 %v3632, %v4583
  %v4966 = vadd.f32 %v3633, %v4586
  %v4967 = vadd.f32 %v3634, %v4591
  %v4968 = vadd.f32 %v3635, %v4594
  %v4969 = vadd.f32 %v3636, %v4599
  %v4970 = vadd.f32 %v3637, %v4602
  %v4971 = vadd.f32 %v3638, %v4607
  %v4972 = vadd.f32 %v3639, %v4610
  %v4973 = vadd.f32 %v3640, %v4615
  %v4974 = vadd.f32 %v3641, %v4618
  %v4975 = vadd.f32 %v3642, %v4623
  %v4976 = vadd.f32 %v3643, %v4626
  %v4977 = vadd.f32 %v3644, %v4631
  %v4978 = vadd.f32 %v3645, %v4634
  %v4979 = vadd.f32 %v3646, %v4639
  %v4980 = vadd.f32 %v3647, %v4642
  %v4981 = vadd.f32 %v3648, %v4647
  %v4982 = vadd.f32 %v3649, %v4650
  %v4983 = vadd.f32 %v3650, %v4655
  %v4984 = vadd.f32 %v3651, %v4658
  %v4985 = vadd.f32 %v3652, %v4663
  %v4986 = vadd.f32 %v3653, %v4666
  %v4987 = vadd.f32 %v3654, %v4671
  %v4988 = vadd.f32 %v3655, %v4674
  %v4989 = vadd.f32 %v3656, %v4679
  %v4990 = vadd.f32 %v3657, %v4682
  %v4991 = vadd.f32 %v3658, %v4687
  %v4992 = vadd.f32 %v3659, %v4690
  %v4993 = vadd.f32 %v3660, %v4695
  %v4994 = vadd.f32 %v3661, %v4698
  %v4995 = vadd.f32 %v3662, %v4703
  %v4996 = vadd.f32 %v3663, %v4706
  %v4997 = vadd.f32 %v3664, %v4711
  %v4998 = vadd.f32 %v3665, %v4714
  %v4999 = vadd.f32 %v3666, %v4719
  %v5000 = vadd.f32 %v3667, %v4722
  %v5001 = vadd.f32 %v3668, %v4727
  %v5002 = vadd.f32 %v3669, %v4730
  %v5003 = vadd.f32 %v3670, %v4735
  %v5004 = vadd.f32 %v3671, %v4738
  %v5005 = vadd.f32 %v3672, %v4743
  %v5006 = vadd.f32 %v3673, %v4746
  %v5007 = vadd.f32 %v3674, %v4751
  %v5008 = vadd.f32 %v3675, %v4754
  %v5009 = vadd.f32 %v3676, %v4759
  %v5010 = vadd.f32 %v3677, %v4762
  %v5011 = vadd.f32 %v3678, %v4767
  %v5012 = vadd.f32 %v3679, %v4770
  %v5013 = vadd.f32 %v3680, %v4775
  %v5014 = vadd.f32 %v3681, %v4778
  %v5015 = vadd.f32 %v3682, %v4783
  %v5016 = vadd.f32 %v3683, %v4786
  %v5017 = vadd.f32 %v3684, %v4791
  %v5018 = vadd.f32 %v3685, %v4794
  %v5019 = vadd.f32 %v3686, %v4799
  %v5020 = vadd.f32 %v3687, %v4802
  %v5021 = vadd.f32 %v3688, %v4807
  %v5022 = vadd.f32 %v3689, %v4810
  %v5023 = vadd.f32 %v3690, %v4815
  %v5024 = vadd.f32 %v3691, %v4818
  %v5025 = vadd.f32 %v3692, %v4823
  %v5026 = vadd.f32 %v3693, %v4826
  %v5027 = vadd.f32 %v3694, %v4831
  %v5028 = vadd.f32 %v3695, %v4834
  %v5029 = vadd.f32 %v3696, %v4839
  %v5030 = vadd.f32 %v3697, %v4842
  %v5031 = vadd.f32 %v3698, %v4847
  %v5032 = vadd.f32 %v3699, %v4850
  %v5033 = vadd.f32 %v3700, %v4855
  %v5034 = vadd.f32 %v3701, %v4858
  %v5035 = vadd.f32 %v3702, %v4863
  %v5036 = vadd.f32 %v3703, %v4866
  %v5037 = vadd.f32 %v3704, %v4871
  %v5038 = vadd.f32 %v3705, %v4874
  %v5039 = vld [vmem:[%s0 + $0x13] sm:$0xff]
  %v5040 = vld [vmem:[%s0 + $0x1b] sm:$0xff]
  %v5041 = vld [vmem:[%s0 + $0x23] sm:$0xff]
  %v5042 = vld [vmem:[%s0 + $0x2b] sm:$0xff]
  %v5043 = vld [vmem:[%s0 + $0x33] sm:$0xff]
  %v5044 = vld [vmem:[%s0 + $0x3b] sm:$0xff]
  %v5045 = vld [vmem:[%s0 + $0x43] sm:$0xff]
  %v5046 = vld [vmem:[%s0 + $0x4b] sm:$0xff]
  %v5047 = vld [vmem:[%s0 + $0x53] sm:$0xff]
  %v5048 = vld [vmem:[%s0 + $0x5b] sm:$0xff]
  %v5049 = vld [vmem:[%s0 + $0x63] sm:$0xff]
  %v5050 = vld [vmem:[%s0 + $0x6b] sm:$0xff]
  %v5051 = vld [vmem:[%s0 + $0x73] sm:$0xff]
  %v5052 = vld [vmem:[%s0 + $0x7b] sm:$0xff]
  %v5053 = vld [vmem:[%s0 + $0x83] sm:$0xff]
  %v5054 = vld [vmem:[%s0 + $0x8b] sm:$0xff]
  %v5055 = vld [vmem:[%s0 + $0x93] sm:$0xff]
  %v5056 = vld [vmem:[%s0 + $0x9b] sm:$0xff]
  %v5057 = vld [vmem:[%s0 + $0xa3] sm:$0xff]
  %v5058 = vld [vmem:[%s0 + $0xab] sm:$0xff]
  %v5059 = vld [vmem:[%s0 + $0xb3] sm:$0xff]
  %v5060 = vld [vmem:[%s0 + $0xbb] sm:$0xff]
  %v5061 = vld [vmem:[%s0 + $0xc3] sm:$0xff]
  %v5062 = vld [vmem:[%s0 + $0xcb] sm:$0xff]
  %v5063 = vld [vmem:[%s0 + $0xd3] sm:$0xff]
  %v5064 = vld [vmem:[%s0 + $0xdb] sm:$0xff]
  %v5065 = vld [vmem:[%s0 + $0xe3] sm:$0xff]
  %v5066 = vld [vmem:[%s0 + $0xeb] sm:$0xff]
  %v5067 = vld [vmem:[%s0 + $0xf3] sm:$0xff]
  %v5068 = vld [vmem:[%s0 + $0xfb] sm:$0xff]
  %v5069 = vld [vmem:[%s0 + $0x103] sm:$0xff]
  %v5070 = vld [vmem:[%s0 + $0x10b] sm:$0xff]
  %v5071 = vld [vmem:[%s0 + $0x113] sm:$0xff]
  %v5072 = vld [vmem:[%s0 + $0x11b] sm:$0xff]
  %v5073 = vld [vmem:[%s0 + $0x123] sm:$0xff]
  %v5074 = vld [vmem:[%s0 + $0x12b] sm:$0xff]
  %v5075 = vld [vmem:[%s0 + $0x133] sm:$0xff]
  %v5076 = vld [vmem:[%s0 + $0x13b] sm:$0xff]
  %v5077 = vld [vmem:[%s0 + $0x143] sm:$0xff]
  %v5078 = vld [vmem:[%s0 + $0x14b] sm:$0xff]
  %v5079 = vld [vmem:[%s0 + $0x153] sm:$0xff]
  %v5080 = vld [vmem:[%s0 + $0x15b] sm:$0xff]
  %v5081 = vld [vmem:[%s0 + $0x163] sm:$0xff]
  %v5082 = vld [vmem:[%s0 + $0x16b] sm:$0xff]
  %v5083 = vld [vmem:[%s0 + $0x173] sm:$0xff]
  %v5084 = vld [vmem:[%s0 + $0x17b] sm:$0xff]
  %v5085 = vld [vmem:[%s0 + $0x183] sm:$0xff]
  %v5086 = vld [vmem:[%s0 + $0x18b] sm:$0xff]
  %v5087 = vld [vmem:[%s0 + $0x193] sm:$0xff]
  %v5088 = vld [vmem:[%s0 + $0x19b] sm:$0xff]
  %v5089 = vld [vmem:[%s0 + $0x1a3] sm:$0xff]
  %v5090 = vld [vmem:[%s0 + $0x1ab] sm:$0xff]
  %v5091 = vld [vmem:[%s0 + $0x1b3] sm:$0xff]
  %v5092 = vld [vmem:[%s0 + $0x1bb] sm:$0xff]
  %v5093 = vld [vmem:[%s0 + $0x1c3] sm:$0xff]
  %v5094 = vld [vmem:[%s0 + $0x1cb] sm:$0xff]
  %v5095 = vld [vmem:[%s0 + $0x1d3] sm:$0xff]
  %v5096 = vld [vmem:[%s0 + $0x1db] sm:$0xff]
  %v5097 = vld [vmem:[%s0 + $0x1e3] sm:$0xff]
  %v5098 = vld [vmem:[%s0 + $0x1eb] sm:$0xff]
  %v5099 = vld [vmem:[%s0 + $0x1f3] sm:$0xff]
  %v5100 = vld [vmem:[%s0 + $0x1fb] sm:$0xff]
  %v5101 = vld [vmem:[%s0 + $0x203] sm:$0xff]
  %v5102 = vld [vmem:[%s0 + $0x20b] sm:$0xff]
  %v5103 = vld [vmem:[%s0 + $0x213] sm:$0xff]
  %v5104 = vld [vmem:[%s0 + $0x21b] sm:$0xff]
  %v5105 = vld [vmem:[%s0 + $0x223] sm:$0xff]
  %v5106 = vld [vmem:[%s0 + $0x22b] sm:$0xff]
  %v5107 = vld [vmem:[%s0 + $0x233] sm:$0xff]
  %v5108 = vld [vmem:[%s0 + $0x23b] sm:$0xff]
  %v5109 = vld [vmem:[%s0 + $0x243] sm:$0xff]
  %v5110 = vld [vmem:[%s0 + $0x24b] sm:$0xff]
  %v5111 = vld [vmem:[%s0 + $0x253] sm:$0xff]
  %v5112 = vld [vmem:[%s0 + $0x25b] sm:$0xff]
  %v5113 = vld [vmem:[%s0 + $0x263] sm:$0xff]
  %v5114 = vld [vmem:[%s0 + $0x26b] sm:$0xff]
  %v5115 = vld [vmem:[%s0 + $0x273] sm:$0xff]
  %v5116 = vld [vmem:[%s0 + $0x27b] sm:$0xff]
  %v5117 = vld [vmem:[%s0 + $0x283] sm:$0xff]
  %v5118 = vld [vmem:[%s0 + $0x28b] sm:$0xff]
  %v5119 = vld [vmem:[%s0 + $0x293] sm:$0xff]
  %v5120 = vld [vmem:[%s0 + $0x29b] sm:$0xff]
  %v5121 = vld [vmem:[%s0 + $0x2a3] sm:$0xff]
  %v5122 = vld [vmem:[%s0 + $0x2ab] sm:$0xff]
  %v5123 = vld [vmem:[%s0 + $0x2b3] sm:$0xff]
  %v5124 = vld [vmem:[%s0 + $0x2bb] sm:$0xff]
  %v5125 = vld [vmem:[%s0 + $0x2c3] sm:$0xff]
  %v5126 = vld [vmem:[%s0 + $0x2cb] sm:$0xff]
  %v5127 = vld [vmem:[%s0 + $0x2d3] sm:$0xff]
  %v5128 = vld [vmem:[%s0 + $0x2db] sm:$0xff]
  %v5129 = vld [vmem:[%s0 + $0x2e3] sm:$0xff]
  %v5130 = vld [vmem:[%s0 + $0x2eb] sm:$0xff]
  %v5131 = vld [vmem:[%s0 + $0x2f3] sm:$0xff]
  %v5132 = vld [vmem:[%s0 + $0x2fb] sm:$0xff]
  %v5133 = vld [vmem:[%s0 + $0x303] sm:$0xff]
  %v5134 = vld [vmem:[%s0 + $0x30b] sm:$0xff]
  %v5135 = vld [vmem:[%s0 + $0x313] sm:$0xff]
  %v5136 = vld [vmem:[%s0 + $0x31b] sm:$0xff]
  %v5137 = vld [vmem:[%s0 + $0x323] sm:$0xff]
  %v5138 = vld [vmem:[%s0 + $0x32b] sm:$0xff]
  %v5139 = vld [vmem:[%s0 + $0x333] sm:$0xff]
  %v5140 = vld [vmem:[%s0 + $0x33b] sm:$0xff]
  %v5141 = vld [vmem:[%s0 + $0x343] sm:$0xff]
  %v5142 = vld [vmem:[%s0 + $0x34b] sm:$0xff]
  %v5143 = vld [vmem:[%s0 + $0x353] sm:$0xff]
  %v5144 = vld [vmem:[%s0 + $0x35b] sm:$0xff]
  %v5145 = vld [vmem:[%s0 + $0x363] sm:$0xff]
  %v5146 = vld [vmem:[%s0 + $0x36b] sm:$0xff]
  %v5147 = vld [vmem:[%s0 + $0x373] sm:$0xff]
  %v5148 = vld [vmem:[%s0 + $0x37b] sm:$0xff]
  %v5149 = vld [vmem:[%s0 + $0x383] sm:$0xff]
  %v5150 = vld [vmem:[%s0 + $0x38b] sm:$0xff]
  %v5151 = vld [vmem:[%s0 + $0x393] sm:$0xff]
  %v5152 = vld [vmem:[%s0 + $0x39b] sm:$0xff]
  %v5153 = vld [vmem:[%s0 + $0x3a3] sm:$0xff]
  %v5154 = vld [vmem:[%s0 + $0x3ab] sm:$0xff]
  %v5155 = vld [vmem:[%s0 + $0x3b3] sm:$0xff]
  %v5156 = vld [vmem:[%s0 + $0x3bb] sm:$0xff]
  %v5157 = vld [vmem:[%s0 + $0x3c3] sm:$0xff]
  %v5158 = vld [vmem:[%s0 + $0x3cb] sm:$0xff]
  %v5159 = vld [vmem:[%s0 + $0x3d3] sm:$0xff]
  %v5160 = vld [vmem:[%s0 + $0x3db] sm:$0xff]
  %v5161 = vld [vmem:[%s0 + $0x3e3] sm:$0xff]
  %v5162 = vld [vmem:[%s0 + $0x3eb] sm:$0xff]
  %v5163 = vld [vmem:[%s0 + $0x3f3] sm:$0xff]
  %v5164 = vld [vmem:[%s0 + $0x3fb] sm:$0xff]
  %v5165 = vld [vmem:[%s0 + $0x403] sm:$0xff]
  %v5166 = vld [vmem:[%s0 + $0x40b] sm:$0xff]
  %v5167 = vld [vmem:[%s0 + $0x413] sm:$0xff]
  %v5168 = vld [vmem:[%s0 + $0x41b] sm:$0xff]
  %v5169 = vld [vmem:[%s0 + $0x423] sm:$0xff]
  %v5170 = vld [vmem:[%s0 + $0x42b] sm:$0xff]
  %v5171 = vld [vmem:[%s0 + $0x433] sm:$0xff]
  %v5172 = vld [vmem:[%s0 + $0x43b] sm:$0xff]
  %v5173 = vld [vmem:[%s0 + $0x443] sm:$0xff]
  %v5174 = vld [vmem:[%s0 + $0x44b] sm:$0xff]
  %v5175 = vld [vmem:[%s0 + $0x453] sm:$0xff]
  %v5176 = vld [vmem:[%s0 + $0x45b] sm:$0xff]
  %v5177 = vld [vmem:[%s0 + $0x463] sm:$0xff]
  %v5178 = vld [vmem:[%s0 + $0x46b] sm:$0xff]
  %v5179 = vld [vmem:[%s0 + $0x473] sm:$0xff]
  %v5180 = vld [vmem:[%s0 + $0x47b] sm:$0xff]
  %v5181 = vld [vmem:[%s0 + $0x483] sm:$0xff]
  %v5182 = vld [vmem:[%s0 + $0x48b] sm:$0xff]
  %v5183 = vld [vmem:[%s0 + $0x493] sm:$0xff]
  %v5184 = vld [vmem:[%s0 + $0x49b] sm:$0xff]
  %v5185 = vld [vmem:[%s0 + $0x4a3] sm:$0xff]
  %v5186 = vld [vmem:[%s0 + $0x4ab] sm:$0xff]
  %v5187 = vld [vmem:[%s0 + $0x4b3] sm:$0xff]
  %v5188 = vld [vmem:[%s0 + $0x4bb] sm:$0xff]
  %v5189 = vld [vmem:[%s0 + $0x4c3] sm:$0xff]
  %v5190 = vld [vmem:[%s0 + $0x4cb] sm:$0xff]
  %v5191 = vld [vmem:[%s0 + $0x4d3] sm:$0xff]
  %v5192 = vld [vmem:[%s0 + $0x4db] sm:$0xff]
  %v5193 = vld [vmem:[%s0 + $0x4e3] sm:$0xff]
  %v5194 = vld [vmem:[%s0 + $0x4eb] sm:$0xff]
  %v5195 = vld [vmem:[%s0 + $0x4f3] sm:$0xff]
  %v5196 = vld [vmem:[%s0 + $0x4fb] sm:$0xff]
  %v5197 = vld [vmem:[%s0 + $0x503] sm:$0xff]
  %v5198 = vld [vmem:[%s0 + $0x50b] sm:$0xff]
  %v5199 = vld [vmem:[%s0 + $0x513] sm:$0xff]
  %v5200 = vld [vmem:[%s0 + $0x51b] sm:$0xff]
  %v5201 = vpack.c.bf16 %v5040, %v5039
  %v5202 = vpack.c.bf16 %v5042, %v5041
  %v5203 = vpack.c.bf16 %v5044, %v5043
  %v5204 = vpack.c.bf16 %v5046, %v5045
  %v5205 = vpack.c.bf16 %v5048, %v5047
  %v5206 = vpack.c.bf16 %v5050, %v5049
  %v5207 = vpack.c.bf16 %v5052, %v5051
  %v5208 = vpack.c.bf16 %v5054, %v5053
  %v5209 = vpack.c.bf16 %v5056, %v5055
  %v5210 = vpack.c.bf16 %v5058, %v5057
  %v5211 = vpack.c.bf16 %v5060, %v5059
  %v5212 = vpack.c.bf16 %v5062, %v5061
  %v5213 = vpack.c.bf16 %v5064, %v5063
  %v5214 = vpack.c.bf16 %v5066, %v5065
  %v5215 = vpack.c.bf16 %v5068, %v5067
  %v5216 = vpack.c.bf16 %v5070, %v5069
  %v5217 = vpack.c.bf16 %v5072, %v5071
  %v5218 = vpack.c.bf16 %v5074, %v5073
  %v5219 = vpack.c.bf16 %v5076, %v5075
  %v5220 = vpack.c.bf16 %v5078, %v5077
  %v5221 = vpack.c.bf16 %v5080, %v5079
  %v5222 = vpack.c.bf16 %v5082, %v5081
  %v5223 = vpack.c.bf16 %v5084, %v5083
  %v5224 = vpack.c.bf16 %v5086, %v5085
  %v5225 = vpack.c.bf16 %v5088, %v5087
  %v5226 = vpack.c.bf16 %v5090, %v5089
  %v5227 = vpack.c.bf16 %v5092, %v5091
  %v5228 = vpack.c.bf16 %v5094, %v5093
  %v5229 = vpack.c.bf16 %v5096, %v5095
  %v5230 = vpack.c.bf16 %v5098, %v5097
  %v5231 = vpack.c.bf16 %v5100, %v5099
  %v5232 = vpack.c.bf16 %v5102, %v5101
  %v5233 = vpack.c.bf16 %v5104, %v5103
  %v5234 = vpack.c.bf16 %v5106, %v5105
  %v5235 = vpack.c.bf16 %v5108, %v5107
  %v5236 = vpack.c.bf16 %v5110, %v5109
  %v5237 = vpack.c.bf16 %v5112, %v5111
  %v5238 = vpack.c.bf16 %v5114, %v5113
  %v5239 = vpack.c.bf16 %v5116, %v5115
  %v5240 = vpack.c.bf16 %v5118, %v5117
  %v5241 = vpack.c.bf16 %v5120, %v5119
  %v5242 = vpack.c.bf16 %v5122, %v5121
  %v5243 = vpack.c.bf16 %v5124, %v5123
  %v5244 = vpack.c.bf16 %v5126, %v5125
  %v5245 = vpack.c.bf16 %v5128, %v5127
  %v5246 = vpack.c.bf16 %v5130, %v5129
  %v5247 = vpack.c.bf16 %v5132, %v5131
  %v5248 = vpack.c.bf16 %v5134, %v5133
  %v5249 = vpack.c.bf16 %v5136, %v5135
  %v5250 = vpack.c.bf16 %v5138, %v5137
  %v5251 = vpack.c.bf16 %v5140, %v5139
  %v5252 = vpack.c.bf16 %v5142, %v5141
  %v5253 = vpack.c.bf16 %v5144, %v5143
  %v5254 = vpack.c.bf16 %v5146, %v5145
  %v5255 = vpack.c.bf16 %v5148, %v5147
  %v5256 = vpack.c.bf16 %v5150, %v5149
  %v5257 = vpack.c.bf16 %v5152, %v5151
  %v5258 = vpack.c.bf16 %v5154, %v5153
  %v5259 = vpack.c.bf16 %v5156, %v5155
  %v5260 = vpack.c.bf16 %v5158, %v5157
  %v5261 = vpack.c.bf16 %v5160, %v5159
  %v5262 = vpack.c.bf16 %v5162, %v5161
  %v5263 = vpack.c.bf16 %v5164, %v5163
  %v5264 = vpack.c.bf16 %v5166, %v5165
  %v5265 = vpack.c.bf16 %v5168, %v5167
  %v5266 = vpack.c.bf16 %v5170, %v5169
  %v5267 = vpack.c.bf16 %v5172, %v5171
  %v5268 = vpack.c.bf16 %v5174, %v5173
  %v5269 = vpack.c.bf16 %v5176, %v5175
  %v5270 = vpack.c.bf16 %v5178, %v5177
  %v5271 = vpack.c.bf16 %v5180, %v5179
  %v5272 = vpack.c.bf16 %v5182, %v5181
  %v5273 = vpack.c.bf16 %v5184, %v5183
  %v5274 = vpack.c.bf16 %v5186, %v5185
  %v5275 = vpack.c.bf16 %v5188, %v5187
  %v5276 = vpack.c.bf16 %v5190, %v5189
  %v5277 = vpack.c.bf16 %v5192, %v5191
  %v5278 = vpack.c.bf16 %v5194, %v5193
  %v5279 = vpack.c.bf16 %v5196, %v5195
  %v5280 = vpack.c.bf16 %v5198, %v5197
  %v5281 = vpack.c.bf16 %v5200, %v5199
  %v5282 = vld [vmem:[%s1 + $0x10] sm:$0xf]
  %v5284 = vsel %vm517, %v5201, 0
  %v5287 = vsel %vm517, %v5202, 0
  %v5290 = vsel %vm517, %v5203, 0
  %v5293 = vsel %vm517, %v5204, 0
  %v5296 = vsel %vm517, %v5205, 0
  %v5299 = vsel %vm517, %v5206, 0
  %v5302 = vsel %vm517, %v5207, 0
  %v5305 = vsel %vm517, %v5208, 0
  %v5308 = vsel %vm517, %v5209, 0
  %v5311 = vsel %vm517, %v5210, 0
  %v5314 = vsel %vm517, %v5211, 0
  %v5317 = vsel %vm517, %v5212, 0
  %v5320 = vsel %vm517, %v5213, 0
  %v5323 = vsel %vm517, %v5214, 0
  %v5326 = vsel %vm517, %v5215, 0
  %v5329 = vsel %vm517, %v5216, 0
  %v5332 = vsel %vm517, %v5217, 0
  %v5335 = vsel %vm517, %v5218, 0
  %v5338 = vsel %vm517, %v5219, 0
  %v5341 = vsel %vm517, %v5220, 0
  %v5344 = vsel %vm517, %v5221, 0
  %v5347 = vsel %vm517, %v5222, 0
  %v5350 = vsel %vm517, %v5223, 0
  %v5353 = vsel %vm517, %v5224, 0
  %v5356 = vsel %vm517, %v5225, 0
  %v5359 = vsel %vm517, %v5226, 0
  %v5362 = vsel %vm517, %v5227, 0
  %v5365 = vsel %vm517, %v5228, 0
  %v5368 = vsel %vm517, %v5229, 0
  %v5371 = vsel %vm517, %v5230, 0
  %v5374 = vsel %vm517, %v5231, 0
  %v5377 = vsel %vm517, %v5232, 0
  %v5380 = vsel %vm517, %v5233, 0
  %v5383 = vsel %vm517, %v5234, 0
  %v5386 = vsel %vm517, %v5235, 0
  %v5389 = vsel %vm517, %v5236, 0
  %v5392 = vsel %vm517, %v5237, 0
  %v5395 = vsel %vm517, %v5238, 0
  %v5398 = vsel %vm517, %v5239, 0
  %v5401 = vsel %vm517, %v5240, 0
  %v5404 = vsel %vm517, %v5241, 0
  %v5407 = vsel %vm517, %v5242, 0
  %v5410 = vsel %vm517, %v5243, 0
  %v5413 = vsel %vm517, %v5244, 0
  %v5416 = vsel %vm517, %v5245, 0
  %v5419 = vsel %vm517, %v5246, 0
  %v5422 = vsel %vm517, %v5247, 0
  %v5425 = vsel %vm517, %v5248, 0
  %v5428 = vsel %vm517, %v5249, 0
  %v5431 = vsel %vm517, %v5250, 0
  %v5434 = vsel %vm517, %v5251, 0
  %v5437 = vsel %vm517, %v5252, 0
  %v5440 = vsel %vm517, %v5253, 0
  %v5443 = vsel %vm517, %v5254, 0
  %v5446 = vsel %vm517, %v5255, 0
  %v5449 = vsel %vm517, %v5256, 0
  %v5452 = vsel %vm517, %v5257, 0
  %v5455 = vsel %vm517, %v5258, 0
  %v5458 = vsel %vm517, %v5259, 0
  %v5461 = vsel %vm517, %v5260, 0
  %v5464 = vsel %vm517, %v5261, 0
  %v5467 = vsel %vm517, %v5262, 0
  %v5470 = vsel %vm517, %v5263, 0
  %v5473 = vsel %vm517, %v5264, 0
  %v5476 = vsel %vm517, %v5265, 0
  %v5479 = vsel %vm517, %v5266, 0
  %v5482 = vsel %vm517, %v5267, 0
  %v5485 = vsel %vm517, %v5268, 0
  %v5488 = vsel %vm517, %v5269, 0
  %v5491 = vsel %vm517, %v5270, 0
  %v5494 = vsel %vm517, %v5271, 0
  %v5497 = vsel %vm517, %v5272, 0
  %v5500 = vsel %vm517, %v5273, 0
  %v5503 = vsel %vm517, %v5274, 0
  %v5506 = vsel %vm517, %v5275, 0
  %v5509 = vsel %vm517, %v5276, 0
  %v5512 = vsel %vm517, %v5277, 0
  %v5515 = vsel %vm517, %v5278, 0
  %v5518 = vsel %vm517, %v5279, 0
  %v5521 = vsel %vm517, %v5280, 0
  %v5524 = vsel %vm517, %v5281, 0
  %v5527 = vsel %vm761, %v5282, 0
  %5529 = vmatprep.subr.bf16.mxu0 0
  %5530 = vmatpush1.bf16.msra.mxu0 %v5527
  %5531 = vmatprep.subr.bf16.mxu0 0
  %5532 = vmatpush1.bf16.msra.mxu0 0
  %5533 = vmatprep.subr.bf16.mxu0 0
  %5534 = vmatpush1.bf16.msra.mxu0 0
  %5535 = vmatprep.subr.bf16.mxu0 0
  %5536 = vmatpush1.bf16.msra.mxu0 0
  %5537 = vmatprep.subr.bf16.mxu0 0
  %5538 = vmatpush1.bf16.msra.mxu0 0
  %5539 = vmatprep.subr.bf16.mxu0 0
  %5540 = vmatpush1.bf16.msra.mxu0 0
  %5541 = vmatprep.subr.bf16.mxu0 0
  %5542 = vmatpush1.bf16.msra.mxu0 0
  %5543 = vmatprep.subr.bf16.mxu0 0
  %5544 = vmatpush1.bf16.msra.mxu0 0
  %5545 = vmatprep.subr.bf16.mxu0 0
  %5546 = vmatpush1.bf16.msra.mxu0 0
  %5547 = vmatprep.subr.bf16.mxu0 0
  %5548 = vmatpush1.bf16.msra.mxu0 0
  %5549 = vmatprep.subr.bf16.mxu0 0
  %5550 = vmatpush1.bf16.msra.mxu0 0
  %5551 = vmatprep.subr.bf16.mxu0 0
  %5552 = vmatpush1.bf16.msra.mxu0 0
  %5553 = vmatprep.subr.bf16.mxu0 0
  %5554 = vmatpush1.bf16.msra.mxu0 0
  %5555 = vmatprep.subr.bf16.mxu0 0
  %5556 = vmatpush1.bf16.msra.mxu0 0
  %5557 = vmatprep.subr.bf16.mxu0 0
  %5558 = vmatpush1.bf16.msra.mxu0 0
  %5559 = vmatprep.subr.bf16.mxu0 0
  %5560 = vmatpush1.bf16.msra.mxu0 0
  %5561 = vmatprep.mubr.bf16.mxu0 0
  %5562 = vmatmul.mubr.bf16.gmra.mrb[0].mxu0 %v5284
  %v5563 = vpop.f32.mrb[0].mxu0
  %v5564 = vadd.f32 0.0, %v5563
  %v5565 = vpop.f32.mrb[0].mxu0
  %v5566 = vpop.f32.mrb[0].mxu0
  %v5567 = vadd.f32 0.0, %v5566
  %v5568 = vpop.f32.mrb[0].mxu0
  %5569 = vmatprep.mubr.bf16.mxu0 0
  %5570 = vmatmul.mubr.bf16.gmra.mrb[0].mxu0 %v5287
  %v5571 = vpop.f32.mrb[0].mxu0
  %v5572 = vadd.f32 0.0, %v5571
  %v5573 = vpop.f32.mrb[0].mxu0
  %v5574 = vpop.f32.mrb[0].mxu0
  %v5575 = vadd.f32 0.0, %v5574
  %v5576 = vpop.f32.mrb[0].mxu0
  %5577 = vmatprep.mubr.bf16.mxu0 0
  %5578 = vmatmul.mubr.bf16.gmra.mrb[0].mxu0 %v5290
  %v5579 = vpop.f32.mrb[0].mxu0
  %v5580 = vadd.f32 0.0, %v5579
  %v5581 = vpop.f32.mrb[0].mxu0
  %v5582 = vpop.f32.mrb[0].mxu0
  %v5583 = vadd.f32 0.0, %v5582
  %v5584 = vpop.f32.mrb[0].mxu0
  %5585 = vmatprep.mubr.bf16.mxu0 0
  %5586 = vmatmul.mubr.bf16.gmra.mrb[0].mxu0 %v5293
  %v5587 = vpop.f32.mrb[0].mxu0
  %v5588 = vadd.f32 0.0, %v5587
  %v5589 = vpop.f32.mrb[0].mxu0
  %v5590 = vpop.f32.mrb[0].mxu0
  %v5591 = vadd.f32 0.0, %v5590
  %v5592 = vpop.f32.mrb[0].mxu0
  %5593 = vmatprep.mubr.bf16.mxu0 0
  %5594 = vmatmul.mubr.bf16.gmra.mrb[0].mxu0 %v5296
  %v5595 = vpop.f32.mrb[0].mxu0
  %v5596 = vadd.f32 0.0, %v5595
  %v5597 = vpop.f32.mrb[0].mxu0
  %v5598 = vpop.f32.mrb[0].mxu0
  %v5599 = vadd.f32 0.0, %v5598
  %v5600 = vpop.f32.mrb[0].mxu0
  %5601 = vmatprep.mubr.bf16.mxu0 0
  %5602 = vmatmul.mubr.bf16.gmra.mrb[0].mxu0 %v5299
  %v5603 = vpop.f32.mrb[0].mxu0
  %v5604 = vadd.f32 0.0, %v5603
  %v5605 = vpop.f32.mrb[0].mxu0
  %v5606 = vpop.f32.mrb[0].mxu0
  %v5607 = vadd.f32 0.0, %v5606
  %v5608 = vpop.f32.mrb[0].mxu0
  %5609 = vmatprep.mubr.bf16.mxu0 0
  %5610 = vmatmul.mubr.bf16.gmra.mrb[0].mxu0 %v5302
  %v5611 = vpop.f32.mrb[0].mxu0
  %v5612 = vadd.f32 0.0, %v5611
  %v5613 = vpop.f32.mrb[0].mxu0
  %v5614 = vpop.f32.mrb[0].mxu0
  %v5615 = vadd.f32 0.0, %v5614
  %v5616 = vpop.f32.mrb[0].mxu0
  %5617 = vmatprep.mubr.bf16.mxu0 0
  %5618 = vmatmul.mubr.bf16.gmra.mrb[0].mxu0 %v5305
  %v5619 = vpop.f32.mrb[0].mxu0
  %v5620 = vadd.f32 0.0, %v5619
  %v5621 = vpop.f32.mrb[0].mxu0
  %v5622 = vpop.f32.mrb[0].mxu0
  %v5623 = vadd.f32 0.0, %v5622
  %v5624 = vpop.f32.mrb[0].mxu0
  %5625 = vmatprep.mubr.bf16.mxu0 0
  %5626 = vmatmul.mubr.bf16.gmra.mrb[0].mxu0 %v5308
  %v5627 = vpop.f32.mrb[0].mxu0
  %v5628 = vadd.f32 0.0, %v5627
  %v5629 = vpop.f32.mrb[0].mxu0
  %v5630 = vpop.f32.mrb[0].mxu0
  %v5631 = vadd.f32 0.0, %v5630
  %v5632 = vpop.f32.mrb[0].mxu0
  %5633 = vmatprep.mubr.bf16.mxu0 0
  %5634 = vmatmul.mubr.bf16.gmra.mrb[0].mxu0 %v5311
  %v5635 = vpop.f32.mrb[0].mxu0
  %v5636 = vadd.f32 0.0, %v5635
  %v5637 = vpop.f32.mrb[0].mxu0
  %v5638 = vpop.f32.mrb[0].mxu0
  %v5639 = vadd.f32 0.0, %v5638
  %v5640 = vpop.f32.mrb[0].mxu0
  %5641 = vmatprep.mubr.bf16.mxu0 0
  %5642 = vmatmul.mubr.bf16.gmra.mrb[0].mxu0 %v5314
  %v5643 = vpop.f32.mrb[0].mxu0
  %v5644 = vadd.f32 0.0, %v5643
  %v5645 = vpop.f32.mrb[0].mxu0
  %v5646 = vpop.f32.mrb[0].mxu0
  %v5647 = vadd.f32 0.0, %v5646
  %v5648 = vpop.f32.mrb[0].mxu0
  %5649 = vmatprep.mubr.bf16.mxu0 0
  %5650 = vmatmul.mubr.bf16.gmra.mrb[0].mxu0 %v5317
  %v5651 = vpop.f32.mrb[0].mxu0
  %v5652 = vadd.f32 0.0, %v5651
  %v5653 = vpop.f32.mrb[0].mxu0
  %v5654 = vpop.f32.mrb[0].mxu0
  %v5655 = vadd.f32 0.0, %v5654
  %v5656 = vpop.f32.mrb[0].mxu0
  %5657 = vmatprep.mubr.bf16.mxu0 0
  %5658 = vmatmul.mubr.bf16.gmra.mrb[0].mxu0 %v5320
  %v5659 = vpop.f32.mrb[0].mxu0
  %v5660 = vadd.f32 0.0, %v5659
  %v5661 = vpop.f32.mrb[0].mxu0
  %v5662 = vpop.f32.mrb[0].mxu0
  %v5663 = vadd.f32 0.0, %v5662
  %v5664 = vpop.f32.mrb[0].mxu0
  %5665 = vmatprep.mubr.bf16.mxu0 0
  %5666 = vmatmul.mubr.bf16.gmra.mrb[0].mxu0 %v5323
  %v5667 = vpop.f32.mrb[0].mxu0
  %v5668 = vadd.f32 0.0, %v5667
  %v5669 = vpop.f32.mrb[0].mxu0
  %v5670 = vpop.f32.mrb[0].mxu0
  %v5671 = vadd.f32 0.0, %v5670
  %v5672 = vpop.f32.mrb[0].mxu0
  %5673 = vmatprep.mubr.bf16.mxu0 0
  %5674 = vmatmul.mubr.bf16.gmra.mrb[0].mxu0 %v5326
  %v5675 = vpop.f32.mrb[0].mxu0
  %v5676 = vadd.f32 0.0, %v5675
  %v5677 = vpop.f32.mrb[0].mxu0
  %v5678 = vpop.f32.mrb[0].mxu0
  %v5679 = vadd.f32 0.0, %v5678
  %v5680 = vpop.f32.mrb[0].mxu0
  %5681 = vmatprep.mubr.bf16.mxu0 0
  %5682 = vmatmul.mubr.bf16.gmra.mrb[0].mxu0 %v5329
  %v5683 = vpop.f32.mrb[0].mxu0
  %v5684 = vadd.f32 0.0, %v5683
  %v5685 = vpop.f32.mrb[0].mxu0
  %v5686 = vpop.f32.mrb[0].mxu0
  %v5687 = vadd.f32 0.0, %v5686
  %v5688 = vpop.f32.mrb[0].mxu0
  %5689 = vmatprep.mubr.bf16.mxu0 0
  %5690 = vmatmul.mubr.bf16.gmra.mrb[0].mxu0 %v5332
  %v5691 = vpop.f32.mrb[0].mxu0
  %v5692 = vadd.f32 0.0, %v5691
  %v5693 = vpop.f32.mrb[0].mxu0
  %v5694 = vpop.f32.mrb[0].mxu0
  %v5695 = vadd.f32 0.0, %v5694
  %v5696 = vpop.f32.mrb[0].mxu0
  %5697 = vmatprep.mubr.bf16.mxu0 0
  %5698 = vmatmul.mubr.bf16.gmra.mrb[0].mxu0 %v5335
  %v5699 = vpop.f32.mrb[0].mxu0
  %v5700 = vadd.f32 0.0, %v5699
  %v5701 = vpop.f32.mrb[0].mxu0
  %v5702 = vpop.f32.mrb[0].mxu0
  %v5703 = vadd.f32 0.0, %v5702
  %v5704 = vpop.f32.mrb[0].mxu0
  %5705 = vmatprep.mubr.bf16.mxu0 0
  %5706 = vmatmul.mubr.bf16.gmra.mrb[0].mxu0 %v5338
  %v5707 = vpop.f32.mrb[0].mxu0
  %v5708 = vadd.f32 0.0, %v5707
  %v5709 = vpop.f32.mrb[0].mxu0
  %v5710 = vpop.f32.mrb[0].mxu0
  %v5711 = vadd.f32 0.0, %v5710
  %v5712 = vpop.f32.mrb[0].mxu0
  %5713 = vmatprep.mubr.bf16.mxu0 0
  %5714 = vmatmul.mubr.bf16.gmra.mrb[0].mxu0 %v5341
  %v5715 = vpop.f32.mrb[0].mxu0
  %v5716 = vadd.f32 0.0, %v5715
  %v5717 = vpop.f32.mrb[0].mxu0
  %v5718 = vpop.f32.mrb[0].mxu0
  %v5719 = vadd.f32 0.0, %v5718
  %v5720 = vpop.f32.mrb[0].mxu0
  %5721 = vmatprep.mubr.bf16.mxu0 0
  %5722 = vmatmul.mubr.bf16.gmra.mrb[0].mxu0 %v5344
  %v5723 = vpop.f32.mrb[0].mxu0
  %v5724 = vadd.f32 0.0, %v5723
  %v5725 = vpop.f32.mrb[0].mxu0
  %v5726 = vpop.f32.mrb[0].mxu0
  %v5727 = vadd.f32 0.0, %v5726
  %v5728 = vpop.f32.mrb[0].mxu0
  %5729 = vmatprep.mubr.bf16.mxu0 0
  %5730 = vmatmul.mubr.bf16.gmra.mrb[0].mxu0 %v5347
  %v5731 = vpop.f32.mrb[0].mxu0
  %v5732 = vadd.f32 0.0, %v5731
  %v5733 = vpop.f32.mrb[0].mxu0
  %v5734 = vpop.f32.mrb[0].mxu0
  %v5735 = vadd.f32 0.0, %v5734
  %v5736 = vpop.f32.mrb[0].mxu0
  %5737 = vmatprep.mubr.bf16.mxu0 0
  %5738 = vmatmul.mubr.bf16.gmra.mrb[0].mxu0 %v5350
  %v5739 = vpop.f32.mrb[0].mxu0
  %v5740 = vadd.f32 0.0, %v5739
  %v5741 = vpop.f32.mrb[0].mxu0
  %v5742 = vpop.f32.mrb[0].mxu0
  %v5743 = vadd.f32 0.0, %v5742
  %v5744 = vpop.f32.mrb[0].mxu0
  %5745 = vmatprep.mubr.bf16.mxu0 0
  %5746 = vmatmul.mubr.bf16.gmra.mrb[0].mxu0 %v5353
  %v5747 = vpop.f32.mrb[0].mxu0
  %v5748 = vadd.f32 0.0, %v5747
  %v5749 = vpop.f32.mrb[0].mxu0
  %v5750 = vpop.f32.mrb[0].mxu0
  %v5751 = vadd.f32 0.0, %v5750
  %v5752 = vpop.f32.mrb[0].mxu0
  %5753 = vmatprep.mubr.bf16.mxu0 0
  %5754 = vmatmul.mubr.bf16.gmra.mrb[0].mxu0 %v5356
  %v5755 = vpop.f32.mrb[0].mxu0
  %v5756 = vadd.f32 0.0, %v5755
  %v5757 = vpop.f32.mrb[0].mxu0
  %v5758 = vpop.f32.mrb[0].mxu0
  %v5759 = vadd.f32 0.0, %v5758
  %v5760 = vpop.f32.mrb[0].mxu0
  %5761 = vmatprep.mubr.bf16.mxu0 0
  %5762 = vmatmul.mubr.bf16.gmra.mrb[0].mxu0 %v5359
  %v5763 = vpop.f32.mrb[0].mxu0
  %v5764 = vadd.f32 0.0, %v5763
  %v5765 = vpop.f32.mrb[0].mxu0
  %v5766 = vpop.f32.mrb[0].mxu0
  %v5767 = vadd.f32 0.0, %v5766
  %v5768 = vpop.f32.mrb[0].mxu0
  %5769 = vmatprep.mubr.bf16.mxu0 0
  %5770 = vmatmul.mubr.bf16.gmra.mrb[0].mxu0 %v5362
  %v5771 = vpop.f32.mrb[0].mxu0
  %v5772 = vadd.f32 0.0, %v5771
  %v5773 = vpop.f32.mrb[0].mxu0
  %v5774 = vpop.f32.mrb[0].mxu0
  %v5775 = vadd.f32 0.0, %v5774
  %v5776 = vpop.f32.mrb[0].mxu0
  %5777 = vmatprep.mubr.bf16.mxu0 0
  %5778 = vmatmul.mubr.bf16.gmra.mrb[0].mxu0 %v5365
  %v5779 = vpop.f32.mrb[0].mxu0
  %v5780 = vadd.f32 0.0, %v5779
  %v5781 = vpop.f32.mrb[0].mxu0
  %v5782 = vpop.f32.mrb[0].mxu0
  %v5783 = vadd.f32 0.0, %v5782
  %v5784 = vpop.f32.mrb[0].mxu0
  %5785 = vmatprep.mubr.bf16.mxu0 0
  %5786 = vmatmul.mubr.bf16.gmra.mrb[0].mxu0 %v5368
  %v5787 = vpop.f32.mrb[0].mxu0
  %v5788 = vadd.f32 0.0, %v5787
  %v5789 = vpop.f32.mrb[0].mxu0
  %v5790 = vpop.f32.mrb[0].mxu0
  %v5791 = vadd.f32 0.0, %v5790
  %v5792 = vpop.f32.mrb[0].mxu0
  %5793 = vmatprep.mubr.bf16.mxu0 0
  %5794 = vmatmul.mubr.bf16.gmra.mrb[0].mxu0 %v5371
  %v5795 = vpop.f32.mrb[0].mxu0
  %v5796 = vadd.f32 0.0, %v5795
  %v5797 = vpop.f32.mrb[0].mxu0
  %v5798 = vpop.f32.mrb[0].mxu0
  %v5799 = vadd.f32 0.0, %v5798
  %v5800 = vpop.f32.mrb[0].mxu0
  %5801 = vmatprep.mubr.bf16.mxu0 0
  %5802 = vmatmul.mubr.bf16.gmra.mrb[0].mxu0 %v5374
  %v5803 = vpop.f32.mrb[0].mxu0
  %v5804 = vadd.f32 0.0, %v5803
  %v5805 = vpop.f32.mrb[0].mxu0
  %v5806 = vpop.f32.mrb[0].mxu0
  %v5807 = vadd.f32 0.0, %v5806
  %v5808 = vpop.f32.mrb[0].mxu0
  %5809 = vmatprep.mubr.bf16.mxu0 0
  %5810 = vmatmul.mubr.bf16.gmra.mrb[0].mxu0 %v5377
  %v5811 = vpop.f32.mrb[0].mxu0
  %v5812 = vadd.f32 0.0, %v5811
  %v5813 = vpop.f32.mrb[0].mxu0
  %v5814 = vpop.f32.mrb[0].mxu0
  %v5815 = vadd.f32 0.0, %v5814
  %v5816 = vpop.f32.mrb[0].mxu0
  %5817 = vmatprep.mubr.bf16.mxu0 0
  %5818 = vmatmul.mubr.bf16.gmra.mrb[0].mxu0 %v5380
  %v5819 = vpop.f32.mrb[0].mxu0
  %v5820 = vadd.f32 0.0, %v5819
  %v5821 = vpop.f32.mrb[0].mxu0
  %v5822 = vpop.f32.mrb[0].mxu0
  %v5823 = vadd.f32 0.0, %v5822
  %v5824 = vpop.f32.mrb[0].mxu0
  %5825 = vmatprep.mubr.bf16.mxu0 0
  %5826 = vmatmul.mubr.bf16.gmra.mrb[0].mxu0 %v5383
  %v5827 = vpop.f32.mrb[0].mxu0
  %v5828 = vadd.f32 0.0, %v5827
  %v5829 = vpop.f32.mrb[0].mxu0
  %v5830 = vpop.f32.mrb[0].mxu0
  %v5831 = vadd.f32 0.0, %v5830
  %v5832 = vpop.f32.mrb[0].mxu0
  %5833 = vmatprep.mubr.bf16.mxu0 0
  %5834 = vmatmul.mubr.bf16.gmra.mrb[0].mxu0 %v5386
  %v5835 = vpop.f32.mrb[0].mxu0
  %v5836 = vadd.f32 0.0, %v5835
  %v5837 = vpop.f32.mrb[0].mxu0
  %v5838 = vpop.f32.mrb[0].mxu0
  %v5839 = vadd.f32 0.0, %v5838
  %v5840 = vpop.f32.mrb[0].mxu0
  %5841 = vmatprep.mubr.bf16.mxu0 0
  %5842 = vmatmul.mubr.bf16.gmra.mrb[0].mxu0 %v5389
  %v5843 = vpop.f32.mrb[0].mxu0
  %v5844 = vadd.f32 0.0, %v5843
  %v5845 = vpop.f32.mrb[0].mxu0
  %v5846 = vpop.f32.mrb[0].mxu0
  %v5847 = vadd.f32 0.0, %v5846
  %v5848 = vpop.f32.mrb[0].mxu0
  %5849 = vmatprep.mubr.bf16.mxu0 0
  %5850 = vmatmul.mubr.bf16.gmra.mrb[0].mxu0 %v5392
  %v5851 = vpop.f32.mrb[0].mxu0
  %v5852 = vadd.f32 0.0, %v5851
  %v5853 = vpop.f32.mrb[0].mxu0
  %v5854 = vpop.f32.mrb[0].mxu0
  %v5855 = vadd.f32 0.0, %v5854
  %v5856 = vpop.f32.mrb[0].mxu0
  %5857 = vmatprep.mubr.bf16.mxu0 0
  %5858 = vmatmul.mubr.bf16.gmra.mrb[0].mxu0 %v5395
  %v5859 = vpop.f32.mrb[0].mxu0
  %v5860 = vadd.f32 0.0, %v5859
  %v5861 = vpop.f32.mrb[0].mxu0
  %v5862 = vpop.f32.mrb[0].mxu0
  %v5863 = vadd.f32 0.0, %v5862
  %v5864 = vpop.f32.mrb[0].mxu0
  %5865 = vmatprep.mubr.bf16.mxu0 0
  %5866 = vmatmul.mubr.bf16.gmra.mrb[0].mxu0 %v5398
  %v5867 = vpop.f32.mrb[0].mxu0
  %v5868 = vadd.f32 0.0, %v5867
  %v5869 = vpop.f32.mrb[0].mxu0
  %v5870 = vpop.f32.mrb[0].mxu0
  %v5871 = vadd.f32 0.0, %v5870
  %v5872 = vpop.f32.mrb[0].mxu0
  %5873 = vmatprep.mubr.bf16.mxu0 0
  %5874 = vmatmul.mubr.bf16.gmra.mrb[0].mxu0 %v5401
  %v5875 = vpop.f32.mrb[0].mxu0
  %v5876 = vadd.f32 0.0, %v5875
  %v5877 = vpop.f32.mrb[0].mxu0
  %v5878 = vpop.f32.mrb[0].mxu0
  %v5879 = vadd.f32 0.0, %v5878
  %v5880 = vpop.f32.mrb[0].mxu0
  %5881 = vmatprep.mubr.bf16.mxu0 0
  %5882 = vmatmul.mubr.bf16.gmra.mrb[0].mxu0 %v5404
  %v5883 = vpop.f32.mrb[0].mxu0
  %v5884 = vadd.f32 0.0, %v5883
  %v5885 = vpop.f32.mrb[0].mxu0
  %v5886 = vpop.f32.mrb[0].mxu0
  %v5887 = vadd.f32 0.0, %v5886
  %v5888 = vpop.f32.mrb[0].mxu0
  %5889 = vmatprep.mubr.bf16.mxu0 0
  %5890 = vmatmul.mubr.bf16.gmra.mrb[0].mxu0 %v5407
  %v5891 = vpop.f32.mrb[0].mxu0
  %v5892 = vadd.f32 0.0, %v5891
  %v5893 = vpop.f32.mrb[0].mxu0
  %v5894 = vpop.f32.mrb[0].mxu0
  %v5895 = vadd.f32 0.0, %v5894
  %v5896 = vpop.f32.mrb[0].mxu0
  %5897 = vmatprep.mubr.bf16.mxu0 0
  %5898 = vmatmul.mubr.bf16.gmra.mrb[0].mxu0 %v5410
  %v5899 = vpop.f32.mrb[0].mxu0
  %v5900 = vadd.f32 0.0, %v5899
  %v5901 = vpop.f32.mrb[0].mxu0
  %v5902 = vpop.f32.mrb[0].mxu0
  %v5903 = vadd.f32 0.0, %v5902
  %v5904 = vpop.f32.mrb[0].mxu0
  %5905 = vmatprep.mubr.bf16.mxu0 0
  %5906 = vmatmul.mubr.bf16.gmra.mrb[0].mxu0 %v5413
  %v5907 = vpop.f32.mrb[0].mxu0
  %v5908 = vadd.f32 0.0, %v5907
  %v5909 = vpop.f32.mrb[0].mxu0
  %v5910 = vpop.f32.mrb[0].mxu0
  %v5911 = vadd.f32 0.0, %v5910
  %v5912 = vpop.f32.mrb[0].mxu0
  %5913 = vmatprep.mubr.bf16.mxu0 0
  %5914 = vmatmul.mubr.bf16.gmra.mrb[0].mxu0 %v5416
  %v5915 = vpop.f32.mrb[0].mxu0
  %v5916 = vadd.f32 0.0, %v5915
  %v5917 = vpop.f32.mrb[0].mxu0
  %v5918 = vpop.f32.mrb[0].mxu0
  %v5919 = vadd.f32 0.0, %v5918
  %v5920 = vpop.f32.mrb[0].mxu0
  %5921 = vmatprep.mubr.bf16.mxu0 0
  %5922 = vmatmul.mubr.bf16.gmra.mrb[0].mxu0 %v5419
  %v5923 = vpop.f32.mrb[0].mxu0
  %v5924 = vadd.f32 0.0, %v5923
  %v5925 = vpop.f32.mrb[0].mxu0
  %v5926 = vpop.f32.mrb[0].mxu0
  %v5927 = vadd.f32 0.0, %v5926
  %v5928 = vpop.f32.mrb[0].mxu0
  %5929 = vmatprep.mubr.bf16.mxu0 0
  %5930 = vmatmul.mubr.bf16.gmra.mrb[0].mxu0 %v5422
  %v5931 = vpop.f32.mrb[0].mxu0
  %v5932 = vadd.f32 0.0, %v5931
  %v5933 = vpop.f32.mrb[0].mxu0
  %v5934 = vpop.f32.mrb[0].mxu0
  %v5935 = vadd.f32 0.0, %v5934
  %v5936 = vpop.f32.mrb[0].mxu0
  %5937 = vmatprep.mubr.bf16.mxu0 0
  %5938 = vmatmul.mubr.bf16.gmra.mrb[0].mxu0 %v5425
  %v5939 = vpop.f32.mrb[0].mxu0
  %v5940 = vadd.f32 0.0, %v5939
  %v5941 = vpop.f32.mrb[0].mxu0
  %v5942 = vpop.f32.mrb[0].mxu0
  %v5943 = vadd.f32 0.0, %v5942
  %v5944 = vpop.f32.mrb[0].mxu0
  %5945 = vmatprep.mubr.bf16.mxu0 0
  %5946 = vmatmul.mubr.bf16.gmra.mrb[0].mxu0 %v5428
  %v5947 = vpop.f32.mrb[0].mxu0
  %v5948 = vadd.f32 0.0, %v5947
  %v5949 = vpop.f32.mrb[0].mxu0
  %v5950 = vpop.f32.mrb[0].mxu0
  %v5951 = vadd.f32 0.0, %v5950
  %v5952 = vpop.f32.mrb[0].mxu0
  %5953 = vmatprep.mubr.bf16.mxu0 0
  %5954 = vmatmul.mubr.bf16.gmra.mrb[0].mxu0 %v5431
  %v5955 = vpop.f32.mrb[0].mxu0
  %v5956 = vadd.f32 0.0, %v5955
  %v5957 = vpop.f32.mrb[0].mxu0
  %v5958 = vpop.f32.mrb[0].mxu0
  %v5959 = vadd.f32 0.0, %v5958
  %v5960 = vpop.f32.mrb[0].mxu0
  %5961 = vmatprep.mubr.bf16.mxu0 0
  %5962 = vmatmul.mubr.bf16.gmra.mrb[0].mxu0 %v5434
  %v5963 = vpop.f32.mrb[0].mxu0
  %v5964 = vadd.f32 0.0, %v5963
  %v5965 = vpop.f32.mrb[0].mxu0
  %v5966 = vpop.f32.mrb[0].mxu0
  %v5967 = vadd.f32 0.0, %v5966
  %v5968 = vpop.f32.mrb[0].mxu0
  %5969 = vmatprep.mubr.bf16.mxu0 0
  %5970 = vmatmul.mubr.bf16.gmra.mrb[0].mxu0 %v5437
  %v5971 = vpop.f32.mrb[0].mxu0
  %v5972 = vadd.f32 0.0, %v5971
  %v5973 = vpop.f32.mrb[0].mxu0
  %v5974 = vpop.f32.mrb[0].mxu0
  %v5975 = vadd.f32 0.0, %v5974
  %v5976 = vpop.f32.mrb[0].mxu0
  %5977 = vmatprep.mubr.bf16.mxu0 0
  %5978 = vmatmul.mubr.bf16.gmra.mrb[0].mxu0 %v5440
  %v5979 = vpop.f32.mrb[0].mxu0
  %v5980 = vadd.f32 0.0, %v5979
  %v5981 = vpop.f32.mrb[0].mxu0
  %v5982 = vpop.f32.mrb[0].mxu0
  %v5983 = vadd.f32 0.0, %v5982
  %v5984 = vpop.f32.mrb[0].mxu0
  %5985 = vmatprep.mubr.bf16.mxu0 0
  %5986 = vmatmul.mubr.bf16.gmra.mrb[0].mxu0 %v5443
  %v5987 = vpop.f32.mrb[0].mxu0
  %v5988 = vadd.f32 0.0, %v5987
  %v5989 = vpop.f32.mrb[0].mxu0
  %v5990 = vpop.f32.mrb[0].mxu0
  %v5991 = vadd.f32 0.0, %v5990
  %v5992 = vpop.f32.mrb[0].mxu0
  %5993 = vmatprep.mubr.bf16.mxu0 0
  %5994 = vmatmul.mubr.bf16.gmra.mrb[0].mxu0 %v5446
  %v5995 = vpop.f32.mrb[0].mxu0
  %v5996 = vadd.f32 0.0, %v5995
  %v5997 = vpop.f32.mrb[0].mxu0
  %v5998 = vpop.f32.mrb[0].mxu0
  %v5999 = vadd.f32 0.0, %v5998
  %v6000 = vpop.f32.mrb[0].mxu0
  %6001 = vmatprep.mubr.bf16.mxu0 0
  %6002 = vmatmul.mubr.bf16.gmra.mrb[0].mxu0 %v5449
  %v6003 = vpop.f32.mrb[0].mxu0
  %v6004 = vadd.f32 0.0, %v6003
  %v6005 = vpop.f32.mrb[0].mxu0
  %v6006 = vpop.f32.mrb[0].mxu0
  %v6007 = vadd.f32 0.0, %v6006
  %v6008 = vpop.f32.mrb[0].mxu0
  %6009 = vmatprep.mubr.bf16.mxu0 0
  %6010 = vmatmul.mubr.bf16.gmra.mrb[0].mxu0 %v5452
  %v6011 = vpop.f32.mrb[0].mxu0
  %v6012 = vadd.f32 0.0, %v6011
  %v6013 = vpop.f32.mrb[0].mxu0
  %v6014 = vpop.f32.mrb[0].mxu0
  %v6015 = vadd.f32 0.0, %v6014
  %v6016 = vpop.f32.mrb[0].mxu0
  %6017 = vmatprep.mubr.bf16.mxu0 0
  %6018 = vmatmul.mubr.bf16.gmra.mrb[0].mxu0 %v5455
  %v6019 = vpop.f32.mrb[0].mxu0
  %v6020 = vadd.f32 0.0, %v6019
  %v6021 = vpop.f32.mrb[0].mxu0
  %v6022 = vpop.f32.mrb[0].mxu0
  %v6023 = vadd.f32 0.0, %v6022
  %v6024 = vpop.f32.mrb[0].mxu0
  %6025 = vmatprep.mubr.bf16.mxu0 0
  %6026 = vmatmul.mubr.bf16.gmra.mrb[0].mxu0 %v5458
  %v6027 = vpop.f32.mrb[0].mxu0
  %v6028 = vadd.f32 0.0, %v6027
  %v6029 = vpop.f32.mrb[0].mxu0
  %v6030 = vpop.f32.mrb[0].mxu0
  %v6031 = vadd.f32 0.0, %v6030
  %v6032 = vpop.f32.mrb[0].mxu0
  %6033 = vmatprep.mubr.bf16.mxu0 0
  %6034 = vmatmul.mubr.bf16.gmra.mrb[0].mxu0 %v5461
  %v6035 = vpop.f32.mrb[0].mxu0
  %v6036 = vadd.f32 0.0, %v6035
  %v6037 = vpop.f32.mrb[0].mxu0
  %v6038 = vpop.f32.mrb[0].mxu0
  %v6039 = vadd.f32 0.0, %v6038
  %v6040 = vpop.f32.mrb[0].mxu0
  %6041 = vmatprep.mubr.bf16.mxu0 0
  %6042 = vmatmul.mubr.bf16.gmra.mrb[0].mxu0 %v5464
  %v6043 = vpop.f32.mrb[0].mxu0
  %v6044 = vadd.f32 0.0, %v6043
  %v6045 = vpop.f32.mrb[0].mxu0
  %v6046 = vpop.f32.mrb[0].mxu0
  %v6047 = vadd.f32 0.0, %v6046
  %v6048 = vpop.f32.mrb[0].mxu0
  %6049 = vmatprep.mubr.bf16.mxu0 0
  %6050 = vmatmul.mubr.bf16.gmra.mrb[0].mxu0 %v5467
  %v6051 = vpop.f32.mrb[0].mxu0
  %v6052 = vadd.f32 0.0, %v6051
  %v6053 = vpop.f32.mrb[0].mxu0
  %v6054 = vpop.f32.mrb[0].mxu0
  %v6055 = vadd.f32 0.0, %v6054
  %v6056 = vpop.f32.mrb[0].mxu0
  %6057 = vmatprep.mubr.bf16.mxu0 0
  %6058 = vmatmul.mubr.bf16.gmra.mrb[0].mxu0 %v5470
  %v6059 = vpop.f32.mrb[0].mxu0
  %v6060 = vadd.f32 0.0, %v6059
  %v6061 = vpop.f32.mrb[0].mxu0
  %v6062 = vpop.f32.mrb[0].mxu0
  %v6063 = vadd.f32 0.0, %v6062
  %v6064 = vpop.f32.mrb[0].mxu0
  %6065 = vmatprep.mubr.bf16.mxu0 0
  %6066 = vmatmul.mubr.bf16.gmra.mrb[0].mxu0 %v5473
  %v6067 = vpop.f32.mrb[0].mxu0
  %v6068 = vadd.f32 0.0, %v6067
  %v6069 = vpop.f32.mrb[0].mxu0
  %v6070 = vpop.f32.mrb[0].mxu0
  %v6071 = vadd.f32 0.0, %v6070
  %v6072 = vpop.f32.mrb[0].mxu0
  %6073 = vmatprep.mubr.bf16.mxu0 0
  %6074 = vmatmul.mubr.bf16.gmra.mrb[0].mxu0 %v5476
  %v6075 = vpop.f32.mrb[0].mxu0
  %v6076 = vadd.f32 0.0, %v6075
  %v6077 = vpop.f32.mrb[0].mxu0
  %v6078 = vpop.f32.mrb[0].mxu0
  %v6079 = vadd.f32 0.0, %v6078
  %v6080 = vpop.f32.mrb[0].mxu0
  %6081 = vmatprep.mubr.bf16.mxu0 0
  %6082 = vmatmul.mubr.bf16.gmra.mrb[0].mxu0 %v5479
  %v6083 = vpop.f32.mrb[0].mxu0
  %v6084 = vadd.f32 0.0, %v6083
  %v6085 = vpop.f32.mrb[0].mxu0
  %v6086 = vpop.f32.mrb[0].mxu0
  %v6087 = vadd.f32 0.0, %v6086
  %v6088 = vpop.f32.mrb[0].mxu0
  %6089 = vmatprep.mubr.bf16.mxu0 0
  %6090 = vmatmul.mubr.bf16.gmra.mrb[0].mxu0 %v5482
  %v6091 = vpop.f32.mrb[0].mxu0
  %v6092 = vadd.f32 0.0, %v6091
  %v6093 = vpop.f32.mrb[0].mxu0
  %v6094 = vpop.f32.mrb[0].mxu0
  %v6095 = vadd.f32 0.0, %v6094
  %v6096 = vpop.f32.mrb[0].mxu0
  %6097 = vmatprep.mubr.bf16.mxu0 0
  %6098 = vmatmul.mubr.bf16.gmra.mrb[0].mxu0 %v5485
  %v6099 = vpop.f32.mrb[0].mxu0
  %v6100 = vadd.f32 0.0, %v6099
  %v6101 = vpop.f32.mrb[0].mxu0
  %v6102 = vpop.f32.mrb[0].mxu0
  %v6103 = vadd.f32 0.0, %v6102
  %v6104 = vpop.f32.mrb[0].mxu0
  %6105 = vmatprep.mubr.bf16.mxu0 0
  %6106 = vmatmul.mubr.bf16.gmra.mrb[0].mxu0 %v5488
  %v6107 = vpop.f32.mrb[0].mxu0
  %v6108 = vadd.f32 0.0, %v6107
  %v6109 = vpop.f32.mrb[0].mxu0
  %v6110 = vpop.f32.mrb[0].mxu0
  %v6111 = vadd.f32 0.0, %v6110
  %v6112 = vpop.f32.mrb[0].mxu0
  %6113 = vmatprep.mubr.bf16.mxu0 0
  %6114 = vmatmul.mubr.bf16.gmra.mrb[0].mxu0 %v5491
  %v6115 = vpop.f32.mrb[0].mxu0
  %v6116 = vadd.f32 0.0, %v6115
  %v6117 = vpop.f32.mrb[0].mxu0
  %v6118 = vpop.f32.mrb[0].mxu0
  %v6119 = vadd.f32 0.0, %v6118
  %v6120 = vpop.f32.mrb[0].mxu0
  %6121 = vmatprep.mubr.bf16.mxu0 0
  %6122 = vmatmul.mubr.bf16.gmra.mrb[0].mxu0 %v5494
  %v6123 = vpop.f32.mrb[0].mxu0
  %v6124 = vadd.f32 0.0, %v6123
  %v6125 = vpop.f32.mrb[0].mxu0
  %v6126 = vpop.f32.mrb[0].mxu0
  %v6127 = vadd.f32 0.0, %v6126
  %v6128 = vpop.f32.mrb[0].mxu0
  %6129 = vmatprep.mubr.bf16.mxu0 0
  %6130 = vmatmul.mubr.bf16.gmra.mrb[0].mxu0 %v5497
  %v6131 = vpop.f32.mrb[0].mxu0
  %v6132 = vadd.f32 0.0, %v6131
  %v6133 = vpop.f32.mrb[0].mxu0
  %v6134 = vpop.f32.mrb[0].mxu0
  %v6135 = vadd.f32 0.0, %v6134
  %v6136 = vpop.f32.mrb[0].mxu0
  %6137 = vmatprep.mubr.bf16.mxu0 0
  %6138 = vmatmul.mubr.bf16.gmra.mrb[0].mxu0 %v5500
  %v6139 = vpop.f32.mrb[0].mxu0
  %v6140 = vadd.f32 0.0, %v6139
  %v6141 = vpop.f32.mrb[0].mxu0
  %v6142 = vpop.f32.mrb[0].mxu0
  %v6143 = vadd.f32 0.0, %v6142
  %v6144 = vpop.f32.mrb[0].mxu0
  %6145 = vmatprep.mubr.bf16.mxu0 0
  %6146 = vmatmul.mubr.bf16.gmra.mrb[0].mxu0 %v5503
  %v6147 = vpop.f32.mrb[0].mxu0
  %v6148 = vadd.f32 0.0, %v6147
  %v6149 = vpop.f32.mrb[0].mxu0
  %v6150 = vpop.f32.mrb[0].mxu0
  %v6151 = vadd.f32 0.0, %v6150
  %v6152 = vpop.f32.mrb[0].mxu0
  %6153 = vmatprep.mubr.bf16.mxu0 0
  %6154 = vmatmul.mubr.bf16.gmra.mrb[0].mxu0 %v5506
  %v6155 = vpop.f32.mrb[0].mxu0
  %v6156 = vadd.f32 0.0, %v6155
  %v6157 = vpop.f32.mrb[0].mxu0
  %v6158 = vpop.f32.mrb[0].mxu0
  %v6159 = vadd.f32 0.0, %v6158
  %v6160 = vpop.f32.mrb[0].mxu0
  %6161 = vmatprep.mubr.bf16.mxu0 0
  %6162 = vmatmul.mubr.bf16.gmra.mrb[0].mxu0 %v5509
  %v6163 = vpop.f32.mrb[0].mxu0
  %v6164 = vadd.f32 0.0, %v6163
  %v6165 = vpop.f32.mrb[0].mxu0
  %v6166 = vpop.f32.mrb[0].mxu0
  %v6167 = vadd.f32 0.0, %v6166
  %v6168 = vpop.f32.mrb[0].mxu0
  %6169 = vmatprep.mubr.bf16.mxu0 0
  %6170 = vmatmul.mubr.bf16.gmra.mrb[0].mxu0 %v5512
  %v6171 = vpop.f32.mrb[0].mxu0
  %v6172 = vadd.f32 0.0, %v6171
  %v6173 = vpop.f32.mrb[0].mxu0
  %v6174 = vpop.f32.mrb[0].mxu0
  %v6175 = vadd.f32 0.0, %v6174
  %v6176 = vpop.f32.mrb[0].mxu0
  %6177 = vmatprep.mubr.bf16.mxu0 0
  %6178 = vmatmul.mubr.bf16.gmra.mrb[0].mxu0 %v5515
  %v6179 = vpop.f32.mrb[0].mxu0
  %v6180 = vadd.f32 0.0, %v6179
  %v6181 = vpop.f32.mrb[0].mxu0
  %v6182 = vpop.f32.mrb[0].mxu0
  %v6183 = vadd.f32 0.0, %v6182
  %v6184 = vpop.f32.mrb[0].mxu0
  %6185 = vmatprep.mubr.bf16.mxu0 0
  %6186 = vmatmul.mubr.bf16.gmra.mrb[0].mxu0 %v5518
  %v6187 = vpop.f32.mrb[0].mxu0
  %v6188 = vadd.f32 0.0, %v6187
  %v6189 = vpop.f32.mrb[0].mxu0
  %v6190 = vpop.f32.mrb[0].mxu0
  %v6191 = vadd.f32 0.0, %v6190
  %v6192 = vpop.f32.mrb[0].mxu0
  %6193 = vmatprep.mubr.bf16.mxu0 0
  %6194 = vmatmul.mubr.bf16.gmra.mrb[0].mxu0 %v5521
  %v6195 = vpop.f32.mrb[0].mxu0
  %v6196 = vadd.f32 0.0, %v6195
  %v6197 = vpop.f32.mrb[0].mxu0
  %v6198 = vpop.f32.mrb[0].mxu0
  %v6199 = vadd.f32 0.0, %v6198
  %v6200 = vpop.f32.mrb[0].mxu0
  %6201 = vmatprep.mubr.bf16.mxu0 0
  %6202 = vmatmul.mubr.bf16.gmra.mrb[0].mxu0 %v5524
  %v6203 = vpop.f32.mrb[0].mxu0
  %v6204 = vadd.f32 0.0, %v6203
  %v6205 = vpop.f32.mrb[0].mxu0
  %v6206 = vpop.f32.mrb[0].mxu0
  %v6207 = vadd.f32 0.0, %v6206
  %v6208 = vpop.f32.mrb[0].mxu0
  %6209 = vdwg.mxu0
  %v6210 = vadd.f32 %v4877, %v5564
  %v6211 = vadd.f32 %v4878, %v5567
  %v6212 = vadd.f32 %v4879, %v5572
  %v6213 = vadd.f32 %v4880, %v5575
  %v6214 = vadd.f32 %v4881, %v5580
  %v6215 = vadd.f32 %v4882, %v5583
  %v6216 = vadd.f32 %v4883, %v5588
  %v6217 = vadd.f32 %v4884, %v5591
  %v6218 = vadd.f32 %v4885, %v5596
  %v6219 = vadd.f32 %v4886, %v5599
  %v6220 = vadd.f32 %v4887, %v5604
  %v6221 = vadd.f32 %v4888, %v5607
  %v6222 = vadd.f32 %v4889, %v5612
  %v6223 = vadd.f32 %v4890, %v5615
  %v6224 = vadd.f32 %v4891, %v5620
  %v6225 = vadd.f32 %v4892, %v5623
  %v6226 = vadd.f32 %v4893, %v5628
  %v6227 = vadd.f32 %v4894, %v5631
  %v6228 = vadd.f32 %v4895, %v5636
  %v6229 = vadd.f32 %v4896, %v5639
  %v6230 = vadd.f32 %v4897, %v5644
  %v6231 = vadd.f32 %v4898, %v5647
  %v6232 = vadd.f32 %v4899, %v5652
  %v6233 = vadd.f32 %v4900, %v5655
  %v6234 = vadd.f32 %v4901, %v5660
  %v6235 = vadd.f32 %v4902, %v5663
  %v6236 = vadd.f32 %v4903, %v5668
  %v6237 = vadd.f32 %v4904, %v5671
  %v6238 = vadd.f32 %v4905, %v5676
  %v6239 = vadd.f32 %v4906, %v5679
  %v6240 = vadd.f32 %v4907, %v5684
  %v6241 = vadd.f32 %v4908, %v5687
  %v6242 = vadd.f32 %v4909, %v5692
  %v6243 = vadd.f32 %v4910, %v5695
  %v6244 = vadd.f32 %v4911, %v5700
  %v6245 = vadd.f32 %v4912, %v5703
  %v6246 = vadd.f32 %v4913, %v5708
  %v6247 = vadd.f32 %v4914, %v5711
  %v6248 = vadd.f32 %v4915, %v5716
  %v6249 = vadd.f32 %v4916, %v5719
  %v6250 = vadd.f32 %v4917, %v5724
  %v6251 = vadd.f32 %v4918, %v5727
  %v6252 = vadd.f32 %v4919, %v5732
  %v6253 = vadd.f32 %v4920, %v5735
  %v6254 = vadd.f32 %v4921, %v5740
  %v6255 = vadd.f32 %v4922, %v5743
  %v6256 = vadd.f32 %v4923, %v5748
  %v6257 = vadd.f32 %v4924, %v5751
  %v6258 = vadd.f32 %v4925, %v5756
  %v6259 = vadd.f32 %v4926, %v5759
  %v6260 = vadd.f32 %v4927, %v5764
  %v6261 = vadd.f32 %v4928, %v5767
  %v6262 = vadd.f32 %v4929, %v5772
  %v6263 = vadd.f32 %v4930, %v5775
  %v6264 = vadd.f32 %v4931, %v5780
  %v6265 = vadd.f32 %v4932, %v5783
  %v6266 = vadd.f32 %v4933, %v5788
  %v6267 = vadd.f32 %v4934, %v5791
  %v6268 = vadd.f32 %v4935, %v5796
  %v6269 = vadd.f32 %v4936, %v5799
  %v6270 = vadd.f32 %v4937, %v5804
  %v6271 = vadd.f32 %v4938, %v5807
  %v6272 = vadd.f32 %v4939, %v5812
  %v6273 = vadd.f32 %v4940, %v5815
  %v6274 = vadd.f32 %v4941, %v5820
  %v6275 = vadd.f32 %v4942, %v5823
  %v6276 = vadd.f32 %v4943, %v5828
  %v6277 = vadd.f32 %v4944, %v5831
  %v6278 = vadd.f32 %v4945, %v5836
  %v6279 = vadd.f32 %v4946, %v5839
  %v6280 = vadd.f32 %v4947, %v5844
  %v6281 = vadd.f32 %v4948, %v5847
  %v6282 = vadd.f32 %v4949, %v5852
  %v6283 = vadd.f32 %v4950, %v5855
  %v6284 = vadd.f32 %v4951, %v5860
  %v6285 = vadd.f32 %v4952, %v5863
  %v6286 = vadd.f32 %v4953, %v5868
  %v6287 = vadd.f32 %v4954, %v5871
  %v6288 = vadd.f32 %v4955, %v5876
  %v6289 = vadd.f32 %v4956, %v5879
  %v6290 = vadd.f32 %v4957, %v5884
  %v6291 = vadd.f32 %v4958, %v5887
  %v6292 = vadd.f32 %v4959, %v5892
  %v6293 = vadd.f32 %v4960, %v5895
  %v6294 = vadd.f32 %v4961, %v5900
  %v6295 = vadd.f32 %v4962, %v5903
  %v6296 = vadd.f32 %v4963, %v5908
  %v6297 = vadd.f32 %v4964, %v5911
  %v6298 = vadd.f32 %v4965, %v5916
  %v6299 = vadd.f32 %v4966, %v5919
  %v6300 = vadd.f32 %v4967, %v5924
  %v6301 = vadd.f32 %v4968, %v5927
  %v6302 = vadd.f32 %v4969, %v5932
  %v6303 = vadd.f32 %v4970, %v5935
  %v6304 = vadd.f32 %v4971, %v5940
  %v6305 = vadd.f32 %v4972, %v5943
  %v6306 = vadd.f32 %v4973, %v5948
  %v6307 = vadd.f32 %v4974, %v5951
  %v6308 = vadd.f32 %v4975, %v5956
  %v6309 = vadd.f32 %v4976, %v5959
  %v6310 = vadd.f32 %v4977, %v5964
  %v6311 = vadd.f32 %v4978, %v5967
  %v6312 = vadd.f32 %v4979, %v5972
  %v6313 = vadd.f32 %v4980, %v5975
  %v6314 = vadd.f32 %v4981, %v5980
  %v6315 = vadd.f32 %v4982, %v5983
  %v6316 = vadd.f32 %v4983, %v5988
  %v6317 = vadd.f32 %v4984, %v5991
  %v6318 = vadd.f32 %v4985, %v5996
  %v6319 = vadd.f32 %v4986, %v5999
  %v6320 = vadd.f32 %v4987, %v6004
  %v6321 = vadd.f32 %v4988, %v6007
  %v6322 = vadd.f32 %v4989, %v6012
  %v6323 = vadd.f32 %v4990, %v6015
  %v6324 = vadd.f32 %v4991, %v6020
  %v6325 = vadd.f32 %v4992, %v6023
  %v6326 = vadd.f32 %v4993, %v6028
  %v6327 = vadd.f32 %v4994, %v6031
  %v6328 = vadd.f32 %v4995, %v6036
  %v6329 = vadd.f32 %v4996, %v6039
  %v6330 = vadd.f32 %v4997, %v6044
  %v6331 = vadd.f32 %v4998, %v6047
  %v6332 = vadd.f32 %v4999, %v6052
  %v6333 = vadd.f32 %v5000, %v6055
  %v6334 = vadd.f32 %v5001, %v6060
  %v6335 = vadd.f32 %v5002, %v6063
  %v6336 = vadd.f32 %v5003, %v6068
  %v6337 = vadd.f32 %v5004, %v6071
  %v6338 = vadd.f32 %v5005, %v6076
  %v6339 = vadd.f32 %v5006, %v6079
  %v6340 = vadd.f32 %v5007, %v6084
  %v6341 = vadd.f32 %v5008, %v6087
  %v6342 = vadd.f32 %v5009, %v6092
  %v6343 = vadd.f32 %v5010, %v6095
  %v6344 = vadd.f32 %v5011, %v6100
  %v6345 = vadd.f32 %v5012, %v6103
  %v6346 = vadd.f32 %v5013, %v6108
  %v6347 = vadd.f32 %v5014, %v6111
  %v6348 = vadd.f32 %v5015, %v6116
  %v6349 = vadd.f32 %v5016, %v6119
  %v6350 = vadd.f32 %v5017, %v6124
  %v6351 = vadd.f32 %v5018, %v6127
  %v6352 = vadd.f32 %v5019, %v6132
  %v6353 = vadd.f32 %v5020, %v6135
  %v6354 = vadd.f32 %v5021, %v6140
  %v6355 = vadd.f32 %v5022, %v6143
  %v6356 = vadd.f32 %v5023, %v6148
  %v6357 = vadd.f32 %v5024, %v6151
  %v6358 = vadd.f32 %v5025, %v6156
  %v6359 = vadd.f32 %v5026, %v6159
  %v6360 = vadd.f32 %v5027, %v6164
  %v6361 = vadd.f32 %v5028, %v6167
  %v6362 = vadd.f32 %v5029, %v6172
  %v6363 = vadd.f32 %v5030, %v6175
  %v6364 = vadd.f32 %v5031, %v6180
  %v6365 = vadd.f32 %v5032, %v6183
  %v6366 = vadd.f32 %v5033, %v6188
  %v6367 = vadd.f32 %v5034, %v6191
  %v6368 = vadd.f32 %v5035, %v6196
  %v6369 = vadd.f32 %v5036, %v6199
  %v6370 = vadd.f32 %v5037, %v6204
  %v6371 = vadd.f32 %v5038, %v6207
  %v6372 = vld [vmem:[%s0 + $0x14] sm:$0xff]
  %v6373 = vld [vmem:[%s0 + $0x1c] sm:$0xff]
  %v6374 = vld [vmem:[%s0 + $0x24] sm:$0xff]
  %v6375 = vld [vmem:[%s0 + $0x2c] sm:$0xff]
  %v6376 = vld [vmem:[%s0 + $0x34] sm:$0xff]
  %v6377 = vld [vmem:[%s0 + $0x3c] sm:$0xff]
  %v6378 = vld [vmem:[%s0 + $0x44] sm:$0xff]
  %v6379 = vld [vmem:[%s0 + $0x4c] sm:$0xff]
  %v6380 = vld [vmem:[%s0 + $0x54] sm:$0xff]
  %v6381 = vld [vmem:[%s0 + $0x5c] sm:$0xff]
  %v6382 = vld [vmem:[%s0 + $0x64] sm:$0xff]
  %v6383 = vld [vmem:[%s0 + $0x6c] sm:$0xff]
  %v6384 = vld [vmem:[%s0 + $0x74] sm:$0xff]
  %v6385 = vld [vmem:[%s0 + $0x7c] sm:$0xff]
  %v6386 = vld [vmem:[%s0 + $0x84] sm:$0xff]
  %v6387 = vld [vmem:[%s0 + $0x8c] sm:$0xff]
  %v6388 = vld [vmem:[%s0 + $0x94] sm:$0xff]
  %v6389 = vld [vmem:[%s0 + $0x9c] sm:$0xff]
  %v6390 = vld [vmem:[%s0 + $0xa4] sm:$0xff]
  %v6391 = vld [vmem:[%s0 + $0xac] sm:$0xff]
  %v6392 = vld [vmem:[%s0 + $0xb4] sm:$0xff]
  %v6393 = vld [vmem:[%s0 + $0xbc] sm:$0xff]
  %v6394 = vld [vmem:[%s0 + $0xc4] sm:$0xff]
  %v6395 = vld [vmem:[%s0 + $0xcc] sm:$0xff]
  %v6396 = vld [vmem:[%s0 + $0xd4] sm:$0xff]
  %v6397 = vld [vmem:[%s0 + $0xdc] sm:$0xff]
  %v6398 = vld [vmem:[%s0 + $0xe4] sm:$0xff]
  %v6399 = vld [vmem:[%s0 + $0xec] sm:$0xff]
  %v6400 = vld [vmem:[%s0 + $0xf4] sm:$0xff]
  %v6401 = vld [vmem:[%s0 + $0xfc] sm:$0xff]
  %v6402 = vld [vmem:[%s0 + $0x104] sm:$0xff]
  %v6403 = vld [vmem:[%s0 + $0x10c] sm:$0xff]
  %v6404 = vld [vmem:[%s0 + $0x114] sm:$0xff]
  %v6405 = vld [vmem:[%s0 + $0x11c] sm:$0xff]
  %v6406 = vld [vmem:[%s0 + $0x124] sm:$0xff]
  %v6407 = vld [vmem:[%s0 + $0x12c] sm:$0xff]
  %v6408 = vld [vmem:[%s0 + $0x134] sm:$0xff]
  %v6409 = vld [vmem:[%s0 + $0x13c] sm:$0xff]
  %v6410 = vld [vmem:[%s0 + $0x144] sm:$0xff]
  %v6411 = vld [vmem:[%s0 + $0x14c] sm:$0xff]
  %v6412 = vld [vmem:[%s0 + $0x154] sm:$0xff]
  %v6413 = vld [vmem:[%s0 + $0x15c] sm:$0xff]
  %v6414 = vld [vmem:[%s0 + $0x164] sm:$0xff]
  %v6415 = vld [vmem:[%s0 + $0x16c] sm:$0xff]
  %v6416 = vld [vmem:[%s0 + $0x174] sm:$0xff]
  %v6417 = vld [vmem:[%s0 + $0x17c] sm:$0xff]
  %v6418 = vld [vmem:[%s0 + $0x184] sm:$0xff]
  %v6419 = vld [vmem:[%s0 + $0x18c] sm:$0xff]
  %v6420 = vld [vmem:[%s0 + $0x194] sm:$0xff]
  %v6421 = vld [vmem:[%s0 + $0x19c] sm:$0xff]
  %v6422 = vld [vmem:[%s0 + $0x1a4] sm:$0xff]
  %v6423 = vld [vmem:[%s0 + $0x1ac] sm:$0xff]
  %v6424 = vld [vmem:[%s0 + $0x1b4] sm:$0xff]
  %v6425 = vld [vmem:[%s0 + $0x1bc] sm:$0xff]
  %v6426 = vld [vmem:[%s0 + $0x1c4] sm:$0xff]
  %v6427 = vld [vmem:[%s0 + $0x1cc] sm:$0xff]
  %v6428 = vld [vmem:[%s0 + $0x1d4] sm:$0xff]
  %v6429 = vld [vmem:[%s0 + $0x1dc] sm:$0xff]
  %v6430 = vld [vmem:[%s0 + $0x1e4] sm:$0xff]
  %v6431 = vld [vmem:[%s0 + $0x1ec] sm:$0xff]
  %v6432 = vld [vmem:[%s0 + $0x1f4] sm:$0xff]
  %v6433 = vld [vmem:[%s0 + $0x1fc] sm:$0xff]
  %v6434 = vld [vmem:[%s0 + $0x204] sm:$0xff]
  %v6435 = vld [vmem:[%s0 + $0x20c] sm:$0xff]
  %v6436 = vld [vmem:[%s0 + $0x214] sm:$0xff]
  %v6437 = vld [vmem:[%s0 + $0x21c] sm:$0xff]
  %v6438 = vld [vmem:[%s0 + $0x224] sm:$0xff]
  %v6439 = vld [vmem:[%s0 + $0x22c] sm:$0xff]
  %v6440 = vld [vmem:[%s0 + $0x234] sm:$0xff]
  %v6441 = vld [vmem:[%s0 + $0x23c] sm:$0xff]
  %v6442 = vld [vmem:[%s0 + $0x244] sm:$0xff]
  %v6443 = vld [vmem:[%s0 + $0x24c] sm:$0xff]
  %v6444 = vld [vmem:[%s0 + $0x254] sm:$0xff]
  %v6445 = vld [vmem:[%s0 + $0x25c] sm:$0xff]
  %v6446 = vld [vmem:[%s0 + $0x264] sm:$0xff]
  %v6447 = vld [vmem:[%s0 + $0x26c] sm:$0xff]
  %v6448 = vld [vmem:[%s0 + $0x274] sm:$0xff]
  %v6449 = vld [vmem:[%s0 + $0x27c] sm:$0xff]
  %v6450 = vld [vmem:[%s0 + $0x284] sm:$0xff]
  %v6451 = vld [vmem:[%s0 + $0x28c] sm:$0xff]
  %v6452 = vld [vmem:[%s0 + $0x294] sm:$0xff]
  %v6453 = vld [vmem:[%s0 + $0x29c] sm:$0xff]
  %v6454 = vld [vmem:[%s0 + $0x2a4] sm:$0xff]
  %v6455 = vld [vmem:[%s0 + $0x2ac] sm:$0xff]
  %v6456 = vld [vmem:[%s0 + $0x2b4] sm:$0xff]
  %v6457 = vld [vmem:[%s0 + $0x2bc] sm:$0xff]
  %v6458 = vld [vmem:[%s0 + $0x2c4] sm:$0xff]
  %v6459 = vld [vmem:[%s0 + $0x2cc] sm:$0xff]
  %v6460 = vld [vmem:[%s0 + $0x2d4] sm:$0xff]
  %v6461 = vld [vmem:[%s0 + $0x2dc] sm:$0xff]
  %v6462 = vld [vmem:[%s0 + $0x2e4] sm:$0xff]
  %v6463 = vld [vmem:[%s0 + $0x2ec] sm:$0xff]
  %v6464 = vld [vmem:[%s0 + $0x2f4] sm:$0xff]
  %v6465 = vld [vmem:[%s0 + $0x2fc] sm:$0xff]
  %v6466 = vld [vmem:[%s0 + $0x304] sm:$0xff]
  %v6467 = vld [vmem:[%s0 + $0x30c] sm:$0xff]
  %v6468 = vld [vmem:[%s0 + $0x314] sm:$0xff]
  %v6469 = vld [vmem:[%s0 + $0x31c] sm:$0xff]
  %v6470 = vld [vmem:[%s0 + $0x324] sm:$0xff]
  %v6471 = vld [vmem:[%s0 + $0x32c] sm:$0xff]
  %v6472 = vld [vmem:[%s0 + $0x334] sm:$0xff]
  %v6473 = vld [vmem:[%s0 + $0x33c] sm:$0xff]
  %v6474 = vld [vmem:[%s0 + $0x344] sm:$0xff]
  %v6475 = vld [vmem:[%s0 + $0x34c] sm:$0xff]
  %v6476 = vld [vmem:[%s0 + $0x354] sm:$0xff]
  %v6477 = vld [vmem:[%s0 + $0x35c] sm:$0xff]
  %v6478 = vld [vmem:[%s0 + $0x364] sm:$0xff]
  %v6479 = vld [vmem:[%s0 + $0x36c] sm:$0xff]
  %v6480 = vld [vmem:[%s0 + $0x374] sm:$0xff]
  %v6481 = vld [vmem:[%s0 + $0x37c] sm:$0xff]
  %v6482 = vld [vmem:[%s0 + $0x384] sm:$0xff]
  %v6483 = vld [vmem:[%s0 + $0x38c] sm:$0xff]
  %v6484 = vld [vmem:[%s0 + $0x394] sm:$0xff]
  %v6485 = vld [vmem:[%s0 + $0x39c] sm:$0xff]
  %v6486 = vld [vmem:[%s0 + $0x3a4] sm:$0xff]
  %v6487 = vld [vmem:[%s0 + $0x3ac] sm:$0xff]
  %v6488 = vld [vmem:[%s0 + $0x3b4] sm:$0xff]
  %v6489 = vld [vmem:[%s0 + $0x3bc] sm:$0xff]
  %v6490 = vld [vmem:[%s0 + $0x3c4] sm:$0xff]
  %v6491 = vld [vmem:[%s0 + $0x3cc] sm:$0xff]
  %v6492 = vld [vmem:[%s0 + $0x3d4] sm:$0xff]
  %v6493 = vld [vmem:[%s0 + $0x3dc] sm:$0xff]
  %v6494 = vld [vmem:[%s0 + $0x3e4] sm:$0xff]
  %v6495 = vld [vmem:[%s0 + $0x3ec] sm:$0xff]
  %v6496 = vld [vmem:[%s0 + $0x3f4] sm:$0xff]
  %v6497 = vld [vmem:[%s0 + $0x3fc] sm:$0xff]
  %v6498 = vld [vmem:[%s0 + $0x404] sm:$0xff]
  %v6499 = vld [vmem:[%s0 + $0x40c] sm:$0xff]
  %v6500 = vld [vmem:[%s0 + $0x414] sm:$0xff]
  %v6501 = vld [vmem:[%s0 + $0x41c] sm:$0xff]
  %v6502 = vld [vmem:[%s0 + $0x424] sm:$0xff]
  %v6503 = vld [vmem:[%s0 + $0x42c] sm:$0xff]
  %v6504 = vld [vmem:[%s0 + $0x434] sm:$0xff]
  %v6505 = vld [vmem:[%s0 + $0x43c] sm:$0xff]
  %v6506 = vld [vmem:[%s0 + $0x444] sm:$0xff]
  %v6507 = vld [vmem:[%s0 + $0x44c] sm:$0xff]
  %v6508 = vld [vmem:[%s0 + $0x454] sm:$0xff]
  %v6509 = vld [vmem:[%s0 + $0x45c] sm:$0xff]
  %v6510 = vld [vmem:[%s0 + $0x464] sm:$0xff]
  %v6511 = vld [vmem:[%s0 + $0x46c] sm:$0xff]
  %v6512 = vld [vmem:[%s0 + $0x474] sm:$0xff]
  %v6513 = vld [vmem:[%s0 + $0x47c] sm:$0xff]
  %v6514 = vld [vmem:[%s0 + $0x484] sm:$0xff]
  %v6515 = vld [vmem:[%s0 + $0x48c] sm:$0xff]
  %v6516 = vld [vmem:[%s0 + $0x494] sm:$0xff]
  %v6517 = vld [vmem:[%s0 + $0x49c] sm:$0xff]
  %v6518 = vld [vmem:[%s0 + $0x4a4] sm:$0xff]
  %v6519 = vld [vmem:[%s0 + $0x4ac] sm:$0xff]
  %v6520 = vld [vmem:[%s0 + $0x4b4] sm:$0xff]
  %v6521 = vld [vmem:[%s0 + $0x4bc] sm:$0xff]
  %v6522 = vld [vmem:[%s0 + $0x4c4] sm:$0xff]
  %v6523 = vld [vmem:[%s0 + $0x4cc] sm:$0xff]
  %v6524 = vld [vmem:[%s0 + $0x4d4] sm:$0xff]
  %v6525 = vld [vmem:[%s0 + $0x4dc] sm:$0xff]
  %v6526 = vld [vmem:[%s0 + $0x4e4] sm:$0xff]
  %v6527 = vld [vmem:[%s0 + $0x4ec] sm:$0xff]
  %v6528 = vld [vmem:[%s0 + $0x4f4] sm:$0xff]
  %v6529 = vld [vmem:[%s0 + $0x4fc] sm:$0xff]
  %v6530 = vld [vmem:[%s0 + $0x504] sm:$0xff]
  %v6531 = vld [vmem:[%s0 + $0x50c] sm:$0xff]
  %v6532 = vld [vmem:[%s0 + $0x514] sm:$0xff]
  %v6533 = vld [vmem:[%s0 + $0x51c] sm:$0xff]
  %v6534 = vpack.c.bf16 %v6373, %v6372
  %v6535 = vpack.c.bf16 %v6375, %v6374
  %v6536 = vpack.c.bf16 %v6377, %v6376
  %v6537 = vpack.c.bf16 %v6379, %v6378
  %v6538 = vpack.c.bf16 %v6381, %v6380
  %v6539 = vpack.c.bf16 %v6383, %v6382
  %v6540 = vpack.c.bf16 %v6385, %v6384
  %v6541 = vpack.c.bf16 %v6387, %v6386
  %v6542 = vpack.c.bf16 %v6389, %v6388
  %v6543 = vpack.c.bf16 %v6391, %v6390
  %v6544 = vpack.c.bf16 %v6393, %v6392
  %v6545 = vpack.c.bf16 %v6395, %v6394
  %v6546 = vpack.c.bf16 %v6397, %v6396
  %v6547 = vpack.c.bf16 %v6399, %v6398
  %v6548 = vpack.c.bf16 %v6401, %v6400
  %v6549 = vpack.c.bf16 %v6403, %v6402
  %v6550 = vpack.c.bf16 %v6405, %v6404
  %v6551 = vpack.c.bf16 %v6407, %v6406
  %v6552 = vpack.c.bf16 %v6409, %v6408
  %v6553 = vpack.c.bf16 %v6411, %v6410
  %v6554 = vpack.c.bf16 %v6413, %v6412
  %v6555 = vpack.c.bf16 %v6415, %v6414
  %v6556 = vpack.c.bf16 %v6417, %v6416
  %v6557 = vpack.c.bf16 %v6419, %v6418
  %v6558 = vpack.c.bf16 %v6421, %v6420
  %v6559 = vpack.c.bf16 %v6423, %v6422
  %v6560 = vpack.c.bf16 %v6425, %v6424
  %v6561 = vpack.c.bf16 %v6427, %v6426
  %v6562 = vpack.c.bf16 %v6429, %v6428
  %v6563 = vpack.c.bf16 %v6431, %v6430
  %v6564 = vpack.c.bf16 %v6433, %v6432
  %v6565 = vpack.c.bf16 %v6435, %v6434
  %v6566 = vpack.c.bf16 %v6437, %v6436
  %v6567 = vpack.c.bf16 %v6439, %v6438
  %v6568 = vpack.c.bf16 %v6441, %v6440
  %v6569 = vpack.c.bf16 %v6443, %v6442
  %v6570 = vpack.c.bf16 %v6445, %v6444
  %v6571 = vpack.c.bf16 %v6447, %v6446
  %v6572 = vpack.c.bf16 %v6449, %v6448
  %v6573 = vpack.c.bf16 %v6451, %v6450
  %v6574 = vpack.c.bf16 %v6453, %v6452
  %v6575 = vpack.c.bf16 %v6455, %v6454
  %v6576 = vpack.c.bf16 %v6457, %v6456
  %v6577 = vpack.c.bf16 %v6459, %v6458
  %v6578 = vpack.c.bf16 %v6461, %v6460
  %v6579 = vpack.c.bf16 %v6463, %v6462
  %v6580 = vpack.c.bf16 %v6465, %v6464
  %v6581 = vpack.c.bf16 %v6467, %v6466
  %v6582 = vpack.c.bf16 %v6469, %v6468
  %v6583 = vpack.c.bf16 %v6471, %v6470
  %v6584 = vpack.c.bf16 %v6473, %v6472
  %v6585 = vpack.c.bf16 %v6475, %v6474
  %v6586 = vpack.c.bf16 %v6477, %v6476
  %v6587 = vpack.c.bf16 %v6479, %v6478
  %v6588 = vpack.c.bf16 %v6481, %v6480
  %v6589 = vpack.c.bf16 %v6483, %v6482
  %v6590 = vpack.c.bf16 %v6485, %v6484
  %v6591 = vpack.c.bf16 %v6487, %v6486
  %v6592 = vpack.c.bf16 %v6489, %v6488
  %v6593 = vpack.c.bf16 %v6491, %v6490
  %v6594 = vpack.c.bf16 %v6493, %v6492
  %v6595 = vpack.c.bf16 %v6495, %v6494
  %v6596 = vpack.c.bf16 %v6497, %v6496
  %v6597 = vpack.c.bf16 %v6499, %v6498
  %v6598 = vpack.c.bf16 %v6501, %v6500
  %v6599 = vpack.c.bf16 %v6503, %v6502
  %v6600 = vpack.c.bf16 %v6505, %v6504
  %v6601 = vpack.c.bf16 %v6507, %v6506
  %v6602 = vpack.c.bf16 %v6509, %v6508
  %v6603 = vpack.c.bf16 %v6511, %v6510
  %v6604 = vpack.c.bf16 %v6513, %v6512
  %v6605 = vpack.c.bf16 %v6515, %v6514
  %v6606 = vpack.c.bf16 %v6517, %v6516
  %v6607 = vpack.c.bf16 %v6519, %v6518
  %v6608 = vpack.c.bf16 %v6521, %v6520
  %v6609 = vpack.c.bf16 %v6523, %v6522
  %v6610 = vpack.c.bf16 %v6525, %v6524
  %v6611 = vpack.c.bf16 %v6527, %v6526
  %v6612 = vpack.c.bf16 %v6529, %v6528
  %v6613 = vpack.c.bf16 %v6531, %v6530
  %v6614 = vpack.c.bf16 %v6533, %v6532
  %v6615 = vld [vmem:[%s1 + $0x14] sm:$0xf]
  %v6617 = vsel %vm517, %v6534, 0
  %v6620 = vsel %vm517, %v6535, 0
  %v6623 = vsel %vm517, %v6536, 0
  %v6626 = vsel %vm517, %v6537, 0
  %v6629 = vsel %vm517, %v6538, 0
  %v6632 = vsel %vm517, %v6539, 0
  %v6635 = vsel %vm517, %v6540, 0
  %v6638 = vsel %vm517, %v6541, 0
  %v6641 = vsel %vm517, %v6542, 0
  %v6644 = vsel %vm517, %v6543, 0
  %v6647 = vsel %vm517, %v6544, 0
  %v6650 = vsel %vm517, %v6545, 0
  %v6653 = vsel %vm517, %v6546, 0
  %v6656 = vsel %vm517, %v6547, 0
  %v6659 = vsel %vm517, %v6548, 0
  %v6662 = vsel %vm517, %v6549, 0
  %v6665 = vsel %vm517, %v6550, 0
  %v6668 = vsel %vm517, %v6551, 0
  %v6671 = vsel %vm517, %v6552, 0
  %v6674 = vsel %vm517, %v6553, 0
  %v6677 = vsel %vm517, %v6554, 0
  %v6680 = vsel %vm517, %v6555, 0
  %v6683 = vsel %vm517, %v6556, 0
  %v6686 = vsel %vm517, %v6557, 0
  %v6689 = vsel %vm517, %v6558, 0
  %v6692 = vsel %vm517, %v6559, 0
  %v6695 = vsel %vm517, %v6560, 0
  %v6698 = vsel %vm517, %v6561, 0
  %v6701 = vsel %vm517, %v6562, 0
  %v6704 = vsel %vm517, %v6563, 0
  %v6707 = vsel %vm517, %v6564, 0
  %v6710 = vsel %vm517, %v6565, 0
  %v6713 = vsel %vm517, %v6566, 0
  %v6716 = vsel %vm517, %v6567, 0
  %v6719 = vsel %vm517, %v6568, 0
  %v6722 = vsel %vm517, %v6569, 0
  %v6725 = vsel %vm517, %v6570, 0
  %v6728 = vsel %vm517, %v6571, 0
  %v6731 = vsel %vm517, %v6572, 0
  %v6734 = vsel %vm517, %v6573, 0
  %v6737 = vsel %vm517, %v6574, 0
  %v6740 = vsel %vm517, %v6575, 0
  %v6743 = vsel %vm517, %v6576, 0
  %v6746 = vsel %vm517, %v6577, 0
  %v6749 = vsel %vm517, %v6578, 0
  %v6752 = vsel %vm517, %v6579, 0
  %v6755 = vsel %vm517, %v6580, 0
  %v6758 = vsel %vm517, %v6581, 0
  %v6761 = vsel %vm517, %v6582, 0
  %v6764 = vsel %vm517, %v6583, 0
  %v6767 = vsel %vm517, %v6584, 0
  %v6770 = vsel %vm517, %v6585, 0
  %v6773 = vsel %vm517, %v6586, 0
  %v6776 = vsel %vm517, %v6587, 0
  %v6779 = vsel %vm517, %v6588, 0
  %v6782 = vsel %vm517, %v6589, 0
  %v6785 = vsel %vm517, %v6590, 0
  %v6788 = vsel %vm517, %v6591, 0
  %v6791 = vsel %vm517, %v6592, 0
  %v6794 = vsel %vm517, %v6593, 0
  %v6797 = vsel %vm517, %v6594, 0
  %v6800 = vsel %vm517, %v6595, 0
  %v6803 = vsel %vm517, %v6596, 0
  %v6806 = vsel %vm517, %v6597, 0
  %v6809 = vsel %vm517, %v6598, 0
  %v6812 = vsel %vm517, %v6599, 0
  %v6815 = vsel %vm517, %v6600, 0
  %v6818 = vsel %vm517, %v6601, 0
  %v6821 = vsel %vm517, %v6602, 0
  %v6824 = vsel %vm517, %v6603, 0
  %v6827 = vsel %vm517, %v6604, 0
  %v6830 = vsel %vm517, %v6605, 0
  %v6833 = vsel %vm517, %v6606, 0
  %v6836 = vsel %vm517, %v6607, 0
  %v6839 = vsel %vm517, %v6608, 0
  %v6842 = vsel %vm517, %v6609, 0
  %v6845 = vsel %vm517, %v6610, 0
  %v6848 = vsel %vm517, %v6611, 0
  %v6851 = vsel %vm517, %v6612, 0
  %v6854 = vsel %vm517, %v6613, 0
  %v6857 = vsel %vm517, %v6614, 0
  %v6860 = vsel %vm761, %v6615, 0
  %6862 = vmatprep.subr.bf16.mxu0 0
  %6863 = vmatpush1.bf16.msra.mxu0 %v6860
  %6864 = vmatprep.subr.bf16.mxu0 0
  %6865 = vmatpush1.bf16.msra.mxu0 0
  %6866 = vmatprep.subr.bf16.mxu0 0
  %6867 = vmatpush1.bf16.msra.mxu0 0
  %6868 = vmatprep.subr.bf16.mxu0 0
  %6869 = vmatpush1.bf16.msra.mxu0 0
  %6870 = vmatprep.subr.bf16.mxu0 0
  %6871 = vmatpush1.bf16.msra.mxu0 0
  %6872 = vmatprep.subr.bf16.mxu0 0
  %6873 = vmatpush1.bf16.msra.mxu0 0
  %6874 = vmatprep.subr.bf16.mxu0 0
  %6875 = vmatpush1.bf16.msra.mxu0 0
  %6876 = vmatprep.subr.bf16.mxu0 0
  %6877 = vmatpush1.bf16.msra.mxu0 0
  %6878 = vmatprep.subr.bf16.mxu0 0
  %6879 = vmatpush1.bf16.msra.mxu0 0
  %6880 = vmatprep.subr.bf16.mxu0 0
  %6881 = vmatpush1.bf16.msra.mxu0 0
  %6882 = vmatprep.subr.bf16.mxu0 0
  %6883 = vmatpush1.bf16.msra.mxu0 0
  %6884 = vmatprep.subr.bf16.mxu0 0
  %6885 = vmatpush1.bf16.msra.mxu0 0
  %6886 = vmatprep.subr.bf16.mxu0 0
  %6887 = vmatpush1.bf16.msra.mxu0 0
  %6888 = vmatprep.subr.bf16.mxu0 0
  %6889 = vmatpush1.bf16.msra.mxu0 0
  %6890 = vmatprep.subr.bf16.mxu0 0
  %6891 = vmatpush1.bf16.msra.mxu0 0
  %6892 = vmatprep.subr.bf16.mxu0 0
  %6893 = vmatpush1.bf16.msra.mxu0 0
  %6894 = vmatprep.mubr.bf16.mxu0 0
  %6895 = vmatmul.mubr.bf16.gmra.mrb[0].mxu0 %v6617
  %v6896 = vpop.f32.mrb[0].mxu0
  %v6897 = vadd.f32 0.0, %v6896
  %v6898 = vpop.f32.mrb[0].mxu0
  %v6899 = vpop.f32.mrb[0].mxu0
  %v6900 = vadd.f32 0.0, %v6899
  %v6901 = vpop.f32.mrb[0].mxu0
  %6902 = vmatprep.mubr.bf16.mxu0 0
  %6903 = vmatmul.mubr.bf16.gmra.mrb[0].mxu0 %v6620
  %v6904 = vpop.f32.mrb[0].mxu0
  %v6905 = vadd.f32 0.0, %v6904
  %v6906 = vpop.f32.mrb[0].mxu0
  %v6907 = vpop.f32.mrb[0].mxu0
  %v6908 = vadd.f32 0.0, %v6907
  %v6909 = vpop.f32.mrb[0].mxu0
  %6910 = vmatprep.mubr.bf16.mxu0 0
  %6911 = vmatmul.mubr.bf16.gmra.mrb[0].mxu0 %v6623
  %v6912 = vpop.f32.mrb[0].mxu0
  %v6913 = vadd.f32 0.0, %v6912
  %v6914 = vpop.f32.mrb[0].mxu0
  %v6915 = vpop.f32.mrb[0].mxu0
  %v6916 = vadd.f32 0.0, %v6915
  %v6917 = vpop.f32.mrb[0].mxu0
  %6918 = vmatprep.mubr.bf16.mxu0 0
  %6919 = vmatmul.mubr.bf16.gmra.mrb[0].mxu0 %v6626
  %v6920 = vpop.f32.mrb[0].mxu0
  %v6921 = vadd.f32 0.0, %v6920
  %v6922 = vpop.f32.mrb[0].mxu0
  %v6923 = vpop.f32.mrb[0].mxu0
  %v6924 = vadd.f32 0.0, %v6923
  %v6925 = vpop.f32.mrb[0].mxu0
  %6926 = vmatprep.mubr.bf16.mxu0 0
  %6927 = vmatmul.mubr.bf16.gmra.mrb[0].mxu0 %v6629
  %v6928 = vpop.f32.mrb[0].mxu0
  %v6929 = vadd.f32 0.0, %v6928
  %v6930 = vpop.f32.mrb[0].mxu0
  %v6931 = vpop.f32.mrb[0].mxu0
  %v6932 = vadd.f32 0.0, %v6931
  %v6933 = vpop.f32.mrb[0].mxu0
  %6934 = vmatprep.mubr.bf16.mxu0 0
  %6935 = vmatmul.mubr.bf16.gmra.mrb[0].mxu0 %v6632
  %v6936 = vpop.f32.mrb[0].mxu0
  %v6937 = vadd.f32 0.0, %v6936
  %v6938 = vpop.f32.mrb[0].mxu0
  %v6939 = vpop.f32.mrb[0].mxu0
  %v6940 = vadd.f32 0.0, %v6939
  %v6941 = vpop.f32.mrb[0].mxu0
  %6942 = vmatprep.mubr.bf16.mxu0 0
  %6943 = vmatmul.mubr.bf16.gmra.mrb[0].mxu0 %v6635
  %v6944 = vpop.f32.mrb[0].mxu0
  %v6945 = vadd.f32 0.0, %v6944
  %v6946 = vpop.f32.mrb[0].mxu0
  %v6947 = vpop.f32.mrb[0].mxu0
  %v6948 = vadd.f32 0.0, %v6947
  %v6949 = vpop.f32.mrb[0].mxu0
  %6950 = vmatprep.mubr.bf16.mxu0 0
  %6951 = vmatmul.mubr.bf16.gmra.mrb[0].mxu0 %v6638
  %v6952 = vpop.f32.mrb[0].mxu0
  %v6953 = vadd.f32 0.0, %v6952
  %v6954 = vpop.f32.mrb[0].mxu0
  %v6955 = vpop.f32.mrb[0].mxu0
  %v6956 = vadd.f32 0.0, %v6955
  %v6957 = vpop.f32.mrb[0].mxu0
  %6958 = vmatprep.mubr.bf16.mxu0 0
  %6959 = vmatmul.mubr.bf16.gmra.mrb[0].mxu0 %v6641
  %v6960 = vpop.f32.mrb[0].mxu0
  %v6961 = vadd.f32 0.0, %v6960
  %v6962 = vpop.f32.mrb[0].mxu0
  %v6963 = vpop.f32.mrb[0].mxu0
  %v6964 = vadd.f32 0.0, %v6963
  %v6965 = vpop.f32.mrb[0].mxu0
  %6966 = vmatprep.mubr.bf16.mxu0 0
  %6967 = vmatmul.mubr.bf16.gmra.mrb[0].mxu0 %v6644
  %v6968 = vpop.f32.mrb[0].mxu0
  %v6969 = vadd.f32 0.0, %v6968
  %v6970 = vpop.f32.mrb[0].mxu0
  %v6971 = vpop.f32.mrb[0].mxu0
  %v6972 = vadd.f32 0.0, %v6971
  %v6973 = vpop.f32.mrb[0].mxu0
  %6974 = vmatprep.mubr.bf16.mxu0 0
  %6975 = vmatmul.mubr.bf16.gmra.mrb[0].mxu0 %v6647
  %v6976 = vpop.f32.mrb[0].mxu0
  %v6977 = vadd.f32 0.0, %v6976
  %v6978 = vpop.f32.mrb[0].mxu0
  %v6979 = vpop.f32.mrb[0].mxu0
  %v6980 = vadd.f32 0.0, %v6979
  %v6981 = vpop.f32.mrb[0].mxu0
  %6982 = vmatprep.mubr.bf16.mxu0 0
  %6983 = vmatmul.mubr.bf16.gmra.mrb[0].mxu0 %v6650
  %v6984 = vpop.f32.mrb[0].mxu0
  %v6985 = vadd.f32 0.0, %v6984
  %v6986 = vpop.f32.mrb[0].mxu0
  %v6987 = vpop.f32.mrb[0].mxu0
  %v6988 = vadd.f32 0.0, %v6987
  %v6989 = vpop.f32.mrb[0].mxu0
  %6990 = vmatprep.mubr.bf16.mxu0 0
  %6991 = vmatmul.mubr.bf16.gmra.mrb[0].mxu0 %v6653
  %v6992 = vpop.f32.mrb[0].mxu0
  %v6993 = vadd.f32 0.0, %v6992
  %v6994 = vpop.f32.mrb[0].mxu0
  %v6995 = vpop.f32.mrb[0].mxu0
  %v6996 = vadd.f32 0.0, %v6995
  %v6997 = vpop.f32.mrb[0].mxu0
  %6998 = vmatprep.mubr.bf16.mxu0 0
  %6999 = vmatmul.mubr.bf16.gmra.mrb[0].mxu0 %v6656
  %v7000 = vpop.f32.mrb[0].mxu0
  %v7001 = vadd.f32 0.0, %v7000
  %v7002 = vpop.f32.mrb[0].mxu0
  %v7003 = vpop.f32.mrb[0].mxu0
  %v7004 = vadd.f32 0.0, %v7003
  %v7005 = vpop.f32.mrb[0].mxu0
  %7006 = vmatprep.mubr.bf16.mxu0 0
  %7007 = vmatmul.mubr.bf16.gmra.mrb[0].mxu0 %v6659
  %v7008 = vpop.f32.mrb[0].mxu0
  %v7009 = vadd.f32 0.0, %v7008
  %v7010 = vpop.f32.mrb[0].mxu0
  %v7011 = vpop.f32.mrb[0].mxu0
  %v7012 = vadd.f32 0.0, %v7011
  %v7013 = vpop.f32.mrb[0].mxu0
  %7014 = vmatprep.mubr.bf16.mxu0 0
  %7015 = vmatmul.mubr.bf16.gmra.mrb[0].mxu0 %v6662
  %v7016 = vpop.f32.mrb[0].mxu0
  %v7017 = vadd.f32 0.0, %v7016
  %v7018 = vpop.f32.mrb[0].mxu0
  %v7019 = vpop.f32.mrb[0].mxu0
  %v7020 = vadd.f32 0.0, %v7019
  %v7021 = vpop.f32.mrb[0].mxu0
  %7022 = vmatprep.mubr.bf16.mxu0 0
  %7023 = vmatmul.mubr.bf16.gmra.mrb[0].mxu0 %v6665
  %v7024 = vpop.f32.mrb[0].mxu0
  %v7025 = vadd.f32 0.0, %v7024
  %v7026 = vpop.f32.mrb[0].mxu0
  %v7027 = vpop.f32.mrb[0].mxu0
  %v7028 = vadd.f32 0.0, %v7027
  %v7029 = vpop.f32.mrb[0].mxu0
  %7030 = vmatprep.mubr.bf16.mxu0 0
  %7031 = vmatmul.mubr.bf16.gmra.mrb[0].mxu0 %v6668
  %v7032 = vpop.f32.mrb[0].mxu0
  %v7033 = vadd.f32 0.0, %v7032
  %v7034 = vpop.f32.mrb[0].mxu0
  %v7035 = vpop.f32.mrb[0].mxu0
  %v7036 = vadd.f32 0.0, %v7035
  %v7037 = vpop.f32.mrb[0].mxu0
  %7038 = vmatprep.mubr.bf16.mxu0 0
  %7039 = vmatmul.mubr.bf16.gmra.mrb[0].mxu0 %v6671
  %v7040 = vpop.f32.mrb[0].mxu0
  %v7041 = vadd.f32 0.0, %v7040
  %v7042 = vpop.f32.mrb[0].mxu0
  %v7043 = vpop.f32.mrb[0].mxu0
  %v7044 = vadd.f32 0.0, %v7043
  %v7045 = vpop.f32.mrb[0].mxu0
  %7046 = vmatprep.mubr.bf16.mxu0 0
  %7047 = vmatmul.mubr.bf16.gmra.mrb[0].mxu0 %v6674
  %v7048 = vpop.f32.mrb[0].mxu0
  %v7049 = vadd.f32 0.0, %v7048
  %v7050 = vpop.f32.mrb[0].mxu0
  %v7051 = vpop.f32.mrb[0].mxu0
  %v7052 = vadd.f32 0.0, %v7051
  %v7053 = vpop.f32.mrb[0].mxu0
  %7054 = vmatprep.mubr.bf16.mxu0 0
  %7055 = vmatmul.mubr.bf16.gmra.mrb[0].mxu0 %v6677
  %v7056 = vpop.f32.mrb[0].mxu0
  %v7057 = vadd.f32 0.0, %v7056
  %v7058 = vpop.f32.mrb[0].mxu0
  %v7059 = vpop.f32.mrb[0].mxu0
  %v7060 = vadd.f32 0.0, %v7059
  %v7061 = vpop.f32.mrb[0].mxu0
  %7062 = vmatprep.mubr.bf16.mxu0 0
  %7063 = vmatmul.mubr.bf16.gmra.mrb[0].mxu0 %v6680
  %v7064 = vpop.f32.mrb[0].mxu0
  %v7065 = vadd.f32 0.0, %v7064
  %v7066 = vpop.f32.mrb[0].mxu0
  %v7067 = vpop.f32.mrb[0].mxu0
  %v7068 = vadd.f32 0.0, %v7067
  %v7069 = vpop.f32.mrb[0].mxu0
  %7070 = vmatprep.mubr.bf16.mxu0 0
  %7071 = vmatmul.mubr.bf16.gmra.mrb[0].mxu0 %v6683
  %v7072 = vpop.f32.mrb[0].mxu0
  %v7073 = vadd.f32 0.0, %v7072
  %v7074 = vpop.f32.mrb[0].mxu0
  %v7075 = vpop.f32.mrb[0].mxu0
  %v7076 = vadd.f32 0.0, %v7075
  %v7077 = vpop.f32.mrb[0].mxu0
  %7078 = vmatprep.mubr.bf16.mxu0 0
  %7079 = vmatmul.mubr.bf16.gmra.mrb[0].mxu0 %v6686
  %v7080 = vpop.f32.mrb[0].mxu0
  %v7081 = vadd.f32 0.0, %v7080
  %v7082 = vpop.f32.mrb[0].mxu0
  %v7083 = vpop.f32.mrb[0].mxu0
  %v7084 = vadd.f32 0.0, %v7083
  %v7085 = vpop.f32.mrb[0].mxu0
  %7086 = vmatprep.mubr.bf16.mxu0 0
  %7087 = vmatmul.mubr.bf16.gmra.mrb[0].mxu0 %v6689
  %v7088 = vpop.f32.mrb[0].mxu0
  %v7089 = vadd.f32 0.0, %v7088
  %v7090 = vpop.f32.mrb[0].mxu0
  %v7091 = vpop.f32.mrb[0].mxu0
  %v7092 = vadd.f32 0.0, %v7091
  %v7093 = vpop.f32.mrb[0].mxu0
  %7094 = vmatprep.mubr.bf16.mxu0 0
  %7095 = vmatmul.mubr.bf16.gmra.mrb[0].mxu0 %v6692
  %v7096 = vpop.f32.mrb[0].mxu0
  %v7097 = vadd.f32 0.0, %v7096
  %v7098 = vpop.f32.mrb[0].mxu0
  %v7099 = vpop.f32.mrb[0].mxu0
  %v7100 = vadd.f32 0.0, %v7099
  %v7101 = vpop.f32.mrb[0].mxu0
  %7102 = vmatprep.mubr.bf16.mxu0 0
  %7103 = vmatmul.mubr.bf16.gmra.mrb[0].mxu0 %v6695
  %v7104 = vpop.f32.mrb[0].mxu0
  %v7105 = vadd.f32 0.0, %v7104
  %v7106 = vpop.f32.mrb[0].mxu0
  %v7107 = vpop.f32.mrb[0].mxu0
  %v7108 = vadd.f32 0.0, %v7107
  %v7109 = vpop.f32.mrb[0].mxu0
  %7110 = vmatprep.mubr.bf16.mxu0 0
  %7111 = vmatmul.mubr.bf16.gmra.mrb[0].mxu0 %v6698
  %v7112 = vpop.f32.mrb[0].mxu0
  %v7113 = vadd.f32 0.0, %v7112
  %v7114 = vpop.f32.mrb[0].mxu0
  %v7115 = vpop.f32.mrb[0].mxu0
  %v7116 = vadd.f32 0.0, %v7115
  %v7117 = vpop.f32.mrb[0].mxu0
  %7118 = vmatprep.mubr.bf16.mxu0 0
  %7119 = vmatmul.mubr.bf16.gmra.mrb[0].mxu0 %v6701
  %v7120 = vpop.f32.mrb[0].mxu0
  %v7121 = vadd.f32 0.0, %v7120
  %v7122 = vpop.f32.mrb[0].mxu0
  %v7123 = vpop.f32.mrb[0].mxu0
  %v7124 = vadd.f32 0.0, %v7123
  %v7125 = vpop.f32.mrb[0].mxu0
  %7126 = vmatprep.mubr.bf16.mxu0 0
  %7127 = vmatmul.mubr.bf16.gmra.mrb[0].mxu0 %v6704
  %v7128 = vpop.f32.mrb[0].mxu0
  %v7129 = vadd.f32 0.0, %v7128
  %v7130 = vpop.f32.mrb[0].mxu0
  %v7131 = vpop.f32.mrb[0].mxu0
  %v7132 = vadd.f32 0.0, %v7131
  %v7133 = vpop.f32.mrb[0].mxu0
  %7134 = vmatprep.mubr.bf16.mxu0 0
  %7135 = vmatmul.mubr.bf16.gmra.mrb[0].mxu0 %v6707
  %v7136 = vpop.f32.mrb[0].mxu0
  %v7137 = vadd.f32 0.0, %v7136
  %v7138 = vpop.f32.mrb[0].mxu0
  %v7139 = vpop.f32.mrb[0].mxu0
  %v7140 = vadd.f32 0.0, %v7139
  %v7141 = vpop.f32.mrb[0].mxu0
  %7142 = vmatprep.mubr.bf16.mxu0 0
  %7143 = vmatmul.mubr.bf16.gmra.mrb[0].mxu0 %v6710
  %v7144 = vpop.f32.mrb[0].mxu0
  %v7145 = vadd.f32 0.0, %v7144
  %v7146 = vpop.f32.mrb[0].mxu0
  %v7147 = vpop.f32.mrb[0].mxu0
  %v7148 = vadd.f32 0.0, %v7147
  %v7149 = vpop.f32.mrb[0].mxu0
  %7150 = vmatprep.mubr.bf16.mxu0 0
  %7151 = vmatmul.mubr.bf16.gmra.mrb[0].mxu0 %v6713
  %v7152 = vpop.f32.mrb[0].mxu0
  %v7153 = vadd.f32 0.0, %v7152
  %v7154 = vpop.f32.mrb[0].mxu0
  %v7155 = vpop.f32.mrb[0].mxu0
  %v7156 = vadd.f32 0.0, %v7155
  %v7157 = vpop.f32.mrb[0].mxu0
  %7158 = vmatprep.mubr.bf16.mxu0 0
  %7159 = vmatmul.mubr.bf16.gmra.mrb[0].mxu0 %v6716
  %v7160 = vpop.f32.mrb[0].mxu0
  %v7161 = vadd.f32 0.0, %v7160
  %v7162 = vpop.f32.mrb[0].mxu0
  %v7163 = vpop.f32.mrb[0].mxu0
  %v7164 = vadd.f32 0.0, %v7163
  %v7165 = vpop.f32.mrb[0].mxu0
  %7166 = vmatprep.mubr.bf16.mxu0 0
  %7167 = vmatmul.mubr.bf16.gmra.mrb[0].mxu0 %v6719
  %v7168 = vpop.f32.mrb[0].mxu0
  %v7169 = vadd.f32 0.0, %v7168
  %v7170 = vpop.f32.mrb[0].mxu0
  %v7171 = vpop.f32.mrb[0].mxu0
  %v7172 = vadd.f32 0.0, %v7171
  %v7173 = vpop.f32.mrb[0].mxu0
  %7174 = vmatprep.mubr.bf16.mxu0 0
  %7175 = vmatmul.mubr.bf16.gmra.mrb[0].mxu0 %v6722
  %v7176 = vpop.f32.mrb[0].mxu0
  %v7177 = vadd.f32 0.0, %v7176
  %v7178 = vpop.f32.mrb[0].mxu0
  %v7179 = vpop.f32.mrb[0].mxu0
  %v7180 = vadd.f32 0.0, %v7179
  %v7181 = vpop.f32.mrb[0].mxu0
  %7182 = vmatprep.mubr.bf16.mxu0 0
  %7183 = vmatmul.mubr.bf16.gmra.mrb[0].mxu0 %v6725
  %v7184 = vpop.f32.mrb[0].mxu0
  %v7185 = vadd.f32 0.0, %v7184
  %v7186 = vpop.f32.mrb[0].mxu0
  %v7187 = vpop.f32.mrb[0].mxu0
  %v7188 = vadd.f32 0.0, %v7187
  %v7189 = vpop.f32.mrb[0].mxu0
  %7190 = vmatprep.mubr.bf16.mxu0 0
  %7191 = vmatmul.mubr.bf16.gmra.mrb[0].mxu0 %v6728
  %v7192 = vpop.f32.mrb[0].mxu0
  %v7193 = vadd.f32 0.0, %v7192
  %v7194 = vpop.f32.mrb[0].mxu0
  %v7195 = vpop.f32.mrb[0].mxu0
  %v7196 = vadd.f32 0.0, %v7195
  %v7197 = vpop.f32.mrb[0].mxu0
  %7198 = vmatprep.mubr.bf16.mxu0 0
  %7199 = vmatmul.mubr.bf16.gmra.mrb[0].mxu0 %v6731
  %v7200 = vpop.f32.mrb[0].mxu0
  %v7201 = vadd.f32 0.0, %v7200
  %v7202 = vpop.f32.mrb[0].mxu0
  %v7203 = vpop.f32.mrb[0].mxu0
  %v7204 = vadd.f32 0.0, %v7203
  %v7205 = vpop.f32.mrb[0].mxu0
  %7206 = vmatprep.mubr.bf16.mxu0 0
  %7207 = vmatmul.mubr.bf16.gmra.mrb[0].mxu0 %v6734
  %v7208 = vpop.f32.mrb[0].mxu0
  %v7209 = vadd.f32 0.0, %v7208
  %v7210 = vpop.f32.mrb[0].mxu0
  %v7211 = vpop.f32.mrb[0].mxu0
  %v7212 = vadd.f32 0.0, %v7211
  %v7213 = vpop.f32.mrb[0].mxu0
  %7214 = vmatprep.mubr.bf16.mxu0 0
  %7215 = vmatmul.mubr.bf16.gmra.mrb[0].mxu0 %v6737
  %v7216 = vpop.f32.mrb[0].mxu0
  %v7217 = vadd.f32 0.0, %v7216
  %v7218 = vpop.f32.mrb[0].mxu0
  %v7219 = vpop.f32.mrb[0].mxu0
  %v7220 = vadd.f32 0.0, %v7219
  %v7221 = vpop.f32.mrb[0].mxu0
  %7222 = vmatprep.mubr.bf16.mxu0 0
  %7223 = vmatmul.mubr.bf16.gmra.mrb[0].mxu0 %v6740
  %v7224 = vpop.f32.mrb[0].mxu0
  %v7225 = vadd.f32 0.0, %v7224
  %v7226 = vpop.f32.mrb[0].mxu0
  %v7227 = vpop.f32.mrb[0].mxu0
  %v7228 = vadd.f32 0.0, %v7227
  %v7229 = vpop.f32.mrb[0].mxu0
  %7230 = vmatprep.mubr.bf16.mxu0 0
  %7231 = vmatmul.mubr.bf16.gmra.mrb[0].mxu0 %v6743
  %v7232 = vpop.f32.mrb[0].mxu0
  %v7233 = vadd.f32 0.0, %v7232
  %v7234 = vpop.f32.mrb[0].mxu0
  %v7235 = vpop.f32.mrb[0].mxu0
  %v7236 = vadd.f32 0.0, %v7235
  %v7237 = vpop.f32.mrb[0].mxu0
  %7238 = vmatprep.mubr.bf16.mxu0 0
  %7239 = vmatmul.mubr.bf16.gmra.mrb[0].mxu0 %v6746
  %v7240 = vpop.f32.mrb[0].mxu0
  %v7241 = vadd.f32 0.0, %v7240
  %v7242 = vpop.f32.mrb[0].mxu0
  %v7243 = vpop.f32.mrb[0].mxu0
  %v7244 = vadd.f32 0.0, %v7243
  %v7245 = vpop.f32.mrb[0].mxu0
  %7246 = vmatprep.mubr.bf16.mxu0 0
  %7247 = vmatmul.mubr.bf16.gmra.mrb[0].mxu0 %v6749
  %v7248 = vpop.f32.mrb[0].mxu0
  %v7249 = vadd.f32 0.0, %v7248
  %v7250 = vpop.f32.mrb[0].mxu0
  %v7251 = vpop.f32.mrb[0].mxu0
  %v7252 = vadd.f32 0.0, %v7251
  %v7253 = vpop.f32.mrb[0].mxu0
  %7254 = vmatprep.mubr.bf16.mxu0 0
  %7255 = vmatmul.mubr.bf16.gmra.mrb[0].mxu0 %v6752
  %v7256 = vpop.f32.mrb[0].mxu0
  %v7257 = vadd.f32 0.0, %v7256
  %v7258 = vpop.f32.mrb[0].mxu0
  %v7259 = vpop.f32.mrb[0].mxu0
  %v7260 = vadd.f32 0.0, %v7259
  %v7261 = vpop.f32.mrb[0].mxu0
  %7262 = vmatprep.mubr.bf16.mxu0 0
  %7263 = vmatmul.mubr.bf16.gmra.mrb[0].mxu0 %v6755
  %v7264 = vpop.f32.mrb[0].mxu0
  %v7265 = vadd.f32 0.0, %v7264
  %v7266 = vpop.f32.mrb[0].mxu0
  %v7267 = vpop.f32.mrb[0].mxu0
  %v7268 = vadd.f32 0.0, %v7267
  %v7269 = vpop.f32.mrb[0].mxu0
  %7270 = vmatprep.mubr.bf16.mxu0 0
  %7271 = vmatmul.mubr.bf16.gmra.mrb[0].mxu0 %v6758
  %v7272 = vpop.f32.mrb[0].mxu0
  %v7273 = vadd.f32 0.0, %v7272
  %v7274 = vpop.f32.mrb[0].mxu0
  %v7275 = vpop.f32.mrb[0].mxu0
  %v7276 = vadd.f32 0.0, %v7275
  %v7277 = vpop.f32.mrb[0].mxu0
  %7278 = vmatprep.mubr.bf16.mxu0 0
  %7279 = vmatmul.mubr.bf16.gmra.mrb[0].mxu0 %v6761
  %v7280 = vpop.f32.mrb[0].mxu0
  %v7281 = vadd.f32 0.0, %v7280
  %v7282 = vpop.f32.mrb[0].mxu0
  %v7283 = vpop.f32.mrb[0].mxu0
  %v7284 = vadd.f32 0.0, %v7283
  %v7285 = vpop.f32.mrb[0].mxu0
  %7286 = vmatprep.mubr.bf16.mxu0 0
  %7287 = vmatmul.mubr.bf16.gmra.mrb[0].mxu0 %v6764
  %v7288 = vpop.f32.mrb[0].mxu0
  %v7289 = vadd.f32 0.0, %v7288
  %v7290 = vpop.f32.mrb[0].mxu0
  %v7291 = vpop.f32.mrb[0].mxu0
  %v7292 = vadd.f32 0.0, %v7291
  %v7293 = vpop.f32.mrb[0].mxu0
  %7294 = vmatprep.mubr.bf16.mxu0 0
  %7295 = vmatmul.mubr.bf16.gmra.mrb[0].mxu0 %v6767
  %v7296 = vpop.f32.mrb[0].mxu0
  %v7297 = vadd.f32 0.0, %v7296
  %v7298 = vpop.f32.mrb[0].mxu0
  %v7299 = vpop.f32.mrb[0].mxu0
  %v7300 = vadd.f32 0.0, %v7299
  %v7301 = vpop.f32.mrb[0].mxu0
  %7302 = vmatprep.mubr.bf16.mxu0 0
  %7303 = vmatmul.mubr.bf16.gmra.mrb[0].mxu0 %v6770
  %v7304 = vpop.f32.mrb[0].mxu0
  %v7305 = vadd.f32 0.0, %v7304
  %v7306 = vpop.f32.mrb[0].mxu0
  %v7307 = vpop.f32.mrb[0].mxu0
  %v7308 = vadd.f32 0.0, %v7307
  %v7309 = vpop.f32.mrb[0].mxu0
  %7310 = vmatprep.mubr.bf16.mxu0 0
  %7311 = vmatmul.mubr.bf16.gmra.mrb[0].mxu0 %v6773
  %v7312 = vpop.f32.mrb[0].mxu0
  %v7313 = vadd.f32 0.0, %v7312
  %v7314 = vpop.f32.mrb[0].mxu0
  %v7315 = vpop.f32.mrb[0].mxu0
  %v7316 = vadd.f32 0.0, %v7315
  %v7317 = vpop.f32.mrb[0].mxu0
  %7318 = vmatprep.mubr.bf16.mxu0 0
  %7319 = vmatmul.mubr.bf16.gmra.mrb[0].mxu0 %v6776
  %v7320 = vpop.f32.mrb[0].mxu0
  %v7321 = vadd.f32 0.0, %v7320
  %v7322 = vpop.f32.mrb[0].mxu0
  %v7323 = vpop.f32.mrb[0].mxu0
  %v7324 = vadd.f32 0.0, %v7323
  %v7325 = vpop.f32.mrb[0].mxu0
  %7326 = vmatprep.mubr.bf16.mxu0 0
  %7327 = vmatmul.mubr.bf16.gmra.mrb[0].mxu0 %v6779
  %v7328 = vpop.f32.mrb[0].mxu0
  %v7329 = vadd.f32 0.0, %v7328
  %v7330 = vpop.f32.mrb[0].mxu0
  %v7331 = vpop.f32.mrb[0].mxu0
  %v7332 = vadd.f32 0.0, %v7331
  %v7333 = vpop.f32.mrb[0].mxu0
  %7334 = vmatprep.mubr.bf16.mxu0 0
  %7335 = vmatmul.mubr.bf16.gmra.mrb[0].mxu0 %v6782
  %v7336 = vpop.f32.mrb[0].mxu0
  %v7337 = vadd.f32 0.0, %v7336
  %v7338 = vpop.f32.mrb[0].mxu0
  %v7339 = vpop.f32.mrb[0].mxu0
  %v7340 = vadd.f32 0.0, %v7339
  %v7341 = vpop.f32.mrb[0].mxu0
  %7342 = vmatprep.mubr.bf16.mxu0 0
  %7343 = vmatmul.mubr.bf16.gmra.mrb[0].mxu0 %v6785
  %v7344 = vpop.f32.mrb[0].mxu0
  %v7345 = vadd.f32 0.0, %v7344
  %v7346 = vpop.f32.mrb[0].mxu0
  %v7347 = vpop.f32.mrb[0].mxu0
  %v7348 = vadd.f32 0.0, %v7347
  %v7349 = vpop.f32.mrb[0].mxu0
  %7350 = vmatprep.mubr.bf16.mxu0 0
  %7351 = vmatmul.mubr.bf16.gmra.mrb[0].mxu0 %v6788
  %v7352 = vpop.f32.mrb[0].mxu0
  %v7353 = vadd.f32 0.0, %v7352
  %v7354 = vpop.f32.mrb[0].mxu0
  %v7355 = vpop.f32.mrb[0].mxu0
  %v7356 = vadd.f32 0.0, %v7355
  %v7357 = vpop.f32.mrb[0].mxu0
  %7358 = vmatprep.mubr.bf16.mxu0 0
  %7359 = vmatmul.mubr.bf16.gmra.mrb[0].mxu0 %v6791
  %v7360 = vpop.f32.mrb[0].mxu0
  %v7361 = vadd.f32 0.0, %v7360
  %v7362 = vpop.f32.mrb[0].mxu0
  %v7363 = vpop.f32.mrb[0].mxu0
  %v7364 = vadd.f32 0.0, %v7363
  %v7365 = vpop.f32.mrb[0].mxu0
  %7366 = vmatprep.mubr.bf16.mxu0 0
  %7367 = vmatmul.mubr.bf16.gmra.mrb[0].mxu0 %v6794
  %v7368 = vpop.f32.mrb[0].mxu0
  %v7369 = vadd.f32 0.0, %v7368
  %v7370 = vpop.f32.mrb[0].mxu0
  %v7371 = vpop.f32.mrb[0].mxu0
  %v7372 = vadd.f32 0.0, %v7371
  %v7373 = vpop.f32.mrb[0].mxu0
  %7374 = vmatprep.mubr.bf16.mxu0 0
  %7375 = vmatmul.mubr.bf16.gmra.mrb[0].mxu0 %v6797
  %v7376 = vpop.f32.mrb[0].mxu0
  %v7377 = vadd.f32 0.0, %v7376
  %v7378 = vpop.f32.mrb[0].mxu0
  %v7379 = vpop.f32.mrb[0].mxu0
  %v7380 = vadd.f32 0.0, %v7379
  %v7381 = vpop.f32.mrb[0].mxu0
  %7382 = vmatprep.mubr.bf16.mxu0 0
  %7383 = vmatmul.mubr.bf16.gmra.mrb[0].mxu0 %v6800
  %v7384 = vpop.f32.mrb[0].mxu0
  %v7385 = vadd.f32 0.0, %v7384
  %v7386 = vpop.f32.mrb[0].mxu0
  %v7387 = vpop.f32.mrb[0].mxu0
  %v7388 = vadd.f32 0.0, %v7387
  %v7389 = vpop.f32.mrb[0].mxu0
  %7390 = vmatprep.mubr.bf16.mxu0 0
  %7391 = vmatmul.mubr.bf16.gmra.mrb[0].mxu0 %v6803
  %v7392 = vpop.f32.mrb[0].mxu0
  %v7393 = vadd.f32 0.0, %v7392
  %v7394 = vpop.f32.mrb[0].mxu0
  %v7395 = vpop.f32.mrb[0].mxu0
  %v7396 = vadd.f32 0.0, %v7395
  %v7397 = vpop.f32.mrb[0].mxu0
  %7398 = vmatprep.mubr.bf16.mxu0 0
  %7399 = vmatmul.mubr.bf16.gmra.mrb[0].mxu0 %v6806
  %v7400 = vpop.f32.mrb[0].mxu0
  %v7401 = vadd.f32 0.0, %v7400
  %v7402 = vpop.f32.mrb[0].mxu0
  %v7403 = vpop.f32.mrb[0].mxu0
  %v7404 = vadd.f32 0.0, %v7403
  %v7405 = vpop.f32.mrb[0].mxu0
  %7406 = vmatprep.mubr.bf16.mxu0 0
  %7407 = vmatmul.mubr.bf16.gmra.mrb[0].mxu0 %v6809
  %v7408 = vpop.f32.mrb[0].mxu0
  %v7409 = vadd.f32 0.0, %v7408
  %v7410 = vpop.f32.mrb[0].mxu0
  %v7411 = vpop.f32.mrb[0].mxu0
  %v7412 = vadd.f32 0.0, %v7411
  %v7413 = vpop.f32.mrb[0].mxu0
  %7414 = vmatprep.mubr.bf16.mxu0 0
  %7415 = vmatmul.mubr.bf16.gmra.mrb[0].mxu0 %v6812
  %v7416 = vpop.f32.mrb[0].mxu0
  %v7417 = vadd.f32 0.0, %v7416
  %v7418 = vpop.f32.mrb[0].mxu0
  %v7419 = vpop.f32.mrb[0].mxu0
  %v7420 = vadd.f32 0.0, %v7419
  %v7421 = vpop.f32.mrb[0].mxu0
  %7422 = vmatprep.mubr.bf16.mxu0 0
  %7423 = vmatmul.mubr.bf16.gmra.mrb[0].mxu0 %v6815
  %v7424 = vpop.f32.mrb[0].mxu0
  %v7425 = vadd.f32 0.0, %v7424
  %v7426 = vpop.f32.mrb[0].mxu0
  %v7427 = vpop.f32.mrb[0].mxu0
  %v7428 = vadd.f32 0.0, %v7427
  %v7429 = vpop.f32.mrb[0].mxu0
  %7430 = vmatprep.mubr.bf16.mxu0 0
  %7431 = vmatmul.mubr.bf16.gmra.mrb[0].mxu0 %v6818
  %v7432 = vpop.f32.mrb[0].mxu0
  %v7433 = vadd.f32 0.0, %v7432
  %v7434 = vpop.f32.mrb[0].mxu0
  %v7435 = vpop.f32.mrb[0].mxu0
  %v7436 = vadd.f32 0.0, %v7435
  %v7437 = vpop.f32.mrb[0].mxu0
  %7438 = vmatprep.mubr.bf16.mxu0 0
  %7439 = vmatmul.mubr.bf16.gmra.mrb[0].mxu0 %v6821
  %v7440 = vpop.f32.mrb[0].mxu0
  %v7441 = vadd.f32 0.0, %v7440
  %v7442 = vpop.f32.mrb[0].mxu0
  %v7443 = vpop.f32.mrb[0].mxu0
  %v7444 = vadd.f32 0.0, %v7443
  %v7445 = vpop.f32.mrb[0].mxu0
  %7446 = vmatprep.mubr.bf16.mxu0 0
  %7447 = vmatmul.mubr.bf16.gmra.mrb[0].mxu0 %v6824
  %v7448 = vpop.f32.mrb[0].mxu0
  %v7449 = vadd.f32 0.0, %v7448
  %v7450 = vpop.f32.mrb[0].mxu0
  %v7451 = vpop.f32.mrb[0].mxu0
  %v7452 = vadd.f32 0.0, %v7451
  %v7453 = vpop.f32.mrb[0].mxu0
  %7454 = vmatprep.mubr.bf16.mxu0 0
  %7455 = vmatmul.mubr.bf16.gmra.mrb[0].mxu0 %v6827
  %v7456 = vpop.f32.mrb[0].mxu0
  %v7457 = vadd.f32 0.0, %v7456
  %v7458 = vpop.f32.mrb[0].mxu0
  %v7459 = vpop.f32.mrb[0].mxu0
  %v7460 = vadd.f32 0.0, %v7459
  %v7461 = vpop.f32.mrb[0].mxu0
  %7462 = vmatprep.mubr.bf16.mxu0 0
  %7463 = vmatmul.mubr.bf16.gmra.mrb[0].mxu0 %v6830
  %v7464 = vpop.f32.mrb[0].mxu0
  %v7465 = vadd.f32 0.0, %v7464
  %v7466 = vpop.f32.mrb[0].mxu0
  %v7467 = vpop.f32.mrb[0].mxu0
  %v7468 = vadd.f32 0.0, %v7467
  %v7469 = vpop.f32.mrb[0].mxu0
  %7470 = vmatprep.mubr.bf16.mxu0 0
  %7471 = vmatmul.mubr.bf16.gmra.mrb[0].mxu0 %v6833
  %v7472 = vpop.f32.mrb[0].mxu0
  %v7473 = vadd.f32 0.0, %v7472
  %v7474 = vpop.f32.mrb[0].mxu0
  %v7475 = vpop.f32.mrb[0].mxu0
  %v7476 = vadd.f32 0.0, %v7475
  %v7477 = vpop.f32.mrb[0].mxu0
  %7478 = vmatprep.mubr.bf16.mxu0 0
  %7479 = vmatmul.mubr.bf16.gmra.mrb[0].mxu0 %v6836
  %v7480 = vpop.f32.mrb[0].mxu0
  %v7481 = vadd.f32 0.0, %v7480
  %v7482 = vpop.f32.mrb[0].mxu0
  %v7483 = vpop.f32.mrb[0].mxu0
  %v7484 = vadd.f32 0.0, %v7483
  %v7485 = vpop.f32.mrb[0].mxu0
  %7486 = vmatprep.mubr.bf16.mxu0 0
  %7487 = vmatmul.mubr.bf16.gmra.mrb[0].mxu0 %v6839
  %v7488 = vpop.f32.mrb[0].mxu0
  %v7489 = vadd.f32 0.0, %v7488
  %v7490 = vpop.f32.mrb[0].mxu0
  %v7491 = vpop.f32.mrb[0].mxu0
  %v7492 = vadd.f32 0.0, %v7491
  %v7493 = vpop.f32.mrb[0].mxu0
  %7494 = vmatprep.mubr.bf16.mxu0 0
  %7495 = vmatmul.mubr.bf16.gmra.mrb[0].mxu0 %v6842
  %v7496 = vpop.f32.mrb[0].mxu0
  %v7497 = vadd.f32 0.0, %v7496
  %v7498 = vpop.f32.mrb[0].mxu0
  %v7499 = vpop.f32.mrb[0].mxu0
  %v7500 = vadd.f32 0.0, %v7499
  %v7501 = vpop.f32.mrb[0].mxu0
  %7502 = vmatprep.mubr.bf16.mxu0 0
  %7503 = vmatmul.mubr.bf16.gmra.mrb[0].mxu0 %v6845
  %v7504 = vpop.f32.mrb[0].mxu0
  %v7505 = vadd.f32 0.0, %v7504
  %v7506 = vpop.f32.mrb[0].mxu0
  %v7507 = vpop.f32.mrb[0].mxu0
  %v7508 = vadd.f32 0.0, %v7507
  %v7509 = vpop.f32.mrb[0].mxu0
  %7510 = vmatprep.mubr.bf16.mxu0 0
  %7511 = vmatmul.mubr.bf16.gmra.mrb[0].mxu0 %v6848
  %v7512 = vpop.f32.mrb[0].mxu0
  %v7513 = vadd.f32 0.0, %v7512
  %v7514 = vpop.f32.mrb[0].mxu0
  %v7515 = vpop.f32.mrb[0].mxu0
  %v7516 = vadd.f32 0.0, %v7515
  %v7517 = vpop.f32.mrb[0].mxu0
  %7518 = vmatprep.mubr.bf16.mxu0 0
  %7519 = vmatmul.mubr.bf16.gmra.mrb[0].mxu0 %v6851
  %v7520 = vpop.f32.mrb[0].mxu0
  %v7521 = vadd.f32 0.0, %v7520
  %v7522 = vpop.f32.mrb[0].mxu0
  %v7523 = vpop.f32.mrb[0].mxu0
  %v7524 = vadd.f32 0.0, %v7523
  %v7525 = vpop.f32.mrb[0].mxu0
  %7526 = vmatprep.mubr.bf16.mxu0 0
  %7527 = vmatmul.mubr.bf16.gmra.mrb[0].mxu0 %v6854
  %v7528 = vpop.f32.mrb[0].mxu0
  %v7529 = vadd.f32 0.0, %v7528
  %v7530 = vpop.f32.mrb[0].mxu0
  %v7531 = vpop.f32.mrb[0].mxu0
  %v7532 = vadd.f32 0.0, %v7531
  %v7533 = vpop.f32.mrb[0].mxu0
  %7534 = vmatprep.mubr.bf16.mxu0 0
  %7535 = vmatmul.mubr.bf16.gmra.mrb[0].mxu0 %v6857
  %v7536 = vpop.f32.mrb[0].mxu0
  %v7537 = vadd.f32 0.0, %v7536
  %v7538 = vpop.f32.mrb[0].mxu0
  %v7539 = vpop.f32.mrb[0].mxu0
  %v7540 = vadd.f32 0.0, %v7539
  %v7541 = vpop.f32.mrb[0].mxu0
  %7542 = vdwg.mxu0
  %v7543 = vadd.f32 %v6210, %v6897
  %v7544 = vadd.f32 %v6211, %v6900
  %v7545 = vadd.f32 %v6212, %v6905
  %v7546 = vadd.f32 %v6213, %v6908
  %v7547 = vadd.f32 %v6214, %v6913
  %v7548 = vadd.f32 %v6215, %v6916
  %v7549 = vadd.f32 %v6216, %v6921
  %v7550 = vadd.f32 %v6217, %v6924
  %v7551 = vadd.f32 %v6218, %v6929
  %v7552 = vadd.f32 %v6219, %v6932
  %v7553 = vadd.f32 %v6220, %v6937
  %v7554 = vadd.f32 %v6221, %v6940
  %v7555 = vadd.f32 %v6222, %v6945
  %v7556 = vadd.f32 %v6223, %v6948
  %v7557 = vadd.f32 %v6224, %v6953
  %v7558 = vadd.f32 %v6225, %v6956
  %v7559 = vadd.f32 %v6226, %v6961
  %v7560 = vadd.f32 %v6227, %v6964
  %v7561 = vadd.f32 %v6228, %v6969
  %v7562 = vadd.f32 %v6229, %v6972
  %v7563 = vadd.f32 %v6230, %v6977
  %v7564 = vadd.f32 %v6231, %v6980
  %v7565 = vadd.f32 %v6232, %v6985
  %v7566 = vadd.f32 %v6233, %v6988
  %v7567 = vadd.f32 %v6234, %v6993
  %v7568 = vadd.f32 %v6235, %v6996
  %v7569 = vadd.f32 %v6236, %v7001
  %v7570 = vadd.f32 %v6237, %v7004
  %v7571 = vadd.f32 %v6238, %v7009
  %v7572 = vadd.f32 %v6239, %v7012
  %v7573 = vadd.f32 %v6240, %v7017
  %v7574 = vadd.f32 %v6241, %v7020
  %v7575 = vadd.f32 %v6242, %v7025
  %v7576 = vadd.f32 %v6243, %v7028
  %v7577 = vadd.f32 %v6244, %v7033
  %v7578 = vadd.f32 %v6245, %v7036
  %v7579 = vadd.f32 %v6246, %v7041
  %v7580 = vadd.f32 %v6247, %v7044
  %v7581 = vadd.f32 %v6248, %v7049
  %v7582 = vadd.f32 %v6249, %v7052
  %v7583 = vadd.f32 %v6250, %v7057
  %v7584 = vadd.f32 %v6251, %v7060
  %v7585 = vadd.f32 %v6252, %v7065
  %v7586 = vadd.f32 %v6253, %v7068
  %v7587 = vadd.f32 %v6254, %v7073
  %v7588 = vadd.f32 %v6255, %v7076
  %v7589 = vadd.f32 %v6256, %v7081
  %v7590 = vadd.f32 %v6257, %v7084
  %v7591 = vadd.f32 %v6258, %v7089
  %v7592 = vadd.f32 %v6259, %v7092
  %v7593 = vadd.f32 %v6260, %v7097
  %v7594 = vadd.f32 %v6261, %v7100
  %v7595 = vadd.f32 %v6262, %v7105
  %v7596 = vadd.f32 %v6263, %v7108
  %v7597 = vadd.f32 %v6264, %v7113
  %v7598 = vadd.f32 %v6265, %v7116
  %v7599 = vadd.f32 %v6266, %v7121
  %v7600 = vadd.f32 %v6267, %v7124
  %v7601 = vadd.f32 %v6268, %v7129
  %v7602 = vadd.f32 %v6269, %v7132
  %v7603 = vadd.f32 %v6270, %v7137
  %v7604 = vadd.f32 %v6271, %v7140
  %v7605 = vadd.f32 %v6272, %v7145
  %v7606 = vadd.f32 %v6273, %v7148
  %v7607 = vadd.f32 %v6274, %v7153
  %v7608 = vadd.f32 %v6275, %v7156
  %v7609 = vadd.f32 %v6276, %v7161
  %v7610 = vadd.f32 %v6277, %v7164
  %v7611 = vadd.f32 %v6278, %v7169
  %v7612 = vadd.f32 %v6279, %v7172
  %v7613 = vadd.f32 %v6280, %v7177
  %v7614 = vadd.f32 %v6281, %v7180
  %v7615 = vadd.f32 %v6282, %v7185
  %v7616 = vadd.f32 %v6283, %v7188
  %v7617 = vadd.f32 %v6284, %v7193
  %v7618 = vadd.f32 %v6285, %v7196
  %v7619 = vadd.f32 %v6286, %v7201
  %v7620 = vadd.f32 %v6287, %v7204
  %v7621 = vadd.f32 %v6288, %v7209
  %v7622 = vadd.f32 %v6289, %v7212
  %v7623 = vadd.f32 %v6290, %v7217
  %v7624 = vadd.f32 %v6291, %v7220
  %v7625 = vadd.f32 %v6292, %v7225
  %v7626 = vadd.f32 %v6293, %v7228
  %v7627 = vadd.f32 %v6294, %v7233
  %v7628 = vadd.f32 %v6295, %v7236
  %v7629 = vadd.f32 %v6296, %v7241
  %v7630 = vadd.f32 %v6297, %v7244
  %v7631 = vadd.f32 %v6298, %v7249
  %v7632 = vadd.f32 %v6299, %v7252
  %v7633 = vadd.f32 %v6300, %v7257
  %v7634 = vadd.f32 %v6301, %v7260
  %v7635 = vadd.f32 %v6302, %v7265
  %v7636 = vadd.f32 %v6303, %v7268
  %v7637 = vadd.f32 %v6304, %v7273
  %v7638 = vadd.f32 %v6305, %v7276
  %v7639 = vadd.f32 %v6306, %v7281
  %v7640 = vadd.f32 %v6307, %v7284
  %v7641 = vadd.f32 %v6308, %v7289
  %v7642 = vadd.f32 %v6309, %v7292
  %v7643 = vadd.f32 %v6310, %v7297
  %v7644 = vadd.f32 %v6311, %v7300
  %v7645 = vadd.f32 %v6312, %v7305
  %v7646 = vadd.f32 %v6313, %v7308
  %v7647 = vadd.f32 %v6314, %v7313
  %v7648 = vadd.f32 %v6315, %v7316
  %v7649 = vadd.f32 %v6316, %v7321
  %v7650 = vadd.f32 %v6317, %v7324
  %v7651 = vadd.f32 %v6318, %v7329
  %v7652 = vadd.f32 %v6319, %v7332
  %v7653 = vadd.f32 %v6320, %v7337
  %v7654 = vadd.f32 %v6321, %v7340
  %v7655 = vadd.f32 %v6322, %v7345
  %v7656 = vadd.f32 %v6323, %v7348
  %v7657 = vadd.f32 %v6324, %v7353
  %v7658 = vadd.f32 %v6325, %v7356
  %v7659 = vadd.f32 %v6326, %v7361
  %v7660 = vadd.f32 %v6327, %v7364
  %v7661 = vadd.f32 %v6328, %v7369
  %v7662 = vadd.f32 %v6329, %v7372
  %v7663 = vadd.f32 %v6330, %v7377
  %v7664 = vadd.f32 %v6331, %v7380
  %v7665 = vadd.f32 %v6332, %v7385
  %v7666 = vadd.f32 %v6333, %v7388
  %v7667 = vadd.f32 %v6334, %v7393
  %v7668 = vadd.f32 %v6335, %v7396
  %v7669 = vadd.f32 %v6336, %v7401
  %v7670 = vadd.f32 %v6337, %v7404
  %v7671 = vadd.f32 %v6338, %v7409
  %v7672 = vadd.f32 %v6339, %v7412
  %v7673 = vadd.f32 %v6340, %v7417
  %v7674 = vadd.f32 %v6341, %v7420
  %v7675 = vadd.f32 %v6342, %v7425
  %v7676 = vadd.f32 %v6343, %v7428
  %v7677 = vadd.f32 %v6344, %v7433
  %v7678 = vadd.f32 %v6345, %v7436
  %v7679 = vadd.f32 %v6346, %v7441
  %v7680 = vadd.f32 %v6347, %v7444
  %v7681 = vadd.f32 %v6348, %v7449
  %v7682 = vadd.f32 %v6349, %v7452
  %v7683 = vadd.f32 %v6350, %v7457
  %v7684 = vadd.f32 %v6351, %v7460
  %v7685 = vadd.f32 %v6352, %v7465
  %v7686 = vadd.f32 %v6353, %v7468
  %v7687 = vadd.f32 %v6354, %v7473
  %v7688 = vadd.f32 %v6355, %v7476
  %v7689 = vadd.f32 %v6356, %v7481
  %v7690 = vadd.f32 %v6357, %v7484
  %v7691 = vadd.f32 %v6358, %v7489
  %v7692 = vadd.f32 %v6359, %v7492
  %v7693 = vadd.f32 %v6360, %v7497
  %v7694 = vadd.f32 %v6361, %v7500
  %v7695 = vadd.f32 %v6362, %v7505
  %v7696 = vadd.f32 %v6363, %v7508
  %v7697 = vadd.f32 %v6364, %v7513
  %v7698 = vadd.f32 %v6365, %v7516
  %v7699 = vadd.f32 %v6366, %v7521
  %v7700 = vadd.f32 %v6367, %v7524
  %v7701 = vadd.f32 %v6368, %v7529
  %v7702 = vadd.f32 %v6369, %v7532
  %v7703 = vadd.f32 %v6370, %v7537
  %v7704 = vadd.f32 %v6371, %v7540
  %v7705 = vld [vmem:[%s0 + $0x24] sm:$0xff]
  %v7706 = vld [vmem:[%s0 + $0x2c] sm:$0xff]
  %v7707 = vld [vmem:[%s0 + $0x34] sm:$0xff]
  %v7708 = vld [vmem:[%s0 + $0x3c] sm:$0xff]
  %v7709 = vld [vmem:[%s0 + $0x44] sm:$0xff]
  %v7710 = vld [vmem:[%s0 + $0x4c] sm:$0xff]
  %v7711 = vld [vmem:[%s0 + $0x54] sm:$0xff]
  %v7712 = vld [vmem:[%s0 + $0x5c] sm:$0xff]
  %v7713 = vld [vmem:[%s0 + $0x64] sm:$0xff]
  %v7714 = vld [vmem:[%s0 + $0x6c] sm:$0xff]
  %v7715 = vld [vmem:[%s0 + $0x74] sm:$0xff]
  %v7716 = vld [vmem:[%s0 + $0x7c] sm:$0xff]
  %v7717 = vld [vmem:[%s0 + $0x84] sm:$0xff]
  %v7718 = vld [vmem:[%s0 + $0x8c] sm:$0xff]
  %v7719 = vld [vmem:[%s0 + $0x94] sm:$0xff]
  %v7720 = vld [vmem:[%s0 + $0x9c] sm:$0xff]
  %v7721 = vld [vmem:[%s0 + $0xa4] sm:$0xff]
  %v7722 = vld [vmem:[%s0 + $0xac] sm:$0xff]
  %v7723 = vld [vmem:[%s0 + $0xb4] sm:$0xff]
  %v7724 = vld [vmem:[%s0 + $0xbc] sm:$0xff]
  %v7725 = vld [vmem:[%s0 + $0xc4] sm:$0xff]
  %v7726 = vld [vmem:[%s0 + $0xcc] sm:$0xff]
  %v7727 = vld [vmem:[%s0 + $0xd4] sm:$0xff]
  %v7728 = vld [vmem:[%s0 + $0xdc] sm:$0xff]
  %v7729 = vld [vmem:[%s0 + $0xe4] sm:$0xff]
  %v7730 = vld [vmem:[%s0 + $0xec] sm:$0xff]
  %v7731 = vld [vmem:[%s0 + $0xf4] sm:$0xff]
  %v7732 = vld [vmem:[%s0 + $0xfc] sm:$0xff]
  %v7733 = vld [vmem:[%s0 + $0x104] sm:$0xff]
  %v7734 = vld [vmem:[%s0 + $0x10c] sm:$0xff]
  %v7735 = vld [vmem:[%s0 + $0x114] sm:$0xff]
  %v7736 = vld [vmem:[%s0 + $0x11c] sm:$0xff]
  %v7737 = vld [vmem:[%s0 + $0x124] sm:$0xff]
  %v7738 = vld [vmem:[%s0 + $0x12c] sm:$0xff]
  %v7739 = vld [vmem:[%s0 + $0x134] sm:$0xff]
  %v7740 = vld [vmem:[%s0 + $0x13c] sm:$0xff]
  %v7741 = vld [vmem:[%s0 + $0x144] sm:$0xff]
  %v7742 = vld [vmem:[%s0 + $0x14c] sm:$0xff]
  %v7743 = vld [vmem:[%s0 + $0x154] sm:$0xff]
  %v7744 = vld [vmem:[%s0 + $0x15c] sm:$0xff]
  %v7745 = vld [vmem:[%s0 + $0x164] sm:$0xff]
  %v7746 = vld [vmem:[%s0 + $0x16c] sm:$0xff]
  %v7747 = vld [vmem:[%s0 + $0x174] sm:$0xff]
  %v7748 = vld [vmem:[%s0 + $0x17c] sm:$0xff]
  %v7749 = vld [vmem:[%s0 + $0x184] sm:$0xff]
  %v7750 = vld [vmem:[%s0 + $0x18c] sm:$0xff]
  %v7751 = vld [vmem:[%s0 + $0x194] sm:$0xff]
  %v7752 = vld [vmem:[%s0 + $0x19c] sm:$0xff]
  %v7753 = vld [vmem:[%s0 + $0x1a4] sm:$0xff]
  %v7754 = vld [vmem:[%s0 + $0x1ac] sm:$0xff]
  %v7755 = vld [vmem:[%s0 + $0x1b4] sm:$0xff]
  %v7756 = vld [vmem:[%s0 + $0x1bc] sm:$0xff]
  %v7757 = vld [vmem:[%s0 + $0x1c4] sm:$0xff]
  %v7758 = vld [vmem:[%s0 + $0x1cc] sm:$0xff]
  %v7759 = vld [vmem:[%s0 + $0x1d4] sm:$0xff]
  %v7760 = vld [vmem:[%s0 + $0x1dc] sm:$0xff]
  %v7761 = vld [vmem:[%s0 + $0x1e4] sm:$0xff]
  %v7762 = vld [vmem:[%s0 + $0x1ec] sm:$0xff]
  %v7763 = vld [vmem:[%s0 + $0x1f4] sm:$0xff]
  %v7764 = vld [vmem:[%s0 + $0x1fc] sm:$0xff]
  %v7765 = vld [vmem:[%s0 + $0x204] sm:$0xff]
  %v7766 = vld [vmem:[%s0 + $0x20c] sm:$0xff]
  %v7767 = vld [vmem:[%s0 + $0x214] sm:$0xff]
  %v7768 = vld [vmem:[%s0 + $0x21c] sm:$0xff]
  %v7769 = vld [vmem:[%s0 + $0x224] sm:$0xff]
  %v7770 = vld [vmem:[%s0 + $0x22c] sm:$0xff]
  %v7771 = vld [vmem:[%s0 + $0x234] sm:$0xff]
  %v7772 = vld [vmem:[%s0 + $0x23c] sm:$0xff]
  %v7773 = vld [vmem:[%s0 + $0x244] sm:$0xff]
  %v7774 = vld [vmem:[%s0 + $0x24c] sm:$0xff]
  %v7775 = vld [vmem:[%s0 + $0x254] sm:$0xff]
  %v7776 = vld [vmem:[%s0 + $0x25c] sm:$0xff]
  %v7777 = vld [vmem:[%s0 + $0x264] sm:$0xff]
  %v7778 = vld [vmem:[%s0 + $0x26c] sm:$0xff]
  %v7779 = vld [vmem:[%s0 + $0x274] sm:$0xff]
  %v7780 = vld [vmem:[%s0 + $0x27c] sm:$0xff]
  %v7781 = vld [vmem:[%s0 + $0x284] sm:$0xff]
  %v7782 = vld [vmem:[%s0 + $0x28c] sm:$0xff]
  %v7783 = vld [vmem:[%s0 + $0x294] sm:$0xff]
  %v7784 = vld [vmem:[%s0 + $0x29c] sm:$0xff]
  %v7785 = vld [vmem:[%s0 + $0x2a4] sm:$0xff]
  %v7786 = vld [vmem:[%s0 + $0x2ac] sm:$0xff]
  %v7787 = vld [vmem:[%s0 + $0x2b4] sm:$0xff]
  %v7788 = vld [vmem:[%s0 + $0x2bc] sm:$0xff]
  %v7789 = vld [vmem:[%s0 + $0x2c4] sm:$0xff]
  %v7790 = vld [vmem:[%s0 + $0x2cc] sm:$0xff]
  %v7791 = vld [vmem:[%s0 + $0x2d4] sm:$0xff]
  %v7792 = vld [vmem:[%s0 + $0x2dc] sm:$0xff]
  %v7793 = vld [vmem:[%s0 + $0x2e4] sm:$0xff]
  %v7794 = vld [vmem:[%s0 + $0x2ec] sm:$0xff]
  %v7795 = vld [vmem:[%s0 + $0x2f4] sm:$0xff]
  %v7796 = vld [vmem:[%s0 + $0x2fc] sm:$0xff]
  %v7797 = vld [vmem:[%s0 + $0x304] sm:$0xff]
  %v7798 = vld [vmem:[%s0 + $0x30c] sm:$0xff]
  %v7799 = vld [vmem:[%s0 + $0x314] sm:$0xff]
  %v7800 = vld [vmem:[%s0 + $0x31c] sm:$0xff]
  %v7801 = vld [vmem:[%s0 + $0x324] sm:$0xff]
  %v7802 = vld [vmem:[%s0 + $0x32c] sm:$0xff]
  %v7803 = vld [vmem:[%s0 + $0x334] sm:$0xff]
  %v7804 = vld [vmem:[%s0 + $0x33c] sm:$0xff]
  %v7805 = vld [vmem:[%s0 + $0x344] sm:$0xff]
  %v7806 = vld [vmem:[%s0 + $0x34c] sm:$0xff]
  %v7807 = vld [vmem:[%s0 + $0x354] sm:$0xff]
  %v7808 = vld [vmem:[%s0 + $0x35c] sm:$0xff]
  %v7809 = vld [vmem:[%s0 + $0x364] sm:$0xff]
  %v7810 = vld [vmem:[%s0 + $0x36c] sm:$0xff]
  %v7811 = vld [vmem:[%s0 + $0x374] sm:$0xff]
  %v7812 = vld [vmem:[%s0 + $0x37c] sm:$0xff]
  %v7813 = vld [vmem:[%s0 + $0x384] sm:$0xff]
  %v7814 = vld [vmem:[%s0 + $0x38c] sm:$0xff]
  %v7815 = vld [vmem:[%s0 + $0x394] sm:$0xff]
  %v7816 = vld [vmem:[%s0 + $0x39c] sm:$0xff]
  %v7817 = vld [vmem:[%s0 + $0x3a4] sm:$0xff]
  %v7818 = vld [vmem:[%s0 + $0x3ac] sm:$0xff]
  %v7819 = vld [vmem:[%s0 + $0x3b4] sm:$0xff]
  %v7820 = vld [vmem:[%s0 + $0x3bc] sm:$0xff]
  %v7821 = vld [vmem:[%s0 + $0x3c4] sm:$0xff]
  %v7822 = vld [vmem:[%s0 + $0x3cc] sm:$0xff]
  %v7823 = vld [vmem:[%s0 + $0x3d4] sm:$0xff]
  %v7824 = vld [vmem:[%s0 + $0x3dc] sm:$0xff]
  %v7825 = vld [vmem:[%s0 + $0x3e4] sm:$0xff]
  %v7826 = vld [vmem:[%s0 + $0x3ec] sm:$0xff]
  %v7827 = vld [vmem:[%s0 + $0x3f4] sm:$0xff]
  %v7828 = vld [vmem:[%s0 + $0x3fc] sm:$0xff]
  %v7829 = vld [vmem:[%s0 + $0x404] sm:$0xff]
  %v7830 = vld [vmem:[%s0 + $0x40c] sm:$0xff]
  %v7831 = vld [vmem:[%s0 + $0x414] sm:$0xff]
  %v7832 = vld [vmem:[%s0 + $0x41c] sm:$0xff]
  %v7833 = vld [vmem:[%s0 + $0x424] sm:$0xff]
  %v7834 = vld [vmem:[%s0 + $0x42c] sm:$0xff]
  %v7835 = vld [vmem:[%s0 + $0x434] sm:$0xff]
  %v7836 = vld [vmem:[%s0 + $0x43c] sm:$0xff]
  %v7837 = vld [vmem:[%s0 + $0x444] sm:$0xff]
  %v7838 = vld [vmem:[%s0 + $0x44c] sm:$0xff]
  %v7839 = vld [vmem:[%s0 + $0x454] sm:$0xff]
  %v7840 = vld [vmem:[%s0 + $0x45c] sm:$0xff]
  %v7841 = vld [vmem:[%s0 + $0x464] sm:$0xff]
  %v7842 = vld [vmem:[%s0 + $0x46c] sm:$0xff]
  %v7843 = vld [vmem:[%s0 + $0x474] sm:$0xff]
  %v7844 = vld [vmem:[%s0 + $0x47c] sm:$0xff]
  %v7845 = vld [vmem:[%s0 + $0x484] sm:$0xff]
  %v7846 = vld [vmem:[%s0 + $0x48c] sm:$0xff]
  %v7847 = vld [vmem:[%s0 + $0x494] sm:$0xff]
  %v7848 = vld [vmem:[%s0 + $0x49c] sm:$0xff]
  %v7849 = vld [vmem:[%s0 + $0x4a4] sm:$0xff]
  %v7850 = vld [vmem:[%s0 + $0x4ac] sm:$0xff]
  %v7851 = vld [vmem:[%s0 + $0x4b4] sm:$0xff]
  %v7852 = vld [vmem:[%s0 + $0x4bc] sm:$0xff]
  %v7853 = vld [vmem:[%s0 + $0x4c4] sm:$0xff]
  %v7854 = vld [vmem:[%s0 + $0x4cc] sm:$0xff]
  %v7855 = vld [vmem:[%s0 + $0x4d4] sm:$0xff]
  %v7856 = vld [vmem:[%s0 + $0x4dc] sm:$0xff]
  %v7857 = vld [vmem:[%s0 + $0x4e4] sm:$0xff]
  %v7858 = vld [vmem:[%s0 + $0x4ec] sm:$0xff]
  %v7859 = vld [vmem:[%s0 + $0x4f4] sm:$0xff]
  %v7860 = vld [vmem:[%s0 + $0x4fc] sm:$0xff]
  %v7861 = vld [vmem:[%s0 + $0x504] sm:$0xff]
  %v7862 = vld [vmem:[%s0 + $0x50c] sm:$0xff]
  %v7863 = vld [vmem:[%s0 + $0x514] sm:$0xff]
  %v7864 = vld [vmem:[%s0 + $0x51c] sm:$0xff]
  %v7865 = vld [vmem:[%s0 + $0x524] sm:$0xff]
  %v7866 = vld [vmem:[%s0 + $0x52c] sm:$0xff]
  %v7867 = vpack.c.bf16 %v7706, %v7705
  %v7868 = vpack.c.bf16 %v7708, %v7707
  %v7869 = vpack.c.bf16 %v7710, %v7709
  %v7870 = vpack.c.bf16 %v7712, %v7711
  %v7871 = vpack.c.bf16 %v7714, %v7713
  %v7872 = vpack.c.bf16 %v7716, %v7715
  %v7873 = vpack.c.bf16 %v7718, %v7717
  %v7874 = vpack.c.bf16 %v7720, %v7719
  %v7875 = vpack.c.bf16 %v7722, %v7721
  %v7876 = vpack.c.bf16 %v7724, %v7723
  %v7877 = vpack.c.bf16 %v7726, %v7725
  %v7878 = vpack.c.bf16 %v7728, %v7727
  %v7879 = vpack.c.bf16 %v7730, %v7729
  %v7880 = vpack.c.bf16 %v7732, %v7731
  %v7881 = vpack.c.bf16 %v7734, %v7733
  %v7882 = vpack.c.bf16 %v7736, %v7735
  %v7883 = vpack.c.bf16 %v7738, %v7737
  %v7884 = vpack.c.bf16 %v7740, %v7739
  %v7885 = vpack.c.bf16 %v7742, %v7741
  %v7886 = vpack.c.bf16 %v7744, %v7743
  %v7887 = vpack.c.bf16 %v7746, %v7745
  %v7888 = vpack.c.bf16 %v7748, %v7747
  %v7889 = vpack.c.bf16 %v7750, %v7749
  %v7890 = vpack.c.bf16 %v7752, %v7751
  %v7891 = vpack.c.bf16 %v7754, %v7753
  %v7892 = vpack.c.bf16 %v7756, %v7755
  %v7893 = vpack.c.bf16 %v7758, %v7757
  %v7894 = vpack.c.bf16 %v7760, %v7759
  %v7895 = vpack.c.bf16 %v7762, %v7761
  %v7896 = vpack.c.bf16 %v7764, %v7763
  %v7897 = vpack.c.bf16 %v7766, %v7765
  %v7898 = vpack.c.bf16 %v7768, %v7767
  %v7899 = vpack.c.bf16 %v7770, %v7769
  %v7900 = vpack.c.bf16 %v7772, %v7771
  %v7901 = vpack.c.bf16 %v7774, %v7773
  %v7902 = vpack.c.bf16 %v7776, %v7775
  %v7903 = vpack.c.bf16 %v7778, %v7777
  %v7904 = vpack.c.bf16 %v7780, %v7779
  %v7905 = vpack.c.bf16 %v7782, %v7781
  %v7906 = vpack.c.bf16 %v7784, %v7783
  %v7907 = vpack.c.bf16 %v7786, %v7785
  %v7908 = vpack.c.bf16 %v7788, %v7787
  %v7909 = vpack.c.bf16 %v7790, %v7789
  %v7910 = vpack.c.bf16 %v7792, %v7791
  %v7911 = vpack.c.bf16 %v7794, %v7793
  %v7912 = vpack.c.bf16 %v7796, %v7795
  %v7913 = vpack.c.bf16 %v7798, %v7797
  %v7914 = vpack.c.bf16 %v7800, %v7799
  %v7915 = vpack.c.bf16 %v7802, %v7801
  %v7916 = vpack.c.bf16 %v7804, %v7803
  %v7917 = vpack.c.bf16 %v7806, %v7805
  %v7918 = vpack.c.bf16 %v7808, %v7807
  %v7919 = vpack.c.bf16 %v7810, %v7809
  %v7920 = vpack.c.bf16 %v7812, %v7811
  %v7921 = vpack.c.bf16 %v7814, %v7813
  %v7922 = vpack.c.bf16 %v7816, %v7815
  %v7923 = vpack.c.bf16 %v7818, %v7817
  %v7924 = vpack.c.bf16 %v7820, %v7819
  %v7925 = vpack.c.bf16 %v7822, %v7821
  %v7926 = vpack.c.bf16 %v7824, %v7823
  %v7927 = vpack.c.bf16 %v7826, %v7825
  %v7928 = vpack.c.bf16 %v7828, %v7827
  %v7929 = vpack.c.bf16 %v7830, %v7829
  %v7930 = vpack.c.bf16 %v7832, %v7831
  %v7931 = vpack.c.bf16 %v7834, %v7833
  %v7932 = vpack.c.bf16 %v7836, %v7835
  %v7933 = vpack.c.bf16 %v7838, %v7837
  %v7934 = vpack.c.bf16 %v7840, %v7839
  %v7935 = vpack.c.bf16 %v7842, %v7841
  %v7936 = vpack.c.bf16 %v7844, %v7843
  %v7937 = vpack.c.bf16 %v7846, %v7845
  %v7938 = vpack.c.bf16 %v7848, %v7847
  %v7939 = vpack.c.bf16 %v7850, %v7849
  %v7940 = vpack.c.bf16 %v7852, %v7851
  %v7941 = vpack.c.bf16 %v7854, %v7853
  %v7942 = vpack.c.bf16 %v7856, %v7855
  %v7943 = vpack.c.bf16 %v7858, %v7857
  %v7944 = vpack.c.bf16 %v7860, %v7859
  %v7945 = vpack.c.bf16 %v7862, %v7861
  %v7946 = vpack.c.bf16 %v7864, %v7863
  %v7947 = vpack.c.bf16 %v7866, %v7865
  %v7948 = vld [vmem:[%s1 + $0x18] sm:$0xf]
  %v7950 = vsel %vm517, %v7867, 0
  %v7953 = vsel %vm517, %v7868, 0
  %v7956 = vsel %vm517, %v7869, 0
  %v7959 = vsel %vm517, %v7870, 0
  %v7962 = vsel %vm517, %v7871, 0
  %v7965 = vsel %vm517, %v7872, 0
  %v7968 = vsel %vm517, %v7873, 0
  %v7971 = vsel %vm517, %v7874, 0
  %v7974 = vsel %vm517, %v7875, 0
  %v7977 = vsel %vm517, %v7876, 0
  %v7980 = vsel %vm517, %v7877, 0
  %v7983 = vsel %vm517, %v7878, 0
  %v7986 = vsel %vm517, %v7879, 0
  %v7989 = vsel %vm517, %v7880, 0
  %v7992 = vsel %vm517, %v7881, 0
  %v7995 = vsel %vm517, %v7882, 0
  %v7998 = vsel %vm517, %v7883, 0
  %v8001 = vsel %vm517, %v7884, 0
  %v8004 = vsel %vm517, %v7885, 0
  %v8007 = vsel %vm517, %v7886, 0
  %v8010 = vsel %vm517, %v7887, 0
  %v8013 = vsel %vm517, %v7888, 0
  %v8016 = vsel %vm517, %v7889, 0
  %v8019 = vsel %vm517, %v7890, 0
  %v8022 = vsel %vm517, %v7891, 0
  %v8025 = vsel %vm517, %v7892, 0
  %v8028 = vsel %vm517, %v7893, 0
  %v8031 = vsel %vm517, %v7894, 0
  %v8034 = vsel %vm517, %v7895, 0
  %v8037 = vsel %vm517, %v7896, 0
  %v8040 = vsel %vm517, %v7897, 0
  %v8043 = vsel %vm517, %v7898, 0
  %v8046 = vsel %vm517, %v7899, 0
  %v8049 = vsel %vm517, %v7900, 0
  %v8052 = vsel %vm517, %v7901, 0
  %v8055 = vsel %vm517, %v7902, 0
  %v8058 = vsel %vm517, %v7903, 0
  %v8061 = vsel %vm517, %v7904, 0
  %v8064 = vsel %vm517, %v7905, 0
  %v8067 = vsel %vm517, %v7906, 0
  %v8070 = vsel %vm517, %v7907, 0
  %v8073 = vsel %vm517, %v7908, 0
  %v8076 = vsel %vm517, %v7909, 0
  %v8079 = vsel %vm517, %v7910, 0
  %v8082 = vsel %vm517, %v7911, 0
  %v8085 = vsel %vm517, %v7912, 0
  %v8088 = vsel %vm517, %v7913, 0
  %v8091 = vsel %vm517, %v7914, 0
  %v8094 = vsel %vm517, %v7915, 0
  %v8097 = vsel %vm517, %v7916, 0
  %v8100 = vsel %vm517, %v7917, 0
  %v8103 = vsel %vm517, %v7918, 0
  %v8106 = vsel %vm517, %v7919, 0
  %v8109 = vsel %vm517, %v7920, 0
  %v8112 = vsel %vm517, %v7921, 0
  %v8115 = vsel %vm517, %v7922, 0
  %v8118 = vsel %vm517, %v7923, 0
  %v8121 = vsel %vm517, %v7924, 0
  %v8124 = vsel %vm517, %v7925, 0
  %v8127 = vsel %vm517, %v7926, 0
  %v8130 = vsel %vm517, %v7927, 0
  %v8133 = vsel %vm517, %v7928, 0
  %v8136 = vsel %vm517, %v7929, 0
  %v8139 = vsel %vm517, %v7930, 0
  %v8142 = vsel %vm517, %v7931, 0
  %v8145 = vsel %vm517, %v7932, 0
  %v8148 = vsel %vm517, %v7933, 0
  %v8151 = vsel %vm517, %v7934, 0
  %v8154 = vsel %vm517, %v7935, 0
  %v8157 = vsel %vm517, %v7936, 0
  %v8160 = vsel %vm517, %v7937, 0
  %v8163 = vsel %vm517, %v7938, 0
  %v8166 = vsel %vm517, %v7939, 0
  %v8169 = vsel %vm517, %v7940, 0
  %v8172 = vsel %vm517, %v7941, 0
  %v8175 = vsel %vm517, %v7942, 0
  %v8178 = vsel %vm517, %v7943, 0
  %v8181 = vsel %vm517, %v7944, 0
  %v8184 = vsel %vm517, %v7945, 0
  %v8187 = vsel %vm517, %v7946, 0
  %v8190 = vsel %vm517, %v7947, 0
  %v8193 = vsel %vm761, %v7948, 0
  %8195 = vmatprep.subr.bf16.mxu0 0
  %8196 = vmatpush1.bf16.msra.mxu0 %v8193
  %8197 = vmatprep.subr.bf16.mxu0 0
  %8198 = vmatpush1.bf16.msra.mxu0 0
  %8199 = vmatprep.subr.bf16.mxu0 0
  %8200 = vmatpush1.bf16.msra.mxu0 0
  %8201 = vmatprep.subr.bf16.mxu0 0
  %8202 = vmatpush1.bf16.msra.mxu0 0
  %8203 = vmatprep.subr.bf16.mxu0 0
  %8204 = vmatpush1.bf16.msra.mxu0 0
  %8205 = vmatprep.subr.bf16.mxu0 0
  %8206 = vmatpush1.bf16.msra.mxu0 0
  %8207 = vmatprep.subr.bf16.mxu0 0
  %8208 = vmatpush1.bf16.msra.mxu0 0
  %8209 = vmatprep.subr.bf16.mxu0 0
  %8210 = vmatpush1.bf16.msra.mxu0 0
  %8211 = vmatprep.subr.bf16.mxu0 0
  %8212 = vmatpush1.bf16.msra.mxu0 0
  %8213 = vmatprep.subr.bf16.mxu0 0
  %8214 = vmatpush1.bf16.msra.mxu0 0
  %8215 = vmatprep.subr.bf16.mxu0 0
  %8216 = vmatpush1.bf16.msra.mxu0 0
  %8217 = vmatprep.subr.bf16.mxu0 0
  %8218 = vmatpush1.bf16.msra.mxu0 0
  %8219 = vmatprep.subr.bf16.mxu0 0
  %8220 = vmatpush1.bf16.msra.mxu0 0
  %8221 = vmatprep.subr.bf16.mxu0 0
  %8222 = vmatpush1.bf16.msra.mxu0 0
  %8223 = vmatprep.subr.bf16.mxu0 0
  %8224 = vmatpush1.bf16.msra.mxu0 0
  %8225 = vmatprep.subr.bf16.mxu0 0
  %8226 = vmatpush1.bf16.msra.mxu0 0
  %8227 = vmatprep.mubr.bf16.mxu0 0
  %8228 = vmatmul.mubr.bf16.gmra.mrb[0].mxu0 %v7950
  %v8229 = vpop.f32.mrb[0].mxu0
  %v8230 = vadd.f32 0.0, %v8229
  %v8231 = vpop.f32.mrb[0].mxu0
  %v8232 = vpop.f32.mrb[0].mxu0
  %v8233 = vadd.f32 0.0, %v8232
  %v8234 = vpop.f32.mrb[0].mxu0
  %8235 = vmatprep.mubr.bf16.mxu0 0
  %8236 = vmatmul.mubr.bf16.gmra.mrb[0].mxu0 %v7953
  %v8237 = vpop.f32.mrb[0].mxu0
  %v8238 = vadd.f32 0.0, %v8237
  %v8239 = vpop.f32.mrb[0].mxu0
  %v8240 = vpop.f32.mrb[0].mxu0
  %v8241 = vadd.f32 0.0, %v8240
  %v8242 = vpop.f32.mrb[0].mxu0
  %8243 = vmatprep.mubr.bf16.mxu0 0
  %8244 = vmatmul.mubr.bf16.gmra.mrb[0].mxu0 %v7956
  %v8245 = vpop.f32.mrb[0].mxu0
  %v8246 = vadd.f32 0.0, %v8245
  %v8247 = vpop.f32.mrb[0].mxu0
  %v8248 = vpop.f32.mrb[0].mxu0
  %v8249 = vadd.f32 0.0, %v8248
  %v8250 = vpop.f32.mrb[0].mxu0
  %8251 = vmatprep.mubr.bf16.mxu0 0
  %8252 = vmatmul.mubr.bf16.gmra.mrb[0].mxu0 %v7959
  %v8253 = vpop.f32.mrb[0].mxu0
  %v8254 = vadd.f32 0.0, %v8253
  %v8255 = vpop.f32.mrb[0].mxu0
  %v8256 = vpop.f32.mrb[0].mxu0
  %v8257 = vadd.f32 0.0, %v8256
  %v8258 = vpop.f32.mrb[0].mxu0
  %8259 = vmatprep.mubr.bf16.mxu0 0
  %8260 = vmatmul.mubr.bf16.gmra.mrb[0].mxu0 %v7962
  %v8261 = vpop.f32.mrb[0].mxu0
  %v8262 = vadd.f32 0.0, %v8261
  %v8263 = vpop.f32.mrb[0].mxu0
  %v8264 = vpop.f32.mrb[0].mxu0
  %v8265 = vadd.f32 0.0, %v8264
  %v8266 = vpop.f32.mrb[0].mxu0
  %8267 = vmatprep.mubr.bf16.mxu0 0
  %8268 = vmatmul.mubr.bf16.gmra.mrb[0].mxu0 %v7965
  %v8269 = vpop.f32.mrb[0].mxu0
  %v8270 = vadd.f32 0.0, %v8269
  %v8271 = vpop.f32.mrb[0].mxu0
  %v8272 = vpop.f32.mrb[0].mxu0
  %v8273 = vadd.f32 0.0, %v8272
  %v8274 = vpop.f32.mrb[0].mxu0
  %8275 = vmatprep.mubr.bf16.mxu0 0
  %8276 = vmatmul.mubr.bf16.gmra.mrb[0].mxu0 %v7968
  %v8277 = vpop.f32.mrb[0].mxu0
  %v8278 = vadd.f32 0.0, %v8277
  %v8279 = vpop.f32.mrb[0].mxu0
  %v8280 = vpop.f32.mrb[0].mxu0
  %v8281 = vadd.f32 0.0, %v8280
  %v8282 = vpop.f32.mrb[0].mxu0
  %8283 = vmatprep.mubr.bf16.mxu0 0
  %8284 = vmatmul.mubr.bf16.gmra.mrb[0].mxu0 %v7971
  %v8285 = vpop.f32.mrb[0].mxu0
  %v8286 = vadd.f32 0.0, %v8285
  %v8287 = vpop.f32.mrb[0].mxu0
  %v8288 = vpop.f32.mrb[0].mxu0
  %v8289 = vadd.f32 0.0, %v8288
  %v8290 = vpop.f32.mrb[0].mxu0
  %8291 = vmatprep.mubr.bf16.mxu0 0
  %8292 = vmatmul.mubr.bf16.gmra.mrb[0].mxu0 %v7974
  %v8293 = vpop.f32.mrb[0].mxu0
  %v8294 = vadd.f32 0.0, %v8293
  %v8295 = vpop.f32.mrb[0].mxu0
  %v8296 = vpop.f32.mrb[0].mxu0
  %v8297 = vadd.f32 0.0, %v8296
  %v8298 = vpop.f32.mrb[0].mxu0
  %8299 = vmatprep.mubr.bf16.mxu0 0
  %8300 = vmatmul.mubr.bf16.gmra.mrb[0].mxu0 %v7977
  %v8301 = vpop.f32.mrb[0].mxu0
  %v8302 = vadd.f32 0.0, %v8301
  %v8303 = vpop.f32.mrb[0].mxu0
  %v8304 = vpop.f32.mrb[0].mxu0
  %v8305 = vadd.f32 0.0, %v8304
  %v8306 = vpop.f32.mrb[0].mxu0
  %8307 = vmatprep.mubr.bf16.mxu0 0
  %8308 = vmatmul.mubr.bf16.gmra.mrb[0].mxu0 %v7980
  %v8309 = vpop.f32.mrb[0].mxu0
  %v8310 = vadd.f32 0.0, %v8309
  %v8311 = vpop.f32.mrb[0].mxu0
  %v8312 = vpop.f32.mrb[0].mxu0
  %v8313 = vadd.f32 0.0, %v8312
  %v8314 = vpop.f32.mrb[0].mxu0
  %8315 = vmatprep.mubr.bf16.mxu0 0
  %8316 = vmatmul.mubr.bf16.gmra.mrb[0].mxu0 %v7983
  %v8317 = vpop.f32.mrb[0].mxu0
  %v8318 = vadd.f32 0.0, %v8317
  %v8319 = vpop.f32.mrb[0].mxu0
  %v8320 = vpop.f32.mrb[0].mxu0
  %v8321 = vadd.f32 0.0, %v8320
  %v8322 = vpop.f32.mrb[0].mxu0
  %8323 = vmatprep.mubr.bf16.mxu0 0
  %8324 = vmatmul.mubr.bf16.gmra.mrb[0].mxu0 %v7986
  %v8325 = vpop.f32.mrb[0].mxu0
  %v8326 = vadd.f32 0.0, %v8325
  %v8327 = vpop.f32.mrb[0].mxu0
  %v8328 = vpop.f32.mrb[0].mxu0
  %v8329 = vadd.f32 0.0, %v8328
  %v8330 = vpop.f32.mrb[0].mxu0
  %8331 = vmatprep.mubr.bf16.mxu0 0
  %8332 = vmatmul.mubr.bf16.gmra.mrb[0].mxu0 %v7989
  %v8333 = vpop.f32.mrb[0].mxu0
  %v8334 = vadd.f32 0.0, %v8333
  %v8335 = vpop.f32.mrb[0].mxu0
  %v8336 = vpop.f32.mrb[0].mxu0
  %v8337 = vadd.f32 0.0, %v8336
  %v8338 = vpop.f32.mrb[0].mxu0
  %8339 = vmatprep.mubr.bf16.mxu0 0
  %8340 = vmatmul.mubr.bf16.gmra.mrb[0].mxu0 %v7992
  %v8341 = vpop.f32.mrb[0].mxu0
  %v8342 = vadd.f32 0.0, %v8341
  %v8343 = vpop.f32.mrb[0].mxu0
  %v8344 = vpop.f32.mrb[0].mxu0
  %v8345 = vadd.f32 0.0, %v8344
  %v8346 = vpop.f32.mrb[0].mxu0
  %8347 = vmatprep.mubr.bf16.mxu0 0
  %8348 = vmatmul.mubr.bf16.gmra.mrb[0].mxu0 %v7995
  %v8349 = vpop.f32.mrb[0].mxu0
  %v8350 = vadd.f32 0.0, %v8349
  %v8351 = vpop.f32.mrb[0].mxu0
  %v8352 = vpop.f32.mrb[0].mxu0
  %v8353 = vadd.f32 0.0, %v8352
  %v8354 = vpop.f32.mrb[0].mxu0
  %8355 = vmatprep.mubr.bf16.mxu0 0
  %8356 = vmatmul.mubr.bf16.gmra.mrb[0].mxu0 %v7998
  %v8357 = vpop.f32.mrb[0].mxu0
  %v8358 = vadd.f32 0.0, %v8357
  %v8359 = vpop.f32.mrb[0].mxu0
  %v8360 = vpop.f32.mrb[0].mxu0
  %v8361 = vadd.f32 0.0, %v8360
  %v8362 = vpop.f32.mrb[0].mxu0
  %8363 = vmatprep.mubr.bf16.mxu0 0
  %8364 = vmatmul.mubr.bf16.gmra.mrb[0].mxu0 %v8001
  %v8365 = vpop.f32.mrb[0].mxu0
  %v8366 = vadd.f32 0.0, %v8365
  %v8367 = vpop.f32.mrb[0].mxu0
  %v8368 = vpop.f32.mrb[0].mxu0
  %v8369 = vadd.f32 0.0, %v8368
  %v8370 = vpop.f32.mrb[0].mxu0
  %8371 = vmatprep.mubr.bf16.mxu0 0
  %8372 = vmatmul.mubr.bf16.gmra.mrb[0].mxu0 %v8004
  %v8373 = vpop.f32.mrb[0].mxu0
  %v8374 = vadd.f32 0.0, %v8373
  %v8375 = vpop.f32.mrb[0].mxu0
  %v8376 = vpop.f32.mrb[0].mxu0
  %v8377 = vadd.f32 0.0, %v8376
  %v8378 = vpop.f32.mrb[0].mxu0
  %8379 = vmatprep.mubr.bf16.mxu0 0
  %8380 = vmatmul.mubr.bf16.gmra.mrb[0].mxu0 %v8007
  %v8381 = vpop.f32.mrb[0].mxu0
  %v8382 = vadd.f32 0.0, %v8381
  %v8383 = vpop.f32.mrb[0].mxu0
  %v8384 = vpop.f32.mrb[0].mxu0
  %v8385 = vadd.f32 0.0, %v8384
  %v8386 = vpop.f32.mrb[0].mxu0
  %8387 = vmatprep.mubr.bf16.mxu0 0
  %8388 = vmatmul.mubr.bf16.gmra.mrb[0].mxu0 %v8010
  %v8389 = vpop.f32.mrb[0].mxu0
  %v8390 = vadd.f32 0.0, %v8389
  %v8391 = vpop.f32.mrb[0].mxu0
  %v8392 = vpop.f32.mrb[0].mxu0
  %v8393 = vadd.f32 0.0, %v8392
  %v8394 = vpop.f32.mrb[0].mxu0
  %8395 = vmatprep.mubr.bf16.mxu0 0
  %8396 = vmatmul.mubr.bf16.gmra.mrb[0].mxu0 %v8013
  %v8397 = vpop.f32.mrb[0].mxu0
  %v8398 = vadd.f32 0.0, %v8397
  %v8399 = vpop.f32.mrb[0].mxu0
  %v8400 = vpop.f32.mrb[0].mxu0
  %v8401 = vadd.f32 0.0, %v8400
  %v8402 = vpop.f32.mrb[0].mxu0
  %8403 = vmatprep.mubr.bf16.mxu0 0
  %8404 = vmatmul.mubr.bf16.gmra.mrb[0].mxu0 %v8016
  %v8405 = vpop.f32.mrb[0].mxu0
  %v8406 = vadd.f32 0.0, %v8405
  %v8407 = vpop.f32.mrb[0].mxu0
  %v8408 = vpop.f32.mrb[0].mxu0
  %v8409 = vadd.f32 0.0, %v8408
  %v8410 = vpop.f32.mrb[0].mxu0
  %8411 = vmatprep.mubr.bf16.mxu0 0
  %8412 = vmatmul.mubr.bf16.gmra.mrb[0].mxu0 %v8019
  %v8413 = vpop.f32.mrb[0].mxu0
  %v8414 = vadd.f32 0.0, %v8413
  %v8415 = vpop.f32.mrb[0].mxu0
  %v8416 = vpop.f32.mrb[0].mxu0
  %v8417 = vadd.f32 0.0, %v8416
  %v8418 = vpop.f32.mrb[0].mxu0
  %8419 = vmatprep.mubr.bf16.mxu0 0
  %8420 = vmatmul.mubr.bf16.gmra.mrb[0].mxu0 %v8022
  %v8421 = vpop.f32.mrb[0].mxu0
  %v8422 = vadd.f32 0.0, %v8421
  %v8423 = vpop.f32.mrb[0].mxu0
  %v8424 = vpop.f32.mrb[0].mxu0
  %v8425 = vadd.f32 0.0, %v8424
  %v8426 = vpop.f32.mrb[0].mxu0
  %8427 = vmatprep.mubr.bf16.mxu0 0
  %8428 = vmatmul.mubr.bf16.gmra.mrb[0].mxu0 %v8025
  %v8429 = vpop.f32.mrb[0].mxu0
  %v8430 = vadd.f32 0.0, %v8429
  %v8431 = vpop.f32.mrb[0].mxu0
  %v8432 = vpop.f32.mrb[0].mxu0
  %v8433 = vadd.f32 0.0, %v8432
  %v8434 = vpop.f32.mrb[0].mxu0
  %8435 = vmatprep.mubr.bf16.mxu0 0
  %8436 = vmatmul.mubr.bf16.gmra.mrb[0].mxu0 %v8028
  %v8437 = vpop.f32.mrb[0].mxu0
  %v8438 = vadd.f32 0.0, %v8437
  %v8439 = vpop.f32.mrb[0].mxu0
  %v8440 = vpop.f32.mrb[0].mxu0
  %v8441 = vadd.f32 0.0, %v8440
  %v8442 = vpop.f32.mrb[0].mxu0
  %8443 = vmatprep.mubr.bf16.mxu0 0
  %8444 = vmatmul.mubr.bf16.gmra.mrb[0].mxu0 %v8031
  %v8445 = vpop.f32.mrb[0].mxu0
  %v8446 = vadd.f32 0.0, %v8445
  %v8447 = vpop.f32.mrb[0].mxu0
  %v8448 = vpop.f32.mrb[0].mxu0
  %v8449 = vadd.f32 0.0, %v8448
  %v8450 = vpop.f32.mrb[0].mxu0
  %8451 = vmatprep.mubr.bf16.mxu0 0
  %8452 = vmatmul.mubr.bf16.gmra.mrb[0].mxu0 %v8034
  %v8453 = vpop.f32.mrb[0].mxu0
  %v8454 = vadd.f32 0.0, %v8453
  %v8455 = vpop.f32.mrb[0].mxu0
  %v8456 = vpop.f32.mrb[0].mxu0
  %v8457 = vadd.f32 0.0, %v8456
  %v8458 = vpop.f32.mrb[0].mxu0
  %8459 = vmatprep.mubr.bf16.mxu0 0
  %8460 = vmatmul.mubr.bf16.gmra.mrb[0].mxu0 %v8037
  %v8461 = vpop.f32.mrb[0].mxu0
  %v8462 = vadd.f32 0.0, %v8461
  %v8463 = vpop.f32.mrb[0].mxu0
  %v8464 = vpop.f32.mrb[0].mxu0
  %v8465 = vadd.f32 0.0, %v8464
  %v8466 = vpop.f32.mrb[0].mxu0
  %8467 = vmatprep.mubr.bf16.mxu0 0
  %8468 = vmatmul.mubr.bf16.gmra.mrb[0].mxu0 %v8040
  %v8469 = vpop.f32.mrb[0].mxu0
  %v8470 = vadd.f32 0.0, %v8469
  %v8471 = vpop.f32.mrb[0].mxu0
  %v8472 = vpop.f32.mrb[0].mxu0
  %v8473 = vadd.f32 0.0, %v8472
  %v8474 = vpop.f32.mrb[0].mxu0
  %8475 = vmatprep.mubr.bf16.mxu0 0
  %8476 = vmatmul.mubr.bf16.gmra.mrb[0].mxu0 %v8043
  %v8477 = vpop.f32.mrb[0].mxu0
  %v8478 = vadd.f32 0.0, %v8477
  %v8479 = vpop.f32.mrb[0].mxu0
  %v8480 = vpop.f32.mrb[0].mxu0
  %v8481 = vadd.f32 0.0, %v8480
  %v8482 = vpop.f32.mrb[0].mxu0
  %8483 = vmatprep.mubr.bf16.mxu0 0
  %8484 = vmatmul.mubr.bf16.gmra.mrb[0].mxu0 %v8046
  %v8485 = vpop.f32.mrb[0].mxu0
  %v8486 = vadd.f32 0.0, %v8485
  %v8487 = vpop.f32.mrb[0].mxu0
  %v8488 = vpop.f32.mrb[0].mxu0
  %v8489 = vadd.f32 0.0, %v8488
  %v8490 = vpop.f32.mrb[0].mxu0
  %8491 = vmatprep.mubr.bf16.mxu0 0
  %8492 = vmatmul.mubr.bf16.gmra.mrb[0].mxu0 %v8049
  %v8493 = vpop.f32.mrb[0].mxu0
  %v8494 = vadd.f32 0.0, %v8493
  %v8495 = vpop.f32.mrb[0].mxu0
  %v8496 = vpop.f32.mrb[0].mxu0
  %v8497 = vadd.f32 0.0, %v8496
  %v8498 = vpop.f32.mrb[0].mxu0
  %8499 = vmatprep.mubr.bf16.mxu0 0
  %8500 = vmatmul.mubr.bf16.gmra.mrb[0].mxu0 %v8052
  %v8501 = vpop.f32.mrb[0].mxu0
  %v8502 = vadd.f32 0.0, %v8501
  %v8503 = vpop.f32.mrb[0].mxu0
  %v8504 = vpop.f32.mrb[0].mxu0
  %v8505 = vadd.f32 0.0, %v8504
  %v8506 = vpop.f32.mrb[0].mxu0
  %8507 = vmatprep.mubr.bf16.mxu0 0
  %8508 = vmatmul.mubr.bf16.gmra.mrb[0].mxu0 %v8055
  %v8509 = vpop.f32.mrb[0].mxu0
  %v8510 = vadd.f32 0.0, %v8509
  %v8511 = vpop.f32.mrb[0].mxu0
  %v8512 = vpop.f32.mrb[0].mxu0
  %v8513 = vadd.f32 0.0, %v8512
  %v8514 = vpop.f32.mrb[0].mxu0
  %8515 = vmatprep.mubr.bf16.mxu0 0
  %8516 = vmatmul.mubr.bf16.gmra.mrb[0].mxu0 %v8058
  %v8517 = vpop.f32.mrb[0].mxu0
  %v8518 = vadd.f32 0.0, %v8517
  %v8519 = vpop.f32.mrb[0].mxu0
  %v8520 = vpop.f32.mrb[0].mxu0
  %v8521 = vadd.f32 0.0, %v8520
  %v8522 = vpop.f32.mrb[0].mxu0
  %8523 = vmatprep.mubr.bf16.mxu0 0
  %8524 = vmatmul.mubr.bf16.gmra.mrb[0].mxu0 %v8061
  %v8525 = vpop.f32.mrb[0].mxu0
  %v8526 = vadd.f32 0.0, %v8525
  %v8527 = vpop.f32.mrb[0].mxu0
  %v8528 = vpop.f32.mrb[0].mxu0
  %v8529 = vadd.f32 0.0, %v8528
  %v8530 = vpop.f32.mrb[0].mxu0
  %8531 = vmatprep.mubr.bf16.mxu0 0
  %8532 = vmatmul.mubr.bf16.gmra.mrb[0].mxu0 %v8064
  %v8533 = vpop.f32.mrb[0].mxu0
  %v8534 = vadd.f32 0.0, %v8533
  %v8535 = vpop.f32.mrb[0].mxu0
  %v8536 = vpop.f32.mrb[0].mxu0
  %v8537 = vadd.f32 0.0, %v8536
  %v8538 = vpop.f32.mrb[0].mxu0
  %8539 = vmatprep.mubr.bf16.mxu0 0
  %8540 = vmatmul.mubr.bf16.gmra.mrb[0].mxu0 %v8067
  %v8541 = vpop.f32.mrb[0].mxu0
  %v8542 = vadd.f32 0.0, %v8541
  %v8543 = vpop.f32.mrb[0].mxu0
  %v8544 = vpop.f32.mrb[0].mxu0
  %v8545 = vadd.f32 0.0, %v8544
  %v8546 = vpop.f32.mrb[0].mxu0
  %8547 = vmatprep.mubr.bf16.mxu0 0
  %8548 = vmatmul.mubr.bf16.gmra.mrb[0].mxu0 %v8070
  %v8549 = vpop.f32.mrb[0].mxu0
  %v8550 = vadd.f32 0.0, %v8549
  %v8551 = vpop.f32.mrb[0].mxu0
  %v8552 = vpop.f32.mrb[0].mxu0
  %v8553 = vadd.f32 0.0, %v8552
  %v8554 = vpop.f32.mrb[0].mxu0
  %8555 = vmatprep.mubr.bf16.mxu0 0
  %8556 = vmatmul.mubr.bf16.gmra.mrb[0].mxu0 %v8073
  %v8557 = vpop.f32.mrb[0].mxu0
  %v8558 = vadd.f32 0.0, %v8557
  %v8559 = vpop.f32.mrb[0].mxu0
  %v8560 = vpop.f32.mrb[0].mxu0
  %v8561 = vadd.f32 0.0, %v8560
  %v8562 = vpop.f32.mrb[0].mxu0
  %8563 = vmatprep.mubr.bf16.mxu0 0
  %8564 = vmatmul.mubr.bf16.gmra.mrb[0].mxu0 %v8076
  %v8565 = vpop.f32.mrb[0].mxu0
  %v8566 = vadd.f32 0.0, %v8565
  %v8567 = vpop.f32.mrb[0].mxu0
  %v8568 = vpop.f32.mrb[0].mxu0
  %v8569 = vadd.f32 0.0, %v8568
  %v8570 = vpop.f32.mrb[0].mxu0
  %8571 = vmatprep.mubr.bf16.mxu0 0
  %8572 = vmatmul.mubr.bf16.gmra.mrb[0].mxu0 %v8079
  %v8573 = vpop.f32.mrb[0].mxu0
  %v8574 = vadd.f32 0.0, %v8573
  %v8575 = vpop.f32.mrb[0].mxu0
  %v8576 = vpop.f32.mrb[0].mxu0
  %v8577 = vadd.f32 0.0, %v8576
  %v8578 = vpop.f32.mrb[0].mxu0
  %8579 = vmatprep.mubr.bf16.mxu0 0
  %8580 = vmatmul.mubr.bf16.gmra.mrb[0].mxu0 %v8082
  %v8581 = vpop.f32.mrb[0].mxu0
  %v8582 = vadd.f32 0.0, %v8581
  %v8583 = vpop.f32.mrb[0].mxu0
  %v8584 = vpop.f32.mrb[0].mxu0
  %v8585 = vadd.f32 0.0, %v8584
  %v8586 = vpop.f32.mrb[0].mxu0
  %8587 = vmatprep.mubr.bf16.mxu0 0
  %8588 = vmatmul.mubr.bf16.gmra.mrb[0].mxu0 %v8085
  %v8589 = vpop.f32.mrb[0].mxu0
  %v8590 = vadd.f32 0.0, %v8589
  %v8591 = vpop.f32.mrb[0].mxu0
  %v8592 = vpop.f32.mrb[0].mxu0
  %v8593 = vadd.f32 0.0, %v8592
  %v8594 = vpop.f32.mrb[0].mxu0
  %8595 = vmatprep.mubr.bf16.mxu0 0
  %8596 = vmatmul.mubr.bf16.gmra.mrb[0].mxu0 %v8088
  %v8597 = vpop.f32.mrb[0].mxu0
  %v8598 = vadd.f32 0.0, %v8597
  %v8599 = vpop.f32.mrb[0].mxu0
  %v8600 = vpop.f32.mrb[0].mxu0
  %v8601 = vadd.f32 0.0, %v8600
  %v8602 = vpop.f32.mrb[0].mxu0
  %8603 = vmatprep.mubr.bf16.mxu0 0
  %8604 = vmatmul.mubr.bf16.gmra.mrb[0].mxu0 %v8091
  %v8605 = vpop.f32.mrb[0].mxu0
  %v8606 = vadd.f32 0.0, %v8605
  %v8607 = vpop.f32.mrb[0].mxu0
  %v8608 = vpop.f32.mrb[0].mxu0
  %v8609 = vadd.f32 0.0, %v8608
  %v8610 = vpop.f32.mrb[0].mxu0
  %8611 = vmatprep.mubr.bf16.mxu0 0
  %8612 = vmatmul.mubr.bf16.gmra.mrb[0].mxu0 %v8094
  %v8613 = vpop.f32.mrb[0].mxu0
  %v8614 = vadd.f32 0.0, %v8613
  %v8615 = vpop.f32.mrb[0].mxu0
  %v8616 = vpop.f32.mrb[0].mxu0
  %v8617 = vadd.f32 0.0, %v8616
  %v8618 = vpop.f32.mrb[0].mxu0
  %8619 = vmatprep.mubr.bf16.mxu0 0
  %8620 = vmatmul.mubr.bf16.gmra.mrb[0].mxu0 %v8097
  %v8621 = vpop.f32.mrb[0].mxu0
  %v8622 = vadd.f32 0.0, %v8621
  %v8623 = vpop.f32.mrb[0].mxu0
  %v8624 = vpop.f32.mrb[0].mxu0
  %v8625 = vadd.f32 0.0, %v8624
  %v8626 = vpop.f32.mrb[0].mxu0
  %8627 = vmatprep.mubr.bf16.mxu0 0
  %8628 = vmatmul.mubr.bf16.gmra.mrb[0].mxu0 %v8100
  %v8629 = vpop.f32.mrb[0].mxu0
  %v8630 = vadd.f32 0.0, %v8629
  %v8631 = vpop.f32.mrb[0].mxu0
  %v8632 = vpop.f32.mrb[0].mxu0
  %v8633 = vadd.f32 0.0, %v8632
  %v8634 = vpop.f32.mrb[0].mxu0
  %8635 = vmatprep.mubr.bf16.mxu0 0
  %8636 = vmatmul.mubr.bf16.gmra.mrb[0].mxu0 %v8103
  %v8637 = vpop.f32.mrb[0].mxu0
  %v8638 = vadd.f32 0.0, %v8637
  %v8639 = vpop.f32.mrb[0].mxu0
  %v8640 = vpop.f32.mrb[0].mxu0
  %v8641 = vadd.f32 0.0, %v8640
  %v8642 = vpop.f32.mrb[0].mxu0
  %8643 = vmatprep.mubr.bf16.mxu0 0
  %8644 = vmatmul.mubr.bf16.gmra.mrb[0].mxu0 %v8106
  %v8645 = vpop.f32.mrb[0].mxu0
  %v8646 = vadd.f32 0.0, %v8645
  %v8647 = vpop.f32.mrb[0].mxu0
  %v8648 = vpop.f32.mrb[0].mxu0
  %v8649 = vadd.f32 0.0, %v8648
  %v8650 = vpop.f32.mrb[0].mxu0
  %8651 = vmatprep.mubr.bf16.mxu0 0
  %8652 = vmatmul.mubr.bf16.gmra.mrb[0].mxu0 %v8109
  %v8653 = vpop.f32.mrb[0].mxu0
  %v8654 = vadd.f32 0.0, %v8653
  %v8655 = vpop.f32.mrb[0].mxu0
  %v8656 = vpop.f32.mrb[0].mxu0
  %v8657 = vadd.f32 0.0, %v8656
  %v8658 = vpop.f32.mrb[0].mxu0
  %8659 = vmatprep.mubr.bf16.mxu0 0
  %8660 = vmatmul.mubr.bf16.gmra.mrb[0].mxu0 %v8112
  %v8661 = vpop.f32.mrb[0].mxu0
  %v8662 = vadd.f32 0.0, %v8661
  %v8663 = vpop.f32.mrb[0].mxu0
  %v8664 = vpop.f32.mrb[0].mxu0
  %v8665 = vadd.f32 0.0, %v8664
  %v8666 = vpop.f32.mrb[0].mxu0
  %8667 = vmatprep.mubr.bf16.mxu0 0
  %8668 = vmatmul.mubr.bf16.gmra.mrb[0].mxu0 %v8115
  %v8669 = vpop.f32.mrb[0].mxu0
  %v8670 = vadd.f32 0.0, %v8669
  %v8671 = vpop.f32.mrb[0].mxu0
  %v8672 = vpop.f32.mrb[0].mxu0
  %v8673 = vadd.f32 0.0, %v8672
  %v8674 = vpop.f32.mrb[0].mxu0
  %8675 = vmatprep.mubr.bf16.mxu0 0
  %8676 = vmatmul.mubr.bf16.gmra.mrb[0].mxu0 %v8118
  %v8677 = vpop.f32.mrb[0].mxu0
  %v8678 = vadd.f32 0.0, %v8677
  %v8679 = vpop.f32.mrb[0].mxu0
  %v8680 = vpop.f32.mrb[0].mxu0
  %v8681 = vadd.f32 0.0, %v8680
  %v8682 = vpop.f32.mrb[0].mxu0
  %8683 = vmatprep.mubr.bf16.mxu0 0
  %8684 = vmatmul.mubr.bf16.gmra.mrb[0].mxu0 %v8121
  %v8685 = vpop.f32.mrb[0].mxu0
  %v8686 = vadd.f32 0.0, %v8685
  %v8687 = vpop.f32.mrb[0].mxu0
  %v8688 = vpop.f32.mrb[0].mxu0
  %v8689 = vadd.f32 0.0, %v8688
  %v8690 = vpop.f32.mrb[0].mxu0
  %8691 = vmatprep.mubr.bf16.mxu0 0
  %8692 = vmatmul.mubr.bf16.gmra.mrb[0].mxu0 %v8124
  %v8693 = vpop.f32.mrb[0].mxu0
  %v8694 = vadd.f32 0.0, %v8693
  %v8695 = vpop.f32.mrb[0].mxu0
  %v8696 = vpop.f32.mrb[0].mxu0
  %v8697 = vadd.f32 0.0, %v8696
  %v8698 = vpop.f32.mrb[0].mxu0
  %8699 = vmatprep.mubr.bf16.mxu0 0
  %8700 = vmatmul.mubr.bf16.gmra.mrb[0].mxu0 %v8127
  %v8701 = vpop.f32.mrb[0].mxu0
  %v8702 = vadd.f32 0.0, %v8701
  %v8703 = vpop.f32.mrb[0].mxu0
  %v8704 = vpop.f32.mrb[0].mxu0
  %v8705 = vadd.f32 0.0, %v8704
  %v8706 = vpop.f32.mrb[0].mxu0
  %8707 = vmatprep.mubr.bf16.mxu0 0
  %8708 = vmatmul.mubr.bf16.gmra.mrb[0].mxu0 %v8130
  %v8709 = vpop.f32.mrb[0].mxu0
  %v8710 = vadd.f32 0.0, %v8709
  %v8711 = vpop.f32.mrb[0].mxu0
  %v8712 = vpop.f32.mrb[0].mxu0
  %v8713 = vadd.f32 0.0, %v8712
  %v8714 = vpop.f32.mrb[0].mxu0
  %8715 = vmatprep.mubr.bf16.mxu0 0
  %8716 = vmatmul.mubr.bf16.gmra.mrb[0].mxu0 %v8133
  %v8717 = vpop.f32.mrb[0].mxu0
  %v8718 = vadd.f32 0.0, %v8717
  %v8719 = vpop.f32.mrb[0].mxu0
  %v8720 = vpop.f32.mrb[0].mxu0
  %v8721 = vadd.f32 0.0, %v8720
  %v8722 = vpop.f32.mrb[0].mxu0
  %8723 = vmatprep.mubr.bf16.mxu0 0
  %8724 = vmatmul.mubr.bf16.gmra.mrb[0].mxu0 %v8136
  %v8725 = vpop.f32.mrb[0].mxu0
  %v8726 = vadd.f32 0.0, %v8725
  %v8727 = vpop.f32.mrb[0].mxu0
  %v8728 = vpop.f32.mrb[0].mxu0
  %v8729 = vadd.f32 0.0, %v8728
  %v8730 = vpop.f32.mrb[0].mxu0
  %8731 = vmatprep.mubr.bf16.mxu0 0
  %8732 = vmatmul.mubr.bf16.gmra.mrb[0].mxu0 %v8139
  %v8733 = vpop.f32.mrb[0].mxu0
  %v8734 = vadd.f32 0.0, %v8733
  %v8735 = vpop.f32.mrb[0].mxu0
  %v8736 = vpop.f32.mrb[0].mxu0
  %v8737 = vadd.f32 0.0, %v8736
  %v8738 = vpop.f32.mrb[0].mxu0
  %8739 = vmatprep.mubr.bf16.mxu0 0
  %8740 = vmatmul.mubr.bf16.gmra.mrb[0].mxu0 %v8142
  %v8741 = vpop.f32.mrb[0].mxu0
  %v8742 = vadd.f32 0.0, %v8741
  %v8743 = vpop.f32.mrb[0].mxu0
  %v8744 = vpop.f32.mrb[0].mxu0
  %v8745 = vadd.f32 0.0, %v8744
  %v8746 = vpop.f32.mrb[0].mxu0
  %8747 = vmatprep.mubr.bf16.mxu0 0
  %8748 = vmatmul.mubr.bf16.gmra.mrb[0].mxu0 %v8145
  %v8749 = vpop.f32.mrb[0].mxu0
  %v8750 = vadd.f32 0.0, %v8749
  %v8751 = vpop.f32.mrb[0].mxu0
  %v8752 = vpop.f32.mrb[0].mxu0
  %v8753 = vadd.f32 0.0, %v8752
  %v8754 = vpop.f32.mrb[0].mxu0
  %8755 = vmatprep.mubr.bf16.mxu0 0
  %8756 = vmatmul.mubr.bf16.gmra.mrb[0].mxu0 %v8148
  %v8757 = vpop.f32.mrb[0].mxu0
  %v8758 = vadd.f32 0.0, %v8757
  %v8759 = vpop.f32.mrb[0].mxu0
  %v8760 = vpop.f32.mrb[0].mxu0
  %v8761 = vadd.f32 0.0, %v8760
  %v8762 = vpop.f32.mrb[0].mxu0
  %8763 = vmatprep.mubr.bf16.mxu0 0
  %8764 = vmatmul.mubr.bf16.gmra.mrb[0].mxu0 %v8151
  %v8765 = vpop.f32.mrb[0].mxu0
  %v8766 = vadd.f32 0.0, %v8765
  %v8767 = vpop.f32.mrb[0].mxu0
  %v8768 = vpop.f32.mrb[0].mxu0
  %v8769 = vadd.f32 0.0, %v8768
  %v8770 = vpop.f32.mrb[0].mxu0
  %8771 = vmatprep.mubr.bf16.mxu0 0
  %8772 = vmatmul.mubr.bf16.gmra.mrb[0].mxu0 %v8154
  %v8773 = vpop.f32.mrb[0].mxu0
  %v8774 = vadd.f32 0.0, %v8773
  %v8775 = vpop.f32.mrb[0].mxu0
  %v8776 = vpop.f32.mrb[0].mxu0
  %v8777 = vadd.f32 0.0, %v8776
  %v8778 = vpop.f32.mrb[0].mxu0
  %8779 = vmatprep.mubr.bf16.mxu0 0
  %8780 = vmatmul.mubr.bf16.gmra.mrb[0].mxu0 %v8157
  %v8781 = vpop.f32.mrb[0].mxu0
  %v8782 = vadd.f32 0.0, %v8781
  %v8783 = vpop.f32.mrb[0].mxu0
  %v8784 = vpop.f32.mrb[0].mxu0
  %v8785 = vadd.f32 0.0, %v8784
  %v8786 = vpop.f32.mrb[0].mxu0
  %8787 = vmatprep.mubr.bf16.mxu0 0
  %8788 = vmatmul.mubr.bf16.gmra.mrb[0].mxu0 %v8160
  %v8789 = vpop.f32.mrb[0].mxu0
  %v8790 = vadd.f32 0.0, %v8789
  %v8791 = vpop.f32.mrb[0].mxu0
  %v8792 = vpop.f32.mrb[0].mxu0
  %v8793 = vadd.f32 0.0, %v8792
  %v8794 = vpop.f32.mrb[0].mxu0
  %8795 = vmatprep.mubr.bf16.mxu0 0
  %8796 = vmatmul.mubr.bf16.gmra.mrb[0].mxu0 %v8163
  %v8797 = vpop.f32.mrb[0].mxu0
  %v8798 = vadd.f32 0.0, %v8797
  %v8799 = vpop.f32.mrb[0].mxu0
  %v8800 = vpop.f32.mrb[0].mxu0
  %v8801 = vadd.f32 0.0, %v8800
  %v8802 = vpop.f32.mrb[0].mxu0
  %8803 = vmatprep.mubr.bf16.mxu0 0
  %8804 = vmatmul.mubr.bf16.gmra.mrb[0].mxu0 %v8166
  %v8805 = vpop.f32.mrb[0].mxu0
  %v8806 = vadd.f32 0.0, %v8805
  %v8807 = vpop.f32.mrb[0].mxu0
  %v8808 = vpop.f32.mrb[0].mxu0
  %v8809 = vadd.f32 0.0, %v8808
  %v8810 = vpop.f32.mrb[0].mxu0
  %8811 = vmatprep.mubr.bf16.mxu0 0
  %8812 = vmatmul.mubr.bf16.gmra.mrb[0].mxu0 %v8169
  %v8813 = vpop.f32.mrb[0].mxu0
  %v8814 = vadd.f32 0.0, %v8813
  %v8815 = vpop.f32.mrb[0].mxu0
  %v8816 = vpop.f32.mrb[0].mxu0
  %v8817 = vadd.f32 0.0, %v8816
  %v8818 = vpop.f32.mrb[0].mxu0
  %8819 = vmatprep.mubr.bf16.mxu0 0
  %8820 = vmatmul.mubr.bf16.gmra.mrb[0].mxu0 %v8172
  %v8821 = vpop.f32.mrb[0].mxu0
  %v8822 = vadd.f32 0.0, %v8821
  %v8823 = vpop.f32.mrb[0].mxu0
  %v8824 = vpop.f32.mrb[0].mxu0
  %v8825 = vadd.f32 0.0, %v8824
  %v8826 = vpop.f32.mrb[0].mxu0
  %8827 = vmatprep.mubr.bf16.mxu0 0
  %8828 = vmatmul.mubr.bf16.gmra.mrb[0].mxu0 %v8175
  %v8829 = vpop.f32.mrb[0].mxu0
  %v8830 = vadd.f32 0.0, %v8829
  %v8831 = vpop.f32.mrb[0].mxu0
  %v8832 = vpop.f32.mrb[0].mxu0
  %v8833 = vadd.f32 0.0, %v8832
  %v8834 = vpop.f32.mrb[0].mxu0
  %8835 = vmatprep.mubr.bf16.mxu0 0
  %8836 = vmatmul.mubr.bf16.gmra.mrb[0].mxu0 %v8178
  %v8837 = vpop.f32.mrb[0].mxu0
  %v8838 = vadd.f32 0.0, %v8837
  %v8839 = vpop.f32.mrb[0].mxu0
  %v8840 = vpop.f32.mrb[0].mxu0
  %v8841 = vadd.f32 0.0, %v8840
  %v8842 = vpop.f32.mrb[0].mxu0
  %8843 = vmatprep.mubr.bf16.mxu0 0
  %8844 = vmatmul.mubr.bf16.gmra.mrb[0].mxu0 %v8181
  %v8845 = vpop.f32.mrb[0].mxu0
  %v8846 = vadd.f32 0.0, %v8845
  %v8847 = vpop.f32.mrb[0].mxu0
  %v8848 = vpop.f32.mrb[0].mxu0
  %v8849 = vadd.f32 0.0, %v8848
  %v8850 = vpop.f32.mrb[0].mxu0
  %8851 = vmatprep.mubr.bf16.mxu0 0
  %8852 = vmatmul.mubr.bf16.gmra.mrb[0].mxu0 %v8184
  %v8853 = vpop.f32.mrb[0].mxu0
  %v8854 = vadd.f32 0.0, %v8853
  %v8855 = vpop.f32.mrb[0].mxu0
  %v8856 = vpop.f32.mrb[0].mxu0
  %v8857 = vadd.f32 0.0, %v8856
  %v8858 = vpop.f32.mrb[0].mxu0
  %8859 = vmatprep.mubr.bf16.mxu0 0
  %8860 = vmatmul.mubr.bf16.gmra.mrb[0].mxu0 %v8187
  %v8861 = vpop.f32.mrb[0].mxu0
  %v8862 = vadd.f32 0.0, %v8861
  %v8863 = vpop.f32.mrb[0].mxu0
  %v8864 = vpop.f32.mrb[0].mxu0
  %v8865 = vadd.f32 0.0, %v8864
  %v8866 = vpop.f32.mrb[0].mxu0
  %8867 = vmatprep.mubr.bf16.mxu0 0
  %8868 = vmatmul.mubr.bf16.gmra.mrb[0].mxu0 %v8190
  %v8869 = vpop.f32.mrb[0].mxu0
  %v8870 = vadd.f32 0.0, %v8869
  %v8871 = vpop.f32.mrb[0].mxu0
  %v8872 = vpop.f32.mrb[0].mxu0
  %v8873 = vadd.f32 0.0, %v8872
  %v8874 = vpop.f32.mrb[0].mxu0
  %8875 = vdwg.mxu0
  %v8876 = vadd.f32 %v7543, %v8230
  %v8877 = vadd.f32 %v7544, %v8233
  %v8878 = vadd.f32 %v7545, %v8238
  %v8879 = vadd.f32 %v7546, %v8241
  %v8880 = vadd.f32 %v7547, %v8246
  %v8881 = vadd.f32 %v7548, %v8249
  %v8882 = vadd.f32 %v7549, %v8254
  %v8883 = vadd.f32 %v7550, %v8257
  %v8884 = vadd.f32 %v7551, %v8262
  %v8885 = vadd.f32 %v7552, %v8265
  %v8886 = vadd.f32 %v7553, %v8270
  %v8887 = vadd.f32 %v7554, %v8273
  %v8888 = vadd.f32 %v7555, %v8278
  %v8889 = vadd.f32 %v7556, %v8281
  %v8890 = vadd.f32 %v7557, %v8286
  %v8891 = vadd.f32 %v7558, %v8289
  %v8892 = vadd.f32 %v7559, %v8294
  %v8893 = vadd.f32 %v7560, %v8297
  %v8894 = vadd.f32 %v7561, %v8302
  %v8895 = vadd.f32 %v7562, %v8305
  %v8896 = vadd.f32 %v7563, %v8310
  %v8897 = vadd.f32 %v7564, %v8313
  %v8898 = vadd.f32 %v7565, %v8318
  %v8899 = vadd.f32 %v7566, %v8321
  %v8900 = vadd.f32 %v7567, %v8326
  %v8901 = vadd.f32 %v7568, %v8329
  %v8902 = vadd.f32 %v7569, %v8334
  %v8903 = vadd.f32 %v7570, %v8337
  %v8904 = vadd.f32 %v7571, %v8342
  %v8905 = vadd.f32 %v7572, %v8345
  %v8906 = vadd.f32 %v7573, %v8350
  %v8907 = vadd.f32 %v7574, %v8353
  %v8908 = vadd.f32 %v7575, %v8358
  %v8909 = vadd.f32 %v7576, %v8361
  %v8910 = vadd.f32 %v7577, %v8366
  %v8911 = vadd.f32 %v7578, %v8369
  %v8912 = vadd.f32 %v7579, %v8374
  %v8913 = vadd.f32 %v7580, %v8377
  %v8914 = vadd.f32 %v7581, %v8382
  %v8915 = vadd.f32 %v7582, %v8385
  %v8916 = vadd.f32 %v7583, %v8390
  %v8917 = vadd.f32 %v7584, %v8393
  %v8918 = vadd.f32 %v7585, %v8398
  %v8919 = vadd.f32 %v7586, %v8401
  %v8920 = vadd.f32 %v7587, %v8406
  %v8921 = vadd.f32 %v7588, %v8409
  %v8922 = vadd.f32 %v7589, %v8414
  %v8923 = vadd.f32 %v7590, %v8417
  %v8924 = vadd.f32 %v7591, %v8422
  %v8925 = vadd.f32 %v7592, %v8425
  %v8926 = vadd.f32 %v7593, %v8430
  %v8927 = vadd.f32 %v7594, %v8433
  %v8928 = vadd.f32 %v7595, %v8438
  %v8929 = vadd.f32 %v7596, %v8441
  %v8930 = vadd.f32 %v7597, %v8446
  %v8931 = vadd.f32 %v7598, %v8449
  %v8932 = vadd.f32 %v7599, %v8454
  %v8933 = vadd.f32 %v7600, %v8457
  %v8934 = vadd.f32 %v7601, %v8462
  %v8935 = vadd.f32 %v7602, %v8465
  %v8936 = vadd.f32 %v7603, %v8470
  %v8937 = vadd.f32 %v7604, %v8473
  %v8938 = vadd.f32 %v7605, %v8478
  %v8939 = vadd.f32 %v7606, %v8481
  %v8940 = vadd.f32 %v7607, %v8486
  %v8941 = vadd.f32 %v7608, %v8489
  %v8942 = vadd.f32 %v7609, %v8494
  %v8943 = vadd.f32 %v7610, %v8497
  %v8944 = vadd.f32 %v7611, %v8502
  %v8945 = vadd.f32 %v7612, %v8505
  %v8946 = vadd.f32 %v7613, %v8510
  %v8947 = vadd.f32 %v7614, %v8513
  %v8948 = vadd.f32 %v7615, %v8518
  %v8949 = vadd.f32 %v7616, %v8521
  %v8950 = vadd.f32 %v7617, %v8526
  %v8951 = vadd.f32 %v7618, %v8529
  %v8952 = vadd.f32 %v7619, %v8534
  %v8953 = vadd.f32 %v7620, %v8537
  %v8954 = vadd.f32 %v7621, %v8542
  %v8955 = vadd.f32 %v7622, %v8545
  %v8956 = vadd.f32 %v7623, %v8550
  %v8957 = vadd.f32 %v7624, %v8553
  %v8958 = vadd.f32 %v7625, %v8558
  %v8959 = vadd.f32 %v7626, %v8561
  %v8960 = vadd.f32 %v7627, %v8566
  %v8961 = vadd.f32 %v7628, %v8569
  %v8962 = vadd.f32 %v7629, %v8574
  %v8963 = vadd.f32 %v7630, %v8577
  %v8964 = vadd.f32 %v7631, %v8582
  %v8965 = vadd.f32 %v7632, %v8585
  %v8966 = vadd.f32 %v7633, %v8590
  %v8967 = vadd.f32 %v7634, %v8593
  %v8968 = vadd.f32 %v7635, %v8598
  %v8969 = vadd.f32 %v7636, %v8601
  %v8970 = vadd.f32 %v7637, %v8606
  %v8971 = vadd.f32 %v7638, %v8609
  %v8972 = vadd.f32 %v7639, %v8614
  %v8973 = vadd.f32 %v7640, %v8617
  %v8974 = vadd.f32 %v7641, %v8622
  %v8975 = vadd.f32 %v7642, %v8625
  %v8976 = vadd.f32 %v7643, %v8630
  %v8977 = vadd.f32 %v7644, %v8633
  %v8978 = vadd.f32 %v7645, %v8638
  %v8979 = vadd.f32 %v7646, %v8641
  %v8980 = vadd.f32 %v7647, %v8646
  %v8981 = vadd.f32 %v7648, %v8649
  %v8982 = vadd.f32 %v7649, %v8654
  %v8983 = vadd.f32 %v7650, %v8657
  %v8984 = vadd.f32 %v7651, %v8662
  %v8985 = vadd.f32 %v7652, %v8665
  %v8986 = vadd.f32 %v7653, %v8670
  %v8987 = vadd.f32 %v7654, %v8673
  %v8988 = vadd.f32 %v7655, %v8678
  %v8989 = vadd.f32 %v7656, %v8681
  %v8990 = vadd.f32 %v7657, %v8686
  %v8991 = vadd.f32 %v7658, %v8689
  %v8992 = vadd.f32 %v7659, %v8694
  %v8993 = vadd.f32 %v7660, %v8697
  %v8994 = vadd.f32 %v7661, %v8702
  %v8995 = vadd.f32 %v7662, %v8705
  %v8996 = vadd.f32 %v7663, %v8710
  %v8997 = vadd.f32 %v7664, %v8713
  %v8998 = vadd.f32 %v7665, %v8718
  %v8999 = vadd.f32 %v7666, %v8721
  %v9000 = vadd.f32 %v7667, %v8726
  %v9001 = vadd.f32 %v7668, %v8729
  %v9002 = vadd.f32 %v7669, %v8734
  %v9003 = vadd.f32 %v7670, %v8737
  %v9004 = vadd.f32 %v7671, %v8742
  %v9005 = vadd.f32 %v7672, %v8745
  %v9006 = vadd.f32 %v7673, %v8750
  %v9007 = vadd.f32 %v7674, %v8753
  %v9008 = vadd.f32 %v7675, %v8758
  %v9009 = vadd.f32 %v7676, %v8761
  %v9010 = vadd.f32 %v7677, %v8766
  %v9011 = vadd.f32 %v7678, %v8769
  %v9012 = vadd.f32 %v7679, %v8774
  %v9013 = vadd.f32 %v7680, %v8777
  %v9014 = vadd.f32 %v7681, %v8782
  %v9015 = vadd.f32 %v7682, %v8785
  %v9016 = vadd.f32 %v7683, %v8790
  %v9017 = vadd.f32 %v7684, %v8793
  %v9018 = vadd.f32 %v7685, %v8798
  %v9019 = vadd.f32 %v7686, %v8801
  %v9020 = vadd.f32 %v7687, %v8806
  %v9021 = vadd.f32 %v7688, %v8809
  %v9022 = vadd.f32 %v7689, %v8814
  %v9023 = vadd.f32 %v7690, %v8817
  %v9024 = vadd.f32 %v7691, %v8822
  %v9025 = vadd.f32 %v7692, %v8825
  %v9026 = vadd.f32 %v7693, %v8830
  %v9027 = vadd.f32 %v7694, %v8833
  %v9028 = vadd.f32 %v7695, %v8838
  %v9029 = vadd.f32 %v7696, %v8841
  %v9030 = vadd.f32 %v7697, %v8846
  %v9031 = vadd.f32 %v7698, %v8849
  %v9032 = vadd.f32 %v7699, %v8854
  %v9033 = vadd.f32 %v7700, %v8857
  %v9034 = vadd.f32 %v7701, %v8862
  %v9035 = vadd.f32 %v7702, %v8865
  %v9036 = vadd.f32 %v7703, %v8870
  %v9037 = vadd.f32 %v7704, %v8873
  %v9038 = vld [vmem:[%s0 + $0x25] sm:$0xff]
  %v9039 = vld [vmem:[%s0 + $0x2d] sm:$0xff]
  %v9040 = vld [vmem:[%s0 + $0x35] sm:$0xff]
  %v9041 = vld [vmem:[%s0 + $0x3d] sm:$0xff]
  %v9042 = vld [vmem:[%s0 + $0x45] sm:$0xff]
  %v9043 = vld [vmem:[%s0 + $0x4d] sm:$0xff]
  %v9044 = vld [vmem:[%s0 + $0x55] sm:$0xff]
  %v9045 = vld [vmem:[%s0 + $0x5d] sm:$0xff]
  %v9046 = vld [vmem:[%s0 + $0x65] sm:$0xff]
  %v9047 = vld [vmem:[%s0 + $0x6d] sm:$0xff]
  %v9048 = vld [vmem:[%s0 + $0x75] sm:$0xff]
  %v9049 = vld [vmem:[%s0 + $0x7d] sm:$0xff]
  %v9050 = vld [vmem:[%s0 + $0x85] sm:$0xff]
  %v9051 = vld [vmem:[%s0 + $0x8d] sm:$0xff]
  %v9052 = vld [vmem:[%s0 + $0x95] sm:$0xff]
  %v9053 = vld [vmem:[%s0 + $0x9d] sm:$0xff]
  %v9054 = vld [vmem:[%s0 + $0xa5] sm:$0xff]
  %v9055 = vld [vmem:[%s0 + $0xad] sm:$0xff]
  %v9056 = vld [vmem:[%s0 + $0xb5] sm:$0xff]
  %v9057 = vld [vmem:[%s0 + $0xbd] sm:$0xff]
  %v9058 = vld [vmem:[%s0 + $0xc5] sm:$0xff]
  %v9059 = vld [vmem:[%s0 + $0xcd] sm:$0xff]
  %v9060 = vld [vmem:[%s0 + $0xd5] sm:$0xff]
  %v9061 = vld [vmem:[%s0 + $0xdd] sm:$0xff]
  %v9062 = vld [vmem:[%s0 + $0xe5] sm:$0xff]
  %v9063 = vld [vmem:[%s0 + $0xed] sm:$0xff]
  %v9064 = vld [vmem:[%s0 + $0xf5] sm:$0xff]
  %v9065 = vld [vmem:[%s0 + $0xfd] sm:$0xff]
  %v9066 = vld [vmem:[%s0 + $0x105] sm:$0xff]
  %v9067 = vld [vmem:[%s0 + $0x10d] sm:$0xff]
  %v9068 = vld [vmem:[%s0 + $0x115] sm:$0xff]
  %v9069 = vld [vmem:[%s0 + $0x11d] sm:$0xff]
  %v9070 = vld [vmem:[%s0 + $0x125] sm:$0xff]
  %v9071 = vld [vmem:[%s0 + $0x12d] sm:$0xff]
  %v9072 = vld [vmem:[%s0 + $0x135] sm:$0xff]
  %v9073 = vld [vmem:[%s0 + $0x13d] sm:$0xff]
  %v9074 = vld [vmem:[%s0 + $0x145] sm:$0xff]
  %v9075 = vld [vmem:[%s0 + $0x14d] sm:$0xff]
  %v9076 = vld [vmem:[%s0 + $0x155] sm:$0xff]
  %v9077 = vld [vmem:[%s0 + $0x15d] sm:$0xff]
  %v9078 = vld [vmem:[%s0 + $0x165] sm:$0xff]
  %v9079 = vld [vmem:[%s0 + $0x16d] sm:$0xff]
  %v9080 = vld [vmem:[%s0 + $0x175] sm:$0xff]
  %v9081 = vld [vmem:[%s0 + $0x17d] sm:$0xff]
  %v9082 = vld [vmem:[%s0 + $0x185] sm:$0xff]
  %v9083 = vld [vmem:[%s0 + $0x18d] sm:$0xff]
  %v9084 = vld [vmem:[%s0 + $0x195] sm:$0xff]
  %v9085 = vld [vmem:[%s0 + $0x19d] sm:$0xff]
  %v9086 = vld [vmem:[%s0 + $0x1a5] sm:$0xff]
  %v9087 = vld [vmem:[%s0 + $0x1ad] sm:$0xff]
  %v9088 = vld [vmem:[%s0 + $0x1b5] sm:$0xff]
  %v9089 = vld [vmem:[%s0 + $0x1bd] sm:$0xff]
  %v9090 = vld [vmem:[%s0 + $0x1c5] sm:$0xff]
  %v9091 = vld [vmem:[%s0 + $0x1cd] sm:$0xff]
  %v9092 = vld [vmem:[%s0 + $0x1d5] sm:$0xff]
  %v9093 = vld [vmem:[%s0 + $0x1dd] sm:$0xff]
  %v9094 = vld [vmem:[%s0 + $0x1e5] sm:$0xff]
  %v9095 = vld [vmem:[%s0 + $0x1ed] sm:$0xff]
  %v9096 = vld [vmem:[%s0 + $0x1f5] sm:$0xff]
  %v9097 = vld [vmem:[%s0 + $0x1fd] sm:$0xff]
  %v9098 = vld [vmem:[%s0 + $0x205] sm:$0xff]
  %v9099 = vld [vmem:[%s0 + $0x20d] sm:$0xff]
  %v9100 = vld [vmem:[%s0 + $0x215] sm:$0xff]
  %v9101 = vld [vmem:[%s0 + $0x21d] sm:$0xff]
  %v9102 = vld [vmem:[%s0 + $0x225] sm:$0xff]
  %v9103 = vld [vmem:[%s0 + $0x22d] sm:$0xff]
  %v9104 = vld [vmem:[%s0 + $0x235] sm:$0xff]
  %v9105 = vld [vmem:[%s0 + $0x23d] sm:$0xff]
  %v9106 = vld [vmem:[%s0 + $0x245] sm:$0xff]
  %v9107 = vld [vmem:[%s0 + $0x24d] sm:$0xff]
  %v9108 = vld [vmem:[%s0 + $0x255] sm:$0xff]
  %v9109 = vld [vmem:[%s0 + $0x25d] sm:$0xff]
  %v9110 = vld [vmem:[%s0 + $0x265] sm:$0xff]
  %v9111 = vld [vmem:[%s0 + $0x26d] sm:$0xff]
  %v9112 = vld [vmem:[%s0 + $0x275] sm:$0xff]
  %v9113 = vld [vmem:[%s0 + $0x27d] sm:$0xff]
  %v9114 = vld [vmem:[%s0 + $0x285] sm:$0xff]
  %v9115 = vld [vmem:[%s0 + $0x28d] sm:$0xff]
  %v9116 = vld [vmem:[%s0 + $0x295] sm:$0xff]
  %v9117 = vld [vmem:[%s0 + $0x29d] sm:$0xff]
  %v9118 = vld [vmem:[%s0 + $0x2a5] sm:$0xff]
  %v9119 = vld [vmem:[%s0 + $0x2ad] sm:$0xff]
  %v9120 = vld [vmem:[%s0 + $0x2b5] sm:$0xff]
  %v9121 = vld [vmem:[%s0 + $0x2bd] sm:$0xff]
  %v9122 = vld [vmem:[%s0 + $0x2c5] sm:$0xff]
  %v9123 = vld [vmem:[%s0 + $0x2cd] sm:$0xff]
  %v9124 = vld [vmem:[%s0 + $0x2d5] sm:$0xff]
  %v9125 = vld [vmem:[%s0 + $0x2dd] sm:$0xff]
  %v9126 = vld [vmem:[%s0 + $0x2e5] sm:$0xff]
  %v9127 = vld [vmem:[%s0 + $0x2ed] sm:$0xff]
  %v9128 = vld [vmem:[%s0 + $0x2f5] sm:$0xff]
  %v9129 = vld [vmem:[%s0 + $0x2fd] sm:$0xff]
  %v9130 = vld [vmem:[%s0 + $0x305] sm:$0xff]
  %v9131 = vld [vmem:[%s0 + $0x30d] sm:$0xff]
  %v9132 = vld [vmem:[%s0 + $0x315] sm:$0xff]
  %v9133 = vld [vmem:[%s0 + $0x31d] sm:$0xff]
  %v9134 = vld [vmem:[%s0 + $0x325] sm:$0xff]
  %v9135 = vld [vmem:[%s0 + $0x32d] sm:$0xff]
  %v9136 = vld [vmem:[%s0 + $0x335] sm:$0xff]
  %v9137 = vld [vmem:[%s0 + $0x33d] sm:$0xff]
  %v9138 = vld [vmem:[%s0 + $0x345] sm:$0xff]
  %v9139 = vld [vmem:[%s0 + $0x34d] sm:$0xff]
  %v9140 = vld [vmem:[%s0 + $0x355] sm:$0xff]
  %v9141 = vld [vmem:[%s0 + $0x35d] sm:$0xff]
  %v9142 = vld [vmem:[%s0 + $0x365] sm:$0xff]
  %v9143 = vld [vmem:[%s0 + $0x36d] sm:$0xff]
  %v9144 = vld [vmem:[%s0 + $0x375] sm:$0xff]
  %v9145 = vld [vmem:[%s0 + $0x37d] sm:$0xff]
  %v9146 = vld [vmem:[%s0 + $0x385] sm:$0xff]
  %v9147 = vld [vmem:[%s0 + $0x38d] sm:$0xff]
  %v9148 = vld [vmem:[%s0 + $0x395] sm:$0xff]
  %v9149 = vld [vmem:[%s0 + $0x39d] sm:$0xff]
  %v9150 = vld [vmem:[%s0 + $0x3a5] sm:$0xff]
  %v9151 = vld [vmem:[%s0 + $0x3ad] sm:$0xff]
  %v9152 = vld [vmem:[%s0 + $0x3b5] sm:$0xff]
  %v9153 = vld [vmem:[%s0 + $0x3bd] sm:$0xff]
  %v9154 = vld [vmem:[%s0 + $0x3c5] sm:$0xff]
  %v9155 = vld [vmem:[%s0 + $0x3cd] sm:$0xff]
  %v9156 = vld [vmem:[%s0 + $0x3d5] sm:$0xff]
  %v9157 = vld [vmem:[%s0 + $0x3dd] sm:$0xff]
  %v9158 = vld [vmem:[%s0 + $0x3e5] sm:$0xff]
  %v9159 = vld [vmem:[%s0 + $0x3ed] sm:$0xff]
  %v9160 = vld [vmem:[%s0 + $0x3f5] sm:$0xff]
  %v9161 = vld [vmem:[%s0 + $0x3fd] sm:$0xff]
  %v9162 = vld [vmem:[%s0 + $0x405] sm:$0xff]
  %v9163 = vld [vmem:[%s0 + $0x40d] sm:$0xff]
  %v9164 = vld [vmem:[%s0 + $0x415] sm:$0xff]
  %v9165 = vld [vmem:[%s0 + $0x41d] sm:$0xff]
  %v9166 = vld [vmem:[%s0 + $0x425] sm:$0xff]
  %v9167 = vld [vmem:[%s0 + $0x42d] sm:$0xff]
  %v9168 = vld [vmem:[%s0 + $0x435] sm:$0xff]
  %v9169 = vld [vmem:[%s0 + $0x43d] sm:$0xff]
  %v9170 = vld [vmem:[%s0 + $0x445] sm:$0xff]
  %v9171 = vld [vmem:[%s0 + $0x44d] sm:$0xff]
  %v9172 = vld [vmem:[%s0 + $0x455] sm:$0xff]
  %v9173 = vld [vmem:[%s0 + $0x45d] sm:$0xff]
  %v9174 = vld [vmem:[%s0 + $0x465] sm:$0xff]
  %v9175 = vld [vmem:[%s0 + $0x46d] sm:$0xff]
  %v9176 = vld [vmem:[%s0 + $0x475] sm:$0xff]
  %v9177 = vld [vmem:[%s0 + $0x47d] sm:$0xff]
  %v9178 = vld [vmem:[%s0 + $0x485] sm:$0xff]
  %v9179 = vld [vmem:[%s0 + $0x48d] sm:$0xff]
  %v9180 = vld [vmem:[%s0 + $0x495] sm:$0xff]
  %v9181 = vld [vmem:[%s0 + $0x49d] sm:$0xff]
  %v9182 = vld [vmem:[%s0 + $0x4a5] sm:$0xff]
  %v9183 = vld [vmem:[%s0 + $0x4ad] sm:$0xff]
  %v9184 = vld [vmem:[%s0 + $0x4b5] sm:$0xff]
  %v9185 = vld [vmem:[%s0 + $0x4bd] sm:$0xff]
  %v9186 = vld [vmem:[%s0 + $0x4c5] sm:$0xff]
  %v9187 = vld [vmem:[%s0 + $0x4cd] sm:$0xff]
  %v9188 = vld [vmem:[%s0 + $0x4d5] sm:$0xff]
  %v9189 = vld [vmem:[%s0 + $0x4dd] sm:$0xff]
  %v9190 = vld [vmem:[%s0 + $0x4e5] sm:$0xff]
  %v9191 = vld [vmem:[%s0 + $0x4ed] sm:$0xff]
  %v9192 = vld [vmem:[%s0 + $0x4f5] sm:$0xff]
  %v9193 = vld [vmem:[%s0 + $0x4fd] sm:$0xff]
  %v9194 = vld [vmem:[%s0 + $0x505] sm:$0xff]
  %v9195 = vld [vmem:[%s0 + $0x50d] sm:$0xff]
  %v9196 = vld [vmem:[%s0 + $0x515] sm:$0xff]
  %v9197 = vld [vmem:[%s0 + $0x51d] sm:$0xff]
  %v9198 = vld [vmem:[%s0 + $0x525] sm:$0xff]
  %v9199 = vld [vmem:[%s0 + $0x52d] sm:$0xff]
  %v9200 = vpack.c.bf16 %v9039, %v9038
  %v9201 = vpack.c.bf16 %v9041, %v9040
  %v9202 = vpack.c.bf16 %v9043, %v9042
  %v9203 = vpack.c.bf16 %v9045, %v9044
  %v9204 = vpack.c.bf16 %v9047, %v9046
  %v9205 = vpack.c.bf16 %v9049, %v9048
  %v9206 = vpack.c.bf16 %v9051, %v9050
  %v9207 = vpack.c.bf16 %v9053, %v9052
  %v9208 = vpack.c.bf16 %v9055, %v9054
  %v9209 = vpack.c.bf16 %v9057, %v9056
  %v9210 = vpack.c.bf16 %v9059, %v9058
  %v9211 = vpack.c.bf16 %v9061, %v9060
  %v9212 = vpack.c.bf16 %v9063, %v9062
  %v9213 = vpack.c.bf16 %v9065, %v9064
  %v9214 = vpack.c.bf16 %v9067, %v9066
  %v9215 = vpack.c.bf16 %v9069, %v9068
  %v9216 = vpack.c.bf16 %v9071, %v9070
  %v9217 = vpack.c.bf16 %v9073, %v9072
  %v9218 = vpack.c.bf16 %v9075, %v9074
  %v9219 = vpack.c.bf16 %v9077, %v9076
  %v9220 = vpack.c.bf16 %v9079, %v9078
  %v9221 = vpack.c.bf16 %v9081, %v9080
  %v9222 = vpack.c.bf16 %v9083, %v9082
  %v9223 = vpack.c.bf16 %v9085, %v9084
  %v9224 = vpack.c.bf16 %v9087, %v9086
  %v9225 = vpack.c.bf16 %v9089, %v9088
  %v9226 = vpack.c.bf16 %v9091, %v9090
  %v9227 = vpack.c.bf16 %v9093, %v9092
  %v9228 = vpack.c.bf16 %v9095, %v9094
  %v9229 = vpack.c.bf16 %v9097, %v9096
  %v9230 = vpack.c.bf16 %v9099, %v9098
  %v9231 = vpack.c.bf16 %v9101, %v9100
  %v9232 = vpack.c.bf16 %v9103, %v9102
  %v9233 = vpack.c.bf16 %v9105, %v9104
  %v9234 = vpack.c.bf16 %v9107, %v9106
  %v9235 = vpack.c.bf16 %v9109, %v9108
  %v9236 = vpack.c.bf16 %v9111, %v9110
  %v9237 = vpack.c.bf16 %v9113, %v9112
  %v9238 = vpack.c.bf16 %v9115, %v9114
  %v9239 = vpack.c.bf16 %v9117, %v9116
  %v9240 = vpack.c.bf16 %v9119, %v9118
  %v9241 = vpack.c.bf16 %v9121, %v9120
  %v9242 = vpack.c.bf16 %v9123, %v9122
  %v9243 = vpack.c.bf16 %v9125, %v9124
  %v9244 = vpack.c.bf16 %v9127, %v9126
  %v9245 = vpack.c.bf16 %v9129, %v9128
  %v9246 = vpack.c.bf16 %v9131, %v9130
  %v9247 = vpack.c.bf16 %v9133, %v9132
  %v9248 = vpack.c.bf16 %v9135, %v9134
  %v9249 = vpack.c.bf16 %v9137, %v9136
  %v9250 = vpack.c.bf16 %v9139, %v9138
  %v9251 = vpack.c.bf16 %v9141, %v9140
  %v9252 = vpack.c.bf16 %v9143, %v9142
  %v9253 = vpack.c.bf16 %v9145, %v9144
  %v9254 = vpack.c.bf16 %v9147, %v9146
  %v9255 = vpack.c.bf16 %v9149, %v9148
  %v9256 = vpack.c.bf16 %v9151, %v9150
  %v9257 = vpack.c.bf16 %v9153, %v9152
  %v9258 = vpack.c.bf16 %v9155, %v9154
  %v9259 = vpack.c.bf16 %v9157, %v9156
  %v9260 = vpack.c.bf16 %v9159, %v9158
  %v9261 = vpack.c.bf16 %v9161, %v9160
  %v9262 = vpack.c.bf16 %v9163, %v9162
  %v9263 = vpack.c.bf16 %v9165, %v9164
  %v9264 = vpack.c.bf16 %v9167, %v9166
  %v9265 = vpack.c.bf16 %v9169, %v9168
  %v9266 = vpack.c.bf16 %v9171, %v9170
  %v9267 = vpack.c.bf16 %v9173, %v9172
  %v9268 = vpack.c.bf16 %v9175, %v9174
  %v9269 = vpack.c.bf16 %v9177, %v9176
  %v9270 = vpack.c.bf16 %v9179, %v9178
  %v9271 = vpack.c.bf16 %v9181, %v9180
  %v9272 = vpack.c.bf16 %v9183, %v9182
  %v9273 = vpack.c.bf16 %v9185, %v9184
  %v9274 = vpack.c.bf16 %v9187, %v9186
  %v9275 = vpack.c.bf16 %v9189, %v9188
  %v9276 = vpack.c.bf16 %v9191, %v9190
  %v9277 = vpack.c.bf16 %v9193, %v9192
  %v9278 = vpack.c.bf16 %v9195, %v9194
  %v9279 = vpack.c.bf16 %v9197, %v9196
  %v9280 = vpack.c.bf16 %v9199, %v9198
  %v9281 = vld [vmem:[%s1 + $0x1c] sm:$0xf]
  %v9283 = vsel %vm517, %v9200, 0
  %v9286 = vsel %vm517, %v9201, 0
  %v9289 = vsel %vm517, %v9202, 0
  %v9292 = vsel %vm517, %v9203, 0
  %v9295 = vsel %vm517, %v9204, 0
  %v9298 = vsel %vm517, %v9205, 0
  %v9301 = vsel %vm517, %v9206, 0
  %v9304 = vsel %vm517, %v9207, 0
  %v9307 = vsel %vm517, %v9208, 0
  %v9310 = vsel %vm517, %v9209, 0
  %v9313 = vsel %vm517, %v9210, 0
  %v9316 = vsel %vm517, %v9211, 0
  %v9319 = vsel %vm517, %v9212, 0
  %v9322 = vsel %vm517, %v9213, 0
  %v9325 = vsel %vm517, %v9214, 0
  %v9328 = vsel %vm517, %v9215, 0
  %v9331 = vsel %vm517, %v9216, 0
  %v9334 = vsel %vm517, %v9217, 0
  %v9337 = vsel %vm517, %v9218, 0
  %v9340 = vsel %vm517, %v9219, 0
  %v9343 = vsel %vm517, %v9220, 0
  %v9346 = vsel %vm517, %v9221, 0
  %v9349 = vsel %vm517, %v9222, 0
  %v9352 = vsel %vm517, %v9223, 0
  %v9355 = vsel %vm517, %v9224, 0
  %v9358 = vsel %vm517, %v9225, 0
  %v9361 = vsel %vm517, %v9226, 0
  %v9364 = vsel %vm517, %v9227, 0
  %v9367 = vsel %vm517, %v9228, 0
  %v9370 = vsel %vm517, %v9229, 0
  %v9373 = vsel %vm517, %v9230, 0
  %v9376 = vsel %vm517, %v9231, 0
  %v9379 = vsel %vm517, %v9232, 0
  %v9382 = vsel %vm517, %v9233, 0
  %v9385 = vsel %vm517, %v9234, 0
  %v9388 = vsel %vm517, %v9235, 0
  %v9391 = vsel %vm517, %v9236, 0
  %v9394 = vsel %vm517, %v9237, 0
  %v9397 = vsel %vm517, %v9238, 0
  %v9400 = vsel %vm517, %v9239, 0
  %v9403 = vsel %vm517, %v9240, 0
  %v9406 = vsel %vm517, %v9241, 0
  %v9409 = vsel %vm517, %v9242, 0
  %v9412 = vsel %vm517, %v9243, 0
  %v9415 = vsel %vm517, %v9244, 0
  %v9418 = vsel %vm517, %v9245, 0
  %v9421 = vsel %vm517, %v9246, 0
  %v9424 = vsel %vm517, %v9247, 0
  %v9427 = vsel %vm517, %v9248, 0
  %v9430 = vsel %vm517, %v9249, 0
  %v9433 = vsel %vm517, %v9250, 0
  %v9436 = vsel %vm517, %v9251, 0
  %v9439 = vsel %vm517, %v9252, 0
  %v9442 = vsel %vm517, %v9253, 0
  %v9445 = vsel %vm517, %v9254, 0
  %v9448 = vsel %vm517, %v9255, 0
  %v9451 = vsel %vm517, %v9256, 0
  %v9454 = vsel %vm517, %v9257, 0
  %v9457 = vsel %vm517, %v9258, 0
  %v9460 = vsel %vm517, %v9259, 0
  %v9463 = vsel %vm517, %v9260, 0
  %v9466 = vsel %vm517, %v9261, 0
  %v9469 = vsel %vm517, %v9262, 0
  %v9472 = vsel %vm517, %v9263, 0
  %v9475 = vsel %vm517, %v9264, 0
  %v9478 = vsel %vm517, %v9265, 0
  %v9481 = vsel %vm517, %v9266, 0
  %v9484 = vsel %vm517, %v9267, 0
  %v9487 = vsel %vm517, %v9268, 0
  %v9490 = vsel %vm517, %v9269, 0
  %v9493 = vsel %vm517, %v9270, 0
  %v9496 = vsel %vm517, %v9271, 0
  %v9499 = vsel %vm517, %v9272, 0
  %v9502 = vsel %vm517, %v9273, 0
  %v9505 = vsel %vm517, %v9274, 0
  %v9508 = vsel %vm517, %v9275, 0
  %v9511 = vsel %vm517, %v9276, 0
  %v9514 = vsel %vm517, %v9277, 0
  %v9517 = vsel %vm517, %v9278, 0
  %v9520 = vsel %vm517, %v9279, 0
  %v9523 = vsel %vm517, %v9280, 0
  %v9526 = vsel %vm761, %v9281, 0
  %9528 = vmatprep.subr.bf16.mxu0 0
  %9529 = vmatpush1.bf16.msra.mxu0 %v9526
  %9530 = vmatprep.subr.bf16.mxu0 0
  %9531 = vmatpush1.bf16.msra.mxu0 0
  %9532 = vmatprep.subr.bf16.mxu0 0
  %9533 = vmatpush1.bf16.msra.mxu0 0
  %9534 = vmatprep.subr.bf16.mxu0 0
  %9535 = vmatpush1.bf16.msra.mxu0 0
  %9536 = vmatprep.subr.bf16.mxu0 0
  %9537 = vmatpush1.bf16.msra.mxu0 0
  %9538 = vmatprep.subr.bf16.mxu0 0
  %9539 = vmatpush1.bf16.msra.mxu0 0
  %9540 = vmatprep.subr.bf16.mxu0 0
  %9541 = vmatpush1.bf16.msra.mxu0 0
  %9542 = vmatprep.subr.bf16.mxu0 0
  %9543 = vmatpush1.bf16.msra.mxu0 0
  %9544 = vmatprep.subr.bf16.mxu0 0
  %9545 = vmatpush1.bf16.msra.mxu0 0
  %9546 = vmatprep.subr.bf16.mxu0 0
  %9547 = vmatpush1.bf16.msra.mxu0 0
  %9548 = vmatprep.subr.bf16.mxu0 0
  %9549 = vmatpush1.bf16.msra.mxu0 0
  %9550 = vmatprep.subr.bf16.mxu0 0
  %9551 = vmatpush1.bf16.msra.mxu0 0
  %9552 = vmatprep.subr.bf16.mxu0 0
  %9553 = vmatpush1.bf16.msra.mxu0 0
  %9554 = vmatprep.subr.bf16.mxu0 0
  %9555 = vmatpush1.bf16.msra.mxu0 0
  %9556 = vmatprep.subr.bf16.mxu0 0
  %9557 = vmatpush1.bf16.msra.mxu0 0
  %9558 = vmatprep.subr.bf16.mxu0 0
  %9559 = vmatpush1.bf16.msra.mxu0 0
  %9560 = vmatprep.mubr.bf16.mxu0 0
  %9561 = vmatmul.mubr.bf16.gmra.mrb[0].mxu0 %v9283
  %v9562 = vpop.f32.mrb[0].mxu0
  %v9563 = vadd.f32 0.0, %v9562
  %v9564 = vpop.f32.mrb[0].mxu0
  %v9565 = vpop.f32.mrb[0].mxu0
  %v9566 = vadd.f32 0.0, %v9565
  %v9567 = vpop.f32.mrb[0].mxu0
  %9568 = vmatprep.mubr.bf16.mxu0 0
  %9569 = vmatmul.mubr.bf16.gmra.mrb[0].mxu0 %v9286
  %v9570 = vpop.f32.mrb[0].mxu0
  %v9571 = vadd.f32 0.0, %v9570
  %v9572 = vpop.f32.mrb[0].mxu0
  %v9573 = vpop.f32.mrb[0].mxu0
  %v9574 = vadd.f32 0.0, %v9573
  %v9575 = vpop.f32.mrb[0].mxu0
  %9576 = vmatprep.mubr.bf16.mxu0 0
  %9577 = vmatmul.mubr.bf16.gmra.mrb[0].mxu0 %v9289
  %v9578 = vpop.f32.mrb[0].mxu0
  %v9579 = vadd.f32 0.0, %v9578
  %v9580 = vpop.f32.mrb[0].mxu0
  %v9581 = vpop.f32.mrb[0].mxu0
  %v9582 = vadd.f32 0.0, %v9581
  %v9583 = vpop.f32.mrb[0].mxu0
  %9584 = vmatprep.mubr.bf16.mxu0 0
  %9585 = vmatmul.mubr.bf16.gmra.mrb[0].mxu0 %v9292
  %v9586 = vpop.f32.mrb[0].mxu0
  %v9587 = vadd.f32 0.0, %v9586
  %v9588 = vpop.f32.mrb[0].mxu0
  %v9589 = vpop.f32.mrb[0].mxu0
  %v9590 = vadd.f32 0.0, %v9589
  %v9591 = vpop.f32.mrb[0].mxu0
  %9592 = vmatprep.mubr.bf16.mxu0 0
  %9593 = vmatmul.mubr.bf16.gmra.mrb[0].mxu0 %v9295
  %v9594 = vpop.f32.mrb[0].mxu0
  %v9595 = vadd.f32 0.0, %v9594
  %v9596 = vpop.f32.mrb[0].mxu0
  %v9597 = vpop.f32.mrb[0].mxu0
  %v9598 = vadd.f32 0.0, %v9597
  %v9599 = vpop.f32.mrb[0].mxu0
  %9600 = vmatprep.mubr.bf16.mxu0 0
  %9601 = vmatmul.mubr.bf16.gmra.mrb[0].mxu0 %v9298
  %v9602 = vpop.f32.mrb[0].mxu0
  %v9603 = vadd.f32 0.0, %v9602
  %v9604 = vpop.f32.mrb[0].mxu0
  %v9605 = vpop.f32.mrb[0].mxu0
  %v9606 = vadd.f32 0.0, %v9605
  %v9607 = vpop.f32.mrb[0].mxu0
  %9608 = vmatprep.mubr.bf16.mxu0 0
  %9609 = vmatmul.mubr.bf16.gmra.mrb[0].mxu0 %v9301
  %v9610 = vpop.f32.mrb[0].mxu0
  %v9611 = vadd.f32 0.0, %v9610
  %v9612 = vpop.f32.mrb[0].mxu0
  %v9613 = vpop.f32.mrb[0].mxu0
  %v9614 = vadd.f32 0.0, %v9613
  %v9615 = vpop.f32.mrb[0].mxu0
  %9616 = vmatprep.mubr.bf16.mxu0 0
  %9617 = vmatmul.mubr.bf16.gmra.mrb[0].mxu0 %v9304
  %v9618 = vpop.f32.mrb[0].mxu0
  %v9619 = vadd.f32 0.0, %v9618
  %v9620 = vpop.f32.mrb[0].mxu0
  %v9621 = vpop.f32.mrb[0].mxu0
  %v9622 = vadd.f32 0.0, %v9621
  %v9623 = vpop.f32.mrb[0].mxu0
  %9624 = vmatprep.mubr.bf16.mxu0 0
  %9625 = vmatmul.mubr.bf16.gmra.mrb[0].mxu0 %v9307
  %v9626 = vpop.f32.mrb[0].mxu0
  %v9627 = vadd.f32 0.0, %v9626
  %v9628 = vpop.f32.mrb[0].mxu0
  %v9629 = vpop.f32.mrb[0].mxu0
  %v9630 = vadd.f32 0.0, %v9629
  %v9631 = vpop.f32.mrb[0].mxu0
  %9632 = vmatprep.mubr.bf16.mxu0 0
  %9633 = vmatmul.mubr.bf16.gmra.mrb[0].mxu0 %v9310
  %v9634 = vpop.f32.mrb[0].mxu0
  %v9635 = vadd.f32 0.0, %v9634
  %v9636 = vpop.f32.mrb[0].mxu0
  %v9637 = vpop.f32.mrb[0].mxu0
  %v9638 = vadd.f32 0.0, %v9637
  %v9639 = vpop.f32.mrb[0].mxu0
  %9640 = vmatprep.mubr.bf16.mxu0 0
  %9641 = vmatmul.mubr.bf16.gmra.mrb[0].mxu0 %v9313
  %v9642 = vpop.f32.mrb[0].mxu0
  %v9643 = vadd.f32 0.0, %v9642
  %v9644 = vpop.f32.mrb[0].mxu0
  %v9645 = vpop.f32.mrb[0].mxu0
  %v9646 = vadd.f32 0.0, %v9645
  %v9647 = vpop.f32.mrb[0].mxu0
  %9648 = vmatprep.mubr.bf16.mxu0 0
  %9649 = vmatmul.mubr.bf16.gmra.mrb[0].mxu0 %v9316
  %v9650 = vpop.f32.mrb[0].mxu0
  %v9651 = vadd.f32 0.0, %v9650
  %v9652 = vpop.f32.mrb[0].mxu0
  %v9653 = vpop.f32.mrb[0].mxu0
  %v9654 = vadd.f32 0.0, %v9653
  %v9655 = vpop.f32.mrb[0].mxu0
  %9656 = vmatprep.mubr.bf16.mxu0 0
  %9657 = vmatmul.mubr.bf16.gmra.mrb[0].mxu0 %v9319
  %v9658 = vpop.f32.mrb[0].mxu0
  %v9659 = vadd.f32 0.0, %v9658
  %v9660 = vpop.f32.mrb[0].mxu0
  %v9661 = vpop.f32.mrb[0].mxu0
  %v9662 = vadd.f32 0.0, %v9661
  %v9663 = vpop.f32.mrb[0].mxu0
  %9664 = vmatprep.mubr.bf16.mxu0 0
  %9665 = vmatmul.mubr.bf16.gmra.mrb[0].mxu0 %v9322
  %v9666 = vpop.f32.mrb[0].mxu0
  %v9667 = vadd.f32 0.0, %v9666
  %v9668 = vpop.f32.mrb[0].mxu0
  %v9669 = vpop.f32.mrb[0].mxu0
  %v9670 = vadd.f32 0.0, %v9669
  %v9671 = vpop.f32.mrb[0].mxu0
  %9672 = vmatprep.mubr.bf16.mxu0 0
  %9673 = vmatmul.mubr.bf16.gmra.mrb[0].mxu0 %v9325
  %v9674 = vpop.f32.mrb[0].mxu0
  %v9675 = vadd.f32 0.0, %v9674
  %v9676 = vpop.f32.mrb[0].mxu0
  %v9677 = vpop.f32.mrb[0].mxu0
  %v9678 = vadd.f32 0.0, %v9677
  %v9679 = vpop.f32.mrb[0].mxu0
  %9680 = vmatprep.mubr.bf16.mxu0 0
  %9681 = vmatmul.mubr.bf16.gmra.mrb[0].mxu0 %v9328
  %v9682 = vpop.f32.mrb[0].mxu0
  %v9683 = vadd.f32 0.0, %v9682
  %v9684 = vpop.f32.mrb[0].mxu0
  %v9685 = vpop.f32.mrb[0].mxu0
  %v9686 = vadd.f32 0.0, %v9685
  %v9687 = vpop.f32.mrb[0].mxu0
  %9688 = vmatprep.mubr.bf16.mxu0 0
  %9689 = vmatmul.mubr.bf16.gmra.mrb[0].mxu0 %v9331
  %v9690 = vpop.f32.mrb[0].mxu0
  %v9691 = vadd.f32 0.0, %v9690
  %v9692 = vpop.f32.mrb[0].mxu0
  %v9693 = vpop.f32.mrb[0].mxu0
  %v9694 = vadd.f32 0.0, %v9693
  %v9695 = vpop.f32.mrb[0].mxu0
  %9696 = vmatprep.mubr.bf16.mxu0 0
  %9697 = vmatmul.mubr.bf16.gmra.mrb[0].mxu0 %v9334
  %v9698 = vpop.f32.mrb[0].mxu0
  %v9699 = vadd.f32 0.0, %v9698
  %v9700 = vpop.f32.mrb[0].mxu0
  %v9701 = vpop.f32.mrb[0].mxu0
  %v9702 = vadd.f32 0.0, %v9701
  %v9703 = vpop.f32.mrb[0].mxu0
  %9704 = vmatprep.mubr.bf16.mxu0 0
  %9705 = vmatmul.mubr.bf16.gmra.mrb[0].mxu0 %v9337
  %v9706 = vpop.f32.mrb[0].mxu0
  %v9707 = vadd.f32 0.0, %v9706
  %v9708 = vpop.f32.mrb[0].mxu0
  %v9709 = vpop.f32.mrb[0].mxu0
  %v9710 = vadd.f32 0.0, %v9709
  %v9711 = vpop.f32.mrb[0].mxu0
  %9712 = vmatprep.mubr.bf16.mxu0 0
  %9713 = vmatmul.mubr.bf16.gmra.mrb[0].mxu0 %v9340
  %v9714 = vpop.f32.mrb[0].mxu0
  %v9715 = vadd.f32 0.0, %v9714
  %v9716 = vpop.f32.mrb[0].mxu0
  %v9717 = vpop.f32.mrb[0].mxu0
  %v9718 = vadd.f32 0.0, %v9717
  %v9719 = vpop.f32.mrb[0].mxu0
  %9720 = vmatprep.mubr.bf16.mxu0 0
  %9721 = vmatmul.mubr.bf16.gmra.mrb[0].mxu0 %v9343
  %v9722 = vpop.f32.mrb[0].mxu0
  %v9723 = vadd.f32 0.0, %v9722
  %v9724 = vpop.f32.mrb[0].mxu0
  %v9725 = vpop.f32.mrb[0].mxu0
  %v9726 = vadd.f32 0.0, %v9725
  %v9727 = vpop.f32.mrb[0].mxu0
  %9728 = vmatprep.mubr.bf16.mxu0 0
  %9729 = vmatmul.mubr.bf16.gmra.mrb[0].mxu0 %v9346
  %v9730 = vpop.f32.mrb[0].mxu0
  %v9731 = vadd.f32 0.0, %v9730
  %v9732 = vpop.f32.mrb[0].mxu0
  %v9733 = vpop.f32.mrb[0].mxu0
  %v9734 = vadd.f32 0.0, %v9733
  %v9735 = vpop.f32.mrb[0].mxu0
  %9736 = vmatprep.mubr.bf16.mxu0 0
  %9737 = vmatmul.mubr.bf16.gmra.mrb[0].mxu0 %v9349
  %v9738 = vpop.f32.mrb[0].mxu0
  %v9739 = vadd.f32 0.0, %v9738
  %v9740 = vpop.f32.mrb[0].mxu0
  %v9741 = vpop.f32.mrb[0].mxu0
  %v9742 = vadd.f32 0.0, %v9741
  %v9743 = vpop.f32.mrb[0].mxu0
  %9744 = vmatprep.mubr.bf16.mxu0 0
  %9745 = vmatmul.mubr.bf16.gmra.mrb[0].mxu0 %v9352
  %v9746 = vpop.f32.mrb[0].mxu0
  %v9747 = vadd.f32 0.0, %v9746
  %v9748 = vpop.f32.mrb[0].mxu0
  %v9749 = vpop.f32.mrb[0].mxu0
  %v9750 = vadd.f32 0.0, %v9749
  %v9751 = vpop.f32.mrb[0].mxu0
  %9752 = vmatprep.mubr.bf16.mxu0 0
  %9753 = vmatmul.mubr.bf16.gmra.mrb[0].mxu0 %v9355
  %v9754 = vpop.f32.mrb[0].mxu0
  %v9755 = vadd.f32 0.0, %v9754
  %v9756 = vpop.f32.mrb[0].mxu0
  %v9757 = vpop.f32.mrb[0].mxu0
  %v9758 = vadd.f32 0.0, %v9757
  %v9759 = vpop.f32.mrb[0].mxu0
  %9760 = vmatprep.mubr.bf16.mxu0 0
  %9761 = vmatmul.mubr.bf16.gmra.mrb[0].mxu0 %v9358
  %v9762 = vpop.f32.mrb[0].mxu0
  %v9763 = vadd.f32 0.0, %v9762
  %v9764 = vpop.f32.mrb[0].mxu0
  %v9765 = vpop.f32.mrb[0].mxu0
  %v9766 = vadd.f32 0.0, %v9765
  %v9767 = vpop.f32.mrb[0].mxu0
  %9768 = vmatprep.mubr.bf16.mxu0 0
  %9769 = vmatmul.mubr.bf16.gmra.mrb[0].mxu0 %v9361
  %v9770 = vpop.f32.mrb[0].mxu0
  %v9771 = vadd.f32 0.0, %v9770
  %v9772 = vpop.f32.mrb[0].mxu0
  %v9773 = vpop.f32.mrb[0].mxu0
  %v9774 = vadd.f32 0.0, %v9773
  %v9775 = vpop.f32.mrb[0].mxu0
  %9776 = vmatprep.mubr.bf16.mxu0 0
  %9777 = vmatmul.mubr.bf16.gmra.mrb[0].mxu0 %v9364
  %v9778 = vpop.f32.mrb[0].mxu0
  %v9779 = vadd.f32 0.0, %v9778
  %v9780 = vpop.f32.mrb[0].mxu0
  %v9781 = vpop.f32.mrb[0].mxu0
  %v9782 = vadd.f32 0.0, %v9781
  %v9783 = vpop.f32.mrb[0].mxu0
  %9784 = vmatprep.mubr.bf16.mxu0 0
  %9785 = vmatmul.mubr.bf16.gmra.mrb[0].mxu0 %v9367
  %v9786 = vpop.f32.mrb[0].mxu0
  %v9787 = vadd.f32 0.0, %v9786
  %v9788 = vpop.f32.mrb[0].mxu0
  %v9789 = vpop.f32.mrb[0].mxu0
  %v9790 = vadd.f32 0.0, %v9789
  %v9791 = vpop.f32.mrb[0].mxu0
  %9792 = vmatprep.mubr.bf16.mxu0 0
  %9793 = vmatmul.mubr.bf16.gmra.mrb[0].mxu0 %v9370
  %v9794 = vpop.f32.mrb[0].mxu0
  %v9795 = vadd.f32 0.0, %v9794
  %v9796 = vpop.f32.mrb[0].mxu0
  %v9797 = vpop.f32.mrb[0].mxu0
  %v9798 = vadd.f32 0.0, %v9797
  %v9799 = vpop.f32.mrb[0].mxu0
  %9800 = vmatprep.mubr.bf16.mxu0 0
  %9801 = vmatmul.mubr.bf16.gmra.mrb[0].mxu0 %v9373
  %v9802 = vpop.f32.mrb[0].mxu0
  %v9803 = vadd.f32 0.0, %v9802
  %v9804 = vpop.f32.mrb[0].mxu0
  %v9805 = vpop.f32.mrb[0].mxu0
  %v9806 = vadd.f32 0.0, %v9805
  %v9807 = vpop.f32.mrb[0].mxu0
  %9808 = vmatprep.mubr.bf16.mxu0 0
  %9809 = vmatmul.mubr.bf16.gmra.mrb[0].mxu0 %v9376
  %v9810 = vpop.f32.mrb[0].mxu0
  %v9811 = vadd.f32 0.0, %v9810
  %v9812 = vpop.f32.mrb[0].mxu0
  %v9813 = vpop.f32.mrb[0].mxu0
  %v9814 = vadd.f32 0.0, %v9813
  %v9815 = vpop.f32.mrb[0].mxu0
  %9816 = vmatprep.mubr.bf16.mxu0 0
  %9817 = vmatmul.mubr.bf16.gmra.mrb[0].mxu0 %v9379
  %v9818 = vpop.f32.mrb[0].mxu0
  %v9819 = vadd.f32 0.0, %v9818
  %v9820 = vpop.f32.mrb[0].mxu0
  %v9821 = vpop.f32.mrb[0].mxu0
  %v9822 = vadd.f32 0.0, %v9821
  %v9823 = vpop.f32.mrb[0].mxu0
  %9824 = vmatprep.mubr.bf16.mxu0 0
  %9825 = vmatmul.mubr.bf16.gmra.mrb[0].mxu0 %v9382
  %v9826 = vpop.f32.mrb[0].mxu0
  %v9827 = vadd.f32 0.0, %v9826
  %v9828 = vpop.f32.mrb[0].mxu0
  %v9829 = vpop.f32.mrb[0].mxu0
  %v9830 = vadd.f32 0.0, %v9829
  %v9831 = vpop.f32.mrb[0].mxu0
  %9832 = vmatprep.mubr.bf16.mxu0 0
  %9833 = vmatmul.mubr.bf16.gmra.mrb[0].mxu0 %v9385
  %v9834 = vpop.f32.mrb[0].mxu0
  %v9835 = vadd.f32 0.0, %v9834
  %v9836 = vpop.f32.mrb[0].mxu0
  %v9837 = vpop.f32.mrb[0].mxu0
  %v9838 = vadd.f32 0.0, %v9837
  %v9839 = vpop.f32.mrb[0].mxu0
  %9840 = vmatprep.mubr.bf16.mxu0 0
  %9841 = vmatmul.mubr.bf16.gmra.mrb[0].mxu0 %v9388
  %v9842 = vpop.f32.mrb[0].mxu0
  %v9843 = vadd.f32 0.0, %v9842
  %v9844 = vpop.f32.mrb[0].mxu0
  %v9845 = vpop.f32.mrb[0].mxu0
  %v9846 = vadd.f32 0.0, %v9845
  %v9847 = vpop.f32.mrb[0].mxu0
  %9848 = vmatprep.mubr.bf16.mxu0 0
  %9849 = vmatmul.mubr.bf16.gmra.mrb[0].mxu0 %v9391
  %v9850 = vpop.f32.mrb[0].mxu0
  %v9851 = vadd.f32 0.0, %v9850
  %v9852 = vpop.f32.mrb[0].mxu0
  %v9853 = vpop.f32.mrb[0].mxu0
  %v9854 = vadd.f32 0.0, %v9853
  %v9855 = vpop.f32.mrb[0].mxu0
  %9856 = vmatprep.mubr.bf16.mxu0 0
  %9857 = vmatmul.mubr.bf16.gmra.mrb[0].mxu0 %v9394
  %v9858 = vpop.f32.mrb[0].mxu0
  %v9859 = vadd.f32 0.0, %v9858
  %v9860 = vpop.f32.mrb[0].mxu0
  %v9861 = vpop.f32.mrb[0].mxu0
  %v9862 = vadd.f32 0.0, %v9861
  %v9863 = vpop.f32.mrb[0].mxu0
  %9864 = vmatprep.mubr.bf16.mxu0 0
  %9865 = vmatmul.mubr.bf16.gmra.mrb[0].mxu0 %v9397
  %v9866 = vpop.f32.mrb[0].mxu0
  %v9867 = vadd.f32 0.0, %v9866
  %v9868 = vpop.f32.mrb[0].mxu0
  %v9869 = vpop.f32.mrb[0].mxu0
  %v9870 = vadd.f32 0.0, %v9869
  %v9871 = vpop.f32.mrb[0].mxu0
  %9872 = vmatprep.mubr.bf16.mxu0 0
  %9873 = vmatmul.mubr.bf16.gmra.mrb[0].mxu0 %v9400
  %v9874 = vpop.f32.mrb[0].mxu0
  %v9875 = vadd.f32 0.0, %v9874
  %v9876 = vpop.f32.mrb[0].mxu0
  %v9877 = vpop.f32.mrb[0].mxu0
  %v9878 = vadd.f32 0.0, %v9877
  %v9879 = vpop.f32.mrb[0].mxu0
  %9880 = vmatprep.mubr.bf16.mxu0 0
  %9881 = vmatmul.mubr.bf16.gmra.mrb[0].mxu0 %v9403
  %v9882 = vpop.f32.mrb[0].mxu0
  %v9883 = vadd.f32 0.0, %v9882
  %v9884 = vpop.f32.mrb[0].mxu0
  %v9885 = vpop.f32.mrb[0].mxu0
  %v9886 = vadd.f32 0.0, %v9885
  %v9887 = vpop.f32.mrb[0].mxu0
  %9888 = vmatprep.mubr.bf16.mxu0 0
  %9889 = vmatmul.mubr.bf16.gmra.mrb[0].mxu0 %v9406
  %v9890 = vpop.f32.mrb[0].mxu0
  %v9891 = vadd.f32 0.0, %v9890
  %v9892 = vpop.f32.mrb[0].mxu0
  %v9893 = vpop.f32.mrb[0].mxu0
  %v9894 = vadd.f32 0.0, %v9893
  %v9895 = vpop.f32.mrb[0].mxu0
  %9896 = vmatprep.mubr.bf16.mxu0 0
  %9897 = vmatmul.mubr.bf16.gmra.mrb[0].mxu0 %v9409
  %v9898 = vpop.f32.mrb[0].mxu0
  %v9899 = vadd.f32 0.0, %v9898
  %v9900 = vpop.f32.mrb[0].mxu0
  %v9901 = vpop.f32.mrb[0].mxu0
  %v9902 = vadd.f32 0.0, %v9901
  %v9903 = vpop.f32.mrb[0].mxu0
  %9904 = vmatprep.mubr.bf16.mxu0 0
  %9905 = vmatmul.mubr.bf16.gmra.mrb[0].mxu0 %v9412
  %v9906 = vpop.f32.mrb[0].mxu0
  %v9907 = vadd.f32 0.0, %v9906
  %v9908 = vpop.f32.mrb[0].mxu0
  %v9909 = vpop.f32.mrb[0].mxu0
  %v9910 = vadd.f32 0.0, %v9909
  %v9911 = vpop.f32.mrb[0].mxu0
  %9912 = vmatprep.mubr.bf16.mxu0 0
  %9913 = vmatmul.mubr.bf16.gmra.mrb[0].mxu0 %v9415
  %v9914 = vpop.f32.mrb[0].mxu0
  %v9915 = vadd.f32 0.0, %v9914
  %v9916 = vpop.f32.mrb[0].mxu0
  %v9917 = vpop.f32.mrb[0].mxu0
  %v9918 = vadd.f32 0.0, %v9917
  %v9919 = vpop.f32.mrb[0].mxu0
  %9920 = vmatprep.mubr.bf16.mxu0 0
  %9921 = vmatmul.mubr.bf16.gmra.mrb[0].mxu0 %v9418
  %v9922 = vpop.f32.mrb[0].mxu0
  %v9923 = vadd.f32 0.0, %v9922
  %v9924 = vpop.f32.mrb[0].mxu0
  %v9925 = vpop.f32.mrb[0].mxu0
  %v9926 = vadd.f32 0.0, %v9925
  %v9927 = vpop.f32.mrb[0].mxu0
  %9928 = vmatprep.mubr.bf16.mxu0 0
  %9929 = vmatmul.mubr.bf16.gmra.mrb[0].mxu0 %v9421
  %v9930 = vpop.f32.mrb[0].mxu0
  %v9931 = vadd.f32 0.0, %v9930
  %v9932 = vpop.f32.mrb[0].mxu0
  %v9933 = vpop.f32.mrb[0].mxu0
  %v9934 = vadd.f32 0.0, %v9933
  %v9935 = vpop.f32.mrb[0].mxu0
  %9936 = vmatprep.mubr.bf16.mxu0 0
  %9937 = vmatmul.mubr.bf16.gmra.mrb[0].mxu0 %v9424
  %v9938 = vpop.f32.mrb[0].mxu0
  %v9939 = vadd.f32 0.0, %v9938
  %v9940 = vpop.f32.mrb[0].mxu0
  %v9941 = vpop.f32.mrb[0].mxu0
  %v9942 = vadd.f32 0.0, %v9941
  %v9943 = vpop.f32.mrb[0].mxu0
  %9944 = vmatprep.mubr.bf16.mxu0 0
  %9945 = vmatmul.mubr.bf16.gmra.mrb[0].mxu0 %v9427
  %v9946 = vpop.f32.mrb[0].mxu0
  %v9947 = vadd.f32 0.0, %v9946
  %v9948 = vpop.f32.mrb[0].mxu0
  %v9949 = vpop.f32.mrb[0].mxu0
  %v9950 = vadd.f32 0.0, %v9949
  %v9951 = vpop.f32.mrb[0].mxu0
  %9952 = vmatprep.mubr.bf16.mxu0 0
  %9953 = vmatmul.mubr.bf16.gmra.mrb[0].mxu0 %v9430
  %v9954 = vpop.f32.mrb[0].mxu0
  %v9955 = vadd.f32 0.0, %v9954
  %v9956 = vpop.f32.mrb[0].mxu0
  %v9957 = vpop.f32.mrb[0].mxu0
  %v9958 = vadd.f32 0.0, %v9957
  %v9959 = vpop.f32.mrb[0].mxu0
  %9960 = vmatprep.mubr.bf16.mxu0 0
  %9961 = vmatmul.mubr.bf16.gmra.mrb[0].mxu0 %v9433
  %v9962 = vpop.f32.mrb[0].mxu0
  %v9963 = vadd.f32 0.0, %v9962
  %v9964 = vpop.f32.mrb[0].mxu0
  %v9965 = vpop.f32.mrb[0].mxu0
  %v9966 = vadd.f32 0.0, %v9965
  %v9967 = vpop.f32.mrb[0].mxu0
  %9968 = vmatprep.mubr.bf16.mxu0 0
  %9969 = vmatmul.mubr.bf16.gmra.mrb[0].mxu0 %v9436
  %v9970 = vpop.f32.mrb[0].mxu0
  %v9971 = vadd.f32 0.0, %v9970
  %v9972 = vpop.f32.mrb[0].mxu0
  %v9973 = vpop.f32.mrb[0].mxu0
  %v9974 = vadd.f32 0.0, %v9973
  %v9975 = vpop.f32.mrb[0].mxu0
  %9976 = vmatprep.mubr.bf16.mxu0 0
  %9977 = vmatmul.mubr.bf16.gmra.mrb[0].mxu0 %v9439
  %v9978 = vpop.f32.mrb[0].mxu0
  %v9979 = vadd.f32 0.0, %v9978
  %v9980 = vpop.f32.mrb[0].mxu0
  %v9981 = vpop.f32.mrb[0].mxu0
  %v9982 = vadd.f32 0.0, %v9981
  %v9983 = vpop.f32.mrb[0].mxu0
  %9984 = vmatprep.mubr.bf16.mxu0 0
  %9985 = vmatmul.mubr.bf16.gmra.mrb[0].mxu0 %v9442
  %v9986 = vpop.f32.mrb[0].mxu0
  %v9987 = vadd.f32 0.0, %v9986
  %v9988 = vpop.f32.mrb[0].mxu0
  %v9989 = vpop.f32.mrb[0].mxu0
  %v9990 = vadd.f32 0.0, %v9989
  %v9991 = vpop.f32.mrb[0].mxu0
  %9992 = vmatprep.mubr.bf16.mxu0 0
  %9993 = vmatmul.mubr.bf16.gmra.mrb[0].mxu0 %v9445
  %v9994 = vpop.f32.mrb[0].mxu0
  %v9995 = vadd.f32 0.0, %v9994
  %v9996 = vpop.f32.mrb[0].mxu0
  %v9997 = vpop.f32.mrb[0].mxu0
  %v9998 = vadd.f32 0.0, %v9997
  %v9999 = vpop.f32.mrb[0].mxu0
  %10000 = vmatprep.mubr.bf16.mxu0 0
  %10001 = vmatmul.mubr.bf16.gmra.mrb[0].mxu0 %v9448
  %v10002 = vpop.f32.mrb[0].mxu0
  %v10003 = vadd.f32 0.0, %v10002
  %v10004 = vpop.f32.mrb[0].mxu0
  %v10005 = vpop.f32.mrb[0].mxu0
  %v10006 = vadd.f32 0.0, %v10005
  %v10007 = vpop.f32.mrb[0].mxu0
  %10008 = vmatprep.mubr.bf16.mxu0 0
  %10009 = vmatmul.mubr.bf16.gmra.mrb[0].mxu0 %v9451
  %v10010 = vpop.f32.mrb[0].mxu0
  %v10011 = vadd.f32 0.0, %v10010
  %v10012 = vpop.f32.mrb[0].mxu0
  %v10013 = vpop.f32.mrb[0].mxu0
  %v10014 = vadd.f32 0.0, %v10013
  %v10015 = vpop.f32.mrb[0].mxu0
  %10016 = vmatprep.mubr.bf16.mxu0 0
  %10017 = vmatmul.mubr.bf16.gmra.mrb[0].mxu0 %v9454
  %v10018 = vpop.f32.mrb[0].mxu0
  %v10019 = vadd.f32 0.0, %v10018
  %v10020 = vpop.f32.mrb[0].mxu0
  %v10021 = vpop.f32.mrb[0].mxu0
  %v10022 = vadd.f32 0.0, %v10021
  %v10023 = vpop.f32.mrb[0].mxu0
  %10024 = vmatprep.mubr.bf16.mxu0 0
  %10025 = vmatmul.mubr.bf16.gmra.mrb[0].mxu0 %v9457
  %v10026 = vpop.f32.mrb[0].mxu0
  %v10027 = vadd.f32 0.0, %v10026
  %v10028 = vpop.f32.mrb[0].mxu0
  %v10029 = vpop.f32.mrb[0].mxu0
  %v10030 = vadd.f32 0.0, %v10029
  %v10031 = vpop.f32.mrb[0].mxu0
  %10032 = vmatprep.mubr.bf16.mxu0 0
  %10033 = vmatmul.mubr.bf16.gmra.mrb[0].mxu0 %v9460
  %v10034 = vpop.f32.mrb[0].mxu0
  %v10035 = vadd.f32 0.0, %v10034
  %v10036 = vpop.f32.mrb[0].mxu0
  %v10037 = vpop.f32.mrb[0].mxu0
  %v10038 = vadd.f32 0.0, %v10037
  %v10039 = vpop.f32.mrb[0].mxu0
  %10040 = vmatprep.mubr.bf16.mxu0 0
  %10041 = vmatmul.mubr.bf16.gmra.mrb[0].mxu0 %v9463
  %v10042 = vpop.f32.mrb[0].mxu0
  %v10043 = vadd.f32 0.0, %v10042
  %v10044 = vpop.f32.mrb[0].mxu0
  %v10045 = vpop.f32.mrb[0].mxu0
  %v10046 = vadd.f32 0.0, %v10045
  %v10047 = vpop.f32.mrb[0].mxu0
  %10048 = vmatprep.mubr.bf16.mxu0 0
  %10049 = vmatmul.mubr.bf16.gmra.mrb[0].mxu0 %v9466
  %v10050 = vpop.f32.mrb[0].mxu0
  %v10051 = vadd.f32 0.0, %v10050
  %v10052 = vpop.f32.mrb[0].mxu0
  %v10053 = vpop.f32.mrb[0].mxu0
  %v10054 = vadd.f32 0.0, %v10053
  %v10055 = vpop.f32.mrb[0].mxu0
  %10056 = vmatprep.mubr.bf16.mxu0 0
  %10057 = vmatmul.mubr.bf16.gmra.mrb[0].mxu0 %v9469
  %v10058 = vpop.f32.mrb[0].mxu0
  %v10059 = vadd.f32 0.0, %v10058
  %v10060 = vpop.f32.mrb[0].mxu0
  %v10061 = vpop.f32.mrb[0].mxu0
  %v10062 = vadd.f32 0.0, %v10061
  %v10063 = vpop.f32.mrb[0].mxu0
  %10064 = vmatprep.mubr.bf16.mxu0 0
  %10065 = vmatmul.mubr.bf16.gmra.mrb[0].mxu0 %v9472
  %v10066 = vpop.f32.mrb[0].mxu0
  %v10067 = vadd.f32 0.0, %v10066
  %v10068 = vpop.f32.mrb[0].mxu0
  %v10069 = vpop.f32.mrb[0].mxu0
  %v10070 = vadd.f32 0.0, %v10069
  %v10071 = vpop.f32.mrb[0].mxu0
  %10072 = vmatprep.mubr.bf16.mxu0 0
  %10073 = vmatmul.mubr.bf16.gmra.mrb[0].mxu0 %v9475
  %v10074 = vpop.f32.mrb[0].mxu0
  %v10075 = vadd.f32 0.0, %v10074
  %v10076 = vpop.f32.mrb[0].mxu0
  %v10077 = vpop.f32.mrb[0].mxu0
  %v10078 = vadd.f32 0.0, %v10077
  %v10079 = vpop.f32.mrb[0].mxu0
  %10080 = vmatprep.mubr.bf16.mxu0 0
  %10081 = vmatmul.mubr.bf16.gmra.mrb[0].mxu0 %v9478
  %v10082 = vpop.f32.mrb[0].mxu0
  %v10083 = vadd.f32 0.0, %v10082
  %v10084 = vpop.f32.mrb[0].mxu0
  %v10085 = vpop.f32.mrb[0].mxu0
  %v10086 = vadd.f32 0.0, %v10085
  %v10087 = vpop.f32.mrb[0].mxu0
  %10088 = vmatprep.mubr.bf16.mxu0 0
  %10089 = vmatmul.mubr.bf16.gmra.mrb[0].mxu0 %v9481
  %v10090 = vpop.f32.mrb[0].mxu0
  %v10091 = vadd.f32 0.0, %v10090
  %v10092 = vpop.f32.mrb[0].mxu0
  %v10093 = vpop.f32.mrb[0].mxu0
  %v10094 = vadd.f32 0.0, %v10093
  %v10095 = vpop.f32.mrb[0].mxu0
  %10096 = vmatprep.mubr.bf16.mxu0 0
  %10097 = vmatmul.mubr.bf16.gmra.mrb[0].mxu0 %v9484
  %v10098 = vpop.f32.mrb[0].mxu0
  %v10099 = vadd.f32 0.0, %v10098
  %v10100 = vpop.f32.mrb[0].mxu0
  %v10101 = vpop.f32.mrb[0].mxu0
  %v10102 = vadd.f32 0.0, %v10101
  %v10103 = vpop.f32.mrb[0].mxu0
  %10104 = vmatprep.mubr.bf16.mxu0 0
  %10105 = vmatmul.mubr.bf16.gmra.mrb[0].mxu0 %v9487
  %v10106 = vpop.f32.mrb[0].mxu0
  %v10107 = vadd.f32 0.0, %v10106
  %v10108 = vpop.f32.mrb[0].mxu0
  %v10109 = vpop.f32.mrb[0].mxu0
  %v10110 = vadd.f32 0.0, %v10109
  %v10111 = vpop.f32.mrb[0].mxu0
  %10112 = vmatprep.mubr.bf16.mxu0 0
  %10113 = vmatmul.mubr.bf16.gmra.mrb[0].mxu0 %v9490
  %v10114 = vpop.f32.mrb[0].mxu0
  %v10115 = vadd.f32 0.0, %v10114
  %v10116 = vpop.f32.mrb[0].mxu0
  %v10117 = vpop.f32.mrb[0].mxu0
  %v10118 = vadd.f32 0.0, %v10117
  %v10119 = vpop.f32.mrb[0].mxu0
  %10120 = vmatprep.mubr.bf16.mxu0 0
  %10121 = vmatmul.mubr.bf16.gmra.mrb[0].mxu0 %v9493
  %v10122 = vpop.f32.mrb[0].mxu0
  %v10123 = vadd.f32 0.0, %v10122
  %v10124 = vpop.f32.mrb[0].mxu0
  %v10125 = vpop.f32.mrb[0].mxu0
  %v10126 = vadd.f32 0.0, %v10125
  %v10127 = vpop.f32.mrb[0].mxu0
  %10128 = vmatprep.mubr.bf16.mxu0 0
  %10129 = vmatmul.mubr.bf16.gmra.mrb[0].mxu0 %v9496
  %v10130 = vpop.f32.mrb[0].mxu0
  %v10131 = vadd.f32 0.0, %v10130
  %v10132 = vpop.f32.mrb[0].mxu0
  %v10133 = vpop.f32.mrb[0].mxu0
  %v10134 = vadd.f32 0.0, %v10133
  %v10135 = vpop.f32.mrb[0].mxu0
  %10136 = vmatprep.mubr.bf16.mxu0 0
  %10137 = vmatmul.mubr.bf16.gmra.mrb[0].mxu0 %v9499
  %v10138 = vpop.f32.mrb[0].mxu0
  %v10139 = vadd.f32 0.0, %v10138
  %v10140 = vpop.f32.mrb[0].mxu0
  %v10141 = vpop.f32.mrb[0].mxu0
  %v10142 = vadd.f32 0.0, %v10141
  %v10143 = vpop.f32.mrb[0].mxu0
  %10144 = vmatprep.mubr.bf16.mxu0 0
  %10145 = vmatmul.mubr.bf16.gmra.mrb[0].mxu0 %v9502
  %v10146 = vpop.f32.mrb[0].mxu0
  %v10147 = vadd.f32 0.0, %v10146
  %v10148 = vpop.f32.mrb[0].mxu0
  %v10149 = vpop.f32.mrb[0].mxu0
  %v10150 = vadd.f32 0.0, %v10149
  %v10151 = vpop.f32.mrb[0].mxu0
  %10152 = vmatprep.mubr.bf16.mxu0 0
  %10153 = vmatmul.mubr.bf16.gmra.mrb[0].mxu0 %v9505
  %v10154 = vpop.f32.mrb[0].mxu0
  %v10155 = vadd.f32 0.0, %v10154
  %v10156 = vpop.f32.mrb[0].mxu0
  %v10157 = vpop.f32.mrb[0].mxu0
  %v10158 = vadd.f32 0.0, %v10157
  %v10159 = vpop.f32.mrb[0].mxu0
  %10160 = vmatprep.mubr.bf16.mxu0 0
  %10161 = vmatmul.mubr.bf16.gmra.mrb[0].mxu0 %v9508
  %v10162 = vpop.f32.mrb[0].mxu0
  %v10163 = vadd.f32 0.0, %v10162
  %v10164 = vpop.f32.mrb[0].mxu0
  %v10165 = vpop.f32.mrb[0].mxu0
  %v10166 = vadd.f32 0.0, %v10165
  %v10167 = vpop.f32.mrb[0].mxu0
  %10168 = vmatprep.mubr.bf16.mxu0 0
  %10169 = vmatmul.mubr.bf16.gmra.mrb[0].mxu0 %v9511
  %v10170 = vpop.f32.mrb[0].mxu0
  %v10171 = vadd.f32 0.0, %v10170
  %v10172 = vpop.f32.mrb[0].mxu0
  %v10173 = vpop.f32.mrb[0].mxu0
  %v10174 = vadd.f32 0.0, %v10173
  %v10175 = vpop.f32.mrb[0].mxu0
  %10176 = vmatprep.mubr.bf16.mxu0 0
  %10177 = vmatmul.mubr.bf16.gmra.mrb[0].mxu0 %v9514
  %v10178 = vpop.f32.mrb[0].mxu0
  %v10179 = vadd.f32 0.0, %v10178
  %v10180 = vpop.f32.mrb[0].mxu0
  %v10181 = vpop.f32.mrb[0].mxu0
  %v10182 = vadd.f32 0.0, %v10181
  %v10183 = vpop.f32.mrb[0].mxu0
  %10184 = vmatprep.mubr.bf16.mxu0 0
  %10185 = vmatmul.mubr.bf16.gmra.mrb[0].mxu0 %v9517
  %v10186 = vpop.f32.mrb[0].mxu0
  %v10187 = vadd.f32 0.0, %v10186
  %v10188 = vpop.f32.mrb[0].mxu0
  %v10189 = vpop.f32.mrb[0].mxu0
  %v10190 = vadd.f32 0.0, %v10189
  %v10191 = vpop.f32.mrb[0].mxu0
  %10192 = vmatprep.mubr.bf16.mxu0 0
  %10193 = vmatmul.mubr.bf16.gmra.mrb[0].mxu0 %v9520
  %v10194 = vpop.f32.mrb[0].mxu0
  %v10195 = vadd.f32 0.0, %v10194
  %v10196 = vpop.f32.mrb[0].mxu0
  %v10197 = vpop.f32.mrb[0].mxu0
  %v10198 = vadd.f32 0.0, %v10197
  %v10199 = vpop.f32.mrb[0].mxu0
  %10200 = vmatprep.mubr.bf16.mxu0 0
  %10201 = vmatmul.mubr.bf16.gmra.mrb[0].mxu0 %v9523
  %v10202 = vpop.f32.mrb[0].mxu0
  %v10203 = vadd.f32 0.0, %v10202
  %v10204 = vpop.f32.mrb[0].mxu0
  %v10205 = vpop.f32.mrb[0].mxu0
  %v10206 = vadd.f32 0.0, %v10205
  %v10207 = vpop.f32.mrb[0].mxu0
  %10208 = vdwg.mxu0
  %v10209 = vadd.f32 %v8876, %v9563
  %v10210 = vadd.f32 %v8877, %v9566
  %v10211 = vadd.f32 %v8878, %v9571
  %v10212 = vadd.f32 %v8879, %v9574
  %v10213 = vadd.f32 %v8880, %v9579
  %v10214 = vadd.f32 %v8881, %v9582
  %v10215 = vadd.f32 %v8882, %v9587
  %v10216 = vadd.f32 %v8883, %v9590
  %v10217 = vadd.f32 %v8884, %v9595
  %v10218 = vadd.f32 %v8885, %v9598
  %v10219 = vadd.f32 %v8886, %v9603
  %v10220 = vadd.f32 %v8887, %v9606
  %v10221 = vadd.f32 %v8888, %v9611
  %v10222 = vadd.f32 %v8889, %v9614
  %v10223 = vadd.f32 %v8890, %v9619
  %v10224 = vadd.f32 %v8891, %v9622
  %v10225 = vadd.f32 %v8892, %v9627
  %v10226 = vadd.f32 %v8893, %v9630
  %v10227 = vadd.f32 %v8894, %v9635
  %v10228 = vadd.f32 %v8895, %v9638
  %v10229 = vadd.f32 %v8896, %v9643
  %v10230 = vadd.f32 %v8897, %v9646
  %v10231 = vadd.f32 %v8898, %v9651
  %v10232 = vadd.f32 %v8899, %v9654
  %v10233 = vadd.f32 %v8900, %v9659
  %v10234 = vadd.f32 %v8901, %v9662
  %v10235 = vadd.f32 %v8902, %v9667
  %v10236 = vadd.f32 %v8903, %v9670
  %v10237 = vadd.f32 %v8904, %v9675
  %v10238 = vadd.f32 %v8905, %v9678
  %v10239 = vadd.f32 %v8906, %v9683
  %v10240 = vadd.f32 %v8907, %v9686
  %v10241 = vadd.f32 %v8908, %v9691
  %v10242 = vadd.f32 %v8909, %v9694
  %v10243 = vadd.f32 %v8910, %v9699
  %v10244 = vadd.f32 %v8911, %v9702
  %v10245 = vadd.f32 %v8912, %v9707
  %v10246 = vadd.f32 %v8913, %v9710
  %v10247 = vadd.f32 %v8914, %v9715
  %v10248 = vadd.f32 %v8915, %v9718
  %v10249 = vadd.f32 %v8916, %v9723
  %v10250 = vadd.f32 %v8917, %v9726
  %v10251 = vadd.f32 %v8918, %v9731
  %v10252 = vadd.f32 %v8919, %v9734
  %v10253 = vadd.f32 %v8920, %v9739
  %v10254 = vadd.f32 %v8921, %v9742
  %v10255 = vadd.f32 %v8922, %v9747
  %v10256 = vadd.f32 %v8923, %v9750
  %v10257 = vadd.f32 %v8924, %v9755
  %v10258 = vadd.f32 %v8925, %v9758
  %v10259 = vadd.f32 %v8926, %v9763
  %v10260 = vadd.f32 %v8927, %v9766
  %v10261 = vadd.f32 %v8928, %v9771
  %v10262 = vadd.f32 %v8929, %v9774
  %v10263 = vadd.f32 %v8930, %v9779
  %v10264 = vadd.f32 %v8931, %v9782
  %v10265 = vadd.f32 %v8932, %v9787
  %v10266 = vadd.f32 %v8933, %v9790
  %v10267 = vadd.f32 %v8934, %v9795
  %v10268 = vadd.f32 %v8935, %v9798
  %v10269 = vadd.f32 %v8936, %v9803
  %v10270 = vadd.f32 %v8937, %v9806
  %v10271 = vadd.f32 %v8938, %v9811
  %v10272 = vadd.f32 %v8939, %v9814
  %v10273 = vadd.f32 %v8940, %v9819
  %v10274 = vadd.f32 %v8941, %v9822
  %v10275 = vadd.f32 %v8942, %v9827
  %v10276 = vadd.f32 %v8943, %v9830
  %v10277 = vadd.f32 %v8944, %v9835
  %v10278 = vadd.f32 %v8945, %v9838
  %v10279 = vadd.f32 %v8946, %v9843
  %v10280 = vadd.f32 %v8947, %v9846
  %v10281 = vadd.f32 %v8948, %v9851
  %v10282 = vadd.f32 %v8949, %v9854
  %v10283 = vadd.f32 %v8950, %v9859
  %v10284 = vadd.f32 %v8951, %v9862
  %v10285 = vadd.f32 %v8952, %v9867
  %v10286 = vadd.f32 %v8953, %v9870
  %v10287 = vadd.f32 %v8954, %v9875
  %v10288 = vadd.f32 %v8955, %v9878
  %v10289 = vadd.f32 %v8956, %v9883
  %v10290 = vadd.f32 %v8957, %v9886
  %v10291 = vadd.f32 %v8958, %v9891
  %v10292 = vadd.f32 %v8959, %v9894
  %v10293 = vadd.f32 %v8960, %v9899
  %v10294 = vadd.f32 %v8961, %v9902
  %v10295 = vadd.f32 %v8962, %v9907
  %v10296 = vadd.f32 %v8963, %v9910
  %v10297 = vadd.f32 %v8964, %v9915
  %v10298 = vadd.f32 %v8965, %v9918
  %v10299 = vadd.f32 %v8966, %v9923
  %v10300 = vadd.f32 %v8967, %v9926
  %v10301 = vadd.f32 %v8968, %v9931
  %v10302 = vadd.f32 %v8969, %v9934
  %v10303 = vadd.f32 %v8970, %v9939
  %v10304 = vadd.f32 %v8971, %v9942
  %v10305 = vadd.f32 %v8972, %v9947
  %v10306 = vadd.f32 %v8973, %v9950
  %v10307 = vadd.f32 %v8974, %v9955
  %v10308 = vadd.f32 %v8975, %v9958
  %v10309 = vadd.f32 %v8976, %v9963
  %v10310 = vadd.f32 %v8977, %v9966
  %v10311 = vadd.f32 %v8978, %v9971
  %v10312 = vadd.f32 %v8979, %v9974
  %v10313 = vadd.f32 %v8980, %v9979
  %v10314 = vadd.f32 %v8981, %v9982
  %v10315 = vadd.f32 %v8982, %v9987
  %v10316 = vadd.f32 %v8983, %v9990
  %v10317 = vadd.f32 %v8984, %v9995
  %v10318 = vadd.f32 %v8985, %v9998
  %v10319 = vadd.f32 %v8986, %v10003
  %v10320 = vadd.f32 %v8987, %v10006
  %v10321 = vadd.f32 %v8988, %v10011
  %v10322 = vadd.f32 %v8989, %v10014
  %v10323 = vadd.f32 %v8990, %v10019
  %v10324 = vadd.f32 %v8991, %v10022
  %v10325 = vadd.f32 %v8992, %v10027
  %v10326 = vadd.f32 %v8993, %v10030
  %v10327 = vadd.f32 %v8994, %v10035
  %v10328 = vadd.f32 %v8995, %v10038
  %v10329 = vadd.f32 %v8996, %v10043
  %v10330 = vadd.f32 %v8997, %v10046
  %v10331 = vadd.f32 %v8998, %v10051
  %v10332 = vadd.f32 %v8999, %v10054
  %v10333 = vadd.f32 %v9000, %v10059
  %v10334 = vadd.f32 %v9001, %v10062
  %v10335 = vadd.f32 %v9002, %v10067
  %v10336 = vadd.f32 %v9003, %v10070
  %v10337 = vadd.f32 %v9004, %v10075
  %v10338 = vadd.f32 %v9005, %v10078
  %v10339 = vadd.f32 %v9006, %v10083
  %v10340 = vadd.f32 %v9007, %v10086
  %v10341 = vadd.f32 %v9008, %v10091
  %v10342 = vadd.f32 %v9009, %v10094
  %v10343 = vadd.f32 %v9010, %v10099
  %v10344 = vadd.f32 %v9011, %v10102
  %v10345 = vadd.f32 %v9012, %v10107
  %v10346 = vadd.f32 %v9013, %v10110
  %v10347 = vadd.f32 %v9014, %v10115
  %v10348 = vadd.f32 %v9015, %v10118
  %v10349 = vadd.f32 %v9016, %v10123
  %v10350 = vadd.f32 %v9017, %v10126
  %v10351 = vadd.f32 %v9018, %v10131
  %v10352 = vadd.f32 %v9019, %v10134
  %v10353 = vadd.f32 %v9020, %v10139
  %v10354 = vadd.f32 %v9021, %v10142
  %v10355 = vadd.f32 %v9022, %v10147
  %v10356 = vadd.f32 %v9023, %v10150
  %v10357 = vadd.f32 %v9024, %v10155
  %v10358 = vadd.f32 %v9025, %v10158
  %v10359 = vadd.f32 %v9026, %v10163
  %v10360 = vadd.f32 %v9027, %v10166
  %v10361 = vadd.f32 %v9028, %v10171
  %v10362 = vadd.f32 %v9029, %v10174
  %v10363 = vadd.f32 %v9030, %v10179
  %v10364 = vadd.f32 %v9031, %v10182
  %v10365 = vadd.f32 %v9032, %v10187
  %v10366 = vadd.f32 %v9033, %v10190
  %v10367 = vadd.f32 %v9034, %v10195
  %v10368 = vadd.f32 %v9035, %v10198
  %v10369 = vadd.f32 %v9036, %v10203
  %v10370 = vadd.f32 %v9037, %v10206
  %v10371 = vld [vmem:[%s0 + $0x26] sm:$0xff]
  %v10372 = vld [vmem:[%s0 + $0x2e] sm:$0xff]
  %v10373 = vld [vmem:[%s0 + $0x36] sm:$0xff]
  %v10374 = vld [vmem:[%s0 + $0x3e] sm:$0xff]
  %v10375 = vld [vmem:[%s0 + $0x46] sm:$0xff]
  %v10376 = vld [vmem:[%s0 + $0x4e] sm:$0xff]
  %v10377 = vld [vmem:[%s0 + $0x56] sm:$0xff]
  %v10378 = vld [vmem:[%s0 + $0x5e] sm:$0xff]
  %v10379 = vld [vmem:[%s0 + $0x66] sm:$0xff]
  %v10380 = vld [vmem:[%s0 + $0x6e] sm:$0xff]
  %v10381 = vld [vmem:[%s0 + $0x76] sm:$0xff]
  %v10382 = vld [vmem:[%s0 + $0x7e] sm:$0xff]
  %v10383 = vld [vmem:[%s0 + $0x86] sm:$0xff]
  %v10384 = vld [vmem:[%s0 + $0x8e] sm:$0xff]
  %v10385 = vld [vmem:[%s0 + $0x96] sm:$0xff]
  %v10386 = vld [vmem:[%s0 + $0x9e] sm:$0xff]
  %v10387 = vld [vmem:[%s0 + $0xa6] sm:$0xff]
  %v10388 = vld [vmem:[%s0 + $0xae] sm:$0xff]
  %v10389 = vld [vmem:[%s0 + $0xb6] sm:$0xff]
  %v10390 = vld [vmem:[%s0 + $0xbe] sm:$0xff]
  %v10391 = vld [vmem:[%s0 + $0xc6] sm:$0xff]
  %v10392 = vld [vmem:[%s0 + $0xce] sm:$0xff]
  %v10393 = vld [vmem:[%s0 + $0xd6] sm:$0xff]
  %v10394 = vld [vmem:[%s0 + $0xde] sm:$0xff]
  %v10395 = vld [vmem:[%s0 + $0xe6] sm:$0xff]
  %v10396 = vld [vmem:[%s0 + $0xee] sm:$0xff]
  %v10397 = vld [vmem:[%s0 + $0xf6] sm:$0xff]
  %v10398 = vld [vmem:[%s0 + $0xfe] sm:$0xff]
  %v10399 = vld [vmem:[%s0 + $0x106] sm:$0xff]
  %v10400 = vld [vmem:[%s0 + $0x10e] sm:$0xff]
  %v10401 = vld [vmem:[%s0 + $0x116] sm:$0xff]
  %v10402 = vld [vmem:[%s0 + $0x11e] sm:$0xff]
  %v10403 = vld [vmem:[%s0 + $0x126] sm:$0xff]
  %v10404 = vld [vmem:[%s0 + $0x12e] sm:$0xff]
  %v10405 = vld [vmem:[%s0 + $0x136] sm:$0xff]
  %v10406 = vld [vmem:[%s0 + $0x13e] sm:$0xff]
  %v10407 = vld [vmem:[%s0 + $0x146] sm:$0xff]
  %v10408 = vld [vmem:[%s0 + $0x14e] sm:$0xff]
  %v10409 = vld [vmem:[%s0 + $0x156] sm:$0xff]
  %v10410 = vld [vmem:[%s0 + $0x15e] sm:$0xff]
  %v10411 = vld [vmem:[%s0 + $0x166] sm:$0xff]
  %v10412 = vld [vmem:[%s0 + $0x16e] sm:$0xff]
  %v10413 = vld [vmem:[%s0 + $0x176] sm:$0xff]
  %v10414 = vld [vmem:[%s0 + $0x17e] sm:$0xff]
  %v10415 = vld [vmem:[%s0 + $0x186] sm:$0xff]
  %v10416 = vld [vmem:[%s0 + $0x18e] sm:$0xff]
  %v10417 = vld [vmem:[%s0 + $0x196] sm:$0xff]
  %v10418 = vld [vmem:[%s0 + $0x19e] sm:$0xff]
  %v10419 = vld [vmem:[%s0 + $0x1a6] sm:$0xff]
  %v10420 = vld [vmem:[%s0 + $0x1ae] sm:$0xff]
  %v10421 = vld [vmem:[%s0 + $0x1b6] sm:$0xff]
  %v10422 = vld [vmem:[%s0 + $0x1be] sm:$0xff]
  %v10423 = vld [vmem:[%s0 + $0x1c6] sm:$0xff]
  %v10424 = vld [vmem:[%s0 + $0x1ce] sm:$0xff]
  %v10425 = vld [vmem:[%s0 + $0x1d6] sm:$0xff]
  %v10426 = vld [vmem:[%s0 + $0x1de] sm:$0xff]
  %v10427 = vld [vmem:[%s0 + $0x1e6] sm:$0xff]
  %v10428 = vld [vmem:[%s0 + $0x1ee] sm:$0xff]
  %v10429 = vld [vmem:[%s0 + $0x1f6] sm:$0xff]
  %v10430 = vld [vmem:[%s0 + $0x1fe] sm:$0xff]
  %v10431 = vld [vmem:[%s0 + $0x206] sm:$0xff]
  %v10432 = vld [vmem:[%s0 + $0x20e] sm:$0xff]
  %v10433 = vld [vmem:[%s0 + $0x216] sm:$0xff]
  %v10434 = vld [vmem:[%s0 + $0x21e] sm:$0xff]
  %v10435 = vld [vmem:[%s0 + $0x226] sm:$0xff]
  %v10436 = vld [vmem:[%s0 + $0x22e] sm:$0xff]
  %v10437 = vld [vmem:[%s0 + $0x236] sm:$0xff]
  %v10438 = vld [vmem:[%s0 + $0x23e] sm:$0xff]
  %v10439 = vld [vmem:[%s0 + $0x246] sm:$0xff]
  %v10440 = vld [vmem:[%s0 + $0x24e] sm:$0xff]
  %v10441 = vld [vmem:[%s0 + $0x256] sm:$0xff]
  %v10442 = vld [vmem:[%s0 + $0x25e] sm:$0xff]
  %v10443 = vld [vmem:[%s0 + $0x266] sm:$0xff]
  %v10444 = vld [vmem:[%s0 + $0x26e] sm:$0xff]
  %v10445 = vld [vmem:[%s0 + $0x276] sm:$0xff]
  %v10446 = vld [vmem:[%s0 + $0x27e] sm:$0xff]
  %v10447 = vld [vmem:[%s0 + $0x286] sm:$0xff]
  %v10448 = vld [vmem:[%s0 + $0x28e] sm:$0xff]
  %v10449 = vld [vmem:[%s0 + $0x296] sm:$0xff]
  %v10450 = vld [vmem:[%s0 + $0x29e] sm:$0xff]
  %v10451 = vld [vmem:[%s0 + $0x2a6] sm:$0xff]
  %v10452 = vld [vmem:[%s0 + $0x2ae] sm:$0xff]
  %v10453 = vld [vmem:[%s0 + $0x2b6] sm:$0xff]
  %v10454 = vld [vmem:[%s0 + $0x2be] sm:$0xff]
  %v10455 = vld [vmem:[%s0 + $0x2c6] sm:$0xff]
  %v10456 = vld [vmem:[%s0 + $0x2ce] sm:$0xff]
  %v10457 = vld [vmem:[%s0 + $0x2d6] sm:$0xff]
  %v10458 = vld [vmem:[%s0 + $0x2de] sm:$0xff]
  %v10459 = vld [vmem:[%s0 + $0x2e6] sm:$0xff]
  %v10460 = vld [vmem:[%s0 + $0x2ee] sm:$0xff]
  %v10461 = vld [vmem:[%s0 + $0x2f6] sm:$0xff]
  %v10462 = vld [vmem:[%s0 + $0x2fe] sm:$0xff]
  %v10463 = vld [vmem:[%s0 + $0x306] sm:$0xff]
  %v10464 = vld [vmem:[%s0 + $0x30e] sm:$0xff]
  %v10465 = vld [vmem:[%s0 + $0x316] sm:$0xff]
  %v10466 = vld [vmem:[%s0 + $0x31e] sm:$0xff]
  %v10467 = vld [vmem:[%s0 + $0x326] sm:$0xff]
  %v10468 = vld [vmem:[%s0 + $0x32e] sm:$0xff]
  %v10469 = vld [vmem:[%s0 + $0x336] sm:$0xff]
  %v10470 = vld [vmem:[%s0 + $0x33e] sm:$0xff]
  %v10471 = vld [vmem:[%s0 + $0x346] sm:$0xff]
  %v10472 = vld [vmem:[%s0 + $0x34e] sm:$0xff]
  %v10473 = vld [vmem:[%s0 + $0x356] sm:$0xff]
  %v10474 = vld [vmem:[%s0 + $0x35e] sm:$0xff]
  %v10475 = vld [vmem:[%s0 + $0x366] sm:$0xff]
  %v10476 = vld [vmem:[%s0 + $0x36e] sm:$0xff]
  %v10477 = vld [vmem:[%s0 + $0x376] sm:$0xff]
  %v10478 = vld [vmem:[%s0 + $0x37e] sm:$0xff]
  %v10479 = vld [vmem:[%s0 + $0x386] sm:$0xff]
  %v10480 = vld [vmem:[%s0 + $0x38e] sm:$0xff]
  %v10481 = vld [vmem:[%s0 + $0x396] sm:$0xff]
  %v10482 = vld [vmem:[%s0 + $0x39e] sm:$0xff]
  %v10483 = vld [vmem:[%s0 + $0x3a6] sm:$0xff]
  %v10484 = vld [vmem:[%s0 + $0x3ae] sm:$0xff]
  %v10485 = vld [vmem:[%s0 + $0x3b6] sm:$0xff]
  %v10486 = vld [vmem:[%s0 + $0x3be] sm:$0xff]
  %v10487 = vld [vmem:[%s0 + $0x3c6] sm:$0xff]
  %v10488 = vld [vmem:[%s0 + $0x3ce] sm:$0xff]
  %v10489 = vld [vmem:[%s0 + $0x3d6] sm:$0xff]
  %v10490 = vld [vmem:[%s0 + $0x3de] sm:$0xff]
  %v10491 = vld [vmem:[%s0 + $0x3e6] sm:$0xff]
  %v10492 = vld [vmem:[%s0 + $0x3ee] sm:$0xff]
  %v10493 = vld [vmem:[%s0 + $0x3f6] sm:$0xff]
  %v10494 = vld [vmem:[%s0 + $0x3fe] sm:$0xff]
  %v10495 = vld [vmem:[%s0 + $0x406] sm:$0xff]
  %v10496 = vld [vmem:[%s0 + $0x40e] sm:$0xff]
  %v10497 = vld [vmem:[%s0 + $0x416] sm:$0xff]
  %v10498 = vld [vmem:[%s0 + $0x41e] sm:$0xff]
  %v10499 = vld [vmem:[%s0 + $0x426] sm:$0xff]
  %v10500 = vld [vmem:[%s0 + $0x42e] sm:$0xff]
  %v10501 = vld [vmem:[%s0 + $0x436] sm:$0xff]
  %v10502 = vld [vmem:[%s0 + $0x43e] sm:$0xff]
  %v10503 = vld [vmem:[%s0 + $0x446] sm:$0xff]
  %v10504 = vld [vmem:[%s0 + $0x44e] sm:$0xff]
  %v10505 = vld [vmem:[%s0 + $0x456] sm:$0xff]
  %v10506 = vld [vmem:[%s0 + $0x45e] sm:$0xff]
  %v10507 = vld [vmem:[%s0 + $0x466] sm:$0xff]
  %v10508 = vld [vmem:[%s0 + $0x46e] sm:$0xff]
  %v10509 = vld [vmem:[%s0 + $0x476] sm:$0xff]
  %v10510 = vld [vmem:[%s0 + $0x47e] sm:$0xff]
  %v10511 = vld [vmem:[%s0 + $0x486] sm:$0xff]
  %v10512 = vld [vmem:[%s0 + $0x48e] sm:$0xff]
  %v10513 = vld [vmem:[%s0 + $0x496] sm:$0xff]
  %v10514 = vld [vmem:[%s0 + $0x49e] sm:$0xff]
  %v10515 = vld [vmem:[%s0 + $0x4a6] sm:$0xff]
  %v10516 = vld [vmem:[%s0 + $0x4ae] sm:$0xff]
  %v10517 = vld [vmem:[%s0 + $0x4b6] sm:$0xff]
  %v10518 = vld [vmem:[%s0 + $0x4be] sm:$0xff]
  %v10519 = vld [vmem:[%s0 + $0x4c6] sm:$0xff]
  %v10520 = vld [vmem:[%s0 + $0x4ce] sm:$0xff]
  %v10521 = vld [vmem:[%s0 + $0x4d6] sm:$0xff]
  %v10522 = vld [vmem:[%s0 + $0x4de] sm:$0xff]
  %v10523 = vld [vmem:[%s0 + $0x4e6] sm:$0xff]
  %v10524 = vld [vmem:[%s0 + $0x4ee] sm:$0xff]
  %v10525 = vld [vmem:[%s0 + $0x4f6] sm:$0xff]
  %v10526 = vld [vmem:[%s0 + $0x4fe] sm:$0xff]
  %v10527 = vld [vmem:[%s0 + $0x506] sm:$0xff]
  %v10528 = vld [vmem:[%s0 + $0x50e] sm:$0xff]
  %v10529 = vld [vmem:[%s0 + $0x516] sm:$0xff]
  %v10530 = vld [vmem:[%s0 + $0x51e] sm:$0xff]
  %v10531 = vld [vmem:[%s0 + $0x526] sm:$0xff]
  %v10532 = vld [vmem:[%s0 + $0x52e] sm:$0xff]
  %v10533 = vpack.c.bf16 %v10372, %v10371
  %v10534 = vpack.c.bf16 %v10374, %v10373
  %v10535 = vpack.c.bf16 %v10376, %v10375
  %v10536 = vpack.c.bf16 %v10378, %v10377
  %v10537 = vpack.c.bf16 %v10380, %v10379
  %v10538 = vpack.c.bf16 %v10382, %v10381
  %v10539 = vpack.c.bf16 %v10384, %v10383
  %v10540 = vpack.c.bf16 %v10386, %v10385
  %v10541 = vpack.c.bf16 %v10388, %v10387
  %v10542 = vpack.c.bf16 %v10390, %v10389
  %v10543 = vpack.c.bf16 %v10392, %v10391
  %v10544 = vpack.c.bf16 %v10394, %v10393
  %v10545 = vpack.c.bf16 %v10396, %v10395
  %v10546 = vpack.c.bf16 %v10398, %v10397
  %v10547 = vpack.c.bf16 %v10400, %v10399
  %v10548 = vpack.c.bf16 %v10402, %v10401
  %v10549 = vpack.c.bf16 %v10404, %v10403
  %v10550 = vpack.c.bf16 %v10406, %v10405
  %v10551 = vpack.c.bf16 %v10408, %v10407
  %v10552 = vpack.c.bf16 %v10410, %v10409
  %v10553 = vpack.c.bf16 %v10412, %v10411
  %v10554 = vpack.c.bf16 %v10414, %v10413
  %v10555 = vpack.c.bf16 %v10416, %v10415
  %v10556 = vpack.c.bf16 %v10418, %v10417
  %v10557 = vpack.c.bf16 %v10420, %v10419
  %v10558 = vpack.c.bf16 %v10422, %v10421
  %v10559 = vpack.c.bf16 %v10424, %v10423
  %v10560 = vpack.c.bf16 %v10426, %v10425
  %v10561 = vpack.c.bf16 %v10428, %v10427
  %v10562 = vpack.c.bf16 %v10430, %v10429
  %v10563 = vpack.c.bf16 %v10432, %v10431
  %v10564 = vpack.c.bf16 %v10434, %v10433
  %v10565 = vpack.c.bf16 %v10436, %v10435
  %v10566 = vpack.c.bf16 %v10438, %v10437
  %v10567 = vpack.c.bf16 %v10440, %v10439
  %v10568 = vpack.c.bf16 %v10442, %v10441
  %v10569 = vpack.c.bf16 %v10444, %v10443
  %v10570 = vpack.c.bf16 %v10446, %v10445
  %v10571 = vpack.c.bf16 %v10448, %v10447
  %v10572 = vpack.c.bf16 %v10450, %v10449
  %v10573 = vpack.c.bf16 %v10452, %v10451
  %v10574 = vpack.c.bf16 %v10454, %v10453
  %v10575 = vpack.c.bf16 %v10456, %v10455
  %v10576 = vpack.c.bf16 %v10458, %v10457
  %v10577 = vpack.c.bf16 %v10460, %v10459
  %v10578 = vpack.c.bf16 %v10462, %v10461
  %v10579 = vpack.c.bf16 %v10464, %v10463
  %v10580 = vpack.c.bf16 %v10466, %v10465
  %v10581 = vpack.c.bf16 %v10468, %v10467
  %v10582 = vpack.c.bf16 %v10470, %v10469
  %v10583 = vpack.c.bf16 %v10472, %v10471
  %v10584 = vpack.c.bf16 %v10474, %v10473
  %v10585 = vpack.c.bf16 %v10476, %v10475
  %v10586 = vpack.c.bf16 %v10478, %v10477
  %v10587 = vpack.c.bf16 %v10480, %v10479
  %v10588 = vpack.c.bf16 %v10482, %v10481
  %v10589 = vpack.c.bf16 %v10484, %v10483
  %v10590 = vpack.c.bf16 %v10486, %v10485
  %v10591 = vpack.c.bf16 %v10488, %v10487
  %v10592 = vpack.c.bf16 %v10490, %v10489
  %v10593 = vpack.c.bf16 %v10492, %v10491
  %v10594 = vpack.c.bf16 %v10494, %v10493
  %v10595 = vpack.c.bf16 %v10496, %v10495
  %v10596 = vpack.c.bf16 %v10498, %v10497
  %v10597 = vpack.c.bf16 %v10500, %v10499
  %v10598 = vpack.c.bf16 %v10502, %v10501
  %v10599 = vpack.c.bf16 %v10504, %v10503
  %v10600 = vpack.c.bf16 %v10506, %v10505
  %v10601 = vpack.c.bf16 %v10508, %v10507
  %v10602 = vpack.c.bf16 %v10510, %v10509
  %v10603 = vpack.c.bf16 %v10512, %v10511
  %v10604 = vpack.c.bf16 %v10514, %v10513
  %v10605 = vpack.c.bf16 %v10516, %v10515
  %v10606 = vpack.c.bf16 %v10518, %v10517
  %v10607 = vpack.c.bf16 %v10520, %v10519
  %v10608 = vpack.c.bf16 %v10522, %v10521
  %v10609 = vpack.c.bf16 %v10524, %v10523
  %v10610 = vpack.c.bf16 %v10526, %v10525
  %v10611 = vpack.c.bf16 %v10528, %v10527
  %v10612 = vpack.c.bf16 %v10530, %v10529
  %v10613 = vpack.c.bf16 %v10532, %v10531
  %v10614 = vld [vmem:[%s1 + $0x20] sm:$0xf]
  %v10616 = vsel %vm517, %v10533, 0
  %v10619 = vsel %vm517, %v10534, 0
  %v10622 = vsel %vm517, %v10535, 0
  %v10625 = vsel %vm517, %v10536, 0
  %v10628 = vsel %vm517, %v10537, 0
  %v10631 = vsel %vm517, %v10538, 0
  %v10634 = vsel %vm517, %v10539, 0
  %v10637 = vsel %vm517, %v10540, 0
  %v10640 = vsel %vm517, %v10541, 0
  %v10643 = vsel %vm517, %v10542, 0
  %v10646 = vsel %vm517, %v10543, 0
  %v10649 = vsel %vm517, %v10544, 0
  %v10652 = vsel %vm517, %v10545, 0
  %v10655 = vsel %vm517, %v10546, 0
  %v10658 = vsel %vm517, %v10547, 0
  %v10661 = vsel %vm517, %v10548, 0
  %v10664 = vsel %vm517, %v10549, 0
  %v10667 = vsel %vm517, %v10550, 0
  %v10670 = vsel %vm517, %v10551, 0
  %v10673 = vsel %vm517, %v10552, 0
  %v10676 = vsel %vm517, %v10553, 0
  %v10679 = vsel %vm517, %v10554, 0
  %v10682 = vsel %vm517, %v10555, 0
  %v10685 = vsel %vm517, %v10556, 0
  %v10688 = vsel %vm517, %v10557, 0
  %v10691 = vsel %vm517, %v10558, 0
  %v10694 = vsel %vm517, %v10559, 0
  %v10697 = vsel %vm517, %v10560, 0
  %v10700 = vsel %vm517, %v10561, 0
  %v10703 = vsel %vm517, %v10562, 0
  %v10706 = vsel %vm517, %v10563, 0
  %v10709 = vsel %vm517, %v10564, 0
  %v10712 = vsel %vm517, %v10565, 0
  %v10715 = vsel %vm517, %v10566, 0
  %v10718 = vsel %vm517, %v10567, 0
  %v10721 = vsel %vm517, %v10568, 0
  %v10724 = vsel %vm517, %v10569, 0
  %v10727 = vsel %vm517, %v10570, 0
  %v10730 = vsel %vm517, %v10571, 0
  %v10733 = vsel %vm517, %v10572, 0
  %v10736 = vsel %vm517, %v10573, 0
  %v10739 = vsel %vm517, %v10574, 0
  %v10742 = vsel %vm517, %v10575, 0
  %v10745 = vsel %vm517, %v10576, 0
  %v10748 = vsel %vm517, %v10577, 0
  %v10751 = vsel %vm517, %v10578, 0
  %v10754 = vsel %vm517, %v10579, 0
  %v10757 = vsel %vm517, %v10580, 0
  %v10760 = vsel %vm517, %v10581, 0
  %v10763 = vsel %vm517, %v10582, 0
  %v10766 = vsel %vm517, %v10583, 0
  %v10769 = vsel %vm517, %v10584, 0
  %v10772 = vsel %vm517, %v10585, 0
  %v10775 = vsel %vm517, %v10586, 0
  %v10778 = vsel %vm517, %v10587, 0
  %v10781 = vsel %vm517, %v10588, 0
  %v10784 = vsel %vm517, %v10589, 0
  %v10787 = vsel %vm517, %v10590, 0
  %v10790 = vsel %vm517, %v10591, 0
  %v10793 = vsel %vm517, %v10592, 0
  %v10796 = vsel %vm517, %v10593, 0
  %v10799 = vsel %vm517, %v10594, 0
  %v10802 = vsel %vm517, %v10595, 0
  %v10805 = vsel %vm517, %v10596, 0
  %v10808 = vsel %vm517, %v10597, 0
  %v10811 = vsel %vm517, %v10598, 0
  %v10814 = vsel %vm517, %v10599, 0
  %v10817 = vsel %vm517, %v10600, 0
  %v10820 = vsel %vm517, %v10601, 0
  %v10823 = vsel %vm517, %v10602, 0
  %v10826 = vsel %vm517, %v10603, 0
  %v10829 = vsel %vm517, %v10604, 0
  %v10832 = vsel %vm517, %v10605, 0
  %v10835 = vsel %vm517, %v10606, 0
  %v10838 = vsel %vm517, %v10607, 0
  %v10841 = vsel %vm517, %v10608, 0
  %v10844 = vsel %vm517, %v10609, 0
  %v10847 = vsel %vm517, %v10610, 0
  %v10850 = vsel %vm517, %v10611, 0
  %v10853 = vsel %vm517, %v10612, 0
  %v10856 = vsel %vm517, %v10613, 0
  %v10859 = vsel %vm761, %v10614, 0
  %10861 = vmatprep.subr.bf16.mxu0 0
  %10862 = vmatpush1.bf16.msra.mxu0 %v10859
  %10863 = vmatprep.subr.bf16.mxu0 0
  %10864 = vmatpush1.bf16.msra.mxu0 0
  %10865 = vmatprep.subr.bf16.mxu0 0
  %10866 = vmatpush1.bf16.msra.mxu0 0
  %10867 = vmatprep.subr.bf16.mxu0 0
  %10868 = vmatpush1.bf16.msra.mxu0 0
  %10869 = vmatprep.subr.bf16.mxu0 0
  %10870 = vmatpush1.bf16.msra.mxu0 0
  %10871 = vmatprep.subr.bf16.mxu0 0
  %10872 = vmatpush1.bf16.msra.mxu0 0
  %10873 = vmatprep.subr.bf16.mxu0 0
  %10874 = vmatpush1.bf16.msra.mxu0 0
  %10875 = vmatprep.subr.bf16.mxu0 0
  %10876 = vmatpush1.bf16.msra.mxu0 0
  %10877 = vmatprep.subr.bf16.mxu0 0
  %10878 = vmatpush1.bf16.msra.mxu0 0
  %10879 = vmatprep.subr.bf16.mxu0 0
  %10880 = vmatpush1.bf16.msra.mxu0 0
  %10881 = vmatprep.subr.bf16.mxu0 0
  %10882 = vmatpush1.bf16.msra.mxu0 0
  %10883 = vmatprep.subr.bf16.mxu0 0
  %10884 = vmatpush1.bf16.msra.mxu0 0
  %10885 = vmatprep.subr.bf16.mxu0 0
  %10886 = vmatpush1.bf16.msra.mxu0 0
  %10887 = vmatprep.subr.bf16.mxu0 0
  %10888 = vmatpush1.bf16.msra.mxu0 0
  %10889 = vmatprep.subr.bf16.mxu0 0
  %10890 = vmatpush1.bf16.msra.mxu0 0
  %10891 = vmatprep.subr.bf16.mxu0 0
  %10892 = vmatpush1.bf16.msra.mxu0 0
  %10893 = vmatprep.mubr.bf16.mxu0 0
  %10894 = vmatmul.mubr.bf16.gmra.mrb[0].mxu0 %v10616
  %v10895 = vpop.f32.mrb[0].mxu0
  %v10896 = vadd.f32 0.0, %v10895
  %v10897 = vpop.f32.mrb[0].mxu0
  %v10898 = vpop.f32.mrb[0].mxu0
  %v10899 = vadd.f32 0.0, %v10898
  %v10900 = vpop.f32.mrb[0].mxu0
  %10901 = vmatprep.mubr.bf16.mxu0 0
  %10902 = vmatmul.mubr.bf16.gmra.mrb[0].mxu0 %v10619
  %v10903 = vpop.f32.mrb[0].mxu0
  %v10904 = vadd.f32 0.0, %v10903
  %v10905 = vpop.f32.mrb[0].mxu0
  %v10906 = vpop.f32.mrb[0].mxu0
  %v10907 = vadd.f32 0.0, %v10906
  %v10908 = vpop.f32.mrb[0].mxu0
  %10909 = vmatprep.mubr.bf16.mxu0 0
  %10910 = vmatmul.mubr.bf16.gmra.mrb[0].mxu0 %v10622
  %v10911 = vpop.f32.mrb[0].mxu0
  %v10912 = vadd.f32 0.0, %v10911
  %v10913 = vpop.f32.mrb[0].mxu0
  %v10914 = vpop.f32.mrb[0].mxu0
  %v10915 = vadd.f32 0.0, %v10914
  %v10916 = vpop.f32.mrb[0].mxu0
  %10917 = vmatprep.mubr.bf16.mxu0 0
  %10918 = vmatmul.mubr.bf16.gmra.mrb[0].mxu0 %v10625
  %v10919 = vpop.f32.mrb[0].mxu0
  %v10920 = vadd.f32 0.0, %v10919
  %v10921 = vpop.f32.mrb[0].mxu0
  %v10922 = vpop.f32.mrb[0].mxu0
  %v10923 = vadd.f32 0.0, %v10922
  %v10924 = vpop.f32.mrb[0].mxu0
  %10925 = vmatprep.mubr.bf16.mxu0 0
  %10926 = vmatmul.mubr.bf16.gmra.mrb[0].mxu0 %v10628
  %v10927 = vpop.f32.mrb[0].mxu0
  %v10928 = vadd.f32 0.0, %v10927
  %v10929 = vpop.f32.mrb[0].mxu0
  %v10930 = vpop.f32.mrb[0].mxu0
  %v10931 = vadd.f32 0.0, %v10930
  %v10932 = vpop.f32.mrb[0].mxu0
  %10933 = vmatprep.mubr.bf16.mxu0 0
  %10934 = vmatmul.mubr.bf16.gmra.mrb[0].mxu0 %v10631
  %v10935 = vpop.f32.mrb[0].mxu0
  %v10936 = vadd.f32 0.0, %v10935
  %v10937 = vpop.f32.mrb[0].mxu0
  %v10938 = vpop.f32.mrb[0].mxu0
  %v10939 = vadd.f32 0.0, %v10938
  %v10940 = vpop.f32.mrb[0].mxu0
  %10941 = vmatprep.mubr.bf16.mxu0 0
  %10942 = vmatmul.mubr.bf16.gmra.mrb[0].mxu0 %v10634
  %v10943 = vpop.f32.mrb[0].mxu0
  %v10944 = vadd.f32 0.0, %v10943
  %v10945 = vpop.f32.mrb[0].mxu0
  %v10946 = vpop.f32.mrb[0].mxu0
  %v10947 = vadd.f32 0.0, %v10946
  %v10948 = vpop.f32.mrb[0].mxu0
  %10949 = vmatprep.mubr.bf16.mxu0 0
  %10950 = vmatmul.mubr.bf16.gmra.mrb[0].mxu0 %v10637
  %v10951 = vpop.f32.mrb[0].mxu0
  %v10952 = vadd.f32 0.0, %v10951
  %v10953 = vpop.f32.mrb[0].mxu0
  %v10954 = vpop.f32.mrb[0].mxu0
  %v10955 = vadd.f32 0.0, %v10954
  %v10956 = vpop.f32.mrb[0].mxu0
  %10957 = vmatprep.mubr.bf16.mxu0 0
  %10958 = vmatmul.mubr.bf16.gmra.mrb[0].mxu0 %v10640
  %v10959 = vpop.f32.mrb[0].mxu0
  %v10960 = vadd.f32 0.0, %v10959
  %v10961 = vpop.f32.mrb[0].mxu0
  %v10962 = vpop.f32.mrb[0].mxu0
  %v10963 = vadd.f32 0.0, %v10962
  %v10964 = vpop.f32.mrb[0].mxu0
  %10965 = vmatprep.mubr.bf16.mxu0 0
  %10966 = vmatmul.mubr.bf16.gmra.mrb[0].mxu0 %v10643
  %v10967 = vpop.f32.mrb[0].mxu0
  %v10968 = vadd.f32 0.0, %v10967
  %v10969 = vpop.f32.mrb[0].mxu0
  %v10970 = vpop.f32.mrb[0].mxu0
  %v10971 = vadd.f32 0.0, %v10970
  %v10972 = vpop.f32.mrb[0].mxu0
  %10973 = vmatprep.mubr.bf16.mxu0 0
  %10974 = vmatmul.mubr.bf16.gmra.mrb[0].mxu0 %v10646
  %v10975 = vpop.f32.mrb[0].mxu0
  %v10976 = vadd.f32 0.0, %v10975
  %v10977 = vpop.f32.mrb[0].mxu0
  %v10978 = vpop.f32.mrb[0].mxu0
  %v10979 = vadd.f32 0.0, %v10978
  %v10980 = vpop.f32.mrb[0].mxu0
  %10981 = vmatprep.mubr.bf16.mxu0 0
  %10982 = vmatmul.mubr.bf16.gmra.mrb[0].mxu0 %v10649
  %v10983 = vpop.f32.mrb[0].mxu0
  %v10984 = vadd.f32 0.0, %v10983
  %v10985 = vpop.f32.mrb[0].mxu0
  %v10986 = vpop.f32.mrb[0].mxu0
  %v10987 = vadd.f32 0.0, %v10986
  %v10988 = vpop.f32.mrb[0].mxu0
  %10989 = vmatprep.mubr.bf16.mxu0 0
  %10990 = vmatmul.mubr.bf16.gmra.mrb[0].mxu0 %v10652
  %v10991 = vpop.f32.mrb[0].mxu0
  %v10992 = vadd.f32 0.0, %v10991
  %v10993 = vpop.f32.mrb[0].mxu0
  %v10994 = vpop.f32.mrb[0].mxu0
  %v10995 = vadd.f32 0.0, %v10994
  %v10996 = vpop.f32.mrb[0].mxu0
  %10997 = vmatprep.mubr.bf16.mxu0 0
  %10998 = vmatmul.mubr.bf16.gmra.mrb[0].mxu0 %v10655
  %v10999 = vpop.f32.mrb[0].mxu0
  %v11000 = vadd.f32 0.0, %v10999
  %v11001 = vpop.f32.mrb[0].mxu0
  %v11002 = vpop.f32.mrb[0].mxu0
  %v11003 = vadd.f32 0.0, %v11002
  %v11004 = vpop.f32.mrb[0].mxu0
  %11005 = vmatprep.mubr.bf16.mxu0 0
  %11006 = vmatmul.mubr.bf16.gmra.mrb[0].mxu0 %v10658
  %v11007 = vpop.f32.mrb[0].mxu0
  %v11008 = vadd.f32 0.0, %v11007
  %v11009 = vpop.f32.mrb[0].mxu0
  %v11010 = vpop.f32.mrb[0].mxu0
  %v11011 = vadd.f32 0.0, %v11010
  %v11012 = vpop.f32.mrb[0].mxu0
  %11013 = vmatprep.mubr.bf16.mxu0 0
  %11014 = vmatmul.mubr.bf16.gmra.mrb[0].mxu0 %v10661
  %v11015 = vpop.f32.mrb[0].mxu0
  %v11016 = vadd.f32 0.0, %v11015
  %v11017 = vpop.f32.mrb[0].mxu0
  %v11018 = vpop.f32.mrb[0].mxu0
  %v11019 = vadd.f32 0.0, %v11018
  %v11020 = vpop.f32.mrb[0].mxu0
  %11021 = vmatprep.mubr.bf16.mxu0 0
  %11022 = vmatmul.mubr.bf16.gmra.mrb[0].mxu0 %v10664
  %v11023 = vpop.f32.mrb[0].mxu0
  %v11024 = vadd.f32 0.0, %v11023
  %v11025 = vpop.f32.mrb[0].mxu0
  %v11026 = vpop.f32.mrb[0].mxu0
  %v11027 = vadd.f32 0.0, %v11026
  %v11028 = vpop.f32.mrb[0].mxu0
  %11029 = vmatprep.mubr.bf16.mxu0 0
  %11030 = vmatmul.mubr.bf16.gmra.mrb[0].mxu0 %v10667
  %v11031 = vpop.f32.mrb[0].mxu0
  %v11032 = vadd.f32 0.0, %v11031
  %v11033 = vpop.f32.mrb[0].mxu0
  %v11034 = vpop.f32.mrb[0].mxu0
  %v11035 = vadd.f32 0.0, %v11034
  %v11036 = vpop.f32.mrb[0].mxu0
  %11037 = vmatprep.mubr.bf16.mxu0 0
  %11038 = vmatmul.mubr.bf16.gmra.mrb[0].mxu0 %v10670
  %v11039 = vpop.f32.mrb[0].mxu0
  %v11040 = vadd.f32 0.0, %v11039
  %v11041 = vpop.f32.mrb[0].mxu0
  %v11042 = vpop.f32.mrb[0].mxu0
  %v11043 = vadd.f32 0.0, %v11042
  %v11044 = vpop.f32.mrb[0].mxu0
  %11045 = vmatprep.mubr.bf16.mxu0 0
  %11046 = vmatmul.mubr.bf16.gmra.mrb[0].mxu0 %v10673
  %v11047 = vpop.f32.mrb[0].mxu0
  %v11048 = vadd.f32 0.0, %v11047
  %v11049 = vpop.f32.mrb[0].mxu0
  %v11050 = vpop.f32.mrb[0].mxu0
  %v11051 = vadd.f32 0.0, %v11050
  %v11052 = vpop.f32.mrb[0].mxu0
  %11053 = vmatprep.mubr.bf16.mxu0 0
  %11054 = vmatmul.mubr.bf16.gmra.mrb[0].mxu0 %v10676
  %v11055 = vpop.f32.mrb[0].mxu0
  %v11056 = vadd.f32 0.0, %v11055
  %v11057 = vpop.f32.mrb[0].mxu0
  %v11058 = vpop.f32.mrb[0].mxu0
  %v11059 = vadd.f32 0.0, %v11058
  %v11060 = vpop.f32.mrb[0].mxu0
  %11061 = vmatprep.mubr.bf16.mxu0 0
  %11062 = vmatmul.mubr.bf16.gmra.mrb[0].mxu0 %v10679
  %v11063 = vpop.f32.mrb[0].mxu0
  %v11064 = vadd.f32 0.0, %v11063
  %v11065 = vpop.f32.mrb[0].mxu0
  %v11066 = vpop.f32.mrb[0].mxu0
  %v11067 = vadd.f32 0.0, %v11066
  %v11068 = vpop.f32.mrb[0].mxu0
  %11069 = vmatprep.mubr.bf16.mxu0 0
  %11070 = vmatmul.mubr.bf16.gmra.mrb[0].mxu0 %v10682
  %v11071 = vpop.f32.mrb[0].mxu0
  %v11072 = vadd.f32 0.0, %v11071
  %v11073 = vpop.f32.mrb[0].mxu0
  %v11074 = vpop.f32.mrb[0].mxu0
  %v11075 = vadd.f32 0.0, %v11074
  %v11076 = vpop.f32.mrb[0].mxu0
  %11077 = vmatprep.mubr.bf16.mxu0 0
  %11078 = vmatmul.mubr.bf16.gmra.mrb[0].mxu0 %v10685
  %v11079 = vpop.f32.mrb[0].mxu0
  %v11080 = vadd.f32 0.0, %v11079
  %v11081 = vpop.f32.mrb[0].mxu0
  %v11082 = vpop.f32.mrb[0].mxu0
  %v11083 = vadd.f32 0.0, %v11082
  %v11084 = vpop.f32.mrb[0].mxu0
  %11085 = vmatprep.mubr.bf16.mxu0 0
  %11086 = vmatmul.mubr.bf16.gmra.mrb[0].mxu0 %v10688
  %v11087 = vpop.f32.mrb[0].mxu0
  %v11088 = vadd.f32 0.0, %v11087
  %v11089 = vpop.f32.mrb[0].mxu0
  %v11090 = vpop.f32.mrb[0].mxu0
  %v11091 = vadd.f32 0.0, %v11090
  %v11092 = vpop.f32.mrb[0].mxu0
  %11093 = vmatprep.mubr.bf16.mxu0 0
  %11094 = vmatmul.mubr.bf16.gmra.mrb[0].mxu0 %v10691
  %v11095 = vpop.f32.mrb[0].mxu0
  %v11096 = vadd.f32 0.0, %v11095
  %v11097 = vpop.f32.mrb[0].mxu0
  %v11098 = vpop.f32.mrb[0].mxu0
  %v11099 = vadd.f32 0.0, %v11098
  %v11100 = vpop.f32.mrb[0].mxu0
  %11101 = vmatprep.mubr.bf16.mxu0 0
  %11102 = vmatmul.mubr.bf16.gmra.mrb[0].mxu0 %v10694
  %v11103 = vpop.f32.mrb[0].mxu0
  %v11104 = vadd.f32 0.0, %v11103
  %v11105 = vpop.f32.mrb[0].mxu0
  %v11106 = vpop.f32.mrb[0].mxu0
  %v11107 = vadd.f32 0.0, %v11106
  %v11108 = vpop.f32.mrb[0].mxu0
  %11109 = vmatprep.mubr.bf16.mxu0 0
  %11110 = vmatmul.mubr.bf16.gmra.mrb[0].mxu0 %v10697
  %v11111 = vpop.f32.mrb[0].mxu0
  %v11112 = vadd.f32 0.0, %v11111
  %v11113 = vpop.f32.mrb[0].mxu0
  %v11114 = vpop.f32.mrb[0].mxu0
  %v11115 = vadd.f32 0.0, %v11114
  %v11116 = vpop.f32.mrb[0].mxu0
  %11117 = vmatprep.mubr.bf16.mxu0 0
  %11118 = vmatmul.mubr.bf16.gmra.mrb[0].mxu0 %v10700
  %v11119 = vpop.f32.mrb[0].mxu0
  %v11120 = vadd.f32 0.0, %v11119
  %v11121 = vpop.f32.mrb[0].mxu0
  %v11122 = vpop.f32.mrb[0].mxu0
  %v11123 = vadd.f32 0.0, %v11122
  %v11124 = vpop.f32.mrb[0].mxu0
  %11125 = vmatprep.mubr.bf16.mxu0 0
  %11126 = vmatmul.mubr.bf16.gmra.mrb[0].mxu0 %v10703
  %v11127 = vpop.f32.mrb[0].mxu0
  %v11128 = vadd.f32 0.0, %v11127
  %v11129 = vpop.f32.mrb[0].mxu0
  %v11130 = vpop.f32.mrb[0].mxu0
  %v11131 = vadd.f32 0.0, %v11130
  %v11132 = vpop.f32.mrb[0].mxu0
  %11133 = vmatprep.mubr.bf16.mxu0 0
  %11134 = vmatmul.mubr.bf16.gmra.mrb[0].mxu0 %v10706
  %v11135 = vpop.f32.mrb[0].mxu0
  %v11136 = vadd.f32 0.0, %v11135
  %v11137 = vpop.f32.mrb[0].mxu0
  %v11138 = vpop.f32.mrb[0].mxu0
  %v11139 = vadd.f32 0.0, %v11138
  %v11140 = vpop.f32.mrb[0].mxu0
  %11141 = vmatprep.mubr.bf16.mxu0 0
  %11142 = vmatmul.mubr.bf16.gmra.mrb[0].mxu0 %v10709
  %v11143 = vpop.f32.mrb[0].mxu0
  %v11144 = vadd.f32 0.0, %v11143
  %v11145 = vpop.f32.mrb[0].mxu0
  %v11146 = vpop.f32.mrb[0].mxu0
  %v11147 = vadd.f32 0.0, %v11146
  %v11148 = vpop.f32.mrb[0].mxu0
  %11149 = vmatprep.mubr.bf16.mxu0 0
  %11150 = vmatmul.mubr.bf16.gmra.mrb[0].mxu0 %v10712
  %v11151 = vpop.f32.mrb[0].mxu0
  %v11152 = vadd.f32 0.0, %v11151
  %v11153 = vpop.f32.mrb[0].mxu0
  %v11154 = vpop.f32.mrb[0].mxu0
  %v11155 = vadd.f32 0.0, %v11154
  %v11156 = vpop.f32.mrb[0].mxu0
  %11157 = vmatprep.mubr.bf16.mxu0 0
  %11158 = vmatmul.mubr.bf16.gmra.mrb[0].mxu0 %v10715
  %v11159 = vpop.f32.mrb[0].mxu0
  %v11160 = vadd.f32 0.0, %v11159
  %v11161 = vpop.f32.mrb[0].mxu0
  %v11162 = vpop.f32.mrb[0].mxu0
  %v11163 = vadd.f32 0.0, %v11162
  %v11164 = vpop.f32.mrb[0].mxu0
  %11165 = vmatprep.mubr.bf16.mxu0 0
  %11166 = vmatmul.mubr.bf16.gmra.mrb[0].mxu0 %v10718
  %v11167 = vpop.f32.mrb[0].mxu0
  %v11168 = vadd.f32 0.0, %v11167
  %v11169 = vpop.f32.mrb[0].mxu0
  %v11170 = vpop.f32.mrb[0].mxu0
  %v11171 = vadd.f32 0.0, %v11170
  %v11172 = vpop.f32.mrb[0].mxu0
  %11173 = vmatprep.mubr.bf16.mxu0 0
  %11174 = vmatmul.mubr.bf16.gmra.mrb[0].mxu0 %v10721
  %v11175 = vpop.f32.mrb[0].mxu0
  %v11176 = vadd.f32 0.0, %v11175
  %v11177 = vpop.f32.mrb[0].mxu0
  %v11178 = vpop.f32.mrb[0].mxu0
  %v11179 = vadd.f32 0.0, %v11178
  %v11180 = vpop.f32.mrb[0].mxu0
  %11181 = vmatprep.mubr.bf16.mxu0 0
  %11182 = vmatmul.mubr.bf16.gmra.mrb[0].mxu0 %v10724
  %v11183 = vpop.f32.mrb[0].mxu0
  %v11184 = vadd.f32 0.0, %v11183
  %v11185 = vpop.f32.mrb[0].mxu0
  %v11186 = vpop.f32.mrb[0].mxu0
  %v11187 = vadd.f32 0.0, %v11186
  %v11188 = vpop.f32.mrb[0].mxu0
  %11189 = vmatprep.mubr.bf16.mxu0 0
  %11190 = vmatmul.mubr.bf16.gmra.mrb[0].mxu0 %v10727
  %v11191 = vpop.f32.mrb[0].mxu0
  %v11192 = vadd.f32 0.0, %v11191
  %v11193 = vpop.f32.mrb[0].mxu0
  %v11194 = vpop.f32.mrb[0].mxu0
  %v11195 = vadd.f32 0.0, %v11194
  %v11196 = vpop.f32.mrb[0].mxu0
  %11197 = vmatprep.mubr.bf16.mxu0 0
  %11198 = vmatmul.mubr.bf16.gmra.mrb[0].mxu0 %v10730
  %v11199 = vpop.f32.mrb[0].mxu0
  %v11200 = vadd.f32 0.0, %v11199
  %v11201 = vpop.f32.mrb[0].mxu0
  %v11202 = vpop.f32.mrb[0].mxu0
  %v11203 = vadd.f32 0.0, %v11202
  %v11204 = vpop.f32.mrb[0].mxu0
  %11205 = vmatprep.mubr.bf16.mxu0 0
  %11206 = vmatmul.mubr.bf16.gmra.mrb[0].mxu0 %v10733
  %v11207 = vpop.f32.mrb[0].mxu0
  %v11208 = vadd.f32 0.0, %v11207
  %v11209 = vpop.f32.mrb[0].mxu0
  %v11210 = vpop.f32.mrb[0].mxu0
  %v11211 = vadd.f32 0.0, %v11210
  %v11212 = vpop.f32.mrb[0].mxu0
  %11213 = vmatprep.mubr.bf16.mxu0 0
  %11214 = vmatmul.mubr.bf16.gmra.mrb[0].mxu0 %v10736
  %v11215 = vpop.f32.mrb[0].mxu0
  %v11216 = vadd.f32 0.0, %v11215
  %v11217 = vpop.f32.mrb[0].mxu0
  %v11218 = vpop.f32.mrb[0].mxu0
  %v11219 = vadd.f32 0.0, %v11218
  %v11220 = vpop.f32.mrb[0].mxu0
  %11221 = vmatprep.mubr.bf16.mxu0 0
  %11222 = vmatmul.mubr.bf16.gmra.mrb[0].mxu0 %v10739
  %v11223 = vpop.f32.mrb[0].mxu0
  %v11224 = vadd.f32 0.0, %v11223
  %v11225 = vpop.f32.mrb[0].mxu0
  %v11226 = vpop.f32.mrb[0].mxu0
  %v11227 = vadd.f32 0.0, %v11226
  %v11228 = vpop.f32.mrb[0].mxu0
  %11229 = vmatprep.mubr.bf16.mxu0 0
  %11230 = vmatmul.mubr.bf16.gmra.mrb[0].mxu0 %v10742
  %v11231 = vpop.f32.mrb[0].mxu0
  %v11232 = vadd.f32 0.0, %v11231
  %v11233 = vpop.f32.mrb[0].mxu0
  %v11234 = vpop.f32.mrb[0].mxu0
  %v11235 = vadd.f32 0.0, %v11234
  %v11236 = vpop.f32.mrb[0].mxu0
  %11237 = vmatprep.mubr.bf16.mxu0 0
  %11238 = vmatmul.mubr.bf16.gmra.mrb[0].mxu0 %v10745
  %v11239 = vpop.f32.mrb[0].mxu0
  %v11240 = vadd.f32 0.0, %v11239
  %v11241 = vpop.f32.mrb[0].mxu0
  %v11242 = vpop.f32.mrb[0].mxu0
  %v11243 = vadd.f32 0.0, %v11242
  %v11244 = vpop.f32.mrb[0].mxu0
  %11245 = vmatprep.mubr.bf16.mxu0 0
  %11246 = vmatmul.mubr.bf16.gmra.mrb[0].mxu0 %v10748
  %v11247 = vpop.f32.mrb[0].mxu0
  %v11248 = vadd.f32 0.0, %v11247
  %v11249 = vpop.f32.mrb[0].mxu0
  %v11250 = vpop.f32.mrb[0].mxu0
  %v11251 = vadd.f32 0.0, %v11250
  %v11252 = vpop.f32.mrb[0].mxu0
  %11253 = vmatprep.mubr.bf16.mxu0 0
  %11254 = vmatmul.mubr.bf16.gmra.mrb[0].mxu0 %v10751
  %v11255 = vpop.f32.mrb[0].mxu0
  %v11256 = vadd.f32 0.0, %v11255
  %v11257 = vpop.f32.mrb[0].mxu0
  %v11258 = vpop.f32.mrb[0].mxu0
  %v11259 = vadd.f32 0.0, %v11258
  %v11260 = vpop.f32.mrb[0].mxu0
  %11261 = vmatprep.mubr.bf16.mxu0 0
  %11262 = vmatmul.mubr.bf16.gmra.mrb[0].mxu0 %v10754
  %v11263 = vpop.f32.mrb[0].mxu0
  %v11264 = vadd.f32 0.0, %v11263
  %v11265 = vpop.f32.mrb[0].mxu0
  %v11266 = vpop.f32.mrb[0].mxu0
  %v11267 = vadd.f32 0.0, %v11266
  %v11268 = vpop.f32.mrb[0].mxu0
  %11269 = vmatprep.mubr.bf16.mxu0 0
  %11270 = vmatmul.mubr.bf16.gmra.mrb[0].mxu0 %v10757
  %v11271 = vpop.f32.mrb[0].mxu0
  %v11272 = vadd.f32 0.0, %v11271
  %v11273 = vpop.f32.mrb[0].mxu0
  %v11274 = vpop.f32.mrb[0].mxu0
  %v11275 = vadd.f32 0.0, %v11274
  %v11276 = vpop.f32.mrb[0].mxu0
  %11277 = vmatprep.mubr.bf16.mxu0 0
  %11278 = vmatmul.mubr.bf16.gmra.mrb[0].mxu0 %v10760
  %v11279 = vpop.f32.mrb[0].mxu0
  %v11280 = vadd.f32 0.0, %v11279
  %v11281 = vpop.f32.mrb[0].mxu0
  %v11282 = vpop.f32.mrb[0].mxu0
  %v11283 = vadd.f32 0.0, %v11282
  %v11284 = vpop.f32.mrb[0].mxu0
  %11285 = vmatprep.mubr.bf16.mxu0 0
  %11286 = vmatmul.mubr.bf16.gmra.mrb[0].mxu0 %v10763
  %v11287 = vpop.f32.mrb[0].mxu0
  %v11288 = vadd.f32 0.0, %v11287
  %v11289 = vpop.f32.mrb[0].mxu0
  %v11290 = vpop.f32.mrb[0].mxu0
  %v11291 = vadd.f32 0.0, %v11290
  %v11292 = vpop.f32.mrb[0].mxu0
  %11293 = vmatprep.mubr.bf16.mxu0 0
  %11294 = vmatmul.mubr.bf16.gmra.mrb[0].mxu0 %v10766
  %v11295 = vpop.f32.mrb[0].mxu0
  %v11296 = vadd.f32 0.0, %v11295
  %v11297 = vpop.f32.mrb[0].mxu0
  %v11298 = vpop.f32.mrb[0].mxu0
  %v11299 = vadd.f32 0.0, %v11298
  %v11300 = vpop.f32.mrb[0].mxu0
  %11301 = vmatprep.mubr.bf16.mxu0 0
  %11302 = vmatmul.mubr.bf16.gmra.mrb[0].mxu0 %v10769
  %v11303 = vpop.f32.mrb[0].mxu0
  %v11304 = vadd.f32 0.0, %v11303
  %v11305 = vpop.f32.mrb[0].mxu0
  %v11306 = vpop.f32.mrb[0].mxu0
  %v11307 = vadd.f32 0.0, %v11306
  %v11308 = vpop.f32.mrb[0].mxu0
  %11309 = vmatprep.mubr.bf16.mxu0 0
  %11310 = vmatmul.mubr.bf16.gmra.mrb[0].mxu0 %v10772
  %v11311 = vpop.f32.mrb[0].mxu0
  %v11312 = vadd.f32 0.0, %v11311
  %v11313 = vpop.f32.mrb[0].mxu0
  %v11314 = vpop.f32.mrb[0].mxu0
  %v11315 = vadd.f32 0.0, %v11314
  %v11316 = vpop.f32.mrb[0].mxu0
  %11317 = vmatprep.mubr.bf16.mxu0 0
  %11318 = vmatmul.mubr.bf16.gmra.mrb[0].mxu0 %v10775
  %v11319 = vpop.f32.mrb[0].mxu0
  %v11320 = vadd.f32 0.0, %v11319
  %v11321 = vpop.f32.mrb[0].mxu0
  %v11322 = vpop.f32.mrb[0].mxu0
  %v11323 = vadd.f32 0.0, %v11322
  %v11324 = vpop.f32.mrb[0].mxu0
  %11325 = vmatprep.mubr.bf16.mxu0 0
  %11326 = vmatmul.mubr.bf16.gmra.mrb[0].mxu0 %v10778
  %v11327 = vpop.f32.mrb[0].mxu0
  %v11328 = vadd.f32 0.0, %v11327
  %v11329 = vpop.f32.mrb[0].mxu0
  %v11330 = vpop.f32.mrb[0].mxu0
  %v11331 = vadd.f32 0.0, %v11330
  %v11332 = vpop.f32.mrb[0].mxu0
  %11333 = vmatprep.mubr.bf16.mxu0 0
  %11334 = vmatmul.mubr.bf16.gmra.mrb[0].mxu0 %v10781
  %v11335 = vpop.f32.mrb[0].mxu0
  %v11336 = vadd.f32 0.0, %v11335
  %v11337 = vpop.f32.mrb[0].mxu0
  %v11338 = vpop.f32.mrb[0].mxu0
  %v11339 = vadd.f32 0.0, %v11338
  %v11340 = vpop.f32.mrb[0].mxu0
  %11341 = vmatprep.mubr.bf16.mxu0 0
  %11342 = vmatmul.mubr.bf16.gmra.mrb[0].mxu0 %v10784
  %v11343 = vpop.f32.mrb[0].mxu0
  %v11344 = vadd.f32 0.0, %v11343
  %v11345 = vpop.f32.mrb[0].mxu0
  %v11346 = vpop.f32.mrb[0].mxu0
  %v11347 = vadd.f32 0.0, %v11346
  %v11348 = vpop.f32.mrb[0].mxu0
  %11349 = vmatprep.mubr.bf16.mxu0 0
  %11350 = vmatmul.mubr.bf16.gmra.mrb[0].mxu0 %v10787
  %v11351 = vpop.f32.mrb[0].mxu0
  %v11352 = vadd.f32 0.0, %v11351
  %v11353 = vpop.f32.mrb[0].mxu0
  %v11354 = vpop.f32.mrb[0].mxu0
  %v11355 = vadd.f32 0.0, %v11354
  %v11356 = vpop.f32.mrb[0].mxu0
  %11357 = vmatprep.mubr.bf16.mxu0 0
  %11358 = vmatmul.mubr.bf16.gmra.mrb[0].mxu0 %v10790
  %v11359 = vpop.f32.mrb[0].mxu0
  %v11360 = vadd.f32 0.0, %v11359
  %v11361 = vpop.f32.mrb[0].mxu0
  %v11362 = vpop.f32.mrb[0].mxu0
  %v11363 = vadd.f32 0.0, %v11362
  %v11364 = vpop.f32.mrb[0].mxu0
  %11365 = vmatprep.mubr.bf16.mxu0 0
  %11366 = vmatmul.mubr.bf16.gmra.mrb[0].mxu0 %v10793
  %v11367 = vpop.f32.mrb[0].mxu0
  %v11368 = vadd.f32 0.0, %v11367
  %v11369 = vpop.f32.mrb[0].mxu0
  %v11370 = vpop.f32.mrb[0].mxu0
  %v11371 = vadd.f32 0.0, %v11370
  %v11372 = vpop.f32.mrb[0].mxu0
  %11373 = vmatprep.mubr.bf16.mxu0 0
  %11374 = vmatmul.mubr.bf16.gmra.mrb[0].mxu0 %v10796
  %v11375 = vpop.f32.mrb[0].mxu0
  %v11376 = vadd.f32 0.0, %v11375
  %v11377 = vpop.f32.mrb[0].mxu0
  %v11378 = vpop.f32.mrb[0].mxu0
  %v11379 = vadd.f32 0.0, %v11378
  %v11380 = vpop.f32.mrb[0].mxu0
  %11381 = vmatprep.mubr.bf16.mxu0 0
  %11382 = vmatmul.mubr.bf16.gmra.mrb[0].mxu0 %v10799
  %v11383 = vpop.f32.mrb[0].mxu0
  %v11384 = vadd.f32 0.0, %v11383
  %v11385 = vpop.f32.mrb[0].mxu0
  %v11386 = vpop.f32.mrb[0].mxu0
  %v11387 = vadd.f32 0.0, %v11386
  %v11388 = vpop.f32.mrb[0].mxu0
  %11389 = vmatprep.mubr.bf16.mxu0 0
  %11390 = vmatmul.mubr.bf16.gmra.mrb[0].mxu0 %v10802
  %v11391 = vpop.f32.mrb[0].mxu0
  %v11392 = vadd.f32 0.0, %v11391
  %v11393 = vpop.f32.mrb[0].mxu0
  %v11394 = vpop.f32.mrb[0].mxu0
  %v11395 = vadd.f32 0.0, %v11394
  %v11396 = vpop.f32.mrb[0].mxu0
  %11397 = vmatprep.mubr.bf16.mxu0 0
  %11398 = vmatmul.mubr.bf16.gmra.mrb[0].mxu0 %v10805
  %v11399 = vpop.f32.mrb[0].mxu0
  %v11400 = vadd.f32 0.0, %v11399
  %v11401 = vpop.f32.mrb[0].mxu0
  %v11402 = vpop.f32.mrb[0].mxu0
  %v11403 = vadd.f32 0.0, %v11402
  %v11404 = vpop.f32.mrb[0].mxu0
  %11405 = vmatprep.mubr.bf16.mxu0 0
  %11406 = vmatmul.mubr.bf16.gmra.mrb[0].mxu0 %v10808
  %v11407 = vpop.f32.mrb[0].mxu0
  %v11408 = vadd.f32 0.0, %v11407
  %v11409 = vpop.f32.mrb[0].mxu0
  %v11410 = vpop.f32.mrb[0].mxu0
  %v11411 = vadd.f32 0.0, %v11410
  %v11412 = vpop.f32.mrb[0].mxu0
  %11413 = vmatprep.mubr.bf16.mxu0 0
  %11414 = vmatmul.mubr.bf16.gmra.mrb[0].mxu0 %v10811
  %v11415 = vpop.f32.mrb[0].mxu0
  %v11416 = vadd.f32 0.0, %v11415
  %v11417 = vpop.f32.mrb[0].mxu0
  %v11418 = vpop.f32.mrb[0].mxu0
  %v11419 = vadd.f32 0.0, %v11418
  %v11420 = vpop.f32.mrb[0].mxu0
  %11421 = vmatprep.mubr.bf16.mxu0 0
  %11422 = vmatmul.mubr.bf16.gmra.mrb[0].mxu0 %v10814
  %v11423 = vpop.f32.mrb[0].mxu0
  %v11424 = vadd.f32 0.0, %v11423
  %v11425 = vpop.f32.mrb[0].mxu0
  %v11426 = vpop.f32.mrb[0].mxu0
  %v11427 = vadd.f32 0.0, %v11426
  %v11428 = vpop.f32.mrb[0].mxu0
  %11429 = vmatprep.mubr.bf16.mxu0 0
  %11430 = vmatmul.mubr.bf16.gmra.mrb[0].mxu0 %v10817
  %v11431 = vpop.f32.mrb[0].mxu0
  %v11432 = vadd.f32 0.0, %v11431
  %v11433 = vpop.f32.mrb[0].mxu0
  %v11434 = vpop.f32.mrb[0].mxu0
  %v11435 = vadd.f32 0.0, %v11434
  %v11436 = vpop.f32.mrb[0].mxu0
  %11437 = vmatprep.mubr.bf16.mxu0 0
  %11438 = vmatmul.mubr.bf16.gmra.mrb[0].mxu0 %v10820
  %v11439 = vpop.f32.mrb[0].mxu0
  %v11440 = vadd.f32 0.0, %v11439
  %v11441 = vpop.f32.mrb[0].mxu0
  %v11442 = vpop.f32.mrb[0].mxu0
  %v11443 = vadd.f32 0.0, %v11442
  %v11444 = vpop.f32.mrb[0].mxu0
  %11445 = vmatprep.mubr.bf16.mxu0 0
  %11446 = vmatmul.mubr.bf16.gmra.mrb[0].mxu0 %v10823
  %v11447 = vpop.f32.mrb[0].mxu0
  %v11448 = vadd.f32 0.0, %v11447
  %v11449 = vpop.f32.mrb[0].mxu0
  %v11450 = vpop.f32.mrb[0].mxu0
  %v11451 = vadd.f32 0.0, %v11450
  %v11452 = vpop.f32.mrb[0].mxu0
  %11453 = vmatprep.mubr.bf16.mxu0 0
  %11454 = vmatmul.mubr.bf16.gmra.mrb[0].mxu0 %v10826
  %v11455 = vpop.f32.mrb[0].mxu0
  %v11456 = vadd.f32 0.0, %v11455
  %v11457 = vpop.f32.mrb[0].mxu0
  %v11458 = vpop.f32.mrb[0].mxu0
  %v11459 = vadd.f32 0.0, %v11458
  %v11460 = vpop.f32.mrb[0].mxu0
  %11461 = vmatprep.mubr.bf16.mxu0 0
  %11462 = vmatmul.mubr.bf16.gmra.mrb[0].mxu0 %v10829
  %v11463 = vpop.f32.mrb[0].mxu0
  %v11464 = vadd.f32 0.0, %v11463
  %v11465 = vpop.f32.mrb[0].mxu0
  %v11466 = vpop.f32.mrb[0].mxu0
  %v11467 = vadd.f32 0.0, %v11466
  %v11468 = vpop.f32.mrb[0].mxu0
  %11469 = vmatprep.mubr.bf16.mxu0 0
  %11470 = vmatmul.mubr.bf16.gmra.mrb[0].mxu0 %v10832
  %v11471 = vpop.f32.mrb[0].mxu0
  %v11472 = vadd.f32 0.0, %v11471
  %v11473 = vpop.f32.mrb[0].mxu0
  %v11474 = vpop.f32.mrb[0].mxu0
  %v11475 = vadd.f32 0.0, %v11474
  %v11476 = vpop.f32.mrb[0].mxu0
  %11477 = vmatprep.mubr.bf16.mxu0 0
  %11478 = vmatmul.mubr.bf16.gmra.mrb[0].mxu0 %v10835
  %v11479 = vpop.f32.mrb[0].mxu0
  %v11480 = vadd.f32 0.0, %v11479
  %v11481 = vpop.f32.mrb[0].mxu0
  %v11482 = vpop.f32.mrb[0].mxu0
  %v11483 = vadd.f32 0.0, %v11482
  %v11484 = vpop.f32.mrb[0].mxu0
  %11485 = vmatprep.mubr.bf16.mxu0 0
  %11486 = vmatmul.mubr.bf16.gmra.mrb[0].mxu0 %v10838
  %v11487 = vpop.f32.mrb[0].mxu0
  %v11488 = vadd.f32 0.0, %v11487
  %v11489 = vpop.f32.mrb[0].mxu0
  %v11490 = vpop.f32.mrb[0].mxu0
  %v11491 = vadd.f32 0.0, %v11490
  %v11492 = vpop.f32.mrb[0].mxu0
  %11493 = vmatprep.mubr.bf16.mxu0 0
  %11494 = vmatmul.mubr.bf16.gmra.mrb[0].mxu0 %v10841
  %v11495 = vpop.f32.mrb[0].mxu0
  %v11496 = vadd.f32 0.0, %v11495
  %v11497 = vpop.f32.mrb[0].mxu0
  %v11498 = vpop.f32.mrb[0].mxu0
  %v11499 = vadd.f32 0.0, %v11498
  %v11500 = vpop.f32.mrb[0].mxu0
  %11501 = vmatprep.mubr.bf16.mxu0 0
  %11502 = vmatmul.mubr.bf16.gmra.mrb[0].mxu0 %v10844
  %v11503 = vpop.f32.mrb[0].mxu0
  %v11504 = vadd.f32 0.0, %v11503
  %v11505 = vpop.f32.mrb[0].mxu0
  %v11506 = vpop.f32.mrb[0].mxu0
  %v11507 = vadd.f32 0.0, %v11506
  %v11508 = vpop.f32.mrb[0].mxu0
  %11509 = vmatprep.mubr.bf16.mxu0 0
  %11510 = vmatmul.mubr.bf16.gmra.mrb[0].mxu0 %v10847
  %v11511 = vpop.f32.mrb[0].mxu0
  %v11512 = vadd.f32 0.0, %v11511
  %v11513 = vpop.f32.mrb[0].mxu0
  %v11514 = vpop.f32.mrb[0].mxu0
  %v11515 = vadd.f32 0.0, %v11514
  %v11516 = vpop.f32.mrb[0].mxu0
  %11517 = vmatprep.mubr.bf16.mxu0 0
  %11518 = vmatmul.mubr.bf16.gmra.mrb[0].mxu0 %v10850
  %v11519 = vpop.f32.mrb[0].mxu0
  %v11520 = vadd.f32 0.0, %v11519
  %v11521 = vpop.f32.mrb[0].mxu0
  %v11522 = vpop.f32.mrb[0].mxu0
  %v11523 = vadd.f32 0.0, %v11522
  %v11524 = vpop.f32.mrb[0].mxu0
  %11525 = vmatprep.mubr.bf16.mxu0 0
  %11526 = vmatmul.mubr.bf16.gmra.mrb[0].mxu0 %v10853
  %v11527 = vpop.f32.mrb[0].mxu0
  %v11528 = vadd.f32 0.0, %v11527
  %v11529 = vpop.f32.mrb[0].mxu0
  %v11530 = vpop.f32.mrb[0].mxu0
  %v11531 = vadd.f32 0.0, %v11530
  %v11532 = vpop.f32.mrb[0].mxu0
  %11533 = vmatprep.mubr.bf16.mxu0 0
  %11534 = vmatmul.mubr.bf16.gmra.mrb[0].mxu0 %v10856
  %v11535 = vpop.f32.mrb[0].mxu0
  %v11536 = vadd.f32 0.0, %v11535
  %v11537 = vpop.f32.mrb[0].mxu0
  %v11538 = vpop.f32.mrb[0].mxu0
  %v11539 = vadd.f32 0.0, %v11538
  %v11540 = vpop.f32.mrb[0].mxu0
  %11541 = vdwg.mxu0
  %v11542 = vadd.f32 %v10209, %v10896
  %v11543 = vadd.f32 %v10210, %v10899
  %v11544 = vadd.f32 %v10211, %v10904
  %v11545 = vadd.f32 %v10212, %v10907
  %v11546 = vadd.f32 %v10213, %v10912
  %v11547 = vadd.f32 %v10214, %v10915
  %v11548 = vadd.f32 %v10215, %v10920
  %v11549 = vadd.f32 %v10216, %v10923
  %v11550 = vadd.f32 %v10217, %v10928
  %v11551 = vadd.f32 %v10218, %v10931
  %v11552 = vadd.f32 %v10219, %v10936
  %v11553 = vadd.f32 %v10220, %v10939
  %v11554 = vadd.f32 %v10221, %v10944
  %v11555 = vadd.f32 %v10222, %v10947
  %v11556 = vadd.f32 %v10223, %v10952
  %v11557 = vadd.f32 %v10224, %v10955
  %v11558 = vadd.f32 %v10225, %v10960
  %v11559 = vadd.f32 %v10226, %v10963
  %v11560 = vadd.f32 %v10227, %v10968
  %v11561 = vadd.f32 %v10228, %v10971
  %v11562 = vadd.f32 %v10229, %v10976
  %v11563 = vadd.f32 %v10230, %v10979
  %v11564 = vadd.f32 %v10231, %v10984
  %v11565 = vadd.f32 %v10232, %v10987
  %v11566 = vadd.f32 %v10233, %v10992
  %v11567 = vadd.f32 %v10234, %v10995
  %v11568 = vadd.f32 %v10235, %v11000
  %v11569 = vadd.f32 %v10236, %v11003
  %v11570 = vadd.f32 %v10237, %v11008
  %v11571 = vadd.f32 %v10238, %v11011
  %v11572 = vadd.f32 %v10239, %v11016
  %v11573 = vadd.f32 %v10240, %v11019
  %v11574 = vadd.f32 %v10241, %v11024
  %v11575 = vadd.f32 %v10242, %v11027
  %v11576 = vadd.f32 %v10243, %v11032
  %v11577 = vadd.f32 %v10244, %v11035
  %v11578 = vadd.f32 %v10245, %v11040
  %v11579 = vadd.f32 %v10246, %v11043
  %v11580 = vadd.f32 %v10247, %v11048
  %v11581 = vadd.f32 %v10248, %v11051
  %v11582 = vadd.f32 %v10249, %v11056
  %v11583 = vadd.f32 %v10250, %v11059
  %v11584 = vadd.f32 %v10251, %v11064
  %v11585 = vadd.f32 %v10252, %v11067
  %v11586 = vadd.f32 %v10253, %v11072
  %v11587 = vadd.f32 %v10254, %v11075
  %v11588 = vadd.f32 %v10255, %v11080
  %v11589 = vadd.f32 %v10256, %v11083
  %v11590 = vadd.f32 %v10257, %v11088
  %v11591 = vadd.f32 %v10258, %v11091
  %v11592 = vadd.f32 %v10259, %v11096
  %v11593 = vadd.f32 %v10260, %v11099
  %v11594 = vadd.f32 %v10261, %v11104
  %v11595 = vadd.f32 %v10262, %v11107
  %v11596 = vadd.f32 %v10263, %v11112
  %v11597 = vadd.f32 %v10264, %v11115
  %v11598 = vadd.f32 %v10265, %v11120
  %v11599 = vadd.f32 %v10266, %v11123
  %v11600 = vadd.f32 %v10267, %v11128
  %v11601 = vadd.f32 %v10268, %v11131
  %v11602 = vadd.f32 %v10269, %v11136
  %v11603 = vadd.f32 %v10270, %v11139
  %v11604 = vadd.f32 %v10271, %v11144
  %v11605 = vadd.f32 %v10272, %v11147
  %v11606 = vadd.f32 %v10273, %v11152
  %v11607 = vadd.f32 %v10274, %v11155
  %v11608 = vadd.f32 %v10275, %v11160
  %v11609 = vadd.f32 %v10276, %v11163
  %v11610 = vadd.f32 %v10277, %v11168
  %v11611 = vadd.f32 %v10278, %v11171
  %v11612 = vadd.f32 %v10279, %v11176
  %v11613 = vadd.f32 %v10280, %v11179
  %v11614 = vadd.f32 %v10281, %v11184
  %v11615 = vadd.f32 %v10282, %v11187
  %v11616 = vadd.f32 %v10283, %v11192
  %v11617 = vadd.f32 %v10284, %v11195
  %v11618 = vadd.f32 %v10285, %v11200
  %v11619 = vadd.f32 %v10286, %v11203
  %v11620 = vadd.f32 %v10287, %v11208
  %v11621 = vadd.f32 %v10288, %v11211
  %v11622 = vadd.f32 %v10289, %v11216
  %v11623 = vadd.f32 %v10290, %v11219
  %v11624 = vadd.f32 %v10291, %v11224
  %v11625 = vadd.f32 %v10292, %v11227
  %v11626 = vadd.f32 %v10293, %v11232
  %v11627 = vadd.f32 %v10294, %v11235
  %v11628 = vadd.f32 %v10295, %v11240
  %v11629 = vadd.f32 %v10296, %v11243
  %v11630 = vadd.f32 %v10297, %v11248
  %v11631 = vadd.f32 %v10298, %v11251
  %v11632 = vadd.f32 %v10299, %v11256
  %v11633 = vadd.f32 %v10300, %v11259
  %v11634 = vadd.f32 %v10301, %v11264
  %v11635 = vadd.f32 %v10302, %v11267
  %v11636 = vadd.f32 %v10303, %v11272
  %v11637 = vadd.f32 %v10304, %v11275
  %v11638 = vadd.f32 %v10305, %v11280
  %v11639 = vadd.f32 %v10306, %v11283
  %v11640 = vadd.f32 %v10307, %v11288
  %v11641 = vadd.f32 %v10308, %v11291
  %v11642 = vadd.f32 %v10309, %v11296
  %v11643 = vadd.f32 %v10310, %v11299
  %v11644 = vadd.f32 %v10311, %v11304
  %v11645 = vadd.f32 %v10312, %v11307
  %v11646 = vadd.f32 %v10313, %v11312
  %v11647 = vadd.f32 %v10314, %v11315
  %v11648 = vadd.f32 %v10315, %v11320
  %v11649 = vadd.f32 %v10316, %v11323
  %v11650 = vadd.f32 %v10317, %v11328
  %v11651 = vadd.f32 %v10318, %v11331
  %v11652 = vadd.f32 %v10319, %v11336
  %v11653 = vadd.f32 %v10320, %v11339
  %v11654 = vadd.f32 %v10321, %v11344
  %v11655 = vadd.f32 %v10322, %v11347
  %v11656 = vadd.f32 %v10323, %v11352
  %v11657 = vadd.f32 %v10324, %v11355
  %v11658 = vadd.f32 %v10325, %v11360
  %v11659 = vadd.f32 %v10326, %v11363
  %v11660 = vadd.f32 %v10327, %v11368
  %v11661 = vadd.f32 %v10328, %v11371
  %v11662 = vadd.f32 %v10329, %v11376
  %v11663 = vadd.f32 %v10330, %v11379
  %v11664 = vadd.f32 %v10331, %v11384
  %v11665 = vadd.f32 %v10332, %v11387
  %v11666 = vadd.f32 %v10333, %v11392
  %v11667 = vadd.f32 %v10334, %v11395
  %v11668 = vadd.f32 %v10335, %v11400
  %v11669 = vadd.f32 %v10336, %v11403
  %v11670 = vadd.f32 %v10337, %v11408
  %v11671 = vadd.f32 %v10338, %v11411
  %v11672 = vadd.f32 %v10339, %v11416
  %v11673 = vadd.f32 %v10340, %v11419
  %v11674 = vadd.f32 %v10341, %v11424
  %v11675 = vadd.f32 %v10342, %v11427
  %v11676 = vadd.f32 %v10343, %v11432
  %v11677 = vadd.f32 %v10344, %v11435
  %v11678 = vadd.f32 %v10345, %v11440
  %v11679 = vadd.f32 %v10346, %v11443
  %v11680 = vadd.f32 %v10347, %v11448
  %v11681 = vadd.f32 %v10348, %v11451
  %v11682 = vadd.f32 %v10349, %v11456
  %v11683 = vadd.f32 %v10350, %v11459
  %v11684 = vadd.f32 %v10351, %v11464
  %v11685 = vadd.f32 %v10352, %v11467
  %v11686 = vadd.f32 %v10353, %v11472
  %v11687 = vadd.f32 %v10354, %v11475
  %v11688 = vadd.f32 %v10355, %v11480
  %v11689 = vadd.f32 %v10356, %v11483
  %v11690 = vadd.f32 %v10357, %v11488
  %v11691 = vadd.f32 %v10358, %v11491
  %v11692 = vadd.f32 %v10359, %v11496
  %v11693 = vadd.f32 %v10360, %v11499
  %v11694 = vadd.f32 %v10361, %v11504
  %v11695 = vadd.f32 %v10362, %v11507
  %v11696 = vadd.f32 %v10363, %v11512
  %v11697 = vadd.f32 %v10364, %v11515
  %v11698 = vadd.f32 %v10365, %v11520
  %v11699 = vadd.f32 %v10366, %v11523
  %v11700 = vadd.f32 %v10367, %v11528
  %v11701 = vadd.f32 %v10368, %v11531
  %v11702 = vadd.f32 %v10369, %v11536
  %v11703 = vadd.f32 %v10370, %v11539
  %v11704 = vld [vmem:[%s2] sm:$0x1]
  %v11706 = vlaneseq
  %v11707 = vshrl.u32 %v11706, 7
  %v11708 = vsub.s32 0, %v11707
  %v11709 = vrot.slane %v11704, %v11708
  %v11711 = vadd.f32 %v11542, %v11709
  %v11712 = vadd.f32 %v11543, %v11709
  %v11713 = vadd.f32 %v11544, %v11709
  %v11714 = vadd.f32 %v11545, %v11709
  %v11715 = vadd.f32 %v11546, %v11709
  %v11716 = vadd.f32 %v11547, %v11709
  %v11717 = vadd.f32 %v11548, %v11709
  %v11718 = vadd.f32 %v11549, %v11709
  %v11719 = vadd.f32 %v11550, %v11709
  %v11720 = vadd.f32 %v11551, %v11709
  %v11721 = vadd.f32 %v11552, %v11709
  %v11722 = vadd.f32 %v11553, %v11709
  %v11723 = vadd.f32 %v11554, %v11709
  %v11724 = vadd.f32 %v11555, %v11709
  %v11725 = vadd.f32 %v11556, %v11709
  %v11726 = vadd.f32 %v11557, %v11709
  %v11727 = vadd.f32 %v11558, %v11709
  %v11728 = vadd.f32 %v11559, %v11709
  %v11729 = vadd.f32 %v11560, %v11709
  %v11730 = vadd.f32 %v11561, %v11709
  %v11731 = vadd.f32 %v11562, %v11709
  %v11732 = vadd.f32 %v11563, %v11709
  %v11733 = vadd.f32 %v11564, %v11709
  %v11734 = vadd.f32 %v11565, %v11709
  %v11735 = vadd.f32 %v11566, %v11709
  %v11736 = vadd.f32 %v11567, %v11709
  %v11737 = vadd.f32 %v11568, %v11709
  %v11738 = vadd.f32 %v11569, %v11709
  %v11739 = vadd.f32 %v11570, %v11709
  %v11740 = vadd.f32 %v11571, %v11709
  %v11741 = vadd.f32 %v11572, %v11709
  %v11742 = vadd.f32 %v11573, %v11709
  %v11743 = vadd.f32 %v11574, %v11709
  %v11744 = vadd.f32 %v11575, %v11709
  %v11745 = vadd.f32 %v11576, %v11709
  %v11746 = vadd.f32 %v11577, %v11709
  %v11747 = vadd.f32 %v11578, %v11709
  %v11748 = vadd.f32 %v11579, %v11709
  %v11749 = vadd.f32 %v11580, %v11709
  %v11750 = vadd.f32 %v11581, %v11709
  %v11751 = vadd.f32 %v11582, %v11709
  %v11752 = vadd.f32 %v11583, %v11709
  %v11753 = vadd.f32 %v11584, %v11709
  %v11754 = vadd.f32 %v11585, %v11709
  %v11755 = vadd.f32 %v11586, %v11709
  %v11756 = vadd.f32 %v11587, %v11709
  %v11757 = vadd.f32 %v11588, %v11709
  %v11758 = vadd.f32 %v11589, %v11709
  %v11759 = vadd.f32 %v11590, %v11709
  %v11760 = vadd.f32 %v11591, %v11709
  %v11761 = vadd.f32 %v11592, %v11709
  %v11762 = vadd.f32 %v11593, %v11709
  %v11763 = vadd.f32 %v11594, %v11709
  %v11764 = vadd.f32 %v11595, %v11709
  %v11765 = vadd.f32 %v11596, %v11709
  %v11766 = vadd.f32 %v11597, %v11709
  %v11767 = vadd.f32 %v11598, %v11709
  %v11768 = vadd.f32 %v11599, %v11709
  %v11769 = vadd.f32 %v11600, %v11709
  %v11770 = vadd.f32 %v11601, %v11709
  %v11771 = vadd.f32 %v11602, %v11709
  %v11772 = vadd.f32 %v11603, %v11709
  %v11773 = vadd.f32 %v11604, %v11709
  %v11774 = vadd.f32 %v11605, %v11709
  %v11775 = vadd.f32 %v11606, %v11709
  %v11776 = vadd.f32 %v11607, %v11709
  %v11777 = vadd.f32 %v11608, %v11709
  %v11778 = vadd.f32 %v11609, %v11709
  %v11779 = vadd.f32 %v11610, %v11709
  %v11780 = vadd.f32 %v11611, %v11709
  %v11781 = vadd.f32 %v11612, %v11709
  %v11782 = vadd.f32 %v11613, %v11709
  %v11783 = vadd.f32 %v11614, %v11709
  %v11784 = vadd.f32 %v11615, %v11709
  %v11785 = vadd.f32 %v11616, %v11709
  %v11786 = vadd.f32 %v11617, %v11709
  %v11787 = vadd.f32 %v11618, %v11709
  %v11788 = vadd.f32 %v11619, %v11709
  %v11789 = vadd.f32 %v11620, %v11709
  %v11790 = vadd.f32 %v11621, %v11709
  %v11791 = vadd.f32 %v11622, %v11709
  %v11792 = vadd.f32 %v11623, %v11709
  %v11793 = vadd.f32 %v11624, %v11709
  %v11794 = vadd.f32 %v11625, %v11709
  %v11795 = vadd.f32 %v11626, %v11709
  %v11796 = vadd.f32 %v11627, %v11709
  %v11797 = vadd.f32 %v11628, %v11709
  %v11798 = vadd.f32 %v11629, %v11709
  %v11799 = vadd.f32 %v11630, %v11709
  %v11800 = vadd.f32 %v11631, %v11709
  %v11801 = vadd.f32 %v11632, %v11709
  %v11802 = vadd.f32 %v11633, %v11709
  %v11803 = vadd.f32 %v11634, %v11709
  %v11804 = vadd.f32 %v11635, %v11709
  %v11805 = vadd.f32 %v11636, %v11709
  %v11806 = vadd.f32 %v11637, %v11709
  %v11807 = vadd.f32 %v11638, %v11709
  %v11808 = vadd.f32 %v11639, %v11709
  %v11809 = vadd.f32 %v11640, %v11709
  %v11810 = vadd.f32 %v11641, %v11709
  %v11811 = vadd.f32 %v11642, %v11709
  %v11812 = vadd.f32 %v11643, %v11709
  %v11813 = vadd.f32 %v11644, %v11709
  %v11814 = vadd.f32 %v11645, %v11709
  %v11815 = vadd.f32 %v11646, %v11709
  %v11816 = vadd.f32 %v11647, %v11709
  %v11817 = vadd.f32 %v11648, %v11709
  %v11818 = vadd.f32 %v11649, %v11709
  %v11819 = vadd.f32 %v11650, %v11709
  %v11820 = vadd.f32 %v11651, %v11709
  %v11821 = vadd.f32 %v11652, %v11709
  %v11822 = vadd.f32 %v11653, %v11709
  %v11823 = vadd.f32 %v11654, %v11709
  %v11824 = vadd.f32 %v11655, %v11709
  %v11825 = vadd.f32 %v11656, %v11709
  %v11826 = vadd.f32 %v11657, %v11709
  %v11827 = vadd.f32 %v11658, %v11709
  %v11828 = vadd.f32 %v11659, %v11709
  %v11829 = vadd.f32 %v11660, %v11709
  %v11830 = vadd.f32 %v11661, %v11709
  %v11831 = vadd.f32 %v11662, %v11709
  %v11832 = vadd.f32 %v11663, %v11709
  %v11833 = vadd.f32 %v11664, %v11709
  %v11834 = vadd.f32 %v11665, %v11709
  %v11835 = vadd.f32 %v11666, %v11709
  %v11836 = vadd.f32 %v11667, %v11709
  %v11837 = vadd.f32 %v11668, %v11709
  %v11838 = vadd.f32 %v11669, %v11709
  %v11839 = vadd.f32 %v11670, %v11709
  %v11840 = vadd.f32 %v11671, %v11709
  %v11841 = vadd.f32 %v11672, %v11709
  %v11842 = vadd.f32 %v11673, %v11709
  %v11843 = vadd.f32 %v11674, %v11709
  %v11844 = vadd.f32 %v11675, %v11709
  %v11845 = vadd.f32 %v11676, %v11709
  %v11846 = vadd.f32 %v11677, %v11709
  %v11847 = vadd.f32 %v11678, %v11709
  %v11848 = vadd.f32 %v11679, %v11709
  %v11849 = vadd.f32 %v11680, %v11709
  %v11850 = vadd.f32 %v11681, %v11709
  %v11851 = vadd.f32 %v11682, %v11709
  %v11852 = vadd.f32 %v11683, %v11709
  %v11853 = vadd.f32 %v11684, %v11709
  %v11854 = vadd.f32 %v11685, %v11709
  %v11855 = vadd.f32 %v11686, %v11709
  %v11856 = vadd.f32 %v11687, %v11709
  %v11857 = vadd.f32 %v11688, %v11709
  %v11858 = vadd.f32 %v11689, %v11709
  %v11859 = vadd.f32 %v11690, %v11709
  %v11860 = vadd.f32 %v11691, %v11709
  %v11861 = vadd.f32 %v11692, %v11709
  %v11862 = vadd.f32 %v11693, %v11709
  %v11863 = vadd.f32 %v11694, %v11709
  %v11864 = vadd.f32 %v11695, %v11709
  %v11865 = vadd.f32 %v11696, %v11709
  %v11866 = vadd.f32 %v11697, %v11709
  %v11867 = vadd.f32 %v11698, %v11709
  %v11868 = vadd.f32 %v11699, %v11709
  %v11869 = vadd.f32 %v11700, %v11709
  %v11870 = vadd.f32 %v11701, %v11709
  %v11871 = vadd.f32 %v11702, %v11709
  %v11872 = vadd.f32 %v11703, %v11709
  %v11873 = vmax.f32 %v11711, 0.0
  %v11874 = vmax.f32 %v11712, 0.0
  %v11875 = vmax.f32 %v11713, 0.0
  %v11876 = vmax.f32 %v11714, 0.0
  %v11877 = vmax.f32 %v11715, 0.0
  %v11878 = vmax.f32 %v11716, 0.0
  %v11879 = vmax.f32 %v11717, 0.0
  %v11880 = vmax.f32 %v11718, 0.0
  %v11881 = vmax.f32 %v11719, 0.0
  %v11882 = vmax.f32 %v11720, 0.0
  %v11883 = vmax.f32 %v11721, 0.0
  %v11884 = vmax.f32 %v11722, 0.0
  %v11885 = vmax.f32 %v11723, 0.0
  %v11886 = vmax.f32 %v11724, 0.0
  %v11887 = vmax.f32 %v11725, 0.0
  %v11888 = vmax.f32 %v11726, 0.0
  %v11889 = vmax.f32 %v11727, 0.0
  %v11890 = vmax.f32 %v11728, 0.0
  %v11891 = vmax.f32 %v11729, 0.0
  %v11892 = vmax.f32 %v11730, 0.0
  %v11893 = vmax.f32 %v11731, 0.0
  %v11894 = vmax.f32 %v11732, 0.0
  %v11895 = vmax.f32 %v11733, 0.0
  %v11896 = vmax.f32 %v11734, 0.0
  %v11897 = vmax.f32 %v11735, 0.0
  %v11898 = vmax.f32 %v11736, 0.0
  %v11899 = vmax.f32 %v11737, 0.0
  %v11900 = vmax.f32 %v11738, 0.0
  %v11901 = vmax.f32 %v11739, 0.0
  %v11902 = vmax.f32 %v11740, 0.0
  %v11903 = vmax.f32 %v11741, 0.0
  %v11904 = vmax.f32 %v11742, 0.0
  %v11905 = vmax.f32 %v11743, 0.0
  %v11906 = vmax.f32 %v11744, 0.0
  %v11907 = vmax.f32 %v11745, 0.0
  %v11908 = vmax.f32 %v11746, 0.0
  %v11909 = vmax.f32 %v11747, 0.0
  %v11910 = vmax.f32 %v11748, 0.0
  %v11911 = vmax.f32 %v11749, 0.0
  %v11912 = vmax.f32 %v11750, 0.0
  %v11913 = vmax.f32 %v11751, 0.0
  %v11914 = vmax.f32 %v11752, 0.0
  %v11915 = vmax.f32 %v11753, 0.0
  %v11916 = vmax.f32 %v11754, 0.0
  %v11917 = vmax.f32 %v11755, 0.0
  %v11918 = vmax.f32 %v11756, 0.0
  %v11919 = vmax.f32 %v11757, 0.0
  %v11920 = vmax.f32 %v11758, 0.0
  %v11921 = vmax.f32 %v11759, 0.0
  %v11922 = vmax.f32 %v11760, 0.0
  %v11923 = vmax.f32 %v11761, 0.0
  %v11924 = vmax.f32 %v11762, 0.0
  %v11925 = vmax.f32 %v11763, 0.0
  %v11926 = vmax.f32 %v11764, 0.0
  %v11927 = vmax.f32 %v11765, 0.0
  %v11928 = vmax.f32 %v11766, 0.0
  %v11929 = vmax.f32 %v11767, 0.0
  %v11930 = vmax.f32 %v11768, 0.0
  %v11931 = vmax.f32 %v11769, 0.0
  %v11932 = vmax.f32 %v11770, 0.0
  %v11933 = vmax.f32 %v11771, 0.0
  %v11934 = vmax.f32 %v11772, 0.0
  %v11935 = vmax.f32 %v11773, 0.0
  %v11936 = vmax.f32 %v11774, 0.0
  %v11937 = vmax.f32 %v11775, 0.0
  %v11938 = vmax.f32 %v11776, 0.0
  %v11939 = vmax.f32 %v11777, 0.0
  %v11940 = vmax.f32 %v11778, 0.0
  %v11941 = vmax.f32 %v11779, 0.0
  %v11942 = vmax.f32 %v11780, 0.0
  %v11943 = vmax.f32 %v11781, 0.0
  %v11944 = vmax.f32 %v11782, 0.0
  %v11945 = vmax.f32 %v11783, 0.0
  %v11946 = vmax.f32 %v11784, 0.0
  %v11947 = vmax.f32 %v11785, 0.0
  %v11948 = vmax.f32 %v11786, 0.0
  %v11949 = vmax.f32 %v11787, 0.0
  %v11950 = vmax.f32 %v11788, 0.0
  %v11951 = vmax.f32 %v11789, 0.0
  %v11952 = vmax.f32 %v11790, 0.0
  %v11953 = vmax.f32 %v11791, 0.0
  %v11954 = vmax.f32 %v11792, 0.0
  %v11955 = vmax.f32 %v11793, 0.0
  %v11956 = vmax.f32 %v11794, 0.0
  %v11957 = vmax.f32 %v11795, 0.0
  %v11958 = vmax.f32 %v11796, 0.0
  %v11959 = vmax.f32 %v11797, 0.0
  %v11960 = vmax.f32 %v11798, 0.0
  %v11961 = vmax.f32 %v11799, 0.0
  %v11962 = vmax.f32 %v11800, 0.0
  %v11963 = vmax.f32 %v11801, 0.0
  %v11964 = vmax.f32 %v11802, 0.0
  %v11965 = vmax.f32 %v11803, 0.0
  %v11966 = vmax.f32 %v11804, 0.0
  %v11967 = vmax.f32 %v11805, 0.0
  %v11968 = vmax.f32 %v11806, 0.0
  %v11969 = vmax.f32 %v11807, 0.0
  %v11970 = vmax.f32 %v11808, 0.0
  %v11971 = vmax.f32 %v11809, 0.0
  %v11972 = vmax.f32 %v11810, 0.0
  %v11973 = vmax.f32 %v11811, 0.0
  %v11974 = vmax.f32 %v11812, 0.0
  %v11975 = vmax.f32 %v11813, 0.0
  %v11976 = vmax.f32 %v11814, 0.0
  %v11977 = vmax.f32 %v11815, 0.0
  %v11978 = vmax.f32 %v11816, 0.0
  %v11979 = vmax.f32 %v11817, 0.0
  %v11980 = vmax.f32 %v11818, 0.0
  %v11981 = vmax.f32 %v11819, 0.0
  %v11982 = vmax.f32 %v11820, 0.0
  %v11983 = vmax.f32 %v11821, 0.0
  %v11984 = vmax.f32 %v11822, 0.0
  %v11985 = vmax.f32 %v11823, 0.0
  %v11986 = vmax.f32 %v11824, 0.0
  %v11987 = vmax.f32 %v11825, 0.0
  %v11988 = vmax.f32 %v11826, 0.0
  %v11989 = vmax.f32 %v11827, 0.0
  %v11990 = vmax.f32 %v11828, 0.0
  %v11991 = vmax.f32 %v11829, 0.0
  %v11992 = vmax.f32 %v11830, 0.0
  %v11993 = vmax.f32 %v11831, 0.0
  %v11994 = vmax.f32 %v11832, 0.0
  %v11995 = vmax.f32 %v11833, 0.0
  %v11996 = vmax.f32 %v11834, 0.0
  %v11997 = vmax.f32 %v11835, 0.0
  %v11998 = vmax.f32 %v11836, 0.0
  %v11999 = vmax.f32 %v11837, 0.0
  %v12000 = vmax.f32 %v11838, 0.0
  %v12001 = vmax.f32 %v11839, 0.0
  %v12002 = vmax.f32 %v11840, 0.0
  %v12003 = vmax.f32 %v11841, 0.0
  %v12004 = vmax.f32 %v11842, 0.0
  %v12005 = vmax.f32 %v11843, 0.0
  %v12006 = vmax.f32 %v11844, 0.0
  %v12007 = vmax.f32 %v11845, 0.0
  %v12008 = vmax.f32 %v11846, 0.0
  %v12009 = vmax.f32 %v11847, 0.0
  %v12010 = vmax.f32 %v11848, 0.0
  %v12011 = vmax.f32 %v11849, 0.0
  %v12012 = vmax.f32 %v11850, 0.0
  %v12013 = vmax.f32 %v11851, 0.0
  %v12014 = vmax.f32 %v11852, 0.0
  %v12015 = vmax.f32 %v11853, 0.0
  %v12016 = vmax.f32 %v11854, 0.0
  %v12017 = vmax.f32 %v11855, 0.0
  %v12018 = vmax.f32 %v11856, 0.0
  %v12019 = vmax.f32 %v11857, 0.0
  %v12020 = vmax.f32 %v11858, 0.0
  %v12021 = vmax.f32 %v11859, 0.0
  %v12022 = vmax.f32 %v11860, 0.0
  %v12023 = vmax.f32 %v11861, 0.0
  %v12024 = vmax.f32 %v11862, 0.0
  %v12025 = vmax.f32 %v11863, 0.0
  %v12026 = vmax.f32 %v11864, 0.0
  %v12027 = vmax.f32 %v11865, 0.0
  %v12028 = vmax.f32 %v11866, 0.0
  %v12029 = vmax.f32 %v11867, 0.0
  %v12030 = vmax.f32 %v11868, 0.0
  %v12031 = vmax.f32 %v11869, 0.0
  %v12032 = vmax.f32 %v11870, 0.0
  %v12033 = vmax.f32 %v11871, 0.0
  %v12034 = vmax.f32 %v11872, 0.0
  %v12035 = vlaneseq
  %v12036 = vand.u32 %v12035, 127
  %v12037 = vadd.s32 %v12036, 128
  %v12038 = vadd.s32 %v12036, 256
  %v12039 = vadd.s32 %v12036, 384
  %v12040 = vadd.s32 %v12036, 512
  %v12041 = vadd.s32 %v12036, 640
  %v12042 = vadd.s32 %v12036, 768
  %v12043 = vadd.s32 %v12036, 896
  %v12044 = vadd.s32 %v12036, 1024
  %v12045 = vadd.s32 %v12036, 1152
  %v12046 = vadd.s32 %v12036, 1280
  %v12047 = vcvt.s32.f32 %v12036
  %v12048 = vcvt.s32.f32 %v12037
  %v12049 = vcvt.s32.f32 %v12038
  %v12050 = vcvt.s32.f32 %v12039
  %v12051 = vcvt.s32.f32 %v12040
  %v12052 = vcvt.s32.f32 %v12041
  %v12053 = vcvt.s32.f32 %v12042
  %v12054 = vcvt.s32.f32 %v12043
  %v12055 = vcvt.s32.f32 %v12044
  %v12056 = vcvt.s32.f32 %v12045
  %v12057 = vcvt.s32.f32 %v12046
  %v12058 = vlaneseq
  %v12059 = vshrl.u32 %v12058, 7
  %v12060 = vcvt.s32.f32 %v12059
  %v12061 = vadd.f32 %v12047, 0.5
  %v12062 = vadd.f32 %v12048, 0.5
  %v12063 = vadd.f32 %v12049, 0.5
  %v12064 = vadd.f32 %v12050, 0.5
  %v12065 = vadd.f32 %v12051, 0.5
  %v12066 = vadd.f32 %v12052, 0.5
  %v12067 = vadd.f32 %v12053, 0.5
  %v12068 = vadd.f32 %v12054, 0.5
  %v12069 = vadd.f32 %v12055, 0.5
  %v12070 = vadd.f32 %v12056, 0.5
  %v12071 = vadd.f32 %v12057, 0.5
  %v12072 = vmul.f32 %v12061, 0.0030864198
  %v12073 = vmul.f32 %v12062, 0.0030864198
  %v12074 = vmul.f32 %v12063, 0.0030864198
  %v12075 = vmul.f32 %v12064, 0.0030864198
  %v12076 = vmul.f32 %v12065, 0.0030864198
  %v12077 = vmul.f32 %v12066, 0.0030864198
  %v12078 = vmul.f32 %v12067, 0.0030864198
  %v12079 = vmul.f32 %v12068, 0.0030864198
  %v12080 = vmul.f32 %v12069, 0.0030864198
  %v12081 = vmul.f32 %v12070, 0.0030864198
  %v12082 = vmul.f32 %v12071, 0.0030864198
  %v12083 = vfloor.f32 %v12072
  %v12084 = vfloor.f32 %v12073
  %v12085 = vfloor.f32 %v12074
  %v12086 = vfloor.f32 %v12075
  %v12087 = vfloor.f32 %v12076
  %v12088 = vfloor.f32 %v12077
  %v12089 = vfloor.f32 %v12078
  %v12090 = vfloor.f32 %v12079
  %v12091 = vfloor.f32 %v12080
  %v12092 = vfloor.f32 %v12081
  %v12093 = vfloor.f32 %v12082
  %v12094 = vmul.f32 %v12083, 324.0
  %v12095 = vmul.f32 %v12084, 324.0
  %v12096 = vmul.f32 %v12085, 324.0
  %v12097 = vmul.f32 %v12086, 324.0
  %v12098 = vmul.f32 %v12087, 324.0
  %v12099 = vmul.f32 %v12088, 324.0
  %v12100 = vmul.f32 %v12089, 324.0
  %v12101 = vmul.f32 %v12090, 324.0
  %v12102 = vmul.f32 %v12091, 324.0
  %v12103 = vmul.f32 %v12092, 324.0
  %v12104 = vmul.f32 %v12093, 324.0
  %v12105 = vsub.f32 %v12047, %v12094
  %v12106 = vsub.f32 %v12048, %v12095
  %v12107 = vsub.f32 %v12049, %v12096
  %v12108 = vsub.f32 %v12050, %v12097
  %v12109 = vsub.f32 %v12051, %v12098
  %v12110 = vsub.f32 %v12052, %v12099
  %v12111 = vsub.f32 %v12053, %v12100
  %v12112 = vsub.f32 %v12054, %v12101
  %v12113 = vsub.f32 %v12055, %v12102
  %v12114 = vsub.f32 %v12056, %v12103
  %v12115 = vsub.f32 %v12057, %v12104
  %v12116 = vadd.f32 %v12105, 0.5
  %v12117 = vadd.f32 %v12106, 0.5
  %v12118 = vadd.f32 %v12107, 0.5
  %v12119 = vadd.f32 %v12108, 0.5
  %v12120 = vadd.f32 %v12109, 0.5
  %v12121 = vadd.f32 %v12110, 0.5
  %v12122 = vadd.f32 %v12111, 0.5
  %v12123 = vadd.f32 %v12112, 0.5
  %v12124 = vadd.f32 %v12113, 0.5
  %v12125 = vadd.f32 %v12114, 0.5
  %v12126 = vadd.f32 %v12115, 0.5
  %v12127 = vmul.f32 %v12116, 0.055555556
  %v12128 = vmul.f32 %v12117, 0.055555556
  %v12129 = vmul.f32 %v12118, 0.055555556
  %v12130 = vmul.f32 %v12119, 0.055555556
  %v12131 = vmul.f32 %v12120, 0.055555556
  %v12132 = vmul.f32 %v12121, 0.055555556
  %v12133 = vmul.f32 %v12122, 0.055555556
  %v12134 = vmul.f32 %v12123, 0.055555556
  %v12135 = vmul.f32 %v12124, 0.055555556
  %v12136 = vmul.f32 %v12125, 0.055555556
  %v12137 = vmul.f32 %v12126, 0.055555556
  %v12138 = vfloor.f32 %v12127
  %v12139 = vfloor.f32 %v12128
  %v12140 = vfloor.f32 %v12129
  %v12141 = vfloor.f32 %v12130
  %v12142 = vfloor.f32 %v12131
  %v12143 = vfloor.f32 %v12132
  %v12144 = vfloor.f32 %v12133
  %v12145 = vfloor.f32 %v12134
  %v12146 = vfloor.f32 %v12135
  %v12147 = vfloor.f32 %v12136
  %v12148 = vfloor.f32 %v12137
  %v12149 = vmul.f32 %v12138, 18.0
  %v12150 = vmul.f32 %v12139, 18.0
  %v12151 = vmul.f32 %v12140, 18.0
  %v12152 = vmul.f32 %v12141, 18.0
  %v12153 = vmul.f32 %v12142, 18.0
  %v12154 = vmul.f32 %v12143, 18.0
  %v12155 = vmul.f32 %v12144, 18.0
  %v12156 = vmul.f32 %v12145, 18.0
  %v12157 = vmul.f32 %v12146, 18.0
  %v12158 = vmul.f32 %v12147, 18.0
  %v12159 = vmul.f32 %v12148, 18.0
  %v12160 = vsub.f32 %v12105, %v12149
  %v12161 = vsub.f32 %v12106, %v12150
  %v12162 = vsub.f32 %v12107, %v12151
  %v12163 = vsub.f32 %v12108, %v12152
  %v12164 = vsub.f32 %v12109, %v12153
  %v12165 = vsub.f32 %v12110, %v12154
  %v12166 = vsub.f32 %v12111, %v12155
  %v12167 = vsub.f32 %v12112, %v12156
  %v12168 = vsub.f32 %v12113, %v12157
  %v12169 = vsub.f32 %v12114, %v12158
  %v12170 = vsub.f32 %v12115, %v12159
  %vm12171 = vcmp.eq.f32.partialorder %v12083, %v12060
  %vm12172 = vcmp.eq.f32.partialorder %v12084, %v12060
  %vm12173 = vcmp.eq.f32.partialorder %v12085, %v12060
  %vm12174 = vcmp.eq.f32.partialorder %v12086, %v12060
  %vm12175 = vcmp.eq.f32.partialorder %v12087, %v12060
  %vm12176 = vcmp.eq.f32.partialorder %v12088, %v12060
  %vm12177 = vcmp.eq.f32.partialorder %v12089, %v12060
  %vm12178 = vcmp.eq.f32.partialorder %v12090, %v12060
  %vm12179 = vcmp.eq.f32.partialorder %v12091, %v12060
  %vm12180 = vcmp.eq.f32.partialorder %v12092, %v12060
  %vm12181 = vcmp.eq.f32.partialorder %v12093, %v12060
  %vm12182 = vcmp.lt.f32.partialorder %v12138, 16.0
  %vm12183 = vcmp.lt.f32.partialorder %v12139, 16.0
  %vm12184 = vcmp.lt.f32.partialorder %v12140, 16.0
  %vm12185 = vcmp.lt.f32.partialorder %v12141, 16.0
  %vm12186 = vcmp.lt.f32.partialorder %v12142, 16.0
  %vm12187 = vcmp.lt.f32.partialorder %v12143, 16.0
  %vm12188 = vcmp.lt.f32.partialorder %v12144, 16.0
  %vm12189 = vcmp.lt.f32.partialorder %v12145, 16.0
  %vm12190 = vcmp.lt.f32.partialorder %v12146, 16.0
  %vm12191 = vcmp.lt.f32.partialorder %v12147, 16.0
  %vm12192 = vcmp.lt.f32.partialorder %v12148, 16.0
  %vm12193 = vmand %vm12171, %vm12182
  %vm12194 = vmand %vm12172, %vm12183
  %vm12195 = vmand %vm12173, %vm12184
  %vm12196 = vmand %vm12174, %vm12185
  %vm12197 = vmand %vm12175, %vm12186
  %vm12198 = vmand %vm12176, %vm12187
  %vm12199 = vmand %vm12177, %vm12188
  %vm12200 = vmand %vm12178, %vm12189
  %vm12201 = vmand %vm12179, %vm12190
  %vm12202 = vmand %vm12180, %vm12191
  %vm12203 = vmand %vm12181, %vm12192
  %vm12204 = vcmp.lt.f32.partialorder %v12160, 16.0
  %vm12205 = vcmp.lt.f32.partialorder %v12161, 16.0
  %vm12206 = vcmp.lt.f32.partialorder %v12162, 16.0
  %vm12207 = vcmp.lt.f32.partialorder %v12163, 16.0
  %vm12208 = vcmp.lt.f32.partialorder %v12164, 16.0
  %vm12209 = vcmp.lt.f32.partialorder %v12165, 16.0
  %vm12210 = vcmp.lt.f32.partialorder %v12166, 16.0
  %vm12211 = vcmp.lt.f32.partialorder %v12167, 16.0
  %vm12212 = vcmp.lt.f32.partialorder %v12168, 16.0
  %vm12213 = vcmp.lt.f32.partialorder %v12169, 16.0
  %vm12214 = vcmp.lt.f32.partialorder %v12170, 16.0
  %vm12215 = vmand %vm12193, %vm12204
  %vm12216 = vmand %vm12194, %vm12205
  %vm12217 = vmand %vm12195, %vm12206
  %vm12218 = vmand %vm12196, %vm12207
  %vm12219 = vmand %vm12197, %vm12208
  %vm12220 = vmand %vm12198, %vm12209
  %vm12221 = vmand %vm12199, %vm12210
  %vm12222 = vmand %vm12200, %vm12211
  %vm12223 = vmand %vm12201, %vm12212
  %vm12224 = vmand %vm12202, %vm12213
  %vm12225 = vmand %vm12203, %vm12214
  %v12226 = vsel %vm12215, 0.00390625, 0.0
  %v12227 = vsel %vm12216, 0.00390625, 0.0
  %v12228 = vsel %vm12217, 0.00390625, 0.0
  %v12229 = vsel %vm12218, 0.00390625, 0.0
  %v12230 = vsel %vm12219, 0.00390625, 0.0
  %v12231 = vsel %vm12220, 0.00390625, 0.0
  %v12232 = vsel %vm12221, 0.00390625, 0.0
  %v12233 = vsel %vm12222, 0.00390625, 0.0
  %v12234 = vsel %vm12223, 0.00390625, 0.0
  %v12235 = vsel %vm12224, 0.00390625, 0.0
  %v12236 = vsel %vm12225, 0.00390625, 0.0
  %v12237 = vpack.c.bf16 %v12226, %v12226
  %v12238 = vpack.c.bf16 %v12227, %v12227
  %v12239 = vpack.c.bf16 %v12228, %v12228
  %v12240 = vpack.c.bf16 %v12229, %v12229
  %v12241 = vpack.c.bf16 %v12230, %v12230
  %v12242 = vpack.c.bf16 %v12231, %v12231
  %v12243 = vpack.c.bf16 %v12232, %v12232
  %v12244 = vpack.c.bf16 %v12233, %v12233
  %v12245 = vpack.c.bf16 %v12234, %v12234
  %v12246 = vpack.c.bf16 %v12235, %v12235
  %v12247 = vpack.c.bf16 %v12236, %v12236
  %v12248 = vpack.c.bf16 %v11874, %v11873
  %v12249 = vpack.c.bf16 %v11876, %v11875
  %v12250 = vpack.c.bf16 %v11878, %v11877
  %v12251 = vpack.c.bf16 %v11880, %v11879
  %v12252 = vpack.c.bf16 %v11882, %v11881
  %v12253 = vpack.c.bf16 %v11884, %v11883
  %v12254 = vpack.c.bf16 %v11886, %v11885
  %v12255 = vpack.c.bf16 %v11888, %v11887
  %v12256 = vpack.c.bf16 %v11890, %v11889
  %v12257 = vpack.c.bf16 %v11892, %v11891
  %v12258 = vpack.c.bf16 %v11894, %v11893
  %v12259 = vpack.c.bf16 %v11896, %v11895
  %v12260 = vpack.c.bf16 %v11898, %v11897
  %v12261 = vpack.c.bf16 %v11900, %v11899
  %v12262 = vpack.c.bf16 %v11902, %v11901
  %v12263 = vpack.c.bf16 %v11904, %v11903
  %v12264 = vpack.c.bf16 %v11906, %v11905
  %v12265 = vpack.c.bf16 %v11908, %v11907
  %v12266 = vpack.c.bf16 %v11910, %v11909
  %v12267 = vpack.c.bf16 %v11912, %v11911
  %v12268 = vpack.c.bf16 %v11914, %v11913
  %v12269 = vpack.c.bf16 %v11916, %v11915
  %v12270 = vpack.c.bf16 %v11918, %v11917
  %v12271 = vpack.c.bf16 %v11920, %v11919
  %v12272 = vpack.c.bf16 %v11922, %v11921
  %v12273 = vpack.c.bf16 %v11924, %v11923
  %v12274 = vpack.c.bf16 %v11926, %v11925
  %v12275 = vpack.c.bf16 %v11928, %v11927
  %v12276 = vpack.c.bf16 %v11930, %v11929
  %v12277 = vpack.c.bf16 %v11932, %v11931
  %v12278 = vpack.c.bf16 %v11934, %v11933
  %v12279 = vpack.c.bf16 %v11936, %v11935
  %v12280 = vpack.c.bf16 %v11938, %v11937
  %v12281 = vpack.c.bf16 %v11940, %v11939
  %v12282 = vpack.c.bf16 %v11942, %v11941
  %v12283 = vpack.c.bf16 %v11944, %v11943
  %v12284 = vpack.c.bf16 %v11946, %v11945
  %v12285 = vpack.c.bf16 %v11948, %v11947
  %v12286 = vpack.c.bf16 %v11950, %v11949
  %v12287 = vpack.c.bf16 %v11952, %v11951
  %v12288 = vpack.c.bf16 %v11954, %v11953
  %v12289 = vpack.c.bf16 %v11956, %v11955
  %v12290 = vpack.c.bf16 %v11958, %v11957
  %v12291 = vpack.c.bf16 %v11960, %v11959
  %v12292 = vpack.c.bf16 %v11962, %v11961
  %v12293 = vpack.c.bf16 %v11964, %v11963
  %v12294 = vpack.c.bf16 %v11966, %v11965
  %v12295 = vpack.c.bf16 %v11968, %v11967
  %v12296 = vpack.c.bf16 %v11970, %v11969
  %v12297 = vpack.c.bf16 %v11972, %v11971
  %v12298 = vpack.c.bf16 %v11974, %v11973
  %v12299 = vpack.c.bf16 %v11976, %v11975
  %v12300 = vpack.c.bf16 %v11978, %v11977
  %v12301 = vpack.c.bf16 %v11980, %v11979
  %v12302 = vpack.c.bf16 %v11982, %v11981
  %v12303 = vpack.c.bf16 %v11984, %v11983
  %v12304 = vpack.c.bf16 %v11986, %v11985
  %v12305 = vpack.c.bf16 %v11988, %v11987
  %v12306 = vpack.c.bf16 %v11990, %v11989
  %v12307 = vpack.c.bf16 %v11992, %v11991
  %v12308 = vpack.c.bf16 %v11994, %v11993
  %v12309 = vpack.c.bf16 %v11996, %v11995
  %v12310 = vpack.c.bf16 %v11998, %v11997
  %v12311 = vpack.c.bf16 %v12000, %v11999
  %v12312 = vpack.c.bf16 %v12002, %v12001
  %v12313 = vpack.c.bf16 %v12004, %v12003
  %v12314 = vpack.c.bf16 %v12006, %v12005
  %v12315 = vpack.c.bf16 %v12008, %v12007
  %v12316 = vpack.c.bf16 %v12010, %v12009
  %v12317 = vpack.c.bf16 %v12012, %v12011
  %v12318 = vpack.c.bf16 %v12014, %v12013
  %v12319 = vpack.c.bf16 %v12016, %v12015
  %v12320 = vpack.c.bf16 %v12018, %v12017
  %v12321 = vpack.c.bf16 %v12020, %v12019
  %v12322 = vpack.c.bf16 %v12022, %v12021
  %v12323 = vpack.c.bf16 %v12024, %v12023
  %v12324 = vpack.c.bf16 %v12026, %v12025
  %v12325 = vpack.c.bf16 %v12028, %v12027
  %v12326 = vpack.c.bf16 %v12030, %v12029
  %v12327 = vpack.c.bf16 %v12032, %v12031
  %v12328 = vpack.c.bf16 %v12034, %v12033
  %vm12329 = vcmask 130048
  %v12331 = vsel %vm12329, %v12247, 0
  %12333 = vmatprep.subr.bf16.mxu0 0
  %12334 = vmatpush1.bf16.msra.mxu0 %v12248
  %12335 = vmatprep.subr.bf16.mxu0 0
  %12336 = vmatpush1.bf16.msra.mxu0 %v12249
  %12337 = vmatprep.subr.bf16.mxu0 0
  %12338 = vmatpush1.bf16.msra.mxu0 %v12250
  %12339 = vmatprep.subr.bf16.mxu0 0
  %12340 = vmatpush1.bf16.msra.mxu0 %v12251
  %12341 = vmatprep.subr.bf16.mxu0 0
  %12342 = vmatpush1.bf16.msra.mxu0 %v12252
  %12343 = vmatprep.subr.bf16.mxu0 0
  %12344 = vmatpush1.bf16.msra.mxu0 %v12253
  %12345 = vmatprep.subr.bf16.mxu0 0
  %12346 = vmatpush1.bf16.msra.mxu0 %v12254
  %12347 = vmatprep.subr.bf16.mxu0 0
  %12348 = vmatpush1.bf16.msra.mxu0 %v12255
  %12349 = vmatprep.subr.bf16.mxu0 0
  %12350 = vmatpush1.bf16.msra.mxu0 %v12256
  %12351 = vmatprep.subr.bf16.mxu0 0
  %12352 = vmatpush1.bf16.msra.mxu0 %v12257
  %12353 = vmatprep.subr.bf16.mxu0 0
  %12354 = vmatpush1.bf16.msra.mxu0 %v12258
  %12355 = vmatprep.subr.bf16.mxu0 0
  %12356 = vmatpush1.bf16.msra.mxu0 %v12259
  %12357 = vmatprep.subr.bf16.mxu0 0
  %12358 = vmatpush1.bf16.msra.mxu0 %v12260
  %12359 = vmatprep.subr.bf16.mxu0 0
  %12360 = vmatpush1.bf16.msra.mxu0 %v12261
  %12361 = vmatprep.subr.bf16.mxu0 0
  %12362 = vmatpush1.bf16.msra.mxu0 %v12262
  %12363 = vmatprep.subr.bf16.mxu0 0
  %12364 = vmatpush1.bf16.msra.mxu0 %v12263
  %12365 = vmatprep.mubr.bf16.mxu0 %v12238
  %12366 = vmatmul.mubr.bf16.gmra.mrb[0].mxu0 %v12237
  %v12367 = vpop.f32.mrb[0].mxu0
  %v12368 = vadd.f32 0.0, %v12367
  %v12369 = vpop.f32.mrb[0].mxu0
  %v12370 = vpop.f32.mrb[0].mxu0
  %v12371 = vpop.f32.mrb[0].mxu0
  %12372 = vdwg.mxu0
  %12373 = vmatprep.subr.bf16.mxu0 0
  %12374 = vmatpush1.bf16.msra.mxu0 %v12264
  %12375 = vmatprep.subr.bf16.mxu0 0
  %12376 = vmatpush1.bf16.msra.mxu0 %v12265
  %12377 = vmatprep.subr.bf16.mxu0 0
  %12378 = vmatpush1.bf16.msra.mxu0 %v12266
  %12379 = vmatprep.subr.bf16.mxu0 0
  %12380 = vmatpush1.bf16.msra.mxu0 %v12267
  %12381 = vmatprep.subr.bf16.mxu0 0
  %12382 = vmatpush1.bf16.msra.mxu0 %v12268
  %12383 = vmatprep.subr.bf16.mxu0 0
  %12384 = vmatpush1.bf16.msra.mxu0 %v12269
  %12385 = vmatprep.subr.bf16.mxu0 0
  %12386 = vmatpush1.bf16.msra.mxu0 %v12270
  %12387 = vmatprep.subr.bf16.mxu0 0
  %12388 = vmatpush1.bf16.msra.mxu0 %v12271
  %12389 = vmatprep.subr.bf16.mxu0 0
  %12390 = vmatpush1.bf16.msra.mxu0 %v12272
  %12391 = vmatprep.subr.bf16.mxu0 0
  %12392 = vmatpush1.bf16.msra.mxu0 %v12273
  %12393 = vmatprep.subr.bf16.mxu0 0
  %12394 = vmatpush1.bf16.msra.mxu0 %v12274
  %12395 = vmatprep.subr.bf16.mxu0 0
  %12396 = vmatpush1.bf16.msra.mxu0 %v12275
  %12397 = vmatprep.subr.bf16.mxu0 0
  %12398 = vmatpush1.bf16.msra.mxu0 %v12276
  %12399 = vmatprep.subr.bf16.mxu0 0
  %12400 = vmatpush1.bf16.msra.mxu0 %v12277
  %12401 = vmatprep.subr.bf16.mxu0 0
  %12402 = vmatpush1.bf16.msra.mxu0 %v12278
  %12403 = vmatprep.subr.bf16.mxu0 0
  %12404 = vmatpush1.bf16.msra.mxu0 %v12279
  %12405 = vmatprep.mubr.bf16.mxu0 %v12240
  %12406 = vmatmul.mubr.bf16.gmra.mrb[0].mxu0 %v12239
  %v12407 = vpop.f32.mrb[0].mxu0
  %v12408 = vadd.f32 %v12368, %v12407
  %v12409 = vpop.f32.mrb[0].mxu0
  %v12410 = vpop.f32.mrb[0].mxu0
  %v12411 = vpop.f32.mrb[0].mxu0
  %12412 = vdwg.mxu0
  %12413 = vmatprep.subr.bf16.mxu0 0
  %12414 = vmatpush1.bf16.msra.mxu0 %v12280
  %12415 = vmatprep.subr.bf16.mxu0 0
  %12416 = vmatpush1.bf16.msra.mxu0 %v12281
  %12417 = vmatprep.subr.bf16.mxu0 0
  %12418 = vmatpush1.bf16.msra.mxu0 %v12282
  %12419 = vmatprep.subr.bf16.mxu0 0
  %12420 = vmatpush1.bf16.msra.mxu0 %v12283
  %12421 = vmatprep.subr.bf16.mxu0 0
  %12422 = vmatpush1.bf16.msra.mxu0 %v12284
  %12423 = vmatprep.subr.bf16.mxu0 0
  %12424 = vmatpush1.bf16.msra.mxu0 %v12285
  %12425 = vmatprep.subr.bf16.mxu0 0
  %12426 = vmatpush1.bf16.msra.mxu0 %v12286
  %12427 = vmatprep.subr.bf16.mxu0 0
  %12428 = vmatpush1.bf16.msra.mxu0 %v12287
  %12429 = vmatprep.subr.bf16.mxu0 0
  %12430 = vmatpush1.bf16.msra.mxu0 %v12288
  %12431 = vmatprep.subr.bf16.mxu0 0
  %12432 = vmatpush1.bf16.msra.mxu0 %v12289
  %12433 = vmatprep.subr.bf16.mxu0 0
  %12434 = vmatpush1.bf16.msra.mxu0 %v12290
  %12435 = vmatprep.subr.bf16.mxu0 0
  %12436 = vmatpush1.bf16.msra.mxu0 %v12291
  %12437 = vmatprep.subr.bf16.mxu0 0
  %12438 = vmatpush1.bf16.msra.mxu0 %v12292
  %12439 = vmatprep.subr.bf16.mxu0 0
  %12440 = vmatpush1.bf16.msra.mxu0 %v12293
  %12441 = vmatprep.subr.bf16.mxu0 0
  %12442 = vmatpush1.bf16.msra.mxu0 %v12294
  %12443 = vmatprep.subr.bf16.mxu0 0
  %12444 = vmatpush1.bf16.msra.mxu0 %v12295
  %12445 = vmatprep.mubr.bf16.mxu0 %v12242
  %12446 = vmatmul.mubr.bf16.gmra.mrb[0].mxu0 %v12241
  %v12447 = vpop.f32.mrb[0].mxu0
  %v12448 = vadd.f32 %v12408, %v12447
  %v12449 = vpop.f32.mrb[0].mxu0
  %v12450 = vpop.f32.mrb[0].mxu0
  %v12451 = vpop.f32.mrb[0].mxu0
  %12452 = vdwg.mxu0
  %12453 = vmatprep.subr.bf16.mxu0 0
  %12454 = vmatpush1.bf16.msra.mxu0 %v12296
  %12455 = vmatprep.subr.bf16.mxu0 0
  %12456 = vmatpush1.bf16.msra.mxu0 %v12297
  %12457 = vmatprep.subr.bf16.mxu0 0
  %12458 = vmatpush1.bf16.msra.mxu0 %v12298
  %12459 = vmatprep.subr.bf16.mxu0 0
  %12460 = vmatpush1.bf16.msra.mxu0 %v12299
  %12461 = vmatprep.subr.bf16.mxu0 0
  %12462 = vmatpush1.bf16.msra.mxu0 %v12300
  %12463 = vmatprep.subr.bf16.mxu0 0
  %12464 = vmatpush1.bf16.msra.mxu0 %v12301
  %12465 = vmatprep.subr.bf16.mxu0 0
  %12466 = vmatpush1.bf16.msra.mxu0 %v12302
  %12467 = vmatprep.subr.bf16.mxu0 0
  %12468 = vmatpush1.bf16.msra.mxu0 %v12303
  %12469 = vmatprep.subr.bf16.mxu0 0
  %12470 = vmatpush1.bf16.msra.mxu0 %v12304
  %12471 = vmatprep.subr.bf16.mxu0 0
  %12472 = vmatpush1.bf16.msra.mxu0 %v12305
  %12473 = vmatprep.subr.bf16.mxu0 0
  %12474 = vmatpush1.bf16.msra.mxu0 %v12306
  %12475 = vmatprep.subr.bf16.mxu0 0
  %12476 = vmatpush1.bf16.msra.mxu0 %v12307
  %12477 = vmatprep.subr.bf16.mxu0 0
  %12478 = vmatpush1.bf16.msra.mxu0 %v12308
  %12479 = vmatprep.subr.bf16.mxu0 0
  %12480 = vmatpush1.bf16.msra.mxu0 %v12309
  %12481 = vmatprep.subr.bf16.mxu0 0
  %12482 = vmatpush1.bf16.msra.mxu0 %v12310
  %12483 = vmatprep.subr.bf16.mxu0 0
  %12484 = vmatpush1.bf16.msra.mxu0 %v12311
  %12485 = vmatprep.mubr.bf16.mxu0 %v12244
  %12486 = vmatmul.mubr.bf16.gmra.mrb[0].mxu0 %v12243
  %v12487 = vpop.f32.mrb[0].mxu0
  %v12488 = vadd.f32 %v12448, %v12487
  %v12489 = vpop.f32.mrb[0].mxu0
  %v12490 = vpop.f32.mrb[0].mxu0
  %v12491 = vpop.f32.mrb[0].mxu0
  %12492 = vdwg.mxu0
  %12493 = vmatprep.subr.bf16.mxu0 0
  %12494 = vmatpush1.bf16.msra.mxu0 %v12312
  %12495 = vmatprep.subr.bf16.mxu0 0
  %12496 = vmatpush1.bf16.msra.mxu0 %v12313
  %12497 = vmatprep.subr.bf16.mxu0 0
  %12498 = vmatpush1.bf16.msra.mxu0 %v12314
  %12499 = vmatprep.subr.bf16.mxu0 0
  %12500 = vmatpush1.bf16.msra.mxu0 %v12315
  %12501 = vmatprep.subr.bf16.mxu0 0
  %12502 = vmatpush1.bf16.msra.mxu0 %v12316
  %12503 = vmatprep.subr.bf16.mxu0 0
  %12504 = vmatpush1.bf16.msra.mxu0 %v12317
  %12505 = vmatprep.subr.bf16.mxu0 0
  %12506 = vmatpush1.bf16.msra.mxu0 %v12318
  %12507 = vmatprep.subr.bf16.mxu0 0
  %12508 = vmatpush1.bf16.msra.mxu0 %v12319
  %12509 = vmatprep.subr.bf16.mxu0 0
  %12510 = vmatpush1.bf16.msra.mxu0 %v12320
  %12511 = vmatprep.subr.bf16.mxu0 0
  %12512 = vmatpush1.bf16.msra.mxu0 %v12321
  %12513 = vmatprep.subr.bf16.mxu0 0
  %12514 = vmatpush1.bf16.msra.mxu0 %v12322
  %12515 = vmatprep.subr.bf16.mxu0 0
  %12516 = vmatpush1.bf16.msra.mxu0 %v12323
  %12517 = vmatprep.subr.bf16.mxu0 0
  %12518 = vmatpush1.bf16.msra.mxu0 %v12324
  %12519 = vmatprep.subr.bf16.mxu0 0
  %12520 = vmatpush1.bf16.msra.mxu0 %v12325
  %12521 = vmatprep.subr.bf16.mxu0 0
  %12522 = vmatpush1.bf16.msra.mxu0 %v12326
  %12523 = vmatprep.subr.bf16.mxu0 0
  %12524 = vmatpush1.bf16.msra.mxu0 %v12327
  %12525 = vmatprep.mubr.bf16.mxu0 %v12246
  %12526 = vmatmul.mubr.bf16.gmra.mrb[0].mxu0 %v12245
  %v12527 = vpop.f32.mrb[0].mxu0
  %v12528 = vadd.f32 %v12488, %v12527
  %v12529 = vpop.f32.mrb[0].mxu0
  %v12530 = vpop.f32.mrb[0].mxu0
  %v12531 = vpop.f32.mrb[0].mxu0
  %12532 = vdwg.mxu0
  %12533 = vmatprep.subr.bf16.mxu0 0
  %12534 = vmatpush1.bf16.msra.mxu0 %v12328
  %12535 = vmatprep.subr.bf16.mxu0 0
  %12536 = vmatpush1.bf16.msra.mxu0 0
  %12537 = vmatprep.subr.bf16.mxu0 0
  %12538 = vmatpush1.bf16.msra.mxu0 0
  %12539 = vmatprep.subr.bf16.mxu0 0
  %12540 = vmatpush1.bf16.msra.mxu0 0
  %12541 = vmatprep.subr.bf16.mxu0 0
  %12542 = vmatpush1.bf16.msra.mxu0 0
  %12543 = vmatprep.subr.bf16.mxu0 0
  %12544 = vmatpush1.bf16.msra.mxu0 0
  %12545 = vmatprep.subr.bf16.mxu0 0
  %12546 = vmatpush1.bf16.msra.mxu0 0
  %12547 = vmatprep.subr.bf16.mxu0 0
  %12548 = vmatpush1.bf16.msra.mxu0 0
  %12549 = vmatprep.subr.bf16.mxu0 0
  %12550 = vmatpush1.bf16.msra.mxu0 0
  %12551 = vmatprep.subr.bf16.mxu0 0
  %12552 = vmatpush1.bf16.msra.mxu0 0
  %12553 = vmatprep.subr.bf16.mxu0 0
  %12554 = vmatpush1.bf16.msra.mxu0 0
  %12555 = vmatprep.subr.bf16.mxu0 0
  %12556 = vmatpush1.bf16.msra.mxu0 0
  %12557 = vmatprep.subr.bf16.mxu0 0
  %12558 = vmatpush1.bf16.msra.mxu0 0
  %12559 = vmatprep.subr.bf16.mxu0 0
  %12560 = vmatpush1.bf16.msra.mxu0 0
  %12561 = vmatprep.subr.bf16.mxu0 0
  %12562 = vmatpush1.bf16.msra.mxu0 0
  %12563 = vmatprep.subr.bf16.mxu0 0
  %12564 = vmatpush1.bf16.msra.mxu0 0
  %12565 = vmatprep.mubr.bf16.mxu0 0
  %12566 = vmatmul.mubr.bf16.gmra.mrb[0].mxu0 %v12331
  %v12567 = vpop.f32.mrb[0].mxu0
  %v12568 = vadd.f32 %v12528, %v12567
  %v12569 = vpop.f32.mrb[0].mxu0
  %v12570 = vpop.f32.mrb[0].mxu0
  %v12571 = vpop.f32.mrb[0].mxu0
  %12572 = vdwg.mxu0
  %v12573 = vpack.c.bf16 %v12568, %v12568
  %v12574 = vld [vmem:[%s3] sm:$0xf]
  %v12575 = vld [vmem:[%s3 + $0x4] sm:$0xf]
  %v12576 = vld [vmem:[%s3 + $0x8] sm:$0xf]
  %v12577 = vld [vmem:[%s3 + $0xc] sm:$0xf]
  %v12578 = vld [vmem:[%s3 + $0x10] sm:$0xf]
  %v12579 = vld [vmem:[%s3 + $0x14] sm:$0xf]
  %v12580 = vld [vmem:[%s3 + $0x18] sm:$0xf]
  %v12581 = vld [vmem:[%s3 + $0x1c] sm:$0xf]
  %v12582 = vld [vmem:[%s3 + $0x20] sm:$0xf]
  %v12583 = vld [vmem:[%s3 + $0x24] sm:$0xf]
  %v12584 = vld [vmem:[%s3 + $0x28] sm:$0xf]
  %v12585 = vld [vmem:[%s3 + $0x2c] sm:$0xf]
  %v12586 = vld [vmem:[%s3 + $0x30] sm:$0xf]
  %v12587 = vld [vmem:[%s3 + $0x34] sm:$0xf]
  %v12588 = vld [vmem:[%s3 + $0x38] sm:$0xf]
  %v12589 = vld [vmem:[%s3 + $0x3c] sm:$0xf]
  %v12590 = vld [vmem:[%s4] sm:$0x1]
  %v12592 = vlaneseq
  %v12593 = vshrl.u32 %v12592, 7
  %v12594 = vsub.s32 0, %v12593
  %v12595 = vrot.slane %v12590, %v12594
  %v12613 = vunpack.c.l.b16 %v12574
  %v12614 = vunpack.c.l.b16 %v12575
  %v12615 = vunpack.c.l.b16 %v12576
  %v12616 = vunpack.c.l.b16 %v12577
  %v12617 = vunpack.c.l.b16 %v12578
  %v12618 = vunpack.c.l.b16 %v12579
  %v12619 = vunpack.c.l.b16 %v12580
  %v12620 = vunpack.c.l.b16 %v12581
  %v12621 = vunpack.c.l.b16 %v12582
  %v12622 = vunpack.c.l.b16 %v12583
  %v12623 = vunpack.c.l.b16 %v12584
  %v12624 = vunpack.c.l.b16 %v12585
  %v12625 = vunpack.c.l.b16 %v12586
  %v12626 = vunpack.c.l.b16 %v12587
  %v12627 = vunpack.c.l.b16 %v12588
  %v12628 = vunpack.c.l.b16 %v12589
  %v12629 = vpack.c.b16 %v12614, %v12613
  %v12630 = vpack.c.b16 %v12616, %v12615
  %v12631 = vpack.c.b16 %v12618, %v12617
  %v12632 = vpack.c.b16 %v12620, %v12619
  %v12633 = vpack.c.b16 %v12622, %v12621
  %v12634 = vpack.c.b16 %v12624, %v12623
  %v12635 = vpack.c.b16 %v12626, %v12625
  %v12636 = vpack.c.b16 %v12628, %v12627
  %12645 = vmatprep.subr.bf16.mxu0 0
  %12646 = vmatpush1.bf16.msra.mxu0 %v12629
  %12647 = vmatprep.subr.bf16.mxu0 0
  %12648 = vmatpush1.bf16.msra.mxu0 %v12630
  %12649 = vmatprep.subr.bf16.mxu0 0
  %12650 = vmatpush1.bf16.msra.mxu0 %v12631
  %12651 = vmatprep.subr.bf16.mxu0 0
  %12652 = vmatpush1.bf16.msra.mxu0 %v12632
  %12653 = vmatprep.subr.bf16.mxu0 0
  %12654 = vmatpush1.bf16.msra.mxu0 %v12633
  %12655 = vmatprep.subr.bf16.mxu0 0
  %12656 = vmatpush1.bf16.msra.mxu0 %v12634
  %12657 = vmatprep.subr.bf16.mxu0 0
  %12658 = vmatpush1.bf16.msra.mxu0 %v12635
  %12659 = vmatprep.subr.bf16.mxu0 0
  %12660 = vmatpush1.bf16.msra.mxu0 %v12636
  %12661 = vmatprep.subr.bf16.mxu0 0
  %12662 = vmatpush1.bf16.msra.mxu0 0
  %12663 = vmatprep.subr.bf16.mxu0 0
  %12664 = vmatpush1.bf16.msra.mxu0 0
  %12665 = vmatprep.subr.bf16.mxu0 0
  %12666 = vmatpush1.bf16.msra.mxu0 0
  %12667 = vmatprep.subr.bf16.mxu0 0
  %12668 = vmatpush1.bf16.msra.mxu0 0
  %12669 = vmatprep.subr.bf16.mxu0 0
  %12670 = vmatpush1.bf16.msra.mxu0 0
  %12671 = vmatprep.subr.bf16.mxu0 0
  %12672 = vmatpush1.bf16.msra.mxu0 0
  %12673 = vmatprep.subr.bf16.mxu0 0
  %12674 = vmatpush1.bf16.msra.mxu0 0
  %12675 = vmatprep.subr.bf16.mxu0 0
  %12676 = vmatpush1.bf16.msra.mxu0 0
  %12677 = vmatprep.mubr.bf16.mxu0 0
  %12678 = vmatmul.mubr.bf16.gmra.mrb[0].mxu0 %v12573
  %v12679 = vpop.f32.mrb[0].mxu0
  %v12680 = vadd.f32 %v12595, %v12679
  %v12681 = vpop.f32.mrb[0].mxu0
  %v12682 = vpop.f32.mrb[0].mxu0
  %v12683 = vpop.f32.mrb[0].mxu0
  %12684 = vdwg.mxu0
  %v12685 = vmax.f32 %v12680, 0.0
  %v12686 = vpack.c.bf16 %v12685, %v12685
  %v12687 = vld [vmem:[%s5] sm:$0xf]
  %v12688 = vld [vmem:[%s5 + $0x4] sm:$0xf]
  %v12689 = vld [vmem:[%s5 + $0x8] sm:$0xf]
  %v12690 = vld [vmem:[%s5 + $0xc] sm:$0xf]
  %v12691 = vld [vmem:[%s5 + $0x10] sm:$0xf]
  %v12692 = vld [vmem:[%s5 + $0x14] sm:$0xf]
  %v12693 = vld [vmem:[%s5 + $0x18] sm:$0xf]
  %v12694 = vld [vmem:[%s5 + $0x1c] sm:$0xf]
  %v12695 = vld [vmem:[%s5 + $0x20] sm:$0xf]
  %v12696 = vld [vmem:[%s5 + $0x24] sm:$0xf]
  %v12697 = vld [vmem:[%s5 + $0x28] sm:$0xf]
  %v12698 = vld [vmem:[%s5 + $0x2c] sm:$0xf]
  %v12699 = vld [vmem:[%s5 + $0x30] sm:$0xf]
  %v12700 = vld [vmem:[%s5 + $0x34] sm:$0xf]
  %v12701 = vld [vmem:[%s5 + $0x38] sm:$0xf]
  %v12702 = vld [vmem:[%s5 + $0x3c] sm:$0xf]
  %v12703 = vld [vmem:[%s6] sm:$0x1]
  %v12705 = vlaneseq
  %v12706 = vshrl.u32 %v12705, 7
  %v12707 = vsub.s32 0, %v12706
  %v12708 = vrot.slane %v12703, %v12707
  %v12726 = vunpack.c.l.b16 %v12687
  %v12727 = vunpack.c.l.b16 %v12688
  %v12728 = vunpack.c.l.b16 %v12689
  %v12729 = vunpack.c.l.b16 %v12690
  %v12730 = vunpack.c.l.b16 %v12691
  %v12731 = vunpack.c.l.b16 %v12692
  %v12732 = vunpack.c.l.b16 %v12693
  %v12733 = vunpack.c.l.b16 %v12694
  %v12734 = vunpack.c.l.b16 %v12695
  %v12735 = vunpack.c.l.b16 %v12696
  %v12736 = vunpack.c.l.b16 %v12697
  %v12737 = vunpack.c.l.b16 %v12698
  %v12738 = vunpack.c.l.b16 %v12699
  %v12739 = vunpack.c.l.b16 %v12700
  %v12740 = vunpack.c.l.b16 %v12701
  %v12741 = vunpack.c.l.b16 %v12702
  %v12742 = vpack.c.b16 %v12727, %v12726
  %v12743 = vpack.c.b16 %v12729, %v12728
  %v12744 = vpack.c.b16 %v12731, %v12730
  %v12745 = vpack.c.b16 %v12733, %v12732
  %v12746 = vpack.c.b16 %v12735, %v12734
  %v12747 = vpack.c.b16 %v12737, %v12736
  %v12748 = vpack.c.b16 %v12739, %v12738
  %v12749 = vpack.c.b16 %v12741, %v12740
  %12758 = vmatprep.subr.bf16.mxu0 0
  %12759 = vmatpush1.bf16.msra.mxu0 %v12742
  %12760 = vmatprep.subr.bf16.mxu0 0
  %12761 = vmatpush1.bf16.msra.mxu0 %v12743
  %12762 = vmatprep.subr.bf16.mxu0 0
  %12763 = vmatpush1.bf16.msra.mxu0 %v12744
  %12764 = vmatprep.subr.bf16.mxu0 0
  %12765 = vmatpush1.bf16.msra.mxu0 %v12745
  %12766 = vmatprep.subr.bf16.mxu0 0
  %12767 = vmatpush1.bf16.msra.mxu0 %v12746
  %12768 = vmatprep.subr.bf16.mxu0 0
  %12769 = vmatpush1.bf16.msra.mxu0 %v12747
  %12770 = vmatprep.subr.bf16.mxu0 0
  %12771 = vmatpush1.bf16.msra.mxu0 %v12748
  %12772 = vmatprep.subr.bf16.mxu0 0
  %12773 = vmatpush1.bf16.msra.mxu0 %v12749
  %12774 = vmatprep.subr.bf16.mxu0 0
  %12775 = vmatpush1.bf16.msra.mxu0 0
  %12776 = vmatprep.subr.bf16.mxu0 0
  %12777 = vmatpush1.bf16.msra.mxu0 0
  %12778 = vmatprep.subr.bf16.mxu0 0
  %12779 = vmatpush1.bf16.msra.mxu0 0
  %12780 = vmatprep.subr.bf16.mxu0 0
  %12781 = vmatpush1.bf16.msra.mxu0 0
  %12782 = vmatprep.subr.bf16.mxu0 0
  %12783 = vmatpush1.bf16.msra.mxu0 0
  %12784 = vmatprep.subr.bf16.mxu0 0
  %12785 = vmatpush1.bf16.msra.mxu0 0
  %12786 = vmatprep.subr.bf16.mxu0 0
  %12787 = vmatpush1.bf16.msra.mxu0 0
  %12788 = vmatprep.subr.bf16.mxu0 0
  %12789 = vmatpush1.bf16.msra.mxu0 0
  %12790 = vmatprep.mubr.bf16.mxu0 0
  %12791 = vmatmul.mubr.bf16.gmra.mrb[0].mxu0 %v12686
  %v12792 = vpop.f32.mrb[0].mxu0
  %v12793 = vadd.f32 %v12708, %v12792
  %v12794 = vpop.f32.mrb[0].mxu0
  %v12795 = vpop.f32.mrb[0].mxu0
  %v12796 = vpop.f32.mrb[0].mxu0
  %12797 = vdwg.mxu0
  %vm12798 = vcmp.lt.s32.totalorder %v12036, 64
  %v12799 = vsel %vm12798, %v12793, 0.0
  %v12800 = vmul.f32 %v12799, %v12799
  %12801 = vadd.xlane.f32.xlu0 %v12800
  %v12802 = vpop.xlane.xlu0 %12801
  %v12803 = vmax.f32 %v12802, 1e-24
  %v12804 = vrsqrt.pop %v12803
  %v12805 = vmul.f32 %v12799, %v12804
  %12806 = vst [vmem:[%s7] sm:$0xff] %v12805
  %vm12807 = vcmp.ge.s32.totalorder %v12036, 64
  %vm12808 = vcmp.lt.s32.totalorder %v12036, 74
  %vm12809 = vmand %vm12807, %vm12808
  %v12810 = vsel %vm12809, %v12793, -1e+30
  %12811 = vmax.xlane.f32.xlu0 %v12810
  %v12812 = vpop.xlane.xlu0 %12811
  %v12813 = vsub.f32 %v12810, %v12812
  %v12814 = vmul.f32 %v12813, 1.442695
  %v12815 = vpow.pop %v12814
  %12816 = vadd.xlane.f32.xlu0 %v12815
  %v12817 = vpop.xlane.xlu0 %12816
  %v12818 = vrcp.pop %v12817
  %v12819 = vmul.f32 %v12815, %v12818
  %12820 = vst [vmem:[%s8] sm:$0xff] %v12819
  // Predicated region
  $region30: #{network_forward.1} parent=0 // pred_check
    _
  $region31: #{network_forward.1} parent=0 // pred_check_branch
    %12822 = sbr.rel (0) target = $region33
  $region32: #{network_forward.1} parent=0 // pred_region
    _
  $region33: #{network_forward.1} parent=0 // pred_fallthru
    _
  // Predicated region
  $region34: #{network_forward.1} parent=0 // pred_check
    _
  $region35: #{network_forward.1} parent=0 // pred_check_branch
    %12824 = sbr.rel (0) target = $region37
  $region36: #{network_forward.1} parent=0 // pred_region
    _
  $region37: #{network_forward.1} parent=0 // pred_fallthru
    _
  // Predicated region
  $region38: #{network_forward.1} parent=0 // pred_check
    _
  $region39: #{network_forward.1} parent=0 // pred_check_branch
    %12826 = sbr.rel (0) target = $region41
  $region40: #{network_forward.1} parent=0 // pred_region
    _
  $region41: #{network_forward.1} parent=0 // pred_fallthru
    _
  // Predicated region
  $region42: #{network_forward.1} parent=0 // pred_check
    _
  $region43: #{network_forward.1} parent=0 // pred_check_branch
    %12828 = sbr.rel (0) target = $region45
  $region44: #{network_forward.1} parent=0 // pred_region
    _
  $region45: #{network_forward.1} parent=0 // pred_fallthru
    _

</llo_original>
